<compile_context>
chip_gen: v6e
topology: v6e:2x2x1
jax: 0.10.0
libtpu: 0.0.40
codegen_flags: <defaults>
</compile_context>

<pallas_src>
import math

import jax
import jax.numpy as jnp
from jax.experimental import pallas as pl
from jax.experimental.pallas import tpu as pltpu

# ---- config (num_filters must equal word_embedding_dim for the torch module to run) ----
NUM_FILTERS = 32                      # config.num_filters == config.word_embedding_dim
NUM_HEADS = 4                         # config.num_attention_heads
D_K = NUM_FILTERS // NUM_HEADS        # 8
NUM_CLICKED = 8                       # num_clicked_news_a_user
SEQ = NUM_CLICKED + 1                 # concatenated sequence length (9)
HIDDEN = NUM_FILTERS // 2             # 16
PROJ = 2 * NUM_FILTERS + NUM_HEADS * HIDDEN   # fused projection width: 32 + 32 + 64 = 128

# MXU operand dtype for the projection matmuls.  jnp.bfloat16 gives ~3x MXU throughput on
# v6e/v7x (f32 accumulation kept), but moves the end-to-end error to ~1e-3; kept at f32 so the
# 1e-4 correctness check stays tight.  Flip to jnp.bfloat16 on v6e/v7x if the budget allows.
MXU_INPUT_DTYPE = jnp.float32


def _round_up(x, m):
    return (x + m - 1) // m * m


def _choose_tb(batch):
    """Batch rows per grid step (the batch rides the lane axis inside the kernel)."""
    if batch >= 512:
        return 256            # 256-lane blocks, still >= 2 grid steps
    if batch >= 256:
        return 128            # guarantees >= 2 grid steps so both v7x TensorCores are used
    # single grid step: block lane dim == full padded batch (satisfies the (8,128) rule)
    return _round_up(max(batch, 1), 8)


def _attention_kernel(candT_ref, clickedT_ref, wT_ref, bT_ref, b1_ref, w2_ref,
                      out_ref, proj_ref):
    """One tile of TB batch rows per grid step; the batch rides the lane axis everywhere.

    candT_ref:    (NUM_CLICKED, D, TB)   candidate news, batch-last
    clickedT_ref: (D, TB)                clicked news, batch-last
    wT_ref:       (PROJ, D)              fused [Wq | Wk | per-head Wv_h @ W1_h], transposed
    bT_ref:       (PROJ, 1)
    b1_ref:       (1, HIDDEN, 1)         dnn layer-1 bias
    w2_ref:       (1, HIDDEN, 1)         dnn layer-2 weight row (bias b2 is softmax-invariant)
    out_ref:      (SEQ, TB)              attention weights, batch-last (lane-dense store)
    proj_ref:     VMEM scratch (SEQ, PROJ, TB)
    """
    wT = wT_ref[...]                                     # (PROJ, D)
    bT = bT_ref[...]                                     # (PROJ, 1)
    if MXU_INPUT_DTYPE != jnp.float32:
        wT = wT.astype(MXU_INPUT_DTYPE)

    # ---- fused QKV + dnn-layer-1 projection: one (PROJ, D) x (D, TB) MXU matmul per token.
    # Token n < NUM_CLICKED comes from the candidate block, token NUM_CLICKED from the clicked
    # vector -> the (candidate, clicked) concat never touches HBM and there is no scatter.
    for n in range(SEQ):                                 # static unroll (9)
        x_n = candT_ref[n] if n < NUM_CLICKED else clickedT_ref[...]      # (D, TB)
        if MXU_INPUT_DTYPE != jnp.float32:
            x_n = x_n.astype(MXU_INPUT_DTYPE)
        proj_ref[n] = jnp.dot(wT, x_n, preferred_element_type=jnp.float32) + bT

    scale = 1.0 / math.sqrt(D_K)

    # ---- per-head attention, fully on the VPU/EUP with the batch on the lane axis.
    # All temporaries are (rows <= 81, lanes = TB): every exp / max / mul uses dense 128-lane
    # vregs, and there are no per-batch micro-matmuls.  Channel slices of proj_ref are
    # contiguous 8-aligned sublane rows.
    h1 = None                                            # (SEQ, HIDDEN, TB) accumulator
    for h in range(NUM_HEADS):                           # static unroll (4)
        q_lo = h * D_K
        k_lo = NUM_FILTERS + h * D_K
        u_lo = 2 * NUM_FILTERS + h * HIDDEN
        qh = proj_ref[:, q_lo:q_lo + D_K, :]             # (SEQ, D_K, TB)
        kh = proj_ref[:, k_lo:k_lo + D_K, :]             # (SEQ, D_K, TB)
        uh = proj_ref[:, u_lo:u_lo + HIDDEN, :]          # (SEQ, HIDDEN, TB)  (Wv_h@W1_h folded)

        # scores[q, k, b] = sum_d qh[q, d, b] * kh[k, d, b]   (unrolled VPU FMAs over D_K = 8)
        s = None
        for d in range(D_K):
            term = qh[:, d, :][:, None, :] * kh[:, d, :][None, :, :]      # (SEQ, SEQ, TB)
            s = term if s is None else s + term
        s = s * scale

        # softmax over k (axis 1); reductions unrolled over the 9 key positions (pure VPU).
        m = s[:, 0, :]
        for k in range(1, SEQ):
            m = jnp.maximum(m, s[:, k, :])
        e = jnp.exp(s - m[:, None, :])                   # (SEQ, SEQ, TB) -- all lanes useful
        den = e[:, 0, :]
        for k in range(1, SEQ):
            den = den + e[:, k, :]
        inv = pl.reciprocal(den, approx=True)            # (SEQ, TB)  (EUP slot)

        # context with dnn layer 1 already folded into u:  h1 += attn @ u_h  (unrolled over k)
        for k in range(SEQ):
            attn_k = e[:, k, :] * inv                                      # (SEQ, TB)
            contrib = attn_k[:, None, :] * uh[k][None, :, :]               # (SEQ, HIDDEN, TB)
            h1 = contrib if h1 is None else h1 + contrib

    # ---- dnn: ReLU(h1 + b1) then Linear(HIDDEN, 1) as broadcast-mul + row sum (b2 dropped:
    # a constant added before the softmax over SEQ cancels exactly).
    h1 = jnp.maximum(h1 + b1_ref[...], 0.0)              # (SEQ, HIDDEN, TB)
    weighted = h1 * w2_ref[...]                          # (SEQ, HIDDEN, TB)
    logits = weighted[:, 0, :]
    for j in range(1, HIDDEN):
        logits = logits + weighted[:, j, :]              # (SEQ, TB)

    # ---- final softmax over the sequence positions (exact), batch stays on lanes.
    m2 = logits[0:1, :]
    for qp in range(1, SEQ):
        m2 = jnp.maximum(m2, logits[qp:qp + 1, :])
    e2 = jnp.exp(logits - m2)                            # (SEQ, TB)
    den2 = e2[0:1, :]
    for qp in range(1, SEQ):
        den2 = den2 + e2[qp:qp + 1, :]
    out_ref[...] = e2 / den2                             # lane-dense (SEQ, TB) store


def attention_forward(candidate_news_vector, clicked_news_vector, params):
    """candidate: (B, N, D), clicked: (B, D) -> attention weights (B, N + 1)."""
    wq, bq, wk, bk, wv, bv, w1, b1, w2, b2 = params      # b2 unused: softmax-invariant constant
    del b2
    B, N, D = candidate_news_vector.shape
    assert N == NUM_CLICKED and D == NUM_FILTERS

    # ---- host-side weight fusion (tiny, once per call) ----
    # per-head:  u_h = x @ (Wv_h @ W1_h) + bv_h @ W1_h  ==  (x @ Wv_h + bv_h) @ W1_h
    wu = [wv[:, h * D_K:(h + 1) * D_K] @ w1[h * D_K:(h + 1) * D_K, :] for h in range(NUM_HEADS)]
    bu = [bv[:, h * D_K:(h + 1) * D_K] @ w1[h * D_K:(h + 1) * D_K, :] for h in range(NUM_HEADS)]
    # Transposed so the projection runs as (PROJ, D) @ (D, TB): channels on sublanes, batch on
    # lanes.  Per-head q/k/u slices are then contiguous 8-aligned rows (no narrow lane slices).
    w_big_t = jnp.concatenate([wq, wk] + wu, axis=1).T   # (PROJ, D)  = (128, 32)
    b_big_t = jnp.concatenate([bq, bk] + bu, axis=1).T   # (PROJ, 1)
    b1_3 = b1.reshape(1, HIDDEN, 1)
    w2_3 = w2.reshape(1, HIDDEN, 1)

    # ---- batch-last inputs: the batch dim becomes the (dense) lane axis inside the kernel ----
    candt = jnp.transpose(candidate_news_vector, (1, 2, 0))     # (NUM_CLICKED, D, B)
    clickedt = jnp.transpose(clicked_news_vector, (1, 0))       # (D, B)

    TB = _choose_tb(B)
    B_pad = _round_up(B, TB)
    if B_pad != B:
        candt = jnp.pad(candt, ((0, 0), (0, 0), (0, B_pad - B)))
        clickedt = jnp.pad(clickedt, ((0, 0), (0, B_pad - B)))

    def _full(shape):
        return pl.BlockSpec(shape, lambda i: (0,) * len(shape))

    out_t = pl.pallas_call(
        _attention_kernel,
        out_shape=jax.ShapeDtypeStruct((SEQ, B_pad), jnp.float32),
        grid=(B_pad // TB,),
        in_specs=[
            pl.BlockSpec((NUM_CLICKED, D, TB), lambda i: (0, 0, i)),   # candidate (batch-last)
            pl.BlockSpec((D, TB), lambda i: (0, i)),                   # clicked   (batch-last)
            _full((PROJ, D)), _full((PROJ, 1)),                        # fused projection W, b
            _full((1, HIDDEN, 1)), _full((1, HIDDEN, 1)),              # dnn b1, dnn W2 row
        ],
        out_specs=pl.BlockSpec((SEQ, TB), lambda i: (0, i)),           # lane-dense output block
        scratch_shapes=[pltpu.VMEM((SEQ, PROJ, TB), jnp.float32)],
        compiler_params=pltpu.CompilerParams(dimension_semantics=("parallel",)),
    )(candt, clickedt, w_big_t, b_big_t, b1_3, w2_3)
    return jnp.transpose(out_t[:, :B])                   # (B, SEQ)


def attention_reference(candidate_news_vector, clicked_news_vector, params):
    """Pure-JAX reference mirroring the PyTorch module (uses the un-fused weights, incl. b2)."""
    wq, bq, wk, bk, wv, bv, w1, b1, w2, b2 = params
    x = jnp.concatenate(
        [candidate_news_vector, clicked_news_vector[:, None, :]], axis=1)   # (B, S, D)
    B, S, D = x.shape
    q = (x @ wq + bq).reshape(B, S, NUM_HEADS, D_K)
    k = (x @ wk + bk).reshape(B, S, NUM_HEADS, D_K)
    v = (x @ wv + bv).reshape(B, S, NUM_HEADS, D_K)
    scores = jnp.einsum('bqhd,bkhd->bhqk', q, k) / math.sqrt(D_K)
    attn = jax.nn.softmax(scores, axis=-1)
    ctx = jnp.einsum('bhqk,bkhd->bqhd', attn, v).reshape(B, S, D)
    h1 = jax.nn.relu(ctx @ w1 + b1)
    logits = (h1 @ w2 + b2)[..., 0]                      # (B, S)
    return jax.nn.softmax(logits, axis=1)


def _init_params(key):
    ks = jax.random.split(key, 10)

    def lin(kw, shape, scale=0.1):
        return scale * jax.random.normal(kw, shape, jnp.float32)

    D, H2 = NUM_FILTERS, HIDDEN
    return (
        lin(ks[0], (D, D)), lin(ks[1], (1, D)),      # W_Q, b_Q
        lin(ks[2], (D, D)), lin(ks[3], (1, D)),      # W_K, b_K
        lin(ks[4], (D, D)), lin(ks[5], (1, D)),      # W_V, b_V
        lin(ks[6], (D, H2)), lin(ks[7], (1, H2)),    # dnn Linear 1
        lin(ks[8], (H2, 1)), lin(ks[9], (1, 1)),     # dnn Linear 2
    )


if __name__ == "__main__":
    key = jax.random.PRNGKey(0)
    k_cand, k_click, k_params = jax.random.split(key, 3)

    B = 2
    candidate_news_vector = jax.random.normal(
        k_cand, (B, NUM_CLICKED, NUM_FILTERS), jnp.float32)   # (B, N, num_filters)
    clicked_news_vector = jax.random.normal(
        k_click, (B, NUM_FILTERS), jnp.float32)               # (B, num_filters)

    params = _init_params(k_params)

    out = attention_forward(candidate_news_vector, clicked_news_vector, params)
    out = jax.block_until_ready(out)

    ref = attention_reference(candidate_news_vector, clicked_news_vector, params)
    assert out.shape == (B, SEQ), out.shape
    # 1e-4 covers the EUP approximate reciprocal in the inner attention softmax and the f32
    # rounding-order change from the Wv@W1 / bv@W1 host-side folding; the final sequence softmax
    # is computed exactly.
    assert jnp.allclose(out, ref, atol=1e-4, rtol=1e-4), (out, ref)
    # rows sum to 1 (softmax over dim=1)
    assert jnp.allclose(jnp.sum(out, axis=1), jnp.ones((B,)), atol=1e-5)

    print("KERNEL_OK")
</pallas_src>

<mosaic_0001>
module attributes {stable_mosaic.version = 11 : i64} {
  func.func @_attention_kernel(%arg0: i32, %arg1: memref<8x32x8xf32, #tpu.memory_space<vmem>>, %arg2: memref<32x8xf32, #tpu.memory_space<vmem>>, %arg3: memref<128x32xf32, #tpu.memory_space<vmem>>, %arg4: memref<128x1xf32, #tpu.memory_space<vmem>>, %arg5: memref<1x16x1xf32, #tpu.memory_space<vmem>>, %arg6: memref<1x16x1xf32, #tpu.memory_space<vmem>>, %arg7: memref<9x8xf32, #tpu.memory_space<vmem>>, %arg8: memref<9x128x8xf32, #tpu.memory_space<vmem>>) attributes {dimension_semantics = [#tpu.dimension_semantics<parallel>], iteration_bounds = array<i64: 1>, scalar_prefetch = 0 : i64, scratch_operands = 1 : i64, tpu.core_type = #tpu.core_type<tc>, window_params = [{transform_indices = @transform_0, window_bounds = array<i64: 8, 32, 8>}, {transform_indices = @transform_1, window_bounds = array<i64: 32, 8>}, {pipeline_mode = #tpu.pipeline_mode<synchronous>, transform_indices = @transform_2, window_bounds = array<i64: 128, 32>}, {pipeline_mode = #tpu.pipeline_mode<synchronous>, transform_indices = @transform_3, window_bounds = array<i64: 128, 1>}, {pipeline_mode = #tpu.pipeline_mode<synchronous>, transform_indices = @transform_4, window_bounds = array<i64: 1, 16, 1>}, {pipeline_mode = #tpu.pipeline_mode<synchronous>, transform_indices = @transform_5, window_bounds = array<i64: 1, 16, 1>}, {transform_indices = @transform_6, window_bounds = array<i64: 9, 8>}]} {
    %c0 = arith.constant 0 : index
    %c0_0 = arith.constant 0 : index
    %0 = vector.load %arg3[%c0, %c0_0] : memref<128x32xf32, #tpu.memory_space<vmem>>, vector<128x32xf32>
    %c0_1 = arith.constant 0 : index
    %c0_2 = arith.constant 0 : index
    %1 = vector.load %arg4[%c0_1, %c0_2] : memref<128x1xf32, #tpu.memory_space<vmem>>, vector<128x1xf32>
    %c0_3 = arith.constant 0 : index
    %c0_4 = arith.constant 0 : index
    %c0_5 = arith.constant 0 : index
    %2 = vector.load %arg1[%c0_3, %c0_4, %c0_5] : memref<8x32x8xf32, #tpu.memory_space<vmem>>, vector<1x32x8xf32>
    %3 = vector.shape_cast %2 : vector<1x32x8xf32> to vector<32x8xf32>
    %cst = arith.constant dense<0.000000e+00> : vector<128x8xf32>
    %4 = tpu.matmul %0, %3, %cst {dimension_numbers = #tpu.dot_dimension_numbers<[1], [0], [0], [1], [0, 0, 1, 1], [], []>} : vector<128x32xf32>, vector<32x8xf32>, vector<128x8xf32> -> vector<128x8xf32>
    %5 = vector.broadcast %1 : vector<128x1xf32> to vector<128x8xf32>
    %6 = arith.addf %4, %5 : vector<128x8xf32>
    %c0_6 = arith.constant 0 : index
    %c0_7 = arith.constant 0 : index
    %c0_8 = arith.constant 0 : index
    %7 = vector.load %arg8[%c0_6, %c0_7, %c0_8] : memref<9x128x8xf32, #tpu.memory_space<vmem>>, vector<1x128x8xf32>
    %8 = vector.shape_cast %7 : vector<1x128x8xf32> to vector<128x8xf32>
    %9 = vector.shape_cast %6 : vector<128x8xf32> to vector<1x128x8xf32>
    tpu.vector_store %arg8[%c0_6, %c0_7, %c0_8], %9 {strides = array<i32>} : memref<9x128x8xf32, #tpu.memory_space<vmem>>, vector<1x128x8xf32>,
    %c1 = arith.constant 1 : index
    %c0_9 = arith.constant 0 : index
    %c0_10 = arith.constant 0 : index
    %10 = vector.load %arg1[%c1, %c0_9, %c0_10] : memref<8x32x8xf32, #tpu.memory_space<vmem>>, vector<1x32x8xf32>
    %11 = vector.shape_cast %10 : vector<1x32x8xf32> to vector<32x8xf32>
    %cst_11 = arith.constant dense<0.000000e+00> : vector<128x8xf32>
    %12 = tpu.matmul %0, %11, %cst_11 {dimension_numbers = #tpu.dot_dimension_numbers<[1], [0], [0], [1], [0, 0, 1, 1], [], []>} : vector<128x32xf32>, vector<32x8xf32>, vector<128x8xf32> -> vector<128x8xf32>
    %13 = vector.broadcast %1 : vector<128x1xf32> to vector<128x8xf32>
    %14 = arith.addf %12, %13 : vector<128x8xf32>
    %c1_12 = arith.constant 1 : index
    %c0_13 = arith.constant 0 : index
    %c0_14 = arith.constant 0 : index
    %15 = vector.load %arg8[%c1_12, %c0_13, %c0_14] : memref<9x128x8xf32, #tpu.memory_space<vmem>>, vector<1x128x8xf32>
    %16 = vector.shape_cast %15 : vector<1x128x8xf32> to vector<128x8xf32>
    %17 = vector.shape_cast %14 : vector<128x8xf32> to vector<1x128x8xf32>
    tpu.vector_store %arg8[%c1_12, %c0_13, %c0_14], %17 {strides = array<i32>} : memref<9x128x8xf32, #tpu.memory_space<vmem>>, vector<1x128x8xf32>,
    %c2 = arith.constant 2 : index
    %c0_15 = arith.constant 0 : index
    %c0_16 = arith.constant 0 : index
    %18 = vector.load %arg1[%c2, %c0_15, %c0_16] : memref<8x32x8xf32, #tpu.memory_space<vmem>>, vector<1x32x8xf32>
    %19 = vector.shape_cast %18 : vector<1x32x8xf32> to vector<32x8xf32>
    %cst_17 = arith.constant dense<0.000000e+00> : vector<128x8xf32>
    %20 = tpu.matmul %0, %19, %cst_17 {dimension_numbers = #tpu.dot_dimension_numbers<[1], [0], [0], [1], [0, 0, 1, 1], [], []>} : vector<128x32xf32>, vector<32x8xf32>, vector<128x8xf32> -> vector<128x8xf32>
    %21 = vector.broadcast %1 : vector<128x1xf32> to vector<128x8xf32>
    %22 = arith.addf %20, %21 : vector<128x8xf32>
    %c2_18 = arith.constant 2 : index
    %c0_19 = arith.constant 0 : index
    %c0_20 = arith.constant 0 : index
    %23 = vector.load %arg8[%c2_18, %c0_19, %c0_20] : memref<9x128x8xf32, #tpu.memory_space<vmem>>, vector<1x128x8xf32>
    %24 = vector.shape_cast %23 : vector<1x128x8xf32> to vector<128x8xf32>
    %25 = vector.shape_cast %22 : vector<128x8xf32> to vector<1x128x8xf32>
    tpu.vector_store %arg8[%c2_18, %c0_19, %c0_20], %25 {strides = array<i32>} : memref<9x128x8xf32, #tpu.memory_space<vmem>>, vector<1x128x8xf32>,
    %c3 = arith.constant 3 : index
    %c0_21 = arith.constant 0 : index
    %c0_22 = arith.constant 0 : index
    %26 = vector.load %arg1[%c3, %c0_21, %c0_22] : memref<8x32x8xf32, #tpu.memory_space<vmem>>, vector<1x32x8xf32>
    %27 = vector.shape_cast %26 : vector<1x32x8xf32> to vector<32x8xf32>
    %cst_23 = arith.constant dense<0.000000e+00> : vector<128x8xf32>
    %28 = tpu.matmul %0, %27, %cst_23 {dimension_numbers = #tpu.dot_dimension_numbers<[1], [0], [0], [1], [0, 0, 1, 1], [], []>} : vector<128x32xf32>, vector<32x8xf32>, vector<128x8xf32> -> vector<128x8xf32>
    %29 = vector.broadcast %1 : vector<128x1xf32> to vector<128x8xf32>
    %30 = arith.addf %28, %29 : vector<128x8xf32>
    %c3_24 = arith.constant 3 : index
    %c0_25 = arith.constant 0 : index
    %c0_26 = arith.constant 0 : index
    %31 = vector.load %arg8[%c3_24, %c0_25, %c0_26] : memref<9x128x8xf32, #tpu.memory_space<vmem>>, vector<1x128x8xf32>
    %32 = vector.shape_cast %31 : vector<1x128x8xf32> to vector<128x8xf32>
    %33 = vector.shape_cast %30 : vector<128x8xf32> to vector<1x128x8xf32>
    tpu.vector_store %arg8[%c3_24, %c0_25, %c0_26], %33 {strides = array<i32>} : memref<9x128x8xf32, #tpu.memory_space<vmem>>, vector<1x128x8xf32>,
    %c4 = arith.constant 4 : index
    %c0_27 = arith.constant 0 : index
    %c0_28 = arith.constant 0 : index
    %34 = vector.load %arg1[%c4, %c0_27, %c0_28] : memref<8x32x8xf32, #tpu.memory_space<vmem>>, vector<1x32x8xf32>
    %35 = vector.shape_cast %34 : vector<1x32x8xf32> to vector<32x8xf32>
    %cst_29 = arith.constant dense<0.000000e+00> : vector<128x8xf32>
    %36 = tpu.matmul %0, %35, %cst_29 {dimension_numbers = #tpu.dot_dimension_numbers<[1], [0], [0], [1], [0, 0, 1, 1], [], []>} : vector<128x32xf32>, vector<32x8xf32>, vector<128x8xf32> -> vector<128x8xf32>
    %37 = vector.broadcast %1 : vector<128x1xf32> to vector<128x8xf32>
    %38 = arith.addf %36, %37 : vector<128x8xf32>
    %c4_30 = arith.constant 4 : index
    %c0_31 = arith.constant 0 : index
    %c0_32 = arith.constant 0 : index
    %39 = vector.load %arg8[%c4_30, %c0_31, %c0_32] : memref<9x128x8xf32, #tpu.memory_space<vmem>>, vector<1x128x8xf32>
    %40 = vector.shape_cast %39 : vector<1x128x8xf32> to vector<128x8xf32>
    %41 = vector.shape_cast %38 : vector<128x8xf32> to vector<1x128x8xf32>
    tpu.vector_store %arg8[%c4_30, %c0_31, %c0_32], %41 {strides = array<i32>} : memref<9x128x8xf32, #tpu.memory_space<vmem>>, vector<1x128x8xf32>,
    %c5 = arith.constant 5 : index
    %c0_33 = arith.constant 0 : index
    %c0_34 = arith.constant 0 : index
    %42 = vector.load %arg1[%c5, %c0_33, %c0_34] : memref<8x32x8xf32, #tpu.memory_space<vmem>>, vector<1x32x8xf32>
    %43 = vector.shape_cast %42 : vector<1x32x8xf32> to vector<32x8xf32>
    %cst_35 = arith.constant dense<0.000000e+00> : vector<128x8xf32>
    %44 = tpu.matmul %0, %43, %cst_35 {dimension_numbers = #tpu.dot_dimension_numbers<[1], [0], [0], [1], [0, 0, 1, 1], [], []>} : vector<128x32xf32>, vector<32x8xf32>, vector<128x8xf32> -> vector<128x8xf32>
    %45 = vector.broadcast %1 : vector<128x1xf32> to vector<128x8xf32>
    %46 = arith.addf %44, %45 : vector<128x8xf32>
    %c5_36 = arith.constant 5 : index
    %c0_37 = arith.constant 0 : index
    %c0_38 = arith.constant 0 : index
    %47 = vector.load %arg8[%c5_36, %c0_37, %c0_38] : memref<9x128x8xf32, #tpu.memory_space<vmem>>, vector<1x128x8xf32>
    %48 = vector.shape_cast %47 : vector<1x128x8xf32> to vector<128x8xf32>
    %49 = vector.shape_cast %46 : vector<128x8xf32> to vector<1x128x8xf32>
    tpu.vector_store %arg8[%c5_36, %c0_37, %c0_38], %49 {strides = array<i32>} : memref<9x128x8xf32, #tpu.memory_space<vmem>>, vector<1x128x8xf32>,
    %c6 = arith.constant 6 : index
    %c0_39 = arith.constant 0 : index
    %c0_40 = arith.constant 0 : index
    %50 = vector.load %arg1[%c6, %c0_39, %c0_40] : memref<8x32x8xf32, #tpu.memory_space<vmem>>, vector<1x32x8xf32>
    %51 = vector.shape_cast %50 : vector<1x32x8xf32> to vector<32x8xf32>
    %cst_41 = arith.constant dense<0.000000e+00> : vector<128x8xf32>
    %52 = tpu.matmul %0, %51, %cst_41 {dimension_numbers = #tpu.dot_dimension_numbers<[1], [0], [0], [1], [0, 0, 1, 1], [], []>} : vector<128x32xf32>, vector<32x8xf32>, vector<128x8xf32> -> vector<128x8xf32>
    %53 = vector.broadcast %1 : vector<128x1xf32> to vector<128x8xf32>
    %54 = arith.addf %52, %53 : vector<128x8xf32>
    %c6_42 = arith.constant 6 : index
    %c0_43 = arith.constant 0 : index
    %c0_44 = arith.constant 0 : index
    %55 = vector.load %arg8[%c6_42, %c0_43, %c0_44] : memref<9x128x8xf32, #tpu.memory_space<vmem>>, vector<1x128x8xf32>
    %56 = vector.shape_cast %55 : vector<1x128x8xf32> to vector<128x8xf32>
    %57 = vector.shape_cast %54 : vector<128x8xf32> to vector<1x128x8xf32>
    tpu.vector_store %arg8[%c6_42, %c0_43, %c0_44], %57 {strides = array<i32>} : memref<9x128x8xf32, #tpu.memory_space<vmem>>, vector<1x128x8xf32>,
    %c7 = arith.constant 7 : index
    %c0_45 = arith.constant 0 : index
    %c0_46 = arith.constant 0 : index
    %58 = vector.load %arg1[%c7, %c0_45, %c0_46] : memref<8x32x8xf32, #tpu.memory_space<vmem>>, vector<1x32x8xf32>
    %59 = vector.shape_cast %58 : vector<1x32x8xf32> to vector<32x8xf32>
    %cst_47 = arith.constant dense<0.000000e+00> : vector<128x8xf32>
    %60 = tpu.matmul %0, %59, %cst_47 {dimension_numbers = #tpu.dot_dimension_numbers<[1], [0], [0], [1], [0, 0, 1, 1], [], []>} : vector<128x32xf32>, vector<32x8xf32>, vector<128x8xf32> -> vector<128x8xf32>
    %61 = vector.broadcast %1 : vector<128x1xf32> to vector<128x8xf32>
    %62 = arith.addf %60, %61 : vector<128x8xf32>
    %c7_48 = arith.constant 7 : index
    %c0_49 = arith.constant 0 : index
    %c0_50 = arith.constant 0 : index
    %63 = vector.load %arg8[%c7_48, %c0_49, %c0_50] : memref<9x128x8xf32, #tpu.memory_space<vmem>>, vector<1x128x8xf32>
    %64 = vector.shape_cast %63 : vector<1x128x8xf32> to vector<128x8xf32>
    %65 = vector.shape_cast %62 : vector<128x8xf32> to vector<1x128x8xf32>
    tpu.vector_store %arg8[%c7_48, %c0_49, %c0_50], %65 {strides = array<i32>} : memref<9x128x8xf32, #tpu.memory_space<vmem>>, vector<1x128x8xf32>,
    %c0_51 = arith.constant 0 : index
    %c0_52 = arith.constant 0 : index
    %66 = vector.load %arg2[%c0_51, %c0_52] : memref<32x8xf32, #tpu.memory_space<vmem>>, vector<32x8xf32>
    %cst_53 = arith.constant dense<0.000000e+00> : vector<128x8xf32>
    %67 = tpu.matmul %0, %66, %cst_53 {dimension_numbers = #tpu.dot_dimension_numbers<[1], [0], [0], [1], [0, 0, 1, 1], [], []>} : vector<128x32xf32>, vector<32x8xf32>, vector<128x8xf32> -> vector<128x8xf32>
    %68 = vector.broadcast %1 : vector<128x1xf32> to vector<128x8xf32>
    %69 = arith.addf %67, %68 : vector<128x8xf32>
    %c8 = arith.constant 8 : index
    %c0_54 = arith.constant 0 : index
    %c0_55 = arith.constant 0 : index
    %70 = vector.load %arg8[%c8, %c0_54, %c0_55] : memref<9x128x8xf32, #tpu.memory_space<vmem>>, vector<1x128x8xf32>
    %71 = vector.shape_cast %70 : vector<1x128x8xf32> to vector<128x8xf32>
    %72 = vector.shape_cast %69 : vector<128x8xf32> to vector<1x128x8xf32>
    tpu.vector_store %arg8[%c8, %c0_54, %c0_55], %72 {strides = array<i32>} : memref<9x128x8xf32, #tpu.memory_space<vmem>>, vector<1x128x8xf32>,
    %c0_56 = arith.constant 0 : index
    %c0_57 = arith.constant 0 : index
    %c0_58 = arith.constant 0 : index
    %73 = vector.load %arg8[%c0_56, %c0_57, %c0_58] : memref<9x128x8xf32, #tpu.memory_space<vmem>>, vector<9x8x8xf32>
    %c0_59 = arith.constant 0 : index
    %c32 = arith.constant 32 : index
    %c0_60 = arith.constant 0 : index
    %74 = vector.load %arg8[%c0_59, %c32, %c0_60] : memref<9x128x8xf32, #tpu.memory_space<vmem>>, vector<9x8x8xf32>
    %c0_61 = arith.constant 0 : index
    %c64 = arith.constant 64 : index
    %c0_62 = arith.constant 0 : index
    %75 = vector.load %arg8[%c0_61, %c64, %c0_62] : memref<9x128x8xf32, #tpu.memory_space<vmem>>, vector<9x16x8xf32>
    %76 = vector.extract_strided_slice %73 {offsets = [0, 0, 0], sizes = [9, 1, 8], strides = [1, 1, 1]} : vector<9x8x8xf32> to vector<9x1x8xf32>
    %77 = vector.shape_cast %76 : vector<9x1x8xf32> to vector<9x8xf32>
    %78 = vector.shape_cast %77 : vector<9x8xf32> to vector<9x1x8xf32>
    %79 = vector.extract_strided_slice %74 {offsets = [0, 0, 0], sizes = [9, 1, 8], strides = [1, 1, 1]} : vector<9x8x8xf32> to vector<9x1x8xf32>
    %80 = vector.shape_cast %79 : vector<9x1x8xf32> to vector<9x8xf32>
    %81 = vector.shape_cast %80 : vector<9x8xf32> to vector<1x9x8xf32>
    %82 = vector.broadcast %78 : vector<9x1x8xf32> to vector<9x9x8xf32>
    %83 = vector.broadcast %81 : vector<1x9x8xf32> to vector<9x9x8xf32>
    %84 = arith.mulf %82, %83 : vector<9x9x8xf32>
    %85 = vector.extract_strided_slice %73 {offsets = [0, 1, 0], sizes = [9, 1, 8], strides = [1, 1, 1]} : vector<9x8x8xf32> to vector<9x1x8xf32>
    %86 = vector.shape_cast %85 : vector<9x1x8xf32> to vector<9x8xf32>
    %87 = vector.shape_cast %86 : vector<9x8xf32> to vector<9x1x8xf32>
    %88 = vector.extract_strided_slice %74 {offsets = [0, 1, 0], sizes = [9, 1, 8], strides = [1, 1, 1]} : vector<9x8x8xf32> to vector<9x1x8xf32>
    %89 = vector.shape_cast %88 : vector<9x1x8xf32> to vector<9x8xf32>
    %90 = vector.shape_cast %89 : vector<9x8xf32> to vector<1x9x8xf32>
    %91 = vector.broadcast %87 : vector<9x1x8xf32> to vector<9x9x8xf32>
    %92 = vector.broadcast %90 : vector<1x9x8xf32> to vector<9x9x8xf32>
    %93 = arith.mulf %91, %92 : vector<9x9x8xf32>
    %94 = arith.addf %84, %93 : vector<9x9x8xf32>
    %95 = vector.extract_strided_slice %73 {offsets = [0, 2, 0], sizes = [9, 1, 8], strides = [1, 1, 1]} : vector<9x8x8xf32> to vector<9x1x8xf32>
    %96 = vector.shape_cast %95 : vector<9x1x8xf32> to vector<9x8xf32>
    %97 = vector.shape_cast %96 : vector<9x8xf32> to vector<9x1x8xf32>
    %98 = vector.extract_strided_slice %74 {offsets = [0, 2, 0], sizes = [9, 1, 8], strides = [1, 1, 1]} : vector<9x8x8xf32> to vector<9x1x8xf32>
    %99 = vector.shape_cast %98 : vector<9x1x8xf32> to vector<9x8xf32>
    %100 = vector.shape_cast %99 : vector<9x8xf32> to vector<1x9x8xf32>
    %101 = vector.broadcast %97 : vector<9x1x8xf32> to vector<9x9x8xf32>
    %102 = vector.broadcast %100 : vector<1x9x8xf32> to vector<9x9x8xf32>
    %103 = arith.mulf %101, %102 : vector<9x9x8xf32>
    %104 = arith.addf %94, %103 : vector<9x9x8xf32>
    %105 = vector.extract_strided_slice %73 {offsets = [0, 3, 0], sizes = [9, 1, 8], strides = [1, 1, 1]} : vector<9x8x8xf32> to vector<9x1x8xf32>
    %106 = vector.shape_cast %105 : vector<9x1x8xf32> to vector<9x8xf32>
    %107 = vector.shape_cast %106 : vector<9x8xf32> to vector<9x1x8xf32>
    %108 = vector.extract_strided_slice %74 {offsets = [0, 3, 0], sizes = [9, 1, 8], strides = [1, 1, 1]} : vector<9x8x8xf32> to vector<9x1x8xf32>
    %109 = vector.shape_cast %108 : vector<9x1x8xf32> to vector<9x8xf32>
    %110 = vector.shape_cast %109 : vector<9x8xf32> to vector<1x9x8xf32>
    %111 = vector.broadcast %107 : vector<9x1x8xf32> to vector<9x9x8xf32>
    %112 = vector.broadcast %110 : vector<1x9x8xf32> to vector<9x9x8xf32>
    %113 = arith.mulf %111, %112 : vector<9x9x8xf32>
    %114 = arith.addf %104, %113 : vector<9x9x8xf32>
    %115 = vector.extract_strided_slice %73 {offsets = [0, 4, 0], sizes = [9, 1, 8], strides = [1, 1, 1]} : vector<9x8x8xf32> to vector<9x1x8xf32>
    %116 = vector.shape_cast %115 : vector<9x1x8xf32> to vector<9x8xf32>
    %117 = vector.shape_cast %116 : vector<9x8xf32> to vector<9x1x8xf32>
    %118 = vector.extract_strided_slice %74 {offsets = [0, 4, 0], sizes = [9, 1, 8], strides = [1, 1, 1]} : vector<9x8x8xf32> to vector<9x1x8xf32>
    %119 = vector.shape_cast %118 : vector<9x1x8xf32> to vector<9x8xf32>
    %120 = vector.shape_cast %119 : vector<9x8xf32> to vector<1x9x8xf32>
    %121 = vector.broadcast %117 : vector<9x1x8xf32> to vector<9x9x8xf32>
    %122 = vector.broadcast %120 : vector<1x9x8xf32> to vector<9x9x8xf32>
    %123 = arith.mulf %121, %122 : vector<9x9x8xf32>
    %124 = arith.addf %114, %123 : vector<9x9x8xf32>
    %125 = vector.extract_strided_slice %73 {offsets = [0, 5, 0], sizes = [9, 1, 8], strides = [1, 1, 1]} : vector<9x8x8xf32> to vector<9x1x8xf32>
    %126 = vector.shape_cast %125 : vector<9x1x8xf32> to vector<9x8xf32>
    %127 = vector.shape_cast %126 : vector<9x8xf32> to vector<9x1x8xf32>
    %128 = vector.extract_strided_slice %74 {offsets = [0, 5, 0], sizes = [9, 1, 8], strides = [1, 1, 1]} : vector<9x8x8xf32> to vector<9x1x8xf32>
    %129 = vector.shape_cast %128 : vector<9x1x8xf32> to vector<9x8xf32>
    %130 = vector.shape_cast %129 : vector<9x8xf32> to vector<1x9x8xf32>
    %131 = vector.broadcast %127 : vector<9x1x8xf32> to vector<9x9x8xf32>
    %132 = vector.broadcast %130 : vector<1x9x8xf32> to vector<9x9x8xf32>
    %133 = arith.mulf %131, %132 : vector<9x9x8xf32>
    %134 = arith.addf %124, %133 : vector<9x9x8xf32>
    %135 = vector.extract_strided_slice %73 {offsets = [0, 6, 0], sizes = [9, 1, 8], strides = [1, 1, 1]} : vector<9x8x8xf32> to vector<9x1x8xf32>
    %136 = vector.shape_cast %135 : vector<9x1x8xf32> to vector<9x8xf32>
    %137 = vector.shape_cast %136 : vector<9x8xf32> to vector<9x1x8xf32>
    %138 = vector.extract_strided_slice %74 {offsets = [0, 6, 0], sizes = [9, 1, 8], strides = [1, 1, 1]} : vector<9x8x8xf32> to vector<9x1x8xf32>
    %139 = vector.shape_cast %138 : vector<9x1x8xf32> to vector<9x8xf32>
    %140 = vector.shape_cast %139 : vector<9x8xf32> to vector<1x9x8xf32>
    %141 = vector.broadcast %137 : vector<9x1x8xf32> to vector<9x9x8xf32>
    %142 = vector.broadcast %140 : vector<1x9x8xf32> to vector<9x9x8xf32>
    %143 = arith.mulf %141, %142 : vector<9x9x8xf32>
    %144 = arith.addf %134, %143 : vector<9x9x8xf32>
    %145 = vector.extract_strided_slice %73 {offsets = [0, 7, 0], sizes = [9, 1, 8], strides = [1, 1, 1]} : vector<9x8x8xf32> to vector<9x1x8xf32>
    %146 = vector.shape_cast %145 : vector<9x1x8xf32> to vector<9x8xf32>
    %147 = vector.shape_cast %146 : vector<9x8xf32> to vector<9x1x8xf32>
    %148 = vector.extract_strided_slice %74 {offsets = [0, 7, 0], sizes = [9, 1, 8], strides = [1, 1, 1]} : vector<9x8x8xf32> to vector<9x1x8xf32>
    %149 = vector.shape_cast %148 : vector<9x1x8xf32> to vector<9x8xf32>
    %150 = vector.shape_cast %149 : vector<9x8xf32> to vector<1x9x8xf32>
    %151 = vector.broadcast %147 : vector<9x1x8xf32> to vector<9x9x8xf32>
    %152 = vector.broadcast %150 : vector<1x9x8xf32> to vector<9x9x8xf32>
    %153 = arith.mulf %151, %152 : vector<9x9x8xf32>
    %154 = arith.addf %144, %153 : vector<9x9x8xf32>
    %cst_63 = arith.constant 0.353553385 : f32
    %155 = vector.broadcast %cst_63 : f32 to vector<9x9x8xf32>
    %156 = arith.mulf %154, %155 : vector<9x9x8xf32>
    %157 = vector.extract_strided_slice %156 {offsets = [0, 0, 0], sizes = [9, 1, 8], strides = [1, 1, 1]} : vector<9x9x8xf32> to vector<9x1x8xf32>
    %158 = vector.shape_cast %157 : vector<9x1x8xf32> to vector<9x8xf32>
    %159 = vector.extract_strided_slice %156 {offsets = [0, 1, 0], sizes = [9, 1, 8], strides = [1, 1, 1]} : vector<9x9x8xf32> to vector<9x1x8xf32>
    %160 = vector.shape_cast %159 : vector<9x1x8xf32> to vector<9x8xf32>
    %161 = arith.maximumf %158, %160 : vector<9x8xf32>
    %162 = vector.extract_strided_slice %156 {offsets = [0, 2, 0], sizes = [9, 1, 8], strides = [1, 1, 1]} : vector<9x9x8xf32> to vector<9x1x8xf32>
    %163 = vector.shape_cast %162 : vector<9x1x8xf32> to vector<9x8xf32>
    %164 = arith.maximumf %161, %163 : vector<9x8xf32>
    %165 = vector.extract_strided_slice %156 {offsets = [0, 3, 0], sizes = [9, 1, 8], strides = [1, 1, 1]} : vector<9x9x8xf32> to vector<9x1x8xf32>
    %166 = vector.shape_cast %165 : vector<9x1x8xf32> to vector<9x8xf32>
    %167 = arith.maximumf %164, %166 : vector<9x8xf32>
    %168 = vector.extract_strided_slice %156 {offsets = [0, 4, 0], sizes = [9, 1, 8], strides = [1, 1, 1]} : vector<9x9x8xf32> to vector<9x1x8xf32>
    %169 = vector.shape_cast %168 : vector<9x1x8xf32> to vector<9x8xf32>
    %170 = arith.maximumf %167, %169 : vector<9x8xf32>
    %171 = vector.extract_strided_slice %156 {offsets = [0, 5, 0], sizes = [9, 1, 8], strides = [1, 1, 1]} : vector<9x9x8xf32> to vector<9x1x8xf32>
    %172 = vector.shape_cast %171 : vector<9x1x8xf32> to vector<9x8xf32>
    %173 = arith.maximumf %170, %172 : vector<9x8xf32>
    %174 = vector.extract_strided_slice %156 {offsets = [0, 6, 0], sizes = [9, 1, 8], strides = [1, 1, 1]} : vector<9x9x8xf32> to vector<9x1x8xf32>
    %175 = vector.shape_cast %174 : vector<9x1x8xf32> to vector<9x8xf32>
    %176 = arith.maximumf %173, %175 : vector<9x8xf32>
    %177 = vector.extract_strided_slice %156 {offsets = [0, 7, 0], sizes = [9, 1, 8], strides = [1, 1, 1]} : vector<9x9x8xf32> to vector<9x1x8xf32>
    %178 = vector.shape_cast %177 : vector<9x1x8xf32> to vector<9x8xf32>
    %179 = arith.maximumf %176, %178 : vector<9x8xf32>
    %180 = vector.extract_strided_slice %156 {offsets = [0, 8, 0], sizes = [9, 1, 8], strides = [1, 1, 1]} : vector<9x9x8xf32> to vector<9x1x8xf32>
    %181 = vector.shape_cast %180 : vector<9x1x8xf32> to vector<9x8xf32>
    %182 = arith.maximumf %179, %181 : vector<9x8xf32>
    %183 = vector.shape_cast %182 : vector<9x8xf32> to vector<9x1x8xf32>
    %184 = vector.broadcast %183 : vector<9x1x8xf32> to vector<9x9x8xf32>
    %185 = arith.subf %156, %184 : vector<9x9x8xf32>
    %186 = math.exp %185 : vector<9x9x8xf32>
    %187 = vector.extract_strided_slice %186 {offsets = [0, 0, 0], sizes = [9, 1, 8], strides = [1, 1, 1]} : vector<9x9x8xf32> to vector<9x1x8xf32>
    %188 = vector.shape_cast %187 : vector<9x1x8xf32> to vector<9x8xf32>
    %189 = vector.extract_strided_slice %186 {offsets = [0, 1, 0], sizes = [9, 1, 8], strides = [1, 1, 1]} : vector<9x9x8xf32> to vector<9x1x8xf32>
    %190 = vector.shape_cast %189 : vector<9x1x8xf32> to vector<9x8xf32>
    %191 = arith.addf %188, %190 : vector<9x8xf32>
    %192 = vector.extract_strided_slice %186 {offsets = [0, 2, 0], sizes = [9, 1, 8], strides = [1, 1, 1]} : vector<9x9x8xf32> to vector<9x1x8xf32>
    %193 = vector.shape_cast %192 : vector<9x1x8xf32> to vector<9x8xf32>
    %194 = arith.addf %191, %193 : vector<9x8xf32>
    %195 = vector.extract_strided_slice %186 {offsets = [0, 3, 0], sizes = [9, 1, 8], strides = [1, 1, 1]} : vector<9x9x8xf32> to vector<9x1x8xf32>
    %196 = vector.shape_cast %195 : vector<9x1x8xf32> to vector<9x8xf32>
    %197 = arith.addf %194, %196 : vector<9x8xf32>
    %198 = vector.extract_strided_slice %186 {offsets = [0, 4, 0], sizes = [9, 1, 8], strides = [1, 1, 1]} : vector<9x9x8xf32> to vector<9x1x8xf32>
    %199 = vector.shape_cast %198 : vector<9x1x8xf32> to vector<9x8xf32>
    %200 = arith.addf %197, %199 : vector<9x8xf32>
    %201 = vector.extract_strided_slice %186 {offsets = [0, 5, 0], sizes = [9, 1, 8], strides = [1, 1, 1]} : vector<9x9x8xf32> to vector<9x1x8xf32>
    %202 = vector.shape_cast %201 : vector<9x1x8xf32> to vector<9x8xf32>
    %203 = arith.addf %200, %202 : vector<9x8xf32>
    %204 = vector.extract_strided_slice %186 {offsets = [0, 6, 0], sizes = [9, 1, 8], strides = [1, 1, 1]} : vector<9x9x8xf32> to vector<9x1x8xf32>
    %205 = vector.shape_cast %204 : vector<9x1x8xf32> to vector<9x8xf32>
    %206 = arith.addf %203, %205 : vector<9x8xf32>
    %207 = vector.extract_strided_slice %186 {offsets = [0, 7, 0], sizes = [9, 1, 8], strides = [1, 1, 1]} : vector<9x9x8xf32> to vector<9x1x8xf32>
    %208 = vector.shape_cast %207 : vector<9x1x8xf32> to vector<9x8xf32>
    %209 = arith.addf %206, %208 : vector<9x8xf32>
    %210 = vector.extract_strided_slice %186 {offsets = [0, 8, 0], sizes = [9, 1, 8], strides = [1, 1, 1]} : vector<9x9x8xf32> to vector<9x1x8xf32>
    %211 = vector.shape_cast %210 : vector<9x1x8xf32> to vector<9x8xf32>
    %212 = arith.addf %209, %211 : vector<9x8xf32>
    %213 = tpu.reciprocal %212 {approx = true} : vector<9x8xf32> -> vector<9x8xf32>
    %214 = vector.extract_strided_slice %186 {offsets = [0, 0, 0], sizes = [9, 1, 8], strides = [1, 1, 1]} : vector<9x9x8xf32> to vector<9x1x8xf32>
    %215 = vector.shape_cast %214 : vector<9x1x8xf32> to vector<9x8xf32>
    %216 = arith.mulf %215, %213 : vector<9x8xf32>
    %217 = vector.shape_cast %216 : vector<9x8xf32> to vector<9x1x8xf32>
    %218 = vector.extract_strided_slice %75 {offsets = [0, 0, 0], sizes = [1, 16, 8], strides = [1, 1, 1]} : vector<9x16x8xf32> to vector<1x16x8xf32>
    %219 = vector.shape_cast %218 : vector<1x16x8xf32> to vector<16x8xf32>
    %220 = vector.shape_cast %219 : vector<16x8xf32> to vector<1x16x8xf32>
    %221 = vector.broadcast %217 : vector<9x1x8xf32> to vector<9x16x8xf32>
    %222 = vector.broadcast %220 : vector<1x16x8xf32> to vector<9x16x8xf32>
    %223 = arith.mulf %221, %222 : vector<9x16x8xf32>
    %224 = vector.extract_strided_slice %186 {offsets = [0, 1, 0], sizes = [9, 1, 8], strides = [1, 1, 1]} : vector<9x9x8xf32> to vector<9x1x8xf32>
    %225 = vector.shape_cast %224 : vector<9x1x8xf32> to vector<9x8xf32>
    %226 = arith.mulf %225, %213 : vector<9x8xf32>
    %227 = vector.shape_cast %226 : vector<9x8xf32> to vector<9x1x8xf32>
    %228 = vector.extract_strided_slice %75 {offsets = [1, 0, 0], sizes = [1, 16, 8], strides = [1, 1, 1]} : vector<9x16x8xf32> to vector<1x16x8xf32>
    %229 = vector.shape_cast %228 : vector<1x16x8xf32> to vector<16x8xf32>
    %230 = vector.shape_cast %229 : vector<16x8xf32> to vector<1x16x8xf32>
    %231 = vector.broadcast %227 : vector<9x1x8xf32> to vector<9x16x8xf32>
    %232 = vector.broadcast %230 : vector<1x16x8xf32> to vector<9x16x8xf32>
    %233 = arith.mulf %231, %232 : vector<9x16x8xf32>
    %234 = arith.addf %223, %233 : vector<9x16x8xf32>
    %235 = vector.extract_strided_slice %186 {offsets = [0, 2, 0], sizes = [9, 1, 8], strides = [1, 1, 1]} : vector<9x9x8xf32> to vector<9x1x8xf32>
    %236 = vector.shape_cast %235 : vector<9x1x8xf32> to vector<9x8xf32>
    %237 = arith.mulf %236, %213 : vector<9x8xf32>
    %238 = vector.shape_cast %237 : vector<9x8xf32> to vector<9x1x8xf32>
    %239 = vector.extract_strided_slice %75 {offsets = [2, 0, 0], sizes = [1, 16, 8], strides = [1, 1, 1]} : vector<9x16x8xf32> to vector<1x16x8xf32>
    %240 = vector.shape_cast %239 : vector<1x16x8xf32> to vector<16x8xf32>
    %241 = vector.shape_cast %240 : vector<16x8xf32> to vector<1x16x8xf32>
    %242 = vector.broadcast %238 : vector<9x1x8xf32> to vector<9x16x8xf32>
    %243 = vector.broadcast %241 : vector<1x16x8xf32> to vector<9x16x8xf32>
    %244 = arith.mulf %242, %243 : vector<9x16x8xf32>
    %245 = arith.addf %234, %244 : vector<9x16x8xf32>
    %246 = vector.extract_strided_slice %186 {offsets = [0, 3, 0], sizes = [9, 1, 8], strides = [1, 1, 1]} : vector<9x9x8xf32> to vector<9x1x8xf32>
    %247 = vector.shape_cast %246 : vector<9x1x8xf32> to vector<9x8xf32>
    %248 = arith.mulf %247, %213 : vector<9x8xf32>
    %249 = vector.shape_cast %248 : vector<9x8xf32> to vector<9x1x8xf32>
    %250 = vector.extract_strided_slice %75 {offsets = [3, 0, 0], sizes = [1, 16, 8], strides = [1, 1, 1]} : vector<9x16x8xf32> to vector<1x16x8xf32>
    %251 = vector.shape_cast %250 : vector<1x16x8xf32> to vector<16x8xf32>
    %252 = vector.shape_cast %251 : vector<16x8xf32> to vector<1x16x8xf32>
    %253 = vector.broadcast %249 : vector<9x1x8xf32> to vector<9x16x8xf32>
    %254 = vector.broadcast %252 : vector<1x16x8xf32> to vector<9x16x8xf32>
    %255 = arith.mulf %253, %254 : vector<9x16x8xf32>
    %256 = arith.addf %245, %255 : vector<9x16x8xf32>
    %257 = vector.extract_strided_slice %186 {offsets = [0, 4, 0], sizes = [9, 1, 8], strides = [1, 1, 1]} : vector<9x9x8xf32> to vector<9x1x8xf32>
    %258 = vector.shape_cast %257 : vector<9x1x8xf32> to vector<9x8xf32>
    %259 = arith.mulf %258, %213 : vector<9x8xf32>
    %260 = vector.shape_cast %259 : vector<9x8xf32> to vector<9x1x8xf32>
    %261 = vector.extract_strided_slice %75 {offsets = [4, 0, 0], sizes = [1, 16, 8], strides = [1, 1, 1]} : vector<9x16x8xf32> to vector<1x16x8xf32>
    %262 = vector.shape_cast %261 : vector<1x16x8xf32> to vector<16x8xf32>
    %263 = vector.shape_cast %262 : vector<16x8xf32> to vector<1x16x8xf32>
    %264 = vector.broadcast %260 : vector<9x1x8xf32> to vector<9x16x8xf32>
    %265 = vector.broadcast %263 : vector<1x16x8xf32> to vector<9x16x8xf32>
    %266 = arith.mulf %264, %265 : vector<9x16x8xf32>
    %267 = arith.addf %256, %266 : vector<9x16x8xf32>
    %268 = vector.extract_strided_slice %186 {offsets = [0, 5, 0], sizes = [9, 1, 8], strides = [1, 1, 1]} : vector<9x9x8xf32> to vector<9x1x8xf32>
    %269 = vector.shape_cast %268 : vector<9x1x8xf32> to vector<9x8xf32>
    %270 = arith.mulf %269, %213 : vector<9x8xf32>
    %271 = vector.shape_cast %270 : vector<9x8xf32> to vector<9x1x8xf32>
    %272 = vector.extract_strided_slice %75 {offsets = [5, 0, 0], sizes = [1, 16, 8], strides = [1, 1, 1]} : vector<9x16x8xf32> to vector<1x16x8xf32>
    %273 = vector.shape_cast %272 : vector<1x16x8xf32> to vector<16x8xf32>
    %274 = vector.shape_cast %273 : vector<16x8xf32> to vector<1x16x8xf32>
    %275 = vector.broadcast %271 : vector<9x1x8xf32> to vector<9x16x8xf32>
    %276 = vector.broadcast %274 : vector<1x16x8xf32> to vector<9x16x8xf32>
    %277 = arith.mulf %275, %276 : vector<9x16x8xf32>
    %278 = arith.addf %267, %277 : vector<9x16x8xf32>
    %279 = vector.extract_strided_slice %186 {offsets = [0, 6, 0], sizes = [9, 1, 8], strides = [1, 1, 1]} : vector<9x9x8xf32> to vector<9x1x8xf32>
    %280 = vector.shape_cast %279 : vector<9x1x8xf32> to vector<9x8xf32>
    %281 = arith.mulf %280, %213 : vector<9x8xf32>
    %282 = vector.shape_cast %281 : vector<9x8xf32> to vector<9x1x8xf32>
    %283 = vector.extract_strided_slice %75 {offsets = [6, 0, 0], sizes = [1, 16, 8], strides = [1, 1, 1]} : vector<9x16x8xf32> to vector<1x16x8xf32>
    %284 = vector.shape_cast %283 : vector<1x16x8xf32> to vector<16x8xf32>
    %285 = vector.shape_cast %284 : vector<16x8xf32> to vector<1x16x8xf32>
    %286 = vector.broadcast %282 : vector<9x1x8xf32> to vector<9x16x8xf32>
    %287 = vector.broadcast %285 : vector<1x16x8xf32> to vector<9x16x8xf32>
    %288 = arith.mulf %286, %287 : vector<9x16x8xf32>
    %289 = arith.addf %278, %288 : vector<9x16x8xf32>
    %290 = vector.extract_strided_slice %186 {offsets = [0, 7, 0], sizes = [9, 1, 8], strides = [1, 1, 1]} : vector<9x9x8xf32> to vector<9x1x8xf32>
    %291 = vector.shape_cast %290 : vector<9x1x8xf32> to vector<9x8xf32>
    %292 = arith.mulf %291, %213 : vector<9x8xf32>
    %293 = vector.shape_cast %292 : vector<9x8xf32> to vector<9x1x8xf32>
    %294 = vector.extract_strided_slice %75 {offsets = [7, 0, 0], sizes = [1, 16, 8], strides = [1, 1, 1]} : vector<9x16x8xf32> to vector<1x16x8xf32>
    %295 = vector.shape_cast %294 : vector<1x16x8xf32> to vector<16x8xf32>
    %296 = vector.shape_cast %295 : vector<16x8xf32> to vector<1x16x8xf32>
    %297 = vector.broadcast %293 : vector<9x1x8xf32> to vector<9x16x8xf32>
    %298 = vector.broadcast %296 : vector<1x16x8xf32> to vector<9x16x8xf32>
    %299 = arith.mulf %297, %298 : vector<9x16x8xf32>
    %300 = arith.addf %289, %299 : vector<9x16x8xf32>
    %301 = vector.extract_strided_slice %186 {offsets = [0, 8, 0], sizes = [9, 1, 8], strides = [1, 1, 1]} : vector<9x9x8xf32> to vector<9x1x8xf32>
    %302 = vector.shape_cast %301 : vector<9x1x8xf32> to vector<9x8xf32>
    %303 = arith.mulf %302, %213 : vector<9x8xf32>
    %304 = vector.shape_cast %303 : vector<9x8xf32> to vector<9x1x8xf32>
    %305 = vector.extract_strided_slice %75 {offsets = [8, 0, 0], sizes = [1, 16, 8], strides = [1, 1, 1]} : vector<9x16x8xf32> to vector<1x16x8xf32>
    %306 = vector.shape_cast %305 : vector<1x16x8xf32> to vector<16x8xf32>
    %307 = vector.shape_cast %306 : vector<16x8xf32> to vector<1x16x8xf32>
    %308 = vector.broadcast %304 : vector<9x1x8xf32> to vector<9x16x8xf32>
    %309 = vector.broadcast %307 : vector<1x16x8xf32> to vector<9x16x8xf32>
    %310 = arith.mulf %308, %309 : vector<9x16x8xf32>
    %311 = arith.addf %300, %310 : vector<9x16x8xf32>
    %c0_64 = arith.constant 0 : index
    %c8_65 = arith.constant 8 : index
    %c0_66 = arith.constant 0 : index
    %312 = vector.load %arg8[%c0_64, %c8_65, %c0_66] : memref<9x128x8xf32, #tpu.memory_space<vmem>>, vector<9x8x8xf32>
    %c0_67 = arith.constant 0 : index
    %c40 = arith.constant 40 : index
    %c0_68 = arith.constant 0 : index
    %313 = vector.load %arg8[%c0_67, %c40, %c0_68] : memref<9x128x8xf32, #tpu.memory_space<vmem>>, vector<9x8x8xf32>
    %c0_69 = arith.constant 0 : index
    %c80 = arith.constant 80 : index
    %c0_70 = arith.constant 0 : index
    %314 = vector.load %arg8[%c0_69, %c80, %c0_70] : memref<9x128x8xf32, #tpu.memory_space<vmem>>, vector<9x16x8xf32>
    %315 = vector.extract_strided_slice %312 {offsets = [0, 0, 0], sizes = [9, 1, 8], strides = [1, 1, 1]} : vector<9x8x8xf32> to vector<9x1x8xf32>
    %316 = vector.shape_cast %315 : vector<9x1x8xf32> to vector<9x8xf32>
    %317 = vector.shape_cast %316 : vector<9x8xf32> to vector<9x1x8xf32>
    %318 = vector.extract_strided_slice %313 {offsets = [0, 0, 0], sizes = [9, 1, 8], strides = [1, 1, 1]} : vector<9x8x8xf32> to vector<9x1x8xf32>
    %319 = vector.shape_cast %318 : vector<9x1x8xf32> to vector<9x8xf32>
    %320 = vector.shape_cast %319 : vector<9x8xf32> to vector<1x9x8xf32>
    %321 = vector.broadcast %317 : vector<9x1x8xf32> to vector<9x9x8xf32>
    %322 = vector.broadcast %320 : vector<1x9x8xf32> to vector<9x9x8xf32>
    %323 = arith.mulf %321, %322 : vector<9x9x8xf32>
    %324 = vector.extract_strided_slice %312 {offsets = [0, 1, 0], sizes = [9, 1, 8], strides = [1, 1, 1]} : vector<9x8x8xf32> to vector<9x1x8xf32>
    %325 = vector.shape_cast %324 : vector<9x1x8xf32> to vector<9x8xf32>
    %326 = vector.shape_cast %325 : vector<9x8xf32> to vector<9x1x8xf32>
    %327 = vector.extract_strided_slice %313 {offsets = [0, 1, 0], sizes = [9, 1, 8], strides = [1, 1, 1]} : vector<9x8x8xf32> to vector<9x1x8xf32>
    %328 = vector.shape_cast %327 : vector<9x1x8xf32> to vector<9x8xf32>
    %329 = vector.shape_cast %328 : vector<9x8xf32> to vector<1x9x8xf32>
    %330 = vector.broadcast %326 : vector<9x1x8xf32> to vector<9x9x8xf32>
    %331 = vector.broadcast %329 : vector<1x9x8xf32> to vector<9x9x8xf32>
    %332 = arith.mulf %330, %331 : vector<9x9x8xf32>
    %333 = arith.addf %323, %332 : vector<9x9x8xf32>
    %334 = vector.extract_strided_slice %312 {offsets = [0, 2, 0], sizes = [9, 1, 8], strides = [1, 1, 1]} : vector<9x8x8xf32> to vector<9x1x8xf32>
    %335 = vector.shape_cast %334 : vector<9x1x8xf32> to vector<9x8xf32>
    %336 = vector.shape_cast %335 : vector<9x8xf32> to vector<9x1x8xf32>
    %337 = vector.extract_strided_slice %313 {offsets = [0, 2, 0], sizes = [9, 1, 8], strides = [1, 1, 1]} : vector<9x8x8xf32> to vector<9x1x8xf32>
    %338 = vector.shape_cast %337 : vector<9x1x8xf32> to vector<9x8xf32>
    %339 = vector.shape_cast %338 : vector<9x8xf32> to vector<1x9x8xf32>
    %340 = vector.broadcast %336 : vector<9x1x8xf32> to vector<9x9x8xf32>
    %341 = vector.broadcast %339 : vector<1x9x8xf32> to vector<9x9x8xf32>
    %342 = arith.mulf %340, %341 : vector<9x9x8xf32>
    %343 = arith.addf %333, %342 : vector<9x9x8xf32>
    %344 = vector.extract_strided_slice %312 {offsets = [0, 3, 0], sizes = [9, 1, 8], strides = [1, 1, 1]} : vector<9x8x8xf32> to vector<9x1x8xf32>
    %345 = vector.shape_cast %344 : vector<9x1x8xf32> to vector<9x8xf32>
    %346 = vector.shape_cast %345 : vector<9x8xf32> to vector<9x1x8xf32>
    %347 = vector.extract_strided_slice %313 {offsets = [0, 3, 0], sizes = [9, 1, 8], strides = [1, 1, 1]} : vector<9x8x8xf32> to vector<9x1x8xf32>
    %348 = vector.shape_cast %347 : vector<9x1x8xf32> to vector<9x8xf32>
    %349 = vector.shape_cast %348 : vector<9x8xf32> to vector<1x9x8xf32>
    %350 = vector.broadcast %346 : vector<9x1x8xf32> to vector<9x9x8xf32>
    %351 = vector.broadcast %349 : vector<1x9x8xf32> to vector<9x9x8xf32>
    %352 = arith.mulf %350, %351 : vector<9x9x8xf32>
    %353 = arith.addf %343, %352 : vector<9x9x8xf32>
    %354 = vector.extract_strided_slice %312 {offsets = [0, 4, 0], sizes = [9, 1, 8], strides = [1, 1, 1]} : vector<9x8x8xf32> to vector<9x1x8xf32>
    %355 = vector.shape_cast %354 : vector<9x1x8xf32> to vector<9x8xf32>
    %356 = vector.shape_cast %355 : vector<9x8xf32> to vector<9x1x8xf32>
    %357 = vector.extract_strided_slice %313 {offsets = [0, 4, 0], sizes = [9, 1, 8], strides = [1, 1, 1]} : vector<9x8x8xf32> to vector<9x1x8xf32>
    %358 = vector.shape_cast %357 : vector<9x1x8xf32> to vector<9x8xf32>
    %359 = vector.shape_cast %358 : vector<9x8xf32> to vector<1x9x8xf32>
    %360 = vector.broadcast %356 : vector<9x1x8xf32> to vector<9x9x8xf32>
    %361 = vector.broadcast %359 : vector<1x9x8xf32> to vector<9x9x8xf32>
    %362 = arith.mulf %360, %361 : vector<9x9x8xf32>
    %363 = arith.addf %353, %362 : vector<9x9x8xf32>
    %364 = vector.extract_strided_slice %312 {offsets = [0, 5, 0], sizes = [9, 1, 8], strides = [1, 1, 1]} : vector<9x8x8xf32> to vector<9x1x8xf32>
    %365 = vector.shape_cast %364 : vector<9x1x8xf32> to vector<9x8xf32>
    %366 = vector.shape_cast %365 : vector<9x8xf32> to vector<9x1x8xf32>
    %367 = vector.extract_strided_slice %313 {offsets = [0, 5, 0], sizes = [9, 1, 8], strides = [1, 1, 1]} : vector<9x8x8xf32> to vector<9x1x8xf32>
    %368 = vector.shape_cast %367 : vector<9x1x8xf32> to vector<9x8xf32>
    %369 = vector.shape_cast %368 : vector<9x8xf32> to vector<1x9x8xf32>
    %370 = vector.broadcast %366 : vector<9x1x8xf32> to vector<9x9x8xf32>
    %371 = vector.broadcast %369 : vector<1x9x8xf32> to vector<9x9x8xf32>
    %372 = arith.mulf %370, %371 : vector<9x9x8xf32>
    %373 = arith.addf %363, %372 : vector<9x9x8xf32>
    %374 = vector.extract_strided_slice %312 {offsets = [0, 6, 0], sizes = [9, 1, 8], strides = [1, 1, 1]} : vector<9x8x8xf32> to vector<9x1x8xf32>
    %375 = vector.shape_cast %374 : vector<9x1x8xf32> to vector<9x8xf32>
    %376 = vector.shape_cast %375 : vector<9x8xf32> to vector<9x1x8xf32>
    %377 = vector.extract_strided_slice %313 {offsets = [0, 6, 0], sizes = [9, 1, 8], strides = [1, 1, 1]} : vector<9x8x8xf32> to vector<9x1x8xf32>
    %378 = vector.shape_cast %377 : vector<9x1x8xf32> to vector<9x8xf32>
    %379 = vector.shape_cast %378 : vector<9x8xf32> to vector<1x9x8xf32>
    %380 = vector.broadcast %376 : vector<9x1x8xf32> to vector<9x9x8xf32>
    %381 = vector.broadcast %379 : vector<1x9x8xf32> to vector<9x9x8xf32>
    %382 = arith.mulf %380, %381 : vector<9x9x8xf32>
    %383 = arith.addf %373, %382 : vector<9x9x8xf32>
    %384 = vector.extract_strided_slice %312 {offsets = [0, 7, 0], sizes = [9, 1, 8], strides = [1, 1, 1]} : vector<9x8x8xf32> to vector<9x1x8xf32>
    %385 = vector.shape_cast %384 : vector<9x1x8xf32> to vector<9x8xf32>
    %386 = vector.shape_cast %385 : vector<9x8xf32> to vector<9x1x8xf32>
    %387 = vector.extract_strided_slice %313 {offsets = [0, 7, 0], sizes = [9, 1, 8], strides = [1, 1, 1]} : vector<9x8x8xf32> to vector<9x1x8xf32>
    %388 = vector.shape_cast %387 : vector<9x1x8xf32> to vector<9x8xf32>
    %389 = vector.shape_cast %388 : vector<9x8xf32> to vector<1x9x8xf32>
    %390 = vector.broadcast %386 : vector<9x1x8xf32> to vector<9x9x8xf32>
    %391 = vector.broadcast %389 : vector<1x9x8xf32> to vector<9x9x8xf32>
    %392 = arith.mulf %390, %391 : vector<9x9x8xf32>
    %393 = arith.addf %383, %392 : vector<9x9x8xf32>
    %cst_71 = arith.constant 0.353553385 : f32
    %394 = vector.broadcast %cst_71 : f32 to vector<9x9x8xf32>
    %395 = arith.mulf %393, %394 : vector<9x9x8xf32>
    %396 = vector.extract_strided_slice %395 {offsets = [0, 0, 0], sizes = [9, 1, 8], strides = [1, 1, 1]} : vector<9x9x8xf32> to vector<9x1x8xf32>
    %397 = vector.shape_cast %396 : vector<9x1x8xf32> to vector<9x8xf32>
    %398 = vector.extract_strided_slice %395 {offsets = [0, 1, 0], sizes = [9, 1, 8], strides = [1, 1, 1]} : vector<9x9x8xf32> to vector<9x1x8xf32>
    %399 = vector.shape_cast %398 : vector<9x1x8xf32> to vector<9x8xf32>
    %400 = arith.maximumf %397, %399 : vector<9x8xf32>
    %401 = vector.extract_strided_slice %395 {offsets = [0, 2, 0], sizes = [9, 1, 8], strides = [1, 1, 1]} : vector<9x9x8xf32> to vector<9x1x8xf32>
    %402 = vector.shape_cast %401 : vector<9x1x8xf32> to vector<9x8xf32>
    %403 = arith.maximumf %400, %402 : vector<9x8xf32>
    %404 = vector.extract_strided_slice %395 {offsets = [0, 3, 0], sizes = [9, 1, 8], strides = [1, 1, 1]} : vector<9x9x8xf32> to vector<9x1x8xf32>
    %405 = vector.shape_cast %404 : vector<9x1x8xf32> to vector<9x8xf32>
    %406 = arith.maximumf %403, %405 : vector<9x8xf32>
    %407 = vector.extract_strided_slice %395 {offsets = [0, 4, 0], sizes = [9, 1, 8], strides = [1, 1, 1]} : vector<9x9x8xf32> to vector<9x1x8xf32>
    %408 = vector.shape_cast %407 : vector<9x1x8xf32> to vector<9x8xf32>
    %409 = arith.maximumf %406, %408 : vector<9x8xf32>
    %410 = vector.extract_strided_slice %395 {offsets = [0, 5, 0], sizes = [9, 1, 8], strides = [1, 1, 1]} : vector<9x9x8xf32> to vector<9x1x8xf32>
    %411 = vector.shape_cast %410 : vector<9x1x8xf32> to vector<9x8xf32>
    %412 = arith.maximumf %409, %411 : vector<9x8xf32>
    %413 = vector.extract_strided_slice %395 {offsets = [0, 6, 0], sizes = [9, 1, 8], strides = [1, 1, 1]} : vector<9x9x8xf32> to vector<9x1x8xf32>
    %414 = vector.shape_cast %413 : vector<9x1x8xf32> to vector<9x8xf32>
    %415 = arith.maximumf %412, %414 : vector<9x8xf32>
    %416 = vector.extract_strided_slice %395 {offsets = [0, 7, 0], sizes = [9, 1, 8], strides = [1, 1, 1]} : vector<9x9x8xf32> to vector<9x1x8xf32>
    %417 = vector.shape_cast %416 : vector<9x1x8xf32> to vector<9x8xf32>
    %418 = arith.maximumf %415, %417 : vector<9x8xf32>
    %419 = vector.extract_strided_slice %395 {offsets = [0, 8, 0], sizes = [9, 1, 8], strides = [1, 1, 1]} : vector<9x9x8xf32> to vector<9x1x8xf32>
    %420 = vector.shape_cast %419 : vector<9x1x8xf32> to vector<9x8xf32>
    %421 = arith.maximumf %418, %420 : vector<9x8xf32>
    %422 = vector.shape_cast %421 : vector<9x8xf32> to vector<9x1x8xf32>
    %423 = vector.broadcast %422 : vector<9x1x8xf32> to vector<9x9x8xf32>
    %424 = arith.subf %395, %423 : vector<9x9x8xf32>
    %425 = math.exp %424 : vector<9x9x8xf32>
    %426 = vector.extract_strided_slice %425 {offsets = [0, 0, 0], sizes = [9, 1, 8], strides = [1, 1, 1]} : vector<9x9x8xf32> to vector<9x1x8xf32>
    %427 = vector.shape_cast %426 : vector<9x1x8xf32> to vector<9x8xf32>
    %428 = vector.extract_strided_slice %425 {offsets = [0, 1, 0], sizes = [9, 1, 8], strides = [1, 1, 1]} : vector<9x9x8xf32> to vector<9x1x8xf32>
    %429 = vector.shape_cast %428 : vector<9x1x8xf32> to vector<9x8xf32>
    %430 = arith.addf %427, %429 : vector<9x8xf32>
    %431 = vector.extract_strided_slice %425 {offsets = [0, 2, 0], sizes = [9, 1, 8], strides = [1, 1, 1]} : vector<9x9x8xf32> to vector<9x1x8xf32>
    %432 = vector.shape_cast %431 : vector<9x1x8xf32> to vector<9x8xf32>
    %433 = arith.addf %430, %432 : vector<9x8xf32>
    %434 = vector.extract_strided_slice %425 {offsets = [0, 3, 0], sizes = [9, 1, 8], strides = [1, 1, 1]} : vector<9x9x8xf32> to vector<9x1x8xf32>
    %435 = vector.shape_cast %434 : vector<9x1x8xf32> to vector<9x8xf32>
    %436 = arith.addf %433, %435 : vector<9x8xf32>
    %437 = vector.extract_strided_slice %425 {offsets = [0, 4, 0], sizes = [9, 1, 8], strides = [1, 1, 1]} : vector<9x9x8xf32> to vector<9x1x8xf32>
    %438 = vector.shape_cast %437 : vector<9x1x8xf32> to vector<9x8xf32>
    %439 = arith.addf %436, %438 : vector<9x8xf32>
    %440 = vector.extract_strided_slice %425 {offsets = [0, 5, 0], sizes = [9, 1, 8], strides = [1, 1, 1]} : vector<9x9x8xf32> to vector<9x1x8xf32>
    %441 = vector.shape_cast %440 : vector<9x1x8xf32> to vector<9x8xf32>
    %442 = arith.addf %439, %441 : vector<9x8xf32>
    %443 = vector.extract_strided_slice %425 {offsets = [0, 6, 0], sizes = [9, 1, 8], strides = [1, 1, 1]} : vector<9x9x8xf32> to vector<9x1x8xf32>
    %444 = vector.shape_cast %443 : vector<9x1x8xf32> to vector<9x8xf32>
    %445 = arith.addf %442, %444 : vector<9x8xf32>
    %446 = vector.extract_strided_slice %425 {offsets = [0, 7, 0], sizes = [9, 1, 8], strides = [1, 1, 1]} : vector<9x9x8xf32> to vector<9x1x8xf32>
    %447 = vector.shape_cast %446 : vector<9x1x8xf32> to vector<9x8xf32>
    %448 = arith.addf %445, %447 : vector<9x8xf32>
    %449 = vector.extract_strided_slice %425 {offsets = [0, 8, 0], sizes = [9, 1, 8], strides = [1, 1, 1]} : vector<9x9x8xf32> to vector<9x1x8xf32>
    %450 = vector.shape_cast %449 : vector<9x1x8xf32> to vector<9x8xf32>
    %451 = arith.addf %448, %450 : vector<9x8xf32>
    %452 = tpu.reciprocal %451 {approx = true} : vector<9x8xf32> -> vector<9x8xf32>
    %453 = vector.extract_strided_slice %425 {offsets = [0, 0, 0], sizes = [9, 1, 8], strides = [1, 1, 1]} : vector<9x9x8xf32> to vector<9x1x8xf32>
    %454 = vector.shape_cast %453 : vector<9x1x8xf32> to vector<9x8xf32>
    %455 = arith.mulf %454, %452 : vector<9x8xf32>
    %456 = vector.shape_cast %455 : vector<9x8xf32> to vector<9x1x8xf32>
    %457 = vector.extract_strided_slice %314 {offsets = [0, 0, 0], sizes = [1, 16, 8], strides = [1, 1, 1]} : vector<9x16x8xf32> to vector<1x16x8xf32>
    %458 = vector.shape_cast %457 : vector<1x16x8xf32> to vector<16x8xf32>
    %459 = vector.shape_cast %458 : vector<16x8xf32> to vector<1x16x8xf32>
    %460 = vector.broadcast %456 : vector<9x1x8xf32> to vector<9x16x8xf32>
    %461 = vector.broadcast %459 : vector<1x16x8xf32> to vector<9x16x8xf32>
    %462 = arith.mulf %460, %461 : vector<9x16x8xf32>
    %463 = arith.addf %311, %462 : vector<9x16x8xf32>
    %464 = vector.extract_strided_slice %425 {offsets = [0, 1, 0], sizes = [9, 1, 8], strides = [1, 1, 1]} : vector<9x9x8xf32> to vector<9x1x8xf32>
    %465 = vector.shape_cast %464 : vector<9x1x8xf32> to vector<9x8xf32>
    %466 = arith.mulf %465, %452 : vector<9x8xf32>
    %467 = vector.shape_cast %466 : vector<9x8xf32> to vector<9x1x8xf32>
    %468 = vector.extract_strided_slice %314 {offsets = [1, 0, 0], sizes = [1, 16, 8], strides = [1, 1, 1]} : vector<9x16x8xf32> to vector<1x16x8xf32>
    %469 = vector.shape_cast %468 : vector<1x16x8xf32> to vector<16x8xf32>
    %470 = vector.shape_cast %469 : vector<16x8xf32> to vector<1x16x8xf32>
    %471 = vector.broadcast %467 : vector<9x1x8xf32> to vector<9x16x8xf32>
    %472 = vector.broadcast %470 : vector<1x16x8xf32> to vector<9x16x8xf32>
    %473 = arith.mulf %471, %472 : vector<9x16x8xf32>
    %474 = arith.addf %463, %473 : vector<9x16x8xf32>
    %475 = vector.extract_strided_slice %425 {offsets = [0, 2, 0], sizes = [9, 1, 8], strides = [1, 1, 1]} : vector<9x9x8xf32> to vector<9x1x8xf32>
    %476 = vector.shape_cast %475 : vector<9x1x8xf32> to vector<9x8xf32>
    %477 = arith.mulf %476, %452 : vector<9x8xf32>
    %478 = vector.shape_cast %477 : vector<9x8xf32> to vector<9x1x8xf32>
    %479 = vector.extract_strided_slice %314 {offsets = [2, 0, 0], sizes = [1, 16, 8], strides = [1, 1, 1]} : vector<9x16x8xf32> to vector<1x16x8xf32>
    %480 = vector.shape_cast %479 : vector<1x16x8xf32> to vector<16x8xf32>
    %481 = vector.shape_cast %480 : vector<16x8xf32> to vector<1x16x8xf32>
    %482 = vector.broadcast %478 : vector<9x1x8xf32> to vector<9x16x8xf32>
    %483 = vector.broadcast %481 : vector<1x16x8xf32> to vector<9x16x8xf32>
    %484 = arith.mulf %482, %483 : vector<9x16x8xf32>
    %485 = arith.addf %474, %484 : vector<9x16x8xf32>
    %486 = vector.extract_strided_slice %425 {offsets = [0, 3, 0], sizes = [9, 1, 8], strides = [1, 1, 1]} : vector<9x9x8xf32> to vector<9x1x8xf32>
    %487 = vector.shape_cast %486 : vector<9x1x8xf32> to vector<9x8xf32>
    %488 = arith.mulf %487, %452 : vector<9x8xf32>
    %489 = vector.shape_cast %488 : vector<9x8xf32> to vector<9x1x8xf32>
    %490 = vector.extract_strided_slice %314 {offsets = [3, 0, 0], sizes = [1, 16, 8], strides = [1, 1, 1]} : vector<9x16x8xf32> to vector<1x16x8xf32>
    %491 = vector.shape_cast %490 : vector<1x16x8xf32> to vector<16x8xf32>
    %492 = vector.shape_cast %491 : vector<16x8xf32> to vector<1x16x8xf32>
    %493 = vector.broadcast %489 : vector<9x1x8xf32> to vector<9x16x8xf32>
    %494 = vector.broadcast %492 : vector<1x16x8xf32> to vector<9x16x8xf32>
    %495 = arith.mulf %493, %494 : vector<9x16x8xf32>
    %496 = arith.addf %485, %495 : vector<9x16x8xf32>
    %497 = vector.extract_strided_slice %425 {offsets = [0, 4, 0], sizes = [9, 1, 8], strides = [1, 1, 1]} : vector<9x9x8xf32> to vector<9x1x8xf32>
    %498 = vector.shape_cast %497 : vector<9x1x8xf32> to vector<9x8xf32>
    %499 = arith.mulf %498, %452 : vector<9x8xf32>
    %500 = vector.shape_cast %499 : vector<9x8xf32> to vector<9x1x8xf32>
    %501 = vector.extract_strided_slice %314 {offsets = [4, 0, 0], sizes = [1, 16, 8], strides = [1, 1, 1]} : vector<9x16x8xf32> to vector<1x16x8xf32>
    %502 = vector.shape_cast %501 : vector<1x16x8xf32> to vector<16x8xf32>
    %503 = vector.shape_cast %502 : vector<16x8xf32> to vector<1x16x8xf32>
    %504 = vector.broadcast %500 : vector<9x1x8xf32> to vector<9x16x8xf32>
    %505 = vector.broadcast %503 : vector<1x16x8xf32> to vector<9x16x8xf32>
    %506 = arith.mulf %504, %505 : vector<9x16x8xf32>
    %507 = arith.addf %496, %506 : vector<9x16x8xf32>
    %508 = vector.extract_strided_slice %425 {offsets = [0, 5, 0], sizes = [9, 1, 8], strides = [1, 1, 1]} : vector<9x9x8xf32> to vector<9x1x8xf32>
    %509 = vector.shape_cast %508 : vector<9x1x8xf32> to vector<9x8xf32>
    %510 = arith.mulf %509, %452 : vector<9x8xf32>
    %511 = vector.shape_cast %510 : vector<9x8xf32> to vector<9x1x8xf32>
    %512 = vector.extract_strided_slice %314 {offsets = [5, 0, 0], sizes = [1, 16, 8], strides = [1, 1, 1]} : vector<9x16x8xf32> to vector<1x16x8xf32>
    %513 = vector.shape_cast %512 : vector<1x16x8xf32> to vector<16x8xf32>
    %514 = vector.shape_cast %513 : vector<16x8xf32> to vector<1x16x8xf32>
    %515 = vector.broadcast %511 : vector<9x1x8xf32> to vector<9x16x8xf32>
    %516 = vector.broadcast %514 : vector<1x16x8xf32> to vector<9x16x8xf32>
    %517 = arith.mulf %515, %516 : vector<9x16x8xf32>
    %518 = arith.addf %507, %517 : vector<9x16x8xf32>
    %519 = vector.extract_strided_slice %425 {offsets = [0, 6, 0], sizes = [9, 1, 8], strides = [1, 1, 1]} : vector<9x9x8xf32> to vector<9x1x8xf32>
    %520 = vector.shape_cast %519 : vector<9x1x8xf32> to vector<9x8xf32>
    %521 = arith.mulf %520, %452 : vector<9x8xf32>
    %522 = vector.shape_cast %521 : vector<9x8xf32> to vector<9x1x8xf32>
    %523 = vector.extract_strided_slice %314 {offsets = [6, 0, 0], sizes = [1, 16, 8], strides = [1, 1, 1]} : vector<9x16x8xf32> to vector<1x16x8xf32>
    %524 = vector.shape_cast %523 : vector<1x16x8xf32> to vector<16x8xf32>
    %525 = vector.shape_cast %524 : vector<16x8xf32> to vector<1x16x8xf32>
    %526 = vector.broadcast %522 : vector<9x1x8xf32> to vector<9x16x8xf32>
    %527 = vector.broadcast %525 : vector<1x16x8xf32> to vector<9x16x8xf32>
    %528 = arith.mulf %526, %527 : vector<9x16x8xf32>
    %529 = arith.addf %518, %528 : vector<9x16x8xf32>
    %530 = vector.extract_strided_slice %425 {offsets = [0, 7, 0], sizes = [9, 1, 8], strides = [1, 1, 1]} : vector<9x9x8xf32> to vector<9x1x8xf32>
    %531 = vector.shape_cast %530 : vector<9x1x8xf32> to vector<9x8xf32>
    %532 = arith.mulf %531, %452 : vector<9x8xf32>
    %533 = vector.shape_cast %532 : vector<9x8xf32> to vector<9x1x8xf32>
    %534 = vector.extract_strided_slice %314 {offsets = [7, 0, 0], sizes = [1, 16, 8], strides = [1, 1, 1]} : vector<9x16x8xf32> to vector<1x16x8xf32>
    %535 = vector.shape_cast %534 : vector<1x16x8xf32> to vector<16x8xf32>
    %536 = vector.shape_cast %535 : vector<16x8xf32> to vector<1x16x8xf32>
    %537 = vector.broadcast %533 : vector<9x1x8xf32> to vector<9x16x8xf32>
    %538 = vector.broadcast %536 : vector<1x16x8xf32> to vector<9x16x8xf32>
    %539 = arith.mulf %537, %538 : vector<9x16x8xf32>
    %540 = arith.addf %529, %539 : vector<9x16x8xf32>
    %541 = vector.extract_strided_slice %425 {offsets = [0, 8, 0], sizes = [9, 1, 8], strides = [1, 1, 1]} : vector<9x9x8xf32> to vector<9x1x8xf32>
    %542 = vector.shape_cast %541 : vector<9x1x8xf32> to vector<9x8xf32>
    %543 = arith.mulf %542, %452 : vector<9x8xf32>
    %544 = vector.shape_cast %543 : vector<9x8xf32> to vector<9x1x8xf32>
    %545 = vector.extract_strided_slice %314 {offsets = [8, 0, 0], sizes = [1, 16, 8], strides = [1, 1, 1]} : vector<9x16x8xf32> to vector<1x16x8xf32>
    %546 = vector.shape_cast %545 : vector<1x16x8xf32> to vector<16x8xf32>
    %547 = vector.shape_cast %546 : vector<16x8xf32> to vector<1x16x8xf32>
    %548 = vector.broadcast %544 : vector<9x1x8xf32> to vector<9x16x8xf32>
    %549 = vector.broadcast %547 : vector<1x16x8xf32> to vector<9x16x8xf32>
    %550 = arith.mulf %548, %549 : vector<9x16x8xf32>
    %551 = arith.addf %540, %550 : vector<9x16x8xf32>
    %c0_72 = arith.constant 0 : index
    %c16 = arith.constant 16 : index
    %c0_73 = arith.constant 0 : index
    %552 = vector.load %arg8[%c0_72, %c16, %c0_73] : memref<9x128x8xf32, #tpu.memory_space<vmem>>, vector<9x8x8xf32>
    %c0_74 = arith.constant 0 : index
    %c48 = arith.constant 48 : index
    %c0_75 = arith.constant 0 : index
    %553 = vector.load %arg8[%c0_74, %c48, %c0_75] : memref<9x128x8xf32, #tpu.memory_space<vmem>>, vector<9x8x8xf32>
    %c0_76 = arith.constant 0 : index
    %c96 = arith.constant 96 : index
    %c0_77 = arith.constant 0 : index
    %554 = vector.load %arg8[%c0_76, %c96, %c0_77] : memref<9x128x8xf32, #tpu.memory_space<vmem>>, vector<9x16x8xf32>
    %555 = vector.extract_strided_slice %552 {offsets = [0, 0, 0], sizes = [9, 1, 8], strides = [1, 1, 1]} : vector<9x8x8xf32> to vector<9x1x8xf32>
    %556 = vector.shape_cast %555 : vector<9x1x8xf32> to vector<9x8xf32>
    %557 = vector.shape_cast %556 : vector<9x8xf32> to vector<9x1x8xf32>
    %558 = vector.extract_strided_slice %553 {offsets = [0, 0, 0], sizes = [9, 1, 8], strides = [1, 1, 1]} : vector<9x8x8xf32> to vector<9x1x8xf32>
    %559 = vector.shape_cast %558 : vector<9x1x8xf32> to vector<9x8xf32>
    %560 = vector.shape_cast %559 : vector<9x8xf32> to vector<1x9x8xf32>
    %561 = vector.broadcast %557 : vector<9x1x8xf32> to vector<9x9x8xf32>
    %562 = vector.broadcast %560 : vector<1x9x8xf32> to vector<9x9x8xf32>
    %563 = arith.mulf %561, %562 : vector<9x9x8xf32>
    %564 = vector.extract_strided_slice %552 {offsets = [0, 1, 0], sizes = [9, 1, 8], strides = [1, 1, 1]} : vector<9x8x8xf32> to vector<9x1x8xf32>
    %565 = vector.shape_cast %564 : vector<9x1x8xf32> to vector<9x8xf32>
    %566 = vector.shape_cast %565 : vector<9x8xf32> to vector<9x1x8xf32>
    %567 = vector.extract_strided_slice %553 {offsets = [0, 1, 0], sizes = [9, 1, 8], strides = [1, 1, 1]} : vector<9x8x8xf32> to vector<9x1x8xf32>
    %568 = vector.shape_cast %567 : vector<9x1x8xf32> to vector<9x8xf32>
    %569 = vector.shape_cast %568 : vector<9x8xf32> to vector<1x9x8xf32>
    %570 = vector.broadcast %566 : vector<9x1x8xf32> to vector<9x9x8xf32>
    %571 = vector.broadcast %569 : vector<1x9x8xf32> to vector<9x9x8xf32>
    %572 = arith.mulf %570, %571 : vector<9x9x8xf32>
    %573 = arith.addf %563, %572 : vector<9x9x8xf32>
    %574 = vector.extract_strided_slice %552 {offsets = [0, 2, 0], sizes = [9, 1, 8], strides = [1, 1, 1]} : vector<9x8x8xf32> to vector<9x1x8xf32>
    %575 = vector.shape_cast %574 : vector<9x1x8xf32> to vector<9x8xf32>
    %576 = vector.shape_cast %575 : vector<9x8xf32> to vector<9x1x8xf32>
    %577 = vector.extract_strided_slice %553 {offsets = [0, 2, 0], sizes = [9, 1, 8], strides = [1, 1, 1]} : vector<9x8x8xf32> to vector<9x1x8xf32>
    %578 = vector.shape_cast %577 : vector<9x1x8xf32> to vector<9x8xf32>
    %579 = vector.shape_cast %578 : vector<9x8xf32> to vector<1x9x8xf32>
    %580 = vector.broadcast %576 : vector<9x1x8xf32> to vector<9x9x8xf32>
    %581 = vector.broadcast %579 : vector<1x9x8xf32> to vector<9x9x8xf32>
    %582 = arith.mulf %580, %581 : vector<9x9x8xf32>
    %583 = arith.addf %573, %582 : vector<9x9x8xf32>
    %584 = vector.extract_strided_slice %552 {offsets = [0, 3, 0], sizes = [9, 1, 8], strides = [1, 1, 1]} : vector<9x8x8xf32> to vector<9x1x8xf32>
    %585 = vector.shape_cast %584 : vector<9x1x8xf32> to vector<9x8xf32>
    %586 = vector.shape_cast %585 : vector<9x8xf32> to vector<9x1x8xf32>
    %587 = vector.extract_strided_slice %553 {offsets = [0, 3, 0], sizes = [9, 1, 8], strides = [1, 1, 1]} : vector<9x8x8xf32> to vector<9x1x8xf32>
    %588 = vector.shape_cast %587 : vector<9x1x8xf32> to vector<9x8xf32>
    %589 = vector.shape_cast %588 : vector<9x8xf32> to vector<1x9x8xf32>
    %590 = vector.broadcast %586 : vector<9x1x8xf32> to vector<9x9x8xf32>
    %591 = vector.broadcast %589 : vector<1x9x8xf32> to vector<9x9x8xf32>
    %592 = arith.mulf %590, %591 : vector<9x9x8xf32>
    %593 = arith.addf %583, %592 : vector<9x9x8xf32>
    %594 = vector.extract_strided_slice %552 {offsets = [0, 4, 0], sizes = [9, 1, 8], strides = [1, 1, 1]} : vector<9x8x8xf32> to vector<9x1x8xf32>
    %595 = vector.shape_cast %594 : vector<9x1x8xf32> to vector<9x8xf32>
    %596 = vector.shape_cast %595 : vector<9x8xf32> to vector<9x1x8xf32>
    %597 = vector.extract_strided_slice %553 {offsets = [0, 4, 0], sizes = [9, 1, 8], strides = [1, 1, 1]} : vector<9x8x8xf32> to vector<9x1x8xf32>
    %598 = vector.shape_cast %597 : vector<9x1x8xf32> to vector<9x8xf32>
    %599 = vector.shape_cast %598 : vector<9x8xf32> to vector<1x9x8xf32>
    %600 = vector.broadcast %596 : vector<9x1x8xf32> to vector<9x9x8xf32>
    %601 = vector.broadcast %599 : vector<1x9x8xf32> to vector<9x9x8xf32>
    %602 = arith.mulf %600, %601 : vector<9x9x8xf32>
    %603 = arith.addf %593, %602 : vector<9x9x8xf32>
    %604 = vector.extract_strided_slice %552 {offsets = [0, 5, 0], sizes = [9, 1, 8], strides = [1, 1, 1]} : vector<9x8x8xf32> to vector<9x1x8xf32>
    %605 = vector.shape_cast %604 : vector<9x1x8xf32> to vector<9x8xf32>
    %606 = vector.shape_cast %605 : vector<9x8xf32> to vector<9x1x8xf32>
    %607 = vector.extract_strided_slice %553 {offsets = [0, 5, 0], sizes = [9, 1, 8], strides = [1, 1, 1]} : vector<9x8x8xf32> to vector<9x1x8xf32>
    %608 = vector.shape_cast %607 : vector<9x1x8xf32> to vector<9x8xf32>
    %609 = vector.shape_cast %608 : vector<9x8xf32> to vector<1x9x8xf32>
    %610 = vector.broadcast %606 : vector<9x1x8xf32> to vector<9x9x8xf32>
    %611 = vector.broadcast %609 : vector<1x9x8xf32> to vector<9x9x8xf32>
    %612 = arith.mulf %610, %611 : vector<9x9x8xf32>
    %613 = arith.addf %603, %612 : vector<9x9x8xf32>
    %614 = vector.extract_strided_slice %552 {offsets = [0, 6, 0], sizes = [9, 1, 8], strides = [1, 1, 1]} : vector<9x8x8xf32> to vector<9x1x8xf32>
    %615 = vector.shape_cast %614 : vector<9x1x8xf32> to vector<9x8xf32>
    %616 = vector.shape_cast %615 : vector<9x8xf32> to vector<9x1x8xf32>
    %617 = vector.extract_strided_slice %553 {offsets = [0, 6, 0], sizes = [9, 1, 8], strides = [1, 1, 1]} : vector<9x8x8xf32> to vector<9x1x8xf32>
    %618 = vector.shape_cast %617 : vector<9x1x8xf32> to vector<9x8xf32>
    %619 = vector.shape_cast %618 : vector<9x8xf32> to vector<1x9x8xf32>
    %620 = vector.broadcast %616 : vector<9x1x8xf32> to vector<9x9x8xf32>
    %621 = vector.broadcast %619 : vector<1x9x8xf32> to vector<9x9x8xf32>
    %622 = arith.mulf %620, %621 : vector<9x9x8xf32>
    %623 = arith.addf %613, %622 : vector<9x9x8xf32>
    %624 = vector.extract_strided_slice %552 {offsets = [0, 7, 0], sizes = [9, 1, 8], strides = [1, 1, 1]} : vector<9x8x8xf32> to vector<9x1x8xf32>
    %625 = vector.shape_cast %624 : vector<9x1x8xf32> to vector<9x8xf32>
    %626 = vector.shape_cast %625 : vector<9x8xf32> to vector<9x1x8xf32>
    %627 = vector.extract_strided_slice %553 {offsets = [0, 7, 0], sizes = [9, 1, 8], strides = [1, 1, 1]} : vector<9x8x8xf32> to vector<9x1x8xf32>
    %628 = vector.shape_cast %627 : vector<9x1x8xf32> to vector<9x8xf32>
    %629 = vector.shape_cast %628 : vector<9x8xf32> to vector<1x9x8xf32>
    %630 = vector.broadcast %626 : vector<9x1x8xf32> to vector<9x9x8xf32>
    %631 = vector.broadcast %629 : vector<1x9x8xf32> to vector<9x9x8xf32>
    %632 = arith.mulf %630, %631 : vector<9x9x8xf32>
    %633 = arith.addf %623, %632 : vector<9x9x8xf32>
    %cst_78 = arith.constant 0.353553385 : f32
    %634 = vector.broadcast %cst_78 : f32 to vector<9x9x8xf32>
    %635 = arith.mulf %633, %634 : vector<9x9x8xf32>
    %636 = vector.extract_strided_slice %635 {offsets = [0, 0, 0], sizes = [9, 1, 8], strides = [1, 1, 1]} : vector<9x9x8xf32> to vector<9x1x8xf32>
    %637 = vector.shape_cast %636 : vector<9x1x8xf32> to vector<9x8xf32>
    %638 = vector.extract_strided_slice %635 {offsets = [0, 1, 0], sizes = [9, 1, 8], strides = [1, 1, 1]} : vector<9x9x8xf32> to vector<9x1x8xf32>
    %639 = vector.shape_cast %638 : vector<9x1x8xf32> to vector<9x8xf32>
    %640 = arith.maximumf %637, %639 : vector<9x8xf32>
    %641 = vector.extract_strided_slice %635 {offsets = [0, 2, 0], sizes = [9, 1, 8], strides = [1, 1, 1]} : vector<9x9x8xf32> to vector<9x1x8xf32>
    %642 = vector.shape_cast %641 : vector<9x1x8xf32> to vector<9x8xf32>
    %643 = arith.maximumf %640, %642 : vector<9x8xf32>
    %644 = vector.extract_strided_slice %635 {offsets = [0, 3, 0], sizes = [9, 1, 8], strides = [1, 1, 1]} : vector<9x9x8xf32> to vector<9x1x8xf32>
    %645 = vector.shape_cast %644 : vector<9x1x8xf32> to vector<9x8xf32>
    %646 = arith.maximumf %643, %645 : vector<9x8xf32>
    %647 = vector.extract_strided_slice %635 {offsets = [0, 4, 0], sizes = [9, 1, 8], strides = [1, 1, 1]} : vector<9x9x8xf32> to vector<9x1x8xf32>
    %648 = vector.shape_cast %647 : vector<9x1x8xf32> to vector<9x8xf32>
    %649 = arith.maximumf %646, %648 : vector<9x8xf32>
    %650 = vector.extract_strided_slice %635 {offsets = [0, 5, 0], sizes = [9, 1, 8], strides = [1, 1, 1]} : vector<9x9x8xf32> to vector<9x1x8xf32>
    %651 = vector.shape_cast %650 : vector<9x1x8xf32> to vector<9x8xf32>
    %652 = arith.maximumf %649, %651 : vector<9x8xf32>
    %653 = vector.extract_strided_slice %635 {offsets = [0, 6, 0], sizes = [9, 1, 8], strides = [1, 1, 1]} : vector<9x9x8xf32> to vector<9x1x8xf32>
    %654 = vector.shape_cast %653 : vector<9x1x8xf32> to vector<9x8xf32>
    %655 = arith.maximumf %652, %654 : vector<9x8xf32>
    %656 = vector.extract_strided_slice %635 {offsets = [0, 7, 0], sizes = [9, 1, 8], strides = [1, 1, 1]} : vector<9x9x8xf32> to vector<9x1x8xf32>
    %657 = vector.shape_cast %656 : vector<9x1x8xf32> to vector<9x8xf32>
    %658 = arith.maximumf %655, %657 : vector<9x8xf32>
    %659 = vector.extract_strided_slice %635 {offsets = [0, 8, 0], sizes = [9, 1, 8], strides = [1, 1, 1]} : vector<9x9x8xf32> to vector<9x1x8xf32>
    %660 = vector.shape_cast %659 : vector<9x1x8xf32> to vector<9x8xf32>
    %661 = arith.maximumf %658, %660 : vector<9x8xf32>
    %662 = vector.shape_cast %661 : vector<9x8xf32> to vector<9x1x8xf32>
    %663 = vector.broadcast %662 : vector<9x1x8xf32> to vector<9x9x8xf32>
    %664 = arith.subf %635, %663 : vector<9x9x8xf32>
    %665 = math.exp %664 : vector<9x9x8xf32>
    %666 = vector.extract_strided_slice %665 {offsets = [0, 0, 0], sizes = [9, 1, 8], strides = [1, 1, 1]} : vector<9x9x8xf32> to vector<9x1x8xf32>
    %667 = vector.shape_cast %666 : vector<9x1x8xf32> to vector<9x8xf32>
    %668 = vector.extract_strided_slice %665 {offsets = [0, 1, 0], sizes = [9, 1, 8], strides = [1, 1, 1]} : vector<9x9x8xf32> to vector<9x1x8xf32>
    %669 = vector.shape_cast %668 : vector<9x1x8xf32> to vector<9x8xf32>
    %670 = arith.addf %667, %669 : vector<9x8xf32>
    %671 = vector.extract_strided_slice %665 {offsets = [0, 2, 0], sizes = [9, 1, 8], strides = [1, 1, 1]} : vector<9x9x8xf32> to vector<9x1x8xf32>
    %672 = vector.shape_cast %671 : vector<9x1x8xf32> to vector<9x8xf32>
    %673 = arith.addf %670, %672 : vector<9x8xf32>
    %674 = vector.extract_strided_slice %665 {offsets = [0, 3, 0], sizes = [9, 1, 8], strides = [1, 1, 1]} : vector<9x9x8xf32> to vector<9x1x8xf32>
    %675 = vector.shape_cast %674 : vector<9x1x8xf32> to vector<9x8xf32>
    %676 = arith.addf %673, %675 : vector<9x8xf32>
    %677 = vector.extract_strided_slice %665 {offsets = [0, 4, 0], sizes = [9, 1, 8], strides = [1, 1, 1]} : vector<9x9x8xf32> to vector<9x1x8xf32>
    %678 = vector.shape_cast %677 : vector<9x1x8xf32> to vector<9x8xf32>
    %679 = arith.addf %676, %678 : vector<9x8xf32>
    %680 = vector.extract_strided_slice %665 {offsets = [0, 5, 0], sizes = [9, 1, 8], strides = [1, 1, 1]} : vector<9x9x8xf32> to vector<9x1x8xf32>
    %681 = vector.shape_cast %680 : vector<9x1x8xf32> to vector<9x8xf32>
    %682 = arith.addf %679, %681 : vector<9x8xf32>
    %683 = vector.extract_strided_slice %665 {offsets = [0, 6, 0], sizes = [9, 1, 8], strides = [1, 1, 1]} : vector<9x9x8xf32> to vector<9x1x8xf32>
    %684 = vector.shape_cast %683 : vector<9x1x8xf32> to vector<9x8xf32>
    %685 = arith.addf %682, %684 : vector<9x8xf32>
    %686 = vector.extract_strided_slice %665 {offsets = [0, 7, 0], sizes = [9, 1, 8], strides = [1, 1, 1]} : vector<9x9x8xf32> to vector<9x1x8xf32>
    %687 = vector.shape_cast %686 : vector<9x1x8xf32> to vector<9x8xf32>
    %688 = arith.addf %685, %687 : vector<9x8xf32>
    %689 = vector.extract_strided_slice %665 {offsets = [0, 8, 0], sizes = [9, 1, 8], strides = [1, 1, 1]} : vector<9x9x8xf32> to vector<9x1x8xf32>
    %690 = vector.shape_cast %689 : vector<9x1x8xf32> to vector<9x8xf32>
    %691 = arith.addf %688, %690 : vector<9x8xf32>
    %692 = tpu.reciprocal %691 {approx = true} : vector<9x8xf32> -> vector<9x8xf32>
    %693 = vector.extract_strided_slice %665 {offsets = [0, 0, 0], sizes = [9, 1, 8], strides = [1, 1, 1]} : vector<9x9x8xf32> to vector<9x1x8xf32>
    %694 = vector.shape_cast %693 : vector<9x1x8xf32> to vector<9x8xf32>
    %695 = arith.mulf %694, %692 : vector<9x8xf32>
    %696 = vector.shape_cast %695 : vector<9x8xf32> to vector<9x1x8xf32>
    %697 = vector.extract_strided_slice %554 {offsets = [0, 0, 0], sizes = [1, 16, 8], strides = [1, 1, 1]} : vector<9x16x8xf32> to vector<1x16x8xf32>
    %698 = vector.shape_cast %697 : vector<1x16x8xf32> to vector<16x8xf32>
    %699 = vector.shape_cast %698 : vector<16x8xf32> to vector<1x16x8xf32>
    %700 = vector.broadcast %696 : vector<9x1x8xf32> to vector<9x16x8xf32>
    %701 = vector.broadcast %699 : vector<1x16x8xf32> to vector<9x16x8xf32>
    %702 = arith.mulf %700, %701 : vector<9x16x8xf32>
    %703 = arith.addf %551, %702 : vector<9x16x8xf32>
    %704 = vector.extract_strided_slice %665 {offsets = [0, 1, 0], sizes = [9, 1, 8], strides = [1, 1, 1]} : vector<9x9x8xf32> to vector<9x1x8xf32>
    %705 = vector.shape_cast %704 : vector<9x1x8xf32> to vector<9x8xf32>
    %706 = arith.mulf %705, %692 : vector<9x8xf32>
    %707 = vector.shape_cast %706 : vector<9x8xf32> to vector<9x1x8xf32>
    %708 = vector.extract_strided_slice %554 {offsets = [1, 0, 0], sizes = [1, 16, 8], strides = [1, 1, 1]} : vector<9x16x8xf32> to vector<1x16x8xf32>
    %709 = vector.shape_cast %708 : vector<1x16x8xf32> to vector<16x8xf32>
    %710 = vector.shape_cast %709 : vector<16x8xf32> to vector<1x16x8xf32>
    %711 = vector.broadcast %707 : vector<9x1x8xf32> to vector<9x16x8xf32>
    %712 = vector.broadcast %710 : vector<1x16x8xf32> to vector<9x16x8xf32>
    %713 = arith.mulf %711, %712 : vector<9x16x8xf32>
    %714 = arith.addf %703, %713 : vector<9x16x8xf32>
    %715 = vector.extract_strided_slice %665 {offsets = [0, 2, 0], sizes = [9, 1, 8], strides = [1, 1, 1]} : vector<9x9x8xf32> to vector<9x1x8xf32>
    %716 = vector.shape_cast %715 : vector<9x1x8xf32> to vector<9x8xf32>
    %717 = arith.mulf %716, %692 : vector<9x8xf32>
    %718 = vector.shape_cast %717 : vector<9x8xf32> to vector<9x1x8xf32>
    %719 = vector.extract_strided_slice %554 {offsets = [2, 0, 0], sizes = [1, 16, 8], strides = [1, 1, 1]} : vector<9x16x8xf32> to vector<1x16x8xf32>
    %720 = vector.shape_cast %719 : vector<1x16x8xf32> to vector<16x8xf32>
    %721 = vector.shape_cast %720 : vector<16x8xf32> to vector<1x16x8xf32>
    %722 = vector.broadcast %718 : vector<9x1x8xf32> to vector<9x16x8xf32>
    %723 = vector.broadcast %721 : vector<1x16x8xf32> to vector<9x16x8xf32>
    %724 = arith.mulf %722, %723 : vector<9x16x8xf32>
    %725 = arith.addf %714, %724 : vector<9x16x8xf32>
    %726 = vector.extract_strided_slice %665 {offsets = [0, 3, 0], sizes = [9, 1, 8], strides = [1, 1, 1]} : vector<9x9x8xf32> to vector<9x1x8xf32>
    %727 = vector.shape_cast %726 : vector<9x1x8xf32> to vector<9x8xf32>
    %728 = arith.mulf %727, %692 : vector<9x8xf32>
    %729 = vector.shape_cast %728 : vector<9x8xf32> to vector<9x1x8xf32>
    %730 = vector.extract_strided_slice %554 {offsets = [3, 0, 0], sizes = [1, 16, 8], strides = [1, 1, 1]} : vector<9x16x8xf32> to vector<1x16x8xf32>
    %731 = vector.shape_cast %730 : vector<1x16x8xf32> to vector<16x8xf32>
    %732 = vector.shape_cast %731 : vector<16x8xf32> to vector<1x16x8xf32>
    %733 = vector.broadcast %729 : vector<9x1x8xf32> to vector<9x16x8xf32>
    %734 = vector.broadcast %732 : vector<1x16x8xf32> to vector<9x16x8xf32>
    %735 = arith.mulf %733, %734 : vector<9x16x8xf32>
    %736 = arith.addf %725, %735 : vector<9x16x8xf32>
    %737 = vector.extract_strided_slice %665 {offsets = [0, 4, 0], sizes = [9, 1, 8], strides = [1, 1, 1]} : vector<9x9x8xf32> to vector<9x1x8xf32>
    %738 = vector.shape_cast %737 : vector<9x1x8xf32> to vector<9x8xf32>
    %739 = arith.mulf %738, %692 : vector<9x8xf32>
    %740 = vector.shape_cast %739 : vector<9x8xf32> to vector<9x1x8xf32>
    %741 = vector.extract_strided_slice %554 {offsets = [4, 0, 0], sizes = [1, 16, 8], strides = [1, 1, 1]} : vector<9x16x8xf32> to vector<1x16x8xf32>
    %742 = vector.shape_cast %741 : vector<1x16x8xf32> to vector<16x8xf32>
    %743 = vector.shape_cast %742 : vector<16x8xf32> to vector<1x16x8xf32>
    %744 = vector.broadcast %740 : vector<9x1x8xf32> to vector<9x16x8xf32>
    %745 = vector.broadcast %743 : vector<1x16x8xf32> to vector<9x16x8xf32>
    %746 = arith.mulf %744, %745 : vector<9x16x8xf32>
    %747 = arith.addf %736, %746 : vector<9x16x8xf32>
    %748 = vector.extract_strided_slice %665 {offsets = [0, 5, 0], sizes = [9, 1, 8], strides = [1, 1, 1]} : vector<9x9x8xf32> to vector<9x1x8xf32>
    %749 = vector.shape_cast %748 : vector<9x1x8xf32> to vector<9x8xf32>
    %750 = arith.mulf %749, %692 : vector<9x8xf32>
    %751 = vector.shape_cast %750 : vector<9x8xf32> to vector<9x1x8xf32>
    %752 = vector.extract_strided_slice %554 {offsets = [5, 0, 0], sizes = [1, 16, 8], strides = [1, 1, 1]} : vector<9x16x8xf32> to vector<1x16x8xf32>
    %753 = vector.shape_cast %752 : vector<1x16x8xf32> to vector<16x8xf32>
    %754 = vector.shape_cast %753 : vector<16x8xf32> to vector<1x16x8xf32>
    %755 = vector.broadcast %751 : vector<9x1x8xf32> to vector<9x16x8xf32>
    %756 = vector.broadcast %754 : vector<1x16x8xf32> to vector<9x16x8xf32>
    %757 = arith.mulf %755, %756 : vector<9x16x8xf32>
    %758 = arith.addf %747, %757 : vector<9x16x8xf32>
    %759 = vector.extract_strided_slice %665 {offsets = [0, 6, 0], sizes = [9, 1, 8], strides = [1, 1, 1]} : vector<9x9x8xf32> to vector<9x1x8xf32>
    %760 = vector.shape_cast %759 : vector<9x1x8xf32> to vector<9x8xf32>
    %761 = arith.mulf %760, %692 : vector<9x8xf32>
    %762 = vector.shape_cast %761 : vector<9x8xf32> to vector<9x1x8xf32>
    %763 = vector.extract_strided_slice %554 {offsets = [6, 0, 0], sizes = [1, 16, 8], strides = [1, 1, 1]} : vector<9x16x8xf32> to vector<1x16x8xf32>
    %764 = vector.shape_cast %763 : vector<1x16x8xf32> to vector<16x8xf32>
    %765 = vector.shape_cast %764 : vector<16x8xf32> to vector<1x16x8xf32>
    %766 = vector.broadcast %762 : vector<9x1x8xf32> to vector<9x16x8xf32>
    %767 = vector.broadcast %765 : vector<1x16x8xf32> to vector<9x16x8xf32>
    %768 = arith.mulf %766, %767 : vector<9x16x8xf32>
    %769 = arith.addf %758, %768 : vector<9x16x8xf32>
    %770 = vector.extract_strided_slice %665 {offsets = [0, 7, 0], sizes = [9, 1, 8], strides = [1, 1, 1]} : vector<9x9x8xf32> to vector<9x1x8xf32>
    %771 = vector.shape_cast %770 : vector<9x1x8xf32> to vector<9x8xf32>
    %772 = arith.mulf %771, %692 : vector<9x8xf32>
    %773 = vector.shape_cast %772 : vector<9x8xf32> to vector<9x1x8xf32>
    %774 = vector.extract_strided_slice %554 {offsets = [7, 0, 0], sizes = [1, 16, 8], strides = [1, 1, 1]} : vector<9x16x8xf32> to vector<1x16x8xf32>
    %775 = vector.shape_cast %774 : vector<1x16x8xf32> to vector<16x8xf32>
    %776 = vector.shape_cast %775 : vector<16x8xf32> to vector<1x16x8xf32>
    %777 = vector.broadcast %773 : vector<9x1x8xf32> to vector<9x16x8xf32>
    %778 = vector.broadcast %776 : vector<1x16x8xf32> to vector<9x16x8xf32>
    %779 = arith.mulf %777, %778 : vector<9x16x8xf32>
    %780 = arith.addf %769, %779 : vector<9x16x8xf32>
    %781 = vector.extract_strided_slice %665 {offsets = [0, 8, 0], sizes = [9, 1, 8], strides = [1, 1, 1]} : vector<9x9x8xf32> to vector<9x1x8xf32>
    %782 = vector.shape_cast %781 : vector<9x1x8xf32> to vector<9x8xf32>
    %783 = arith.mulf %782, %692 : vector<9x8xf32>
    %784 = vector.shape_cast %783 : vector<9x8xf32> to vector<9x1x8xf32>
    %785 = vector.extract_strided_slice %554 {offsets = [8, 0, 0], sizes = [1, 16, 8], strides = [1, 1, 1]} : vector<9x16x8xf32> to vector<1x16x8xf32>
    %786 = vector.shape_cast %785 : vector<1x16x8xf32> to vector<16x8xf32>
    %787 = vector.shape_cast %786 : vector<16x8xf32> to vector<1x16x8xf32>
    %788 = vector.broadcast %784 : vector<9x1x8xf32> to vector<9x16x8xf32>
    %789 = vector.broadcast %787 : vector<1x16x8xf32> to vector<9x16x8xf32>
    %790 = arith.mulf %788, %789 : vector<9x16x8xf32>
    %791 = arith.addf %780, %790 : vector<9x16x8xf32>
    %c0_79 = arith.constant 0 : index
    %c24 = arith.constant 24 : index
    %c0_80 = arith.constant 0 : index
    %792 = vector.load %arg8[%c0_79, %c24, %c0_80] : memref<9x128x8xf32, #tpu.memory_space<vmem>>, vector<9x8x8xf32>
    %c0_81 = arith.constant 0 : index
    %c56 = arith.constant 56 : index
    %c0_82 = arith.constant 0 : index
    %793 = vector.load %arg8[%c0_81, %c56, %c0_82] : memref<9x128x8xf32, #tpu.memory_space<vmem>>, vector<9x8x8xf32>
    %c0_83 = arith.constant 0 : index
    %c112 = arith.constant 112 : index
    %c0_84 = arith.constant 0 : index
    %794 = vector.load %arg8[%c0_83, %c112, %c0_84] : memref<9x128x8xf32, #tpu.memory_space<vmem>>, vector<9x16x8xf32>
    %795 = vector.extract_strided_slice %792 {offsets = [0, 0, 0], sizes = [9, 1, 8], strides = [1, 1, 1]} : vector<9x8x8xf32> to vector<9x1x8xf32>
    %796 = vector.shape_cast %795 : vector<9x1x8xf32> to vector<9x8xf32>
    %797 = vector.shape_cast %796 : vector<9x8xf32> to vector<9x1x8xf32>
    %798 = vector.extract_strided_slice %793 {offsets = [0, 0, 0], sizes = [9, 1, 8], strides = [1, 1, 1]} : vector<9x8x8xf32> to vector<9x1x8xf32>
    %799 = vector.shape_cast %798 : vector<9x1x8xf32> to vector<9x8xf32>
    %800 = vector.shape_cast %799 : vector<9x8xf32> to vector<1x9x8xf32>
    %801 = vector.broadcast %797 : vector<9x1x8xf32> to vector<9x9x8xf32>
    %802 = vector.broadcast %800 : vector<1x9x8xf32> to vector<9x9x8xf32>
    %803 = arith.mulf %801, %802 : vector<9x9x8xf32>
    %804 = vector.extract_strided_slice %792 {offsets = [0, 1, 0], sizes = [9, 1, 8], strides = [1, 1, 1]} : vector<9x8x8xf32> to vector<9x1x8xf32>
    %805 = vector.shape_cast %804 : vector<9x1x8xf32> to vector<9x8xf32>
    %806 = vector.shape_cast %805 : vector<9x8xf32> to vector<9x1x8xf32>
    %807 = vector.extract_strided_slice %793 {offsets = [0, 1, 0], sizes = [9, 1, 8], strides = [1, 1, 1]} : vector<9x8x8xf32> to vector<9x1x8xf32>
    %808 = vector.shape_cast %807 : vector<9x1x8xf32> to vector<9x8xf32>
    %809 = vector.shape_cast %808 : vector<9x8xf32> to vector<1x9x8xf32>
    %810 = vector.broadcast %806 : vector<9x1x8xf32> to vector<9x9x8xf32>
    %811 = vector.broadcast %809 : vector<1x9x8xf32> to vector<9x9x8xf32>
    %812 = arith.mulf %810, %811 : vector<9x9x8xf32>
    %813 = arith.addf %803, %812 : vector<9x9x8xf32>
    %814 = vector.extract_strided_slice %792 {offsets = [0, 2, 0], sizes = [9, 1, 8], strides = [1, 1, 1]} : vector<9x8x8xf32> to vector<9x1x8xf32>
    %815 = vector.shape_cast %814 : vector<9x1x8xf32> to vector<9x8xf32>
    %816 = vector.shape_cast %815 : vector<9x8xf32> to vector<9x1x8xf32>
    %817 = vector.extract_strided_slice %793 {offsets = [0, 2, 0], sizes = [9, 1, 8], strides = [1, 1, 1]} : vector<9x8x8xf32> to vector<9x1x8xf32>
    %818 = vector.shape_cast %817 : vector<9x1x8xf32> to vector<9x8xf32>
    %819 = vector.shape_cast %818 : vector<9x8xf32> to vector<1x9x8xf32>
    %820 = vector.broadcast %816 : vector<9x1x8xf32> to vector<9x9x8xf32>
    %821 = vector.broadcast %819 : vector<1x9x8xf32> to vector<9x9x8xf32>
    %822 = arith.mulf %820, %821 : vector<9x9x8xf32>
    %823 = arith.addf %813, %822 : vector<9x9x8xf32>
    %824 = vector.extract_strided_slice %792 {offsets = [0, 3, 0], sizes = [9, 1, 8], strides = [1, 1, 1]} : vector<9x8x8xf32> to vector<9x1x8xf32>
    %825 = vector.shape_cast %824 : vector<9x1x8xf32> to vector<9x8xf32>
    %826 = vector.shape_cast %825 : vector<9x8xf32> to vector<9x1x8xf32>
    %827 = vector.extract_strided_slice %793 {offsets = [0, 3, 0], sizes = [9, 1, 8], strides = [1, 1, 1]} : vector<9x8x8xf32> to vector<9x1x8xf32>
    %828 = vector.shape_cast %827 : vector<9x1x8xf32> to vector<9x8xf32>
    %829 = vector.shape_cast %828 : vector<9x8xf32> to vector<1x9x8xf32>
    %830 = vector.broadcast %826 : vector<9x1x8xf32> to vector<9x9x8xf32>
    %831 = vector.broadcast %829 : vector<1x9x8xf32> to vector<9x9x8xf32>
    %832 = arith.mulf %830, %831 : vector<9x9x8xf32>
    %833 = arith.addf %823, %832 : vector<9x9x8xf32>
    %834 = vector.extract_strided_slice %792 {offsets = [0, 4, 0], sizes = [9, 1, 8], strides = [1, 1, 1]} : vector<9x8x8xf32> to vector<9x1x8xf32>
    %835 = vector.shape_cast %834 : vector<9x1x8xf32> to vector<9x8xf32>
    %836 = vector.shape_cast %835 : vector<9x8xf32> to vector<9x1x8xf32>
    %837 = vector.extract_strided_slice %793 {offsets = [0, 4, 0], sizes = [9, 1, 8], strides = [1, 1, 1]} : vector<9x8x8xf32> to vector<9x1x8xf32>
    %838 = vector.shape_cast %837 : vector<9x1x8xf32> to vector<9x8xf32>
    %839 = vector.shape_cast %838 : vector<9x8xf32> to vector<1x9x8xf32>
    %840 = vector.broadcast %836 : vector<9x1x8xf32> to vector<9x9x8xf32>
    %841 = vector.broadcast %839 : vector<1x9x8xf32> to vector<9x9x8xf32>
    %842 = arith.mulf %840, %841 : vector<9x9x8xf32>
    %843 = arith.addf %833, %842 : vector<9x9x8xf32>
    %844 = vector.extract_strided_slice %792 {offsets = [0, 5, 0], sizes = [9, 1, 8], strides = [1, 1, 1]} : vector<9x8x8xf32> to vector<9x1x8xf32>
    %845 = vector.shape_cast %844 : vector<9x1x8xf32> to vector<9x8xf32>
    %846 = vector.shape_cast %845 : vector<9x8xf32> to vector<9x1x8xf32>
    %847 = vector.extract_strided_slice %793 {offsets = [0, 5, 0], sizes = [9, 1, 8], strides = [1, 1, 1]} : vector<9x8x8xf32> to vector<9x1x8xf32>
    %848 = vector.shape_cast %847 : vector<9x1x8xf32> to vector<9x8xf32>
    %849 = vector.shape_cast %848 : vector<9x8xf32> to vector<1x9x8xf32>
    %850 = vector.broadcast %846 : vector<9x1x8xf32> to vector<9x9x8xf32>
    %851 = vector.broadcast %849 : vector<1x9x8xf32> to vector<9x9x8xf32>
    %852 = arith.mulf %850, %851 : vector<9x9x8xf32>
    %853 = arith.addf %843, %852 : vector<9x9x8xf32>
    %854 = vector.extract_strided_slice %792 {offsets = [0, 6, 0], sizes = [9, 1, 8], strides = [1, 1, 1]} : vector<9x8x8xf32> to vector<9x1x8xf32>
    %855 = vector.shape_cast %854 : vector<9x1x8xf32> to vector<9x8xf32>
    %856 = vector.shape_cast %855 : vector<9x8xf32> to vector<9x1x8xf32>
    %857 = vector.extract_strided_slice %793 {offsets = [0, 6, 0], sizes = [9, 1, 8], strides = [1, 1, 1]} : vector<9x8x8xf32> to vector<9x1x8xf32>
    %858 = vector.shape_cast %857 : vector<9x1x8xf32> to vector<9x8xf32>
    %859 = vector.shape_cast %858 : vector<9x8xf32> to vector<1x9x8xf32>
    %860 = vector.broadcast %856 : vector<9x1x8xf32> to vector<9x9x8xf32>
    %861 = vector.broadcast %859 : vector<1x9x8xf32> to vector<9x9x8xf32>
    %862 = arith.mulf %860, %861 : vector<9x9x8xf32>
    %863 = arith.addf %853, %862 : vector<9x9x8xf32>
    %864 = vector.extract_strided_slice %792 {offsets = [0, 7, 0], sizes = [9, 1, 8], strides = [1, 1, 1]} : vector<9x8x8xf32> to vector<9x1x8xf32>
    %865 = vector.shape_cast %864 : vector<9x1x8xf32> to vector<9x8xf32>
    %866 = vector.shape_cast %865 : vector<9x8xf32> to vector<9x1x8xf32>
    %867 = vector.extract_strided_slice %793 {offsets = [0, 7, 0], sizes = [9, 1, 8], strides = [1, 1, 1]} : vector<9x8x8xf32> to vector<9x1x8xf32>
    %868 = vector.shape_cast %867 : vector<9x1x8xf32> to vector<9x8xf32>
    %869 = vector.shape_cast %868 : vector<9x8xf32> to vector<1x9x8xf32>
    %870 = vector.broadcast %866 : vector<9x1x8xf32> to vector<9x9x8xf32>
    %871 = vector.broadcast %869 : vector<1x9x8xf32> to vector<9x9x8xf32>
    %872 = arith.mulf %870, %871 : vector<9x9x8xf32>
    %873 = arith.addf %863, %872 : vector<9x9x8xf32>
    %cst_85 = arith.constant 0.353553385 : f32
    %874 = vector.broadcast %cst_85 : f32 to vector<9x9x8xf32>
    %875 = arith.mulf %873, %874 : vector<9x9x8xf32>
    %876 = vector.extract_strided_slice %875 {offsets = [0, 0, 0], sizes = [9, 1, 8], strides = [1, 1, 1]} : vector<9x9x8xf32> to vector<9x1x8xf32>
    %877 = vector.shape_cast %876 : vector<9x1x8xf32> to vector<9x8xf32>
    %878 = vector.extract_strided_slice %875 {offsets = [0, 1, 0], sizes = [9, 1, 8], strides = [1, 1, 1]} : vector<9x9x8xf32> to vector<9x1x8xf32>
    %879 = vector.shape_cast %878 : vector<9x1x8xf32> to vector<9x8xf32>
    %880 = arith.maximumf %877, %879 : vector<9x8xf32>
    %881 = vector.extract_strided_slice %875 {offsets = [0, 2, 0], sizes = [9, 1, 8], strides = [1, 1, 1]} : vector<9x9x8xf32> to vector<9x1x8xf32>
    %882 = vector.shape_cast %881 : vector<9x1x8xf32> to vector<9x8xf32>
    %883 = arith.maximumf %880, %882 : vector<9x8xf32>
    %884 = vector.extract_strided_slice %875 {offsets = [0, 3, 0], sizes = [9, 1, 8], strides = [1, 1, 1]} : vector<9x9x8xf32> to vector<9x1x8xf32>
    %885 = vector.shape_cast %884 : vector<9x1x8xf32> to vector<9x8xf32>
    %886 = arith.maximumf %883, %885 : vector<9x8xf32>
    %887 = vector.extract_strided_slice %875 {offsets = [0, 4, 0], sizes = [9, 1, 8], strides = [1, 1, 1]} : vector<9x9x8xf32> to vector<9x1x8xf32>
    %888 = vector.shape_cast %887 : vector<9x1x8xf32> to vector<9x8xf32>
    %889 = arith.maximumf %886, %888 : vector<9x8xf32>
    %890 = vector.extract_strided_slice %875 {offsets = [0, 5, 0], sizes = [9, 1, 8], strides = [1, 1, 1]} : vector<9x9x8xf32> to vector<9x1x8xf32>
    %891 = vector.shape_cast %890 : vector<9x1x8xf32> to vector<9x8xf32>
    %892 = arith.maximumf %889, %891 : vector<9x8xf32>
    %893 = vector.extract_strided_slice %875 {offsets = [0, 6, 0], sizes = [9, 1, 8], strides = [1, 1, 1]} : vector<9x9x8xf32> to vector<9x1x8xf32>
    %894 = vector.shape_cast %893 : vector<9x1x8xf32> to vector<9x8xf32>
    %895 = arith.maximumf %892, %894 : vector<9x8xf32>
    %896 = vector.extract_strided_slice %875 {offsets = [0, 7, 0], sizes = [9, 1, 8], strides = [1, 1, 1]} : vector<9x9x8xf32> to vector<9x1x8xf32>
    %897 = vector.shape_cast %896 : vector<9x1x8xf32> to vector<9x8xf32>
    %898 = arith.maximumf %895, %897 : vector<9x8xf32>
    %899 = vector.extract_strided_slice %875 {offsets = [0, 8, 0], sizes = [9, 1, 8], strides = [1, 1, 1]} : vector<9x9x8xf32> to vector<9x1x8xf32>
    %900 = vector.shape_cast %899 : vector<9x1x8xf32> to vector<9x8xf32>
    %901 = arith.maximumf %898, %900 : vector<9x8xf32>
    %902 = vector.shape_cast %901 : vector<9x8xf32> to vector<9x1x8xf32>
    %903 = vector.broadcast %902 : vector<9x1x8xf32> to vector<9x9x8xf32>
    %904 = arith.subf %875, %903 : vector<9x9x8xf32>
    %905 = math.exp %904 : vector<9x9x8xf32>
    %906 = vector.extract_strided_slice %905 {offsets = [0, 0, 0], sizes = [9, 1, 8], strides = [1, 1, 1]} : vector<9x9x8xf32> to vector<9x1x8xf32>
    %907 = vector.shape_cast %906 : vector<9x1x8xf32> to vector<9x8xf32>
    %908 = vector.extract_strided_slice %905 {offsets = [0, 1, 0], sizes = [9, 1, 8], strides = [1, 1, 1]} : vector<9x9x8xf32> to vector<9x1x8xf32>
    %909 = vector.shape_cast %908 : vector<9x1x8xf32> to vector<9x8xf32>
    %910 = arith.addf %907, %909 : vector<9x8xf32>
    %911 = vector.extract_strided_slice %905 {offsets = [0, 2, 0], sizes = [9, 1, 8], strides = [1, 1, 1]} : vector<9x9x8xf32> to vector<9x1x8xf32>
    %912 = vector.shape_cast %911 : vector<9x1x8xf32> to vector<9x8xf32>
    %913 = arith.addf %910, %912 : vector<9x8xf32>
    %914 = vector.extract_strided_slice %905 {offsets = [0, 3, 0], sizes = [9, 1, 8], strides = [1, 1, 1]} : vector<9x9x8xf32> to vector<9x1x8xf32>
    %915 = vector.shape_cast %914 : vector<9x1x8xf32> to vector<9x8xf32>
    %916 = arith.addf %913, %915 : vector<9x8xf32>
    %917 = vector.extract_strided_slice %905 {offsets = [0, 4, 0], sizes = [9, 1, 8], strides = [1, 1, 1]} : vector<9x9x8xf32> to vector<9x1x8xf32>
    %918 = vector.shape_cast %917 : vector<9x1x8xf32> to vector<9x8xf32>
    %919 = arith.addf %916, %918 : vector<9x8xf32>
    %920 = vector.extract_strided_slice %905 {offsets = [0, 5, 0], sizes = [9, 1, 8], strides = [1, 1, 1]} : vector<9x9x8xf32> to vector<9x1x8xf32>
    %921 = vector.shape_cast %920 : vector<9x1x8xf32> to vector<9x8xf32>
    %922 = arith.addf %919, %921 : vector<9x8xf32>
    %923 = vector.extract_strided_slice %905 {offsets = [0, 6, 0], sizes = [9, 1, 8], strides = [1, 1, 1]} : vector<9x9x8xf32> to vector<9x1x8xf32>
    %924 = vector.shape_cast %923 : vector<9x1x8xf32> to vector<9x8xf32>
    %925 = arith.addf %922, %924 : vector<9x8xf32>
    %926 = vector.extract_strided_slice %905 {offsets = [0, 7, 0], sizes = [9, 1, 8], strides = [1, 1, 1]} : vector<9x9x8xf32> to vector<9x1x8xf32>
    %927 = vector.shape_cast %926 : vector<9x1x8xf32> to vector<9x8xf32>
    %928 = arith.addf %925, %927 : vector<9x8xf32>
    %929 = vector.extract_strided_slice %905 {offsets = [0, 8, 0], sizes = [9, 1, 8], strides = [1, 1, 1]} : vector<9x9x8xf32> to vector<9x1x8xf32>
    %930 = vector.shape_cast %929 : vector<9x1x8xf32> to vector<9x8xf32>
    %931 = arith.addf %928, %930 : vector<9x8xf32>
    %932 = tpu.reciprocal %931 {approx = true} : vector<9x8xf32> -> vector<9x8xf32>
    %933 = vector.extract_strided_slice %905 {offsets = [0, 0, 0], sizes = [9, 1, 8], strides = [1, 1, 1]} : vector<9x9x8xf32> to vector<9x1x8xf32>
    %934 = vector.shape_cast %933 : vector<9x1x8xf32> to vector<9x8xf32>
    %935 = arith.mulf %934, %932 : vector<9x8xf32>
    %936 = vector.shape_cast %935 : vector<9x8xf32> to vector<9x1x8xf32>
    %937 = vector.extract_strided_slice %794 {offsets = [0, 0, 0], sizes = [1, 16, 8], strides = [1, 1, 1]} : vector<9x16x8xf32> to vector<1x16x8xf32>
    %938 = vector.shape_cast %937 : vector<1x16x8xf32> to vector<16x8xf32>
    %939 = vector.shape_cast %938 : vector<16x8xf32> to vector<1x16x8xf32>
    %940 = vector.broadcast %936 : vector<9x1x8xf32> to vector<9x16x8xf32>
    %941 = vector.broadcast %939 : vector<1x16x8xf32> to vector<9x16x8xf32>
    %942 = arith.mulf %940, %941 : vector<9x16x8xf32>
    %943 = arith.addf %791, %942 : vector<9x16x8xf32>
    %944 = vector.extract_strided_slice %905 {offsets = [0, 1, 0], sizes = [9, 1, 8], strides = [1, 1, 1]} : vector<9x9x8xf32> to vector<9x1x8xf32>
    %945 = vector.shape_cast %944 : vector<9x1x8xf32> to vector<9x8xf32>
    %946 = arith.mulf %945, %932 : vector<9x8xf32>
    %947 = vector.shape_cast %946 : vector<9x8xf32> to vector<9x1x8xf32>
    %948 = vector.extract_strided_slice %794 {offsets = [1, 0, 0], sizes = [1, 16, 8], strides = [1, 1, 1]} : vector<9x16x8xf32> to vector<1x16x8xf32>
    %949 = vector.shape_cast %948 : vector<1x16x8xf32> to vector<16x8xf32>
    %950 = vector.shape_cast %949 : vector<16x8xf32> to vector<1x16x8xf32>
    %951 = vector.broadcast %947 : vector<9x1x8xf32> to vector<9x16x8xf32>
    %952 = vector.broadcast %950 : vector<1x16x8xf32> to vector<9x16x8xf32>
    %953 = arith.mulf %951, %952 : vector<9x16x8xf32>
    %954 = arith.addf %943, %953 : vector<9x16x8xf32>
    %955 = vector.extract_strided_slice %905 {offsets = [0, 2, 0], sizes = [9, 1, 8], strides = [1, 1, 1]} : vector<9x9x8xf32> to vector<9x1x8xf32>
    %956 = vector.shape_cast %955 : vector<9x1x8xf32> to vector<9x8xf32>
    %957 = arith.mulf %956, %932 : vector<9x8xf32>
    %958 = vector.shape_cast %957 : vector<9x8xf32> to vector<9x1x8xf32>
    %959 = vector.extract_strided_slice %794 {offsets = [2, 0, 0], sizes = [1, 16, 8], strides = [1, 1, 1]} : vector<9x16x8xf32> to vector<1x16x8xf32>
    %960 = vector.shape_cast %959 : vector<1x16x8xf32> to vector<16x8xf32>
    %961 = vector.shape_cast %960 : vector<16x8xf32> to vector<1x16x8xf32>
    %962 = vector.broadcast %958 : vector<9x1x8xf32> to vector<9x16x8xf32>
    %963 = vector.broadcast %961 : vector<1x16x8xf32> to vector<9x16x8xf32>
    %964 = arith.mulf %962, %963 : vector<9x16x8xf32>
    %965 = arith.addf %954, %964 : vector<9x16x8xf32>
    %966 = vector.extract_strided_slice %905 {offsets = [0, 3, 0], sizes = [9, 1, 8], strides = [1, 1, 1]} : vector<9x9x8xf32> to vector<9x1x8xf32>
    %967 = vector.shape_cast %966 : vector<9x1x8xf32> to vector<9x8xf32>
    %968 = arith.mulf %967, %932 : vector<9x8xf32>
    %969 = vector.shape_cast %968 : vector<9x8xf32> to vector<9x1x8xf32>
    %970 = vector.extract_strided_slice %794 {offsets = [3, 0, 0], sizes = [1, 16, 8], strides = [1, 1, 1]} : vector<9x16x8xf32> to vector<1x16x8xf32>
    %971 = vector.shape_cast %970 : vector<1x16x8xf32> to vector<16x8xf32>
    %972 = vector.shape_cast %971 : vector<16x8xf32> to vector<1x16x8xf32>
    %973 = vector.broadcast %969 : vector<9x1x8xf32> to vector<9x16x8xf32>
    %974 = vector.broadcast %972 : vector<1x16x8xf32> to vector<9x16x8xf32>
    %975 = arith.mulf %973, %974 : vector<9x16x8xf32>
    %976 = arith.addf %965, %975 : vector<9x16x8xf32>
    %977 = vector.extract_strided_slice %905 {offsets = [0, 4, 0], sizes = [9, 1, 8], strides = [1, 1, 1]} : vector<9x9x8xf32> to vector<9x1x8xf32>
    %978 = vector.shape_cast %977 : vector<9x1x8xf32> to vector<9x8xf32>
    %979 = arith.mulf %978, %932 : vector<9x8xf32>
    %980 = vector.shape_cast %979 : vector<9x8xf32> to vector<9x1x8xf32>
    %981 = vector.extract_strided_slice %794 {offsets = [4, 0, 0], sizes = [1, 16, 8], strides = [1, 1, 1]} : vector<9x16x8xf32> to vector<1x16x8xf32>
    %982 = vector.shape_cast %981 : vector<1x16x8xf32> to vector<16x8xf32>
    %983 = vector.shape_cast %982 : vector<16x8xf32> to vector<1x16x8xf32>
    %984 = vector.broadcast %980 : vector<9x1x8xf32> to vector<9x16x8xf32>
    %985 = vector.broadcast %983 : vector<1x16x8xf32> to vector<9x16x8xf32>
    %986 = arith.mulf %984, %985 : vector<9x16x8xf32>
    %987 = arith.addf %976, %986 : vector<9x16x8xf32>
    %988 = vector.extract_strided_slice %905 {offsets = [0, 5, 0], sizes = [9, 1, 8], strides = [1, 1, 1]} : vector<9x9x8xf32> to vector<9x1x8xf32>
    %989 = vector.shape_cast %988 : vector<9x1x8xf32> to vector<9x8xf32>
    %990 = arith.mulf %989, %932 : vector<9x8xf32>
    %991 = vector.shape_cast %990 : vector<9x8xf32> to vector<9x1x8xf32>
    %992 = vector.extract_strided_slice %794 {offsets = [5, 0, 0], sizes = [1, 16, 8], strides = [1, 1, 1]} : vector<9x16x8xf32> to vector<1x16x8xf32>
    %993 = vector.shape_cast %992 : vector<1x16x8xf32> to vector<16x8xf32>
    %994 = vector.shape_cast %993 : vector<16x8xf32> to vector<1x16x8xf32>
    %995 = vector.broadcast %991 : vector<9x1x8xf32> to vector<9x16x8xf32>
    %996 = vector.broadcast %994 : vector<1x16x8xf32> to vector<9x16x8xf32>
    %997 = arith.mulf %995, %996 : vector<9x16x8xf32>
    %998 = arith.addf %987, %997 : vector<9x16x8xf32>
    %999 = vector.extract_strided_slice %905 {offsets = [0, 6, 0], sizes = [9, 1, 8], strides = [1, 1, 1]} : vector<9x9x8xf32> to vector<9x1x8xf32>
    %1000 = vector.shape_cast %999 : vector<9x1x8xf32> to vector<9x8xf32>
    %1001 = arith.mulf %1000, %932 : vector<9x8xf32>
    %1002 = vector.shape_cast %1001 : vector<9x8xf32> to vector<9x1x8xf32>
    %1003 = vector.extract_strided_slice %794 {offsets = [6, 0, 0], sizes = [1, 16, 8], strides = [1, 1, 1]} : vector<9x16x8xf32> to vector<1x16x8xf32>
    %1004 = vector.shape_cast %1003 : vector<1x16x8xf32> to vector<16x8xf32>
    %1005 = vector.shape_cast %1004 : vector<16x8xf32> to vector<1x16x8xf32>
    %1006 = vector.broadcast %1002 : vector<9x1x8xf32> to vector<9x16x8xf32>
    %1007 = vector.broadcast %1005 : vector<1x16x8xf32> to vector<9x16x8xf32>
    %1008 = arith.mulf %1006, %1007 : vector<9x16x8xf32>
    %1009 = arith.addf %998, %1008 : vector<9x16x8xf32>
    %1010 = vector.extract_strided_slice %905 {offsets = [0, 7, 0], sizes = [9, 1, 8], strides = [1, 1, 1]} : vector<9x9x8xf32> to vector<9x1x8xf32>
    %1011 = vector.shape_cast %1010 : vector<9x1x8xf32> to vector<9x8xf32>
    %1012 = arith.mulf %1011, %932 : vector<9x8xf32>
    %1013 = vector.shape_cast %1012 : vector<9x8xf32> to vector<9x1x8xf32>
    %1014 = vector.extract_strided_slice %794 {offsets = [7, 0, 0], sizes = [1, 16, 8], strides = [1, 1, 1]} : vector<9x16x8xf32> to vector<1x16x8xf32>
    %1015 = vector.shape_cast %1014 : vector<1x16x8xf32> to vector<16x8xf32>
    %1016 = vector.shape_cast %1015 : vector<16x8xf32> to vector<1x16x8xf32>
    %1017 = vector.broadcast %1013 : vector<9x1x8xf32> to vector<9x16x8xf32>
    %1018 = vector.broadcast %1016 : vector<1x16x8xf32> to vector<9x16x8xf32>
    %1019 = arith.mulf %1017, %1018 : vector<9x16x8xf32>
    %1020 = arith.addf %1009, %1019 : vector<9x16x8xf32>
    %1021 = vector.extract_strided_slice %905 {offsets = [0, 8, 0], sizes = [9, 1, 8], strides = [1, 1, 1]} : vector<9x9x8xf32> to vector<9x1x8xf32>
    %1022 = vector.shape_cast %1021 : vector<9x1x8xf32> to vector<9x8xf32>
    %1023 = arith.mulf %1022, %932 : vector<9x8xf32>
    %1024 = vector.shape_cast %1023 : vector<9x8xf32> to vector<9x1x8xf32>
    %1025 = vector.extract_strided_slice %794 {offsets = [8, 0, 0], sizes = [1, 16, 8], strides = [1, 1, 1]} : vector<9x16x8xf32> to vector<1x16x8xf32>
    %1026 = vector.shape_cast %1025 : vector<1x16x8xf32> to vector<16x8xf32>
    %1027 = vector.shape_cast %1026 : vector<16x8xf32> to vector<1x16x8xf32>
    %1028 = vector.broadcast %1024 : vector<9x1x8xf32> to vector<9x16x8xf32>
    %1029 = vector.broadcast %1027 : vector<1x16x8xf32> to vector<9x16x8xf32>
    %1030 = arith.mulf %1028, %1029 : vector<9x16x8xf32>
    %1031 = arith.addf %1020, %1030 : vector<9x16x8xf32>
    %c0_86 = arith.constant 0 : index
    %c0_87 = arith.constant 0 : index
    %c0_88 = arith.constant 0 : index
    %1032 = vector.load %arg5[%c0_86, %c0_87, %c0_88] : memref<1x16x1xf32, #tpu.memory_space<vmem>>, vector<1x16x1xf32>
    %1033 = vector.broadcast %1032 : vector<1x16x1xf32> to vector<9x16x8xf32>
    %1034 = arith.addf %1031, %1033 : vector<9x16x8xf32>
    %cst_89 = arith.constant 0.000000e+00 : f32
    %1035 = vector.broadcast %cst_89 : f32 to vector<9x16x8xf32>
    %1036 = arith.maximumf %1034, %1035 : vector<9x16x8xf32>
    %c0_90 = arith.constant 0 : index
    %c0_91 = arith.constant 0 : index
    %c0_92 = arith.constant 0 : index
    %1037 = vector.load %arg6[%c0_90, %c0_91, %c0_92] : memref<1x16x1xf32, #tpu.memory_space<vmem>>, vector<1x16x1xf32>
    %1038 = vector.broadcast %1037 : vector<1x16x1xf32> to vector<9x16x8xf32>
    %1039 = arith.mulf %1036, %1038 : vector<9x16x8xf32>
    %1040 = vector.extract_strided_slice %1039 {offsets = [0, 0, 0], sizes = [9, 1, 8], strides = [1, 1, 1]} : vector<9x16x8xf32> to vector<9x1x8xf32>
    %1041 = vector.shape_cast %1040 : vector<9x1x8xf32> to vector<9x8xf32>
    %1042 = vector.extract_strided_slice %1039 {offsets = [0, 1, 0], sizes = [9, 1, 8], strides = [1, 1, 1]} : vector<9x16x8xf32> to vector<9x1x8xf32>
    %1043 = vector.shape_cast %1042 : vector<9x1x8xf32> to vector<9x8xf32>
    %1044 = arith.addf %1041, %1043 : vector<9x8xf32>
    %1045 = vector.extract_strided_slice %1039 {offsets = [0, 2, 0], sizes = [9, 1, 8], strides = [1, 1, 1]} : vector<9x16x8xf32> to vector<9x1x8xf32>
    %1046 = vector.shape_cast %1045 : vector<9x1x8xf32> to vector<9x8xf32>
    %1047 = arith.addf %1044, %1046 : vector<9x8xf32>
    %1048 = vector.extract_strided_slice %1039 {offsets = [0, 3, 0], sizes = [9, 1, 8], strides = [1, 1, 1]} : vector<9x16x8xf32> to vector<9x1x8xf32>
    %1049 = vector.shape_cast %1048 : vector<9x1x8xf32> to vector<9x8xf32>
    %1050 = arith.addf %1047, %1049 : vector<9x8xf32>
    %1051 = vector.extract_strided_slice %1039 {offsets = [0, 4, 0], sizes = [9, 1, 8], strides = [1, 1, 1]} : vector<9x16x8xf32> to vector<9x1x8xf32>
    %1052 = vector.shape_cast %1051 : vector<9x1x8xf32> to vector<9x8xf32>
    %1053 = arith.addf %1050, %1052 : vector<9x8xf32>
    %1054 = vector.extract_strided_slice %1039 {offsets = [0, 5, 0], sizes = [9, 1, 8], strides = [1, 1, 1]} : vector<9x16x8xf32> to vector<9x1x8xf32>
    %1055 = vector.shape_cast %1054 : vector<9x1x8xf32> to vector<9x8xf32>
    %1056 = arith.addf %1053, %1055 : vector<9x8xf32>
    %1057 = vector.extract_strided_slice %1039 {offsets = [0, 6, 0], sizes = [9, 1, 8], strides = [1, 1, 1]} : vector<9x16x8xf32> to vector<9x1x8xf32>
    %1058 = vector.shape_cast %1057 : vector<9x1x8xf32> to vector<9x8xf32>
    %1059 = arith.addf %1056, %1058 : vector<9x8xf32>
    %1060 = vector.extract_strided_slice %1039 {offsets = [0, 7, 0], sizes = [9, 1, 8], strides = [1, 1, 1]} : vector<9x16x8xf32> to vector<9x1x8xf32>
    %1061 = vector.shape_cast %1060 : vector<9x1x8xf32> to vector<9x8xf32>
    %1062 = arith.addf %1059, %1061 : vector<9x8xf32>
    %1063 = vector.extract_strided_slice %1039 {offsets = [0, 8, 0], sizes = [9, 1, 8], strides = [1, 1, 1]} : vector<9x16x8xf32> to vector<9x1x8xf32>
    %1064 = vector.shape_cast %1063 : vector<9x1x8xf32> to vector<9x8xf32>
    %1065 = arith.addf %1062, %1064 : vector<9x8xf32>
    %1066 = vector.extract_strided_slice %1039 {offsets = [0, 9, 0], sizes = [9, 1, 8], strides = [1, 1, 1]} : vector<9x16x8xf32> to vector<9x1x8xf32>
    %1067 = vector.shape_cast %1066 : vector<9x1x8xf32> to vector<9x8xf32>
    %1068 = arith.addf %1065, %1067 : vector<9x8xf32>
    %1069 = vector.extract_strided_slice %1039 {offsets = [0, 10, 0], sizes = [9, 1, 8], strides = [1, 1, 1]} : vector<9x16x8xf32> to vector<9x1x8xf32>
    %1070 = vector.shape_cast %1069 : vector<9x1x8xf32> to vector<9x8xf32>
    %1071 = arith.addf %1068, %1070 : vector<9x8xf32>
    %1072 = vector.extract_strided_slice %1039 {offsets = [0, 11, 0], sizes = [9, 1, 8], strides = [1, 1, 1]} : vector<9x16x8xf32> to vector<9x1x8xf32>
    %1073 = vector.shape_cast %1072 : vector<9x1x8xf32> to vector<9x8xf32>
    %1074 = arith.addf %1071, %1073 : vector<9x8xf32>
    %1075 = vector.extract_strided_slice %1039 {offsets = [0, 12, 0], sizes = [9, 1, 8], strides = [1, 1, 1]} : vector<9x16x8xf32> to vector<9x1x8xf32>
    %1076 = vector.shape_cast %1075 : vector<9x1x8xf32> to vector<9x8xf32>
    %1077 = arith.addf %1074, %1076 : vector<9x8xf32>
    %1078 = vector.extract_strided_slice %1039 {offsets = [0, 13, 0], sizes = [9, 1, 8], strides = [1, 1, 1]} : vector<9x16x8xf32> to vector<9x1x8xf32>
    %1079 = vector.shape_cast %1078 : vector<9x1x8xf32> to vector<9x8xf32>
    %1080 = arith.addf %1077, %1079 : vector<9x8xf32>
    %1081 = vector.extract_strided_slice %1039 {offsets = [0, 14, 0], sizes = [9, 1, 8], strides = [1, 1, 1]} : vector<9x16x8xf32> to vector<9x1x8xf32>
    %1082 = vector.shape_cast %1081 : vector<9x1x8xf32> to vector<9x8xf32>
    %1083 = arith.addf %1080, %1082 : vector<9x8xf32>
    %1084 = vector.extract_strided_slice %1039 {offsets = [0, 15, 0], sizes = [9, 1, 8], strides = [1, 1, 1]} : vector<9x16x8xf32> to vector<9x1x8xf32>
    %1085 = vector.shape_cast %1084 : vector<9x1x8xf32> to vector<9x8xf32>
    %1086 = arith.addf %1083, %1085 : vector<9x8xf32>
    %1087 = vector.extract_strided_slice %1086 {offsets = [0, 0], sizes = [1, 8], strides = [1, 1]} : vector<9x8xf32> to vector<1x8xf32>
    %1088 = vector.extract_strided_slice %1086 {offsets = [1, 0], sizes = [1, 8], strides = [1, 1]} : vector<9x8xf32> to vector<1x8xf32>
    %1089 = arith.maximumf %1087, %1088 : vector<1x8xf32>
    %1090 = vector.extract_strided_slice %1086 {offsets = [2, 0], sizes = [1, 8], strides = [1, 1]} : vector<9x8xf32> to vector<1x8xf32>
    %1091 = arith.maximumf %1089, %1090 : vector<1x8xf32>
    %1092 = vector.extract_strided_slice %1086 {offsets = [3, 0], sizes = [1, 8], strides = [1, 1]} : vector<9x8xf32> to vector<1x8xf32>
    %1093 = arith.maximumf %1091, %1092 : vector<1x8xf32>
    %1094 = vector.extract_strided_slice %1086 {offsets = [4, 0], sizes = [1, 8], strides = [1, 1]} : vector<9x8xf32> to vector<1x8xf32>
    %1095 = arith.maximumf %1093, %1094 : vector<1x8xf32>
    %1096 = vector.extract_strided_slice %1086 {offsets = [5, 0], sizes = [1, 8], strides = [1, 1]} : vector<9x8xf32> to vector<1x8xf32>
    %1097 = arith.maximumf %1095, %1096 : vector<1x8xf32>
    %1098 = vector.extract_strided_slice %1086 {offsets = [6, 0], sizes = [1, 8], strides = [1, 1]} : vector<9x8xf32> to vector<1x8xf32>
    %1099 = arith.maximumf %1097, %1098 : vector<1x8xf32>
    %1100 = vector.extract_strided_slice %1086 {offsets = [7, 0], sizes = [1, 8], strides = [1, 1]} : vector<9x8xf32> to vector<1x8xf32>
    %1101 = arith.maximumf %1099, %1100 : vector<1x8xf32>
    %1102 = vector.extract_strided_slice %1086 {offsets = [8, 0], sizes = [1, 8], strides = [1, 1]} : vector<9x8xf32> to vector<1x8xf32>
    %1103 = arith.maximumf %1101, %1102 : vector<1x8xf32>
    %1104 = vector.broadcast %1103 : vector<1x8xf32> to vector<9x8xf32>
    %1105 = arith.subf %1086, %1104 : vector<9x8xf32>
    %1106 = math.exp %1105 : vector<9x8xf32>
    %1107 = vector.extract_strided_slice %1106 {offsets = [0, 0], sizes = [1, 8], strides = [1, 1]} : vector<9x8xf32> to vector<1x8xf32>
    %1108 = vector.extract_strided_slice %1106 {offsets = [1, 0], sizes = [1, 8], strides = [1, 1]} : vector<9x8xf32> to vector<1x8xf32>
    %1109 = arith.addf %1107, %1108 : vector<1x8xf32>
    %1110 = vector.extract_strided_slice %1106 {offsets = [2, 0], sizes = [1, 8], strides = [1, 1]} : vector<9x8xf32> to vector<1x8xf32>
    %1111 = arith.addf %1109, %1110 : vector<1x8xf32>
    %1112 = vector.extract_strided_slice %1106 {offsets = [3, 0], sizes = [1, 8], strides = [1, 1]} : vector<9x8xf32> to vector<1x8xf32>
    %1113 = arith.addf %1111, %1112 : vector<1x8xf32>
    %1114 = vector.extract_strided_slice %1106 {offsets = [4, 0], sizes = [1, 8], strides = [1, 1]} : vector<9x8xf32> to vector<1x8xf32>
    %1115 = arith.addf %1113, %1114 : vector<1x8xf32>
    %1116 = vector.extract_strided_slice %1106 {offsets = [5, 0], sizes = [1, 8], strides = [1, 1]} : vector<9x8xf32> to vector<1x8xf32>
    %1117 = arith.addf %1115, %1116 : vector<1x8xf32>
    %1118 = vector.extract_strided_slice %1106 {offsets = [6, 0], sizes = [1, 8], strides = [1, 1]} : vector<9x8xf32> to vector<1x8xf32>
    %1119 = arith.addf %1117, %1118 : vector<1x8xf32>
    %1120 = vector.extract_strided_slice %1106 {offsets = [7, 0], sizes = [1, 8], strides = [1, 1]} : vector<9x8xf32> to vector<1x8xf32>
    %1121 = arith.addf %1119, %1120 : vector<1x8xf32>
    %1122 = vector.extract_strided_slice %1106 {offsets = [8, 0], sizes = [1, 8], strides = [1, 1]} : vector<9x8xf32> to vector<1x8xf32>
    %1123 = arith.addf %1121, %1122 : vector<1x8xf32>
    %1124 = vector.broadcast %1123 : vector<1x8xf32> to vector<9x8xf32>
    %1125 = arith.divf %1106, %1124 : vector<9x8xf32>
    %c0_93 = arith.constant 0 : index
    %c0_94 = arith.constant 0 : index
    %1126 = vector.load %arg7[%c0_93, %c0_94] : memref<9x8xf32, #tpu.memory_space<vmem>>, vector<9x8xf32>
    tpu.vector_store %arg7[%c0_93, %c0_94], %1125 {strides = array<i32>} : memref<9x8xf32, #tpu.memory_space<vmem>>, vector<9x8xf32>,
    return
  }
  func.func @transform_0(%arg0: i32) -> (i32, i32, i32) {
    %c0_i32 = arith.constant 0 : i32
    %c0_i32_0 = arith.constant 0 : i32
    %c0_i32_1 = arith.constant 0 : i32
    return %c0_i32, %c0_i32_0, %arg0 : i32, i32, i32
  }
  func.func @transform_1(%arg0: i32) -> (i32, i32) {
    %c0_i32 = arith.constant 0 : i32
    %c0_i32_0 = arith.constant 0 : i32
    return %c0_i32, %arg0 : i32, i32
  }
  func.func @transform_2(%arg0: i32) -> (i32, i32) {
    %c0_i32 = arith.constant 0 : i32
    %c0_i32_0 = arith.constant 0 : i32
    %c0_i32_1 = arith.constant 0 : i32
    return %c0_i32, %c0_i32_0 : i32, i32
  }
  func.func @transform_3(%arg0: i32) -> (i32, i32) {
    %c0_i32 = arith.constant 0 : i32
    %c0_i32_0 = arith.constant 0 : i32
    %c0_i32_1 = arith.constant 0 : i32
    return %c0_i32, %c0_i32_0 : i32, i32
  }
  func.func @transform_4(%arg0: i32) -> (i32, i32, i32) {
    %c0_i32 = arith.constant 0 : i32
    %c0_i32_0 = arith.constant 0 : i32
    %c0_i32_1 = arith.constant 0 : i32
    %c0_i32_2 = arith.constant 0 : i32
    return %c0_i32, %c0_i32_0, %c0_i32_1 : i32, i32, i32
  }
  func.func @transform_5(%arg0: i32) -> (i32, i32, i32) {
    %c0_i32 = arith.constant 0 : i32
    %c0_i32_0 = arith.constant 0 : i32
    %c0_i32_1 = arith.constant 0 : i32
    %c0_i32_2 = arith.constant 0 : i32
    return %c0_i32, %c0_i32_0, %c0_i32_1 : i32, i32, i32
  }
  func.func @transform_6(%arg0: i32) -> (i32, i32) {
    %c0_i32 = arith.constant 0 : i32
    %c0_i32_0 = arith.constant 0 : i32
    return %c0_i32, %arg0 : i32, i32
  }
}

</mosaic_0001>

<llo_original>
// kernel: tpu_custom_call.1
$region0: #{tpu_custom_call.1}
  #allocation0 [shape = 'u32[]', space=smem, size = 0x4, offset = 0x4, fixed_abs, tag = 'smem constant byte address 0x4 - core index']
  #allocation1 [shape = 'u32[144,128]{1,0:T(1,128)}', space=vmem, size = 0x12000, scoped, tag = 'internal scratch']
  #allocation2 [shape = 'f32[9,128,8]{2,1,0:T(8,128)}', space=vmem, size = 0x90000, scoped, tag = 'scratch operand']
  %s0 = inlined_call_operand.vmem [shape: f32[8,32,8], index: 0, kind: input, shape index: {}]
  %s1 = inlined_call_operand.vmem [shape: f32[32,8], index: 1, kind: input, shape index: {}]
  %s2 = inlined_call_operand.vmem [shape: f32[128,32], index: 2, kind: input, shape index: {}]
  %s3 = inlined_call_operand.vmem [shape: f32[128,1], index: 3, kind: input, shape index: {}]
  %s4 = inlined_call_operand.vmem [shape: f32[1,16,1], index: 4, kind: input, shape index: {}]
  %s5 = inlined_call_operand.vmem [shape: f32[1,16,1], index: 5, kind: input, shape index: {}]
  %s6 = inlined_call_operand.vmem [shape: f32[9,8], index: 6, kind: output, shape index: {}]
  %s7 = sld [smem:[#allocation0]]
  $region34: #{tpu_custom_call.1} parent=0
    _
  %s9 = ssub.s32 1, %s7
  %s10 = scalar_select 0, %s9, %s7
  // Predicated region
  $region2: #{tpu_custom_call.1} parent=0 // pred_check
    _
  $region3: #{tpu_custom_call.1} parent=0 // pred_check_branch
    %12 = sbr.rel (0) target = $region5
  $region4: #{tpu_custom_call.1} parent=0 // pred_region
    _
  $region5: #{tpu_custom_call.1} parent=0 // pred_fallthru
    _
  // Predicated region
  $region6: #{tpu_custom_call.1} parent=0 // pred_check
    _
  $region7: #{tpu_custom_call.1} parent=0 // pred_check_branch
    %14 = sbr.rel (0) target = $region9
  $region8: #{tpu_custom_call.1} parent=0 // pred_region
    _
  $region9: #{tpu_custom_call.1} parent=0 // pred_fallthru
    _
  // Predicated region
  $region10: #{tpu_custom_call.1} parent=0 // pred_check
    _
  $region11: #{tpu_custom_call.1} parent=0 // pred_check_branch
    %16 = sbr.rel (0) target = $region13
  $region12: #{tpu_custom_call.1} parent=0 // pred_region
    _
  $region13: #{tpu_custom_call.1} parent=0 // pred_fallthru
    _
  // Predicated region
  $region14: #{tpu_custom_call.1} parent=0 // pred_check
    _
  $region15: #{tpu_custom_call.1} parent=0 // pred_check_branch
    %18 = sbr.rel (0) target = $region17
  $region16: #{tpu_custom_call.1} parent=0 // pred_region
    _
  $region17: #{tpu_custom_call.1} parent=0 // pred_fallthru
    _
  // Predicated region
  $region18: #{tpu_custom_call.1} parent=0 // pred_check
    _
  $region19: #{tpu_custom_call.1} parent=0 // pred_check_branch
    %20 = sbr.rel (0) target = $region21
  $region20: #{tpu_custom_call.1} parent=0 // pred_region
    _
  $region21: #{tpu_custom_call.1} parent=0 // pred_fallthru
    _
  // Predicated region
  $region22: #{tpu_custom_call.1} parent=0 // pred_check
    _
  $region23: #{tpu_custom_call.1} parent=0 // pred_check_branch
    %22 = sbr.rel (0) target = $region25
  $region24: #{tpu_custom_call.1} parent=0 // pred_region
    _
  $region25: #{tpu_custom_call.1} parent=0 // pred_fallthru
    _
  %v23 = vld [vmem:[%s2] sm:$0xff]
  %v24 = vld [vmem:[%s2 + $0x8] sm:$0xff]
  %v25 = vld [vmem:[%s2 + $0x10] sm:$0xff]
  %v26 = vld [vmem:[%s2 + $0x18] sm:$0xff]
  %v27 = vld [vmem:[%s2 + $0x20] sm:$0xff]
  %v28 = vld [vmem:[%s2 + $0x28] sm:$0xff]
  %v29 = vld [vmem:[%s2 + $0x30] sm:$0xff]
  %v30 = vld [vmem:[%s2 + $0x38] sm:$0xff]
  %v31 = vld [vmem:[%s2 + $0x40] sm:$0xff]
  %v32 = vld [vmem:[%s2 + $0x48] sm:$0xff]
  %v33 = vld [vmem:[%s2 + $0x50] sm:$0xff]
  %v34 = vld [vmem:[%s2 + $0x58] sm:$0xff]
  %v35 = vld [vmem:[%s2 + $0x60] sm:$0xff]
  %v36 = vld [vmem:[%s2 + $0x68] sm:$0xff]
  %v37 = vld [vmem:[%s2 + $0x70] sm:$0xff]
  %v38 = vld [vmem:[%s2 + $0x78] sm:$0xff]
  %v39 = vld [vmem:[%s3] sm:$0xff]
  %v40 = vld [vmem:[%s3 + $0x8] sm:$0xff]
  %v41 = vld [vmem:[%s3 + $0x10] sm:$0xff]
  %v42 = vld [vmem:[%s3 + $0x18] sm:$0xff]
  %v43 = vld [vmem:[%s3 + $0x20] sm:$0xff]
  %v44 = vld [vmem:[%s3 + $0x28] sm:$0xff]
  %v45 = vld [vmem:[%s3 + $0x30] sm:$0xff]
  %v46 = vld [vmem:[%s3 + $0x38] sm:$0xff]
  %v47 = vld [vmem:[%s3 + $0x40] sm:$0xff]
  %v48 = vld [vmem:[%s3 + $0x48] sm:$0xff]
  %v49 = vld [vmem:[%s3 + $0x50] sm:$0xff]
  %v50 = vld [vmem:[%s3 + $0x58] sm:$0xff]
  %v51 = vld [vmem:[%s3 + $0x60] sm:$0xff]
  %v52 = vld [vmem:[%s3 + $0x68] sm:$0xff]
  %v53 = vld [vmem:[%s3 + $0x70] sm:$0xff]
  %v54 = vld [vmem:[%s3 + $0x78] sm:$0xff]
  %v55 = vld [vmem:[%s0] sm:$0xff]
  %v56 = vld [vmem:[%s0 + $0x8] sm:$0xff]
  %v57 = vld [vmem:[%s0 + $0x10] sm:$0xff]
  %v58 = vld [vmem:[%s0 + $0x18] sm:$0xff]
  %60 = vset.pattern.permute.xlu0 0
  %61 = vperm.xlu0 %60, %v39
  %v62 = vpop.permute.xlu0 %61
  %65 = vset.pattern.permute.xlu0 0
  %66 = vperm.xlu0 %65, %v40
  %v67 = vpop.permute.xlu0 %66
  %70 = vset.pattern.permute.xlu0 0
  %71 = vperm.xlu0 %70, %v41
  %v72 = vpop.permute.xlu0 %71
  %75 = vset.pattern.permute.xlu0 0
  %76 = vperm.xlu0 %75, %v42
  %v77 = vpop.permute.xlu0 %76
  %80 = vset.pattern.permute.xlu0 0
  %81 = vperm.xlu0 %80, %v43
  %v82 = vpop.permute.xlu0 %81
  %85 = vset.pattern.permute.xlu0 0
  %86 = vperm.xlu0 %85, %v44
  %v87 = vpop.permute.xlu0 %86
  %90 = vset.pattern.permute.xlu0 0
  %91 = vperm.xlu0 %90, %v45
  %v92 = vpop.permute.xlu0 %91
  %95 = vset.pattern.permute.xlu0 0
  %96 = vperm.xlu0 %95, %v46
  %v97 = vpop.permute.xlu0 %96
  %100 = vset.pattern.permute.xlu0 0
  %101 = vperm.xlu0 %100, %v47
  %v102 = vpop.permute.xlu0 %101
  %105 = vset.pattern.permute.xlu0 0
  %106 = vperm.xlu0 %105, %v48
  %v107 = vpop.permute.xlu0 %106
  %110 = vset.pattern.permute.xlu0 0
  %111 = vperm.xlu0 %110, %v49
  %v112 = vpop.permute.xlu0 %111
  %115 = vset.pattern.permute.xlu0 0
  %116 = vperm.xlu0 %115, %v50
  %v117 = vpop.permute.xlu0 %116
  %120 = vset.pattern.permute.xlu0 0
  %121 = vperm.xlu0 %120, %v51
  %v122 = vpop.permute.xlu0 %121
  %125 = vset.pattern.permute.xlu0 0
  %126 = vperm.xlu0 %125, %v52
  %v127 = vpop.permute.xlu0 %126
  %130 = vset.pattern.permute.xlu0 0
  %131 = vperm.xlu0 %130, %v53
  %v132 = vpop.permute.xlu0 %131
  %135 = vset.pattern.permute.xlu0 0
  %136 = vperm.xlu0 %135, %v54
  %v137 = vpop.permute.xlu0 %136
  %vm139 = vcmask 261120
  %v141 = vsel %vm139, %v23, 0
  %v144 = vsel %vm139, %v24, 0
  %v147 = vsel %vm139, %v25, 0
  %v150 = vsel %vm139, %v26, 0
  %v153 = vsel %vm139, %v27, 0
  %v156 = vsel %vm139, %v28, 0
  %v159 = vsel %vm139, %v29, 0
  %v162 = vsel %vm139, %v30, 0
  %v165 = vsel %vm139, %v31, 0
  %v168 = vsel %vm139, %v32, 0
  %v171 = vsel %vm139, %v33, 0
  %v174 = vsel %vm139, %v34, 0
  %v177 = vsel %vm139, %v35, 0
  %v180 = vsel %vm139, %v36, 0
  %v183 = vsel %vm139, %v37, 0
  %v186 = vsel %vm139, %v38, 0
  %188 = vmatprep.subr.mxu0 0.0
  %189 = vmatpush1.msra.mxu0 0.0
  %190 = vmatprep.subr.mxu0 0.0
  %191 = vmatpush1.msra.mxu0 0.0
  %192 = vmatprep.subr.mxu0 0.0
  %193 = vmatpush1.msra.mxu0 0.0
  %194 = vmatprep.subr.mxu0 0.0
  %195 = vmatpush1.msra.mxu0 0.0
  %196 = vmatprep.subr.mxu0 0.0
  %197 = vmatpush1.msra.mxu0 0.0
  %198 = vmatprep.subr.mxu0 0.0
  %199 = vmatpush1.msra.mxu0 0.0
  %200 = vmatprep.subr.mxu0 0.0
  %201 = vmatpush1.msra.mxu0 0.0
  %202 = vmatprep.subr.mxu0 0.0
  %203 = vmatpush1.msra.mxu0 0.0
  %204 = vmatprep.subr.mxu0 0.0
  %205 = vmatpush1.msra.mxu0 0.0
  %206 = vmatprep.subr.mxu0 0.0
  %207 = vmatpush1.msra.mxu0 0.0
  %208 = vmatprep.subr.mxu0 0.0
  %209 = vmatpush1.msra.mxu0 0.0
  %210 = vmatprep.subr.mxu0 0.0
  %211 = vmatpush1.msra.mxu0 0.0
  %212 = vmatprep.subr.mxu0 0.0
  %213 = vmatpush1.msra.mxu0 %v58
  %214 = vmatprep.subr.mxu0 0.0
  %215 = vmatpush1.msra.mxu0 %v57
  %216 = vmatprep.subr.mxu0 0.0
  %217 = vmatpush1.msra.mxu0 %v56
  %218 = vmatprep.subr.mxu0 0.0
  %219 = vmatpush1.msra.mxu0 %v55
  %220 = vmatprep.subr.mxu0 0.0
  %221 = vmatpush2.msra.mxu0 0.0
  %222 = vmatprep.subr.mxu0 0.0
  %223 = vmatpush2.msra.mxu0 0.0
  %224 = vmatprep.subr.mxu0 0.0
  %225 = vmatpush2.msra.mxu0 0.0
  %226 = vmatprep.subr.mxu0 0.0
  %227 = vmatpush2.msra.mxu0 0.0
  %228 = vmatprep.subr.mxu0 0.0
  %229 = vmatpush2.msra.mxu0 0.0
  %230 = vmatprep.subr.mxu0 0.0
  %231 = vmatpush2.msra.mxu0 0.0
  %232 = vmatprep.subr.mxu0 0.0
  %233 = vmatpush2.msra.mxu0 0.0
  %234 = vmatprep.subr.mxu0 0.0
  %235 = vmatpush2.msra.mxu0 0.0
  %236 = vmatprep.subr.mxu0 0.0
  %237 = vmatpush2.msra.mxu0 0.0
  %238 = vmatprep.subr.mxu0 0.0
  %239 = vmatpush2.msra.mxu0 0.0
  %240 = vmatprep.subr.mxu0 0.0
  %241 = vmatpush2.msra.mxu0 0.0
  %242 = vmatprep.subr.mxu0 0.0
  %243 = vmatpush2.msra.mxu0 0.0
  %244 = vmatprep.subr.mxu0 0.0
  %245 = vmatpush2.msra.mxu0 0.0
  %246 = vmatprep.subr.mxu0 0.0
  %247 = vmatpush2.msra.mxu0 0.0
  %248 = vmatprep.subr.mxu0 0.0
  %249 = vmatpush2.msra.mxu0 0.0
  %250 = vmatprep.subr.mxu0 0.0
  %251 = vmatpush2.msra.mxu0 0.0
  %252 = vmatprep.mubr.f32.mxu0 0.0
  %253 = vmatmul.mubr.f32.gmra.mxu0 %v141
  %v254 = vpop.f32.mrf.mxu0
  %v255 = vadd.f32 %v62, %v254
  %v256 = vpop.f32.mrf.mxu0
  %257 = vmatprep.mubr.f32.mxu0 0.0
  %258 = vmatmul.mubr.f32.gmra.mxu0 %v144
  %v259 = vpop.f32.mrf.mxu0
  %v260 = vadd.f32 %v67, %v259
  %v261 = vpop.f32.mrf.mxu0
  %262 = vmatprep.mubr.f32.mxu0 0.0
  %263 = vmatmul.mubr.f32.gmra.mxu0 %v147
  %v264 = vpop.f32.mrf.mxu0
  %v265 = vadd.f32 %v72, %v264
  %v266 = vpop.f32.mrf.mxu0
  %267 = vmatprep.mubr.f32.mxu0 0.0
  %268 = vmatmul.mubr.f32.gmra.mxu0 %v150
  %v269 = vpop.f32.mrf.mxu0
  %v270 = vadd.f32 %v77, %v269
  %v271 = vpop.f32.mrf.mxu0
  %272 = vmatprep.mubr.f32.mxu0 0.0
  %273 = vmatmul.mubr.f32.gmra.mxu0 %v153
  %v274 = vpop.f32.mrf.mxu0
  %v275 = vadd.f32 %v82, %v274
  %v276 = vpop.f32.mrf.mxu0
  %277 = vmatprep.mubr.f32.mxu0 0.0
  %278 = vmatmul.mubr.f32.gmra.mxu0 %v156
  %v279 = vpop.f32.mrf.mxu0
  %v280 = vadd.f32 %v87, %v279
  %v281 = vpop.f32.mrf.mxu0
  %282 = vmatprep.mubr.f32.mxu0 0.0
  %283 = vmatmul.mubr.f32.gmra.mxu0 %v159
  %v284 = vpop.f32.mrf.mxu0
  %v285 = vadd.f32 %v92, %v284
  %v286 = vpop.f32.mrf.mxu0
  %287 = vmatprep.mubr.f32.mxu0 0.0
  %288 = vmatmul.mubr.f32.gmra.mxu0 %v162
  %v289 = vpop.f32.mrf.mxu0
  %v290 = vadd.f32 %v97, %v289
  %v291 = vpop.f32.mrf.mxu0
  %292 = vmatprep.mubr.f32.mxu0 0.0
  %293 = vmatmul.mubr.f32.gmra.mxu0 %v165
  %v294 = vpop.f32.mrf.mxu0
  %v295 = vadd.f32 %v102, %v294
  %v296 = vpop.f32.mrf.mxu0
  %297 = vmatprep.mubr.f32.mxu0 0.0
  %298 = vmatmul.mubr.f32.gmra.mxu0 %v168
  %v299 = vpop.f32.mrf.mxu0
  %v300 = vadd.f32 %v107, %v299
  %v301 = vpop.f32.mrf.mxu0
  %302 = vmatprep.mubr.f32.mxu0 0.0
  %303 = vmatmul.mubr.f32.gmra.mxu0 %v171
  %v304 = vpop.f32.mrf.mxu0
  %v305 = vadd.f32 %v112, %v304
  %v306 = vpop.f32.mrf.mxu0
  %307 = vmatprep.mubr.f32.mxu0 0.0
  %308 = vmatmul.mubr.f32.gmra.mxu0 %v174
  %v309 = vpop.f32.mrf.mxu0
  %v310 = vadd.f32 %v117, %v309
  %v311 = vpop.f32.mrf.mxu0
  %312 = vmatprep.mubr.f32.mxu0 0.0
  %313 = vmatmul.mubr.f32.gmra.mxu0 %v177
  %v314 = vpop.f32.mrf.mxu0
  %v315 = vadd.f32 %v122, %v314
  %v316 = vpop.f32.mrf.mxu0
  %317 = vmatprep.mubr.f32.mxu0 0.0
  %318 = vmatmul.mubr.f32.gmra.mxu0 %v180
  %v319 = vpop.f32.mrf.mxu0
  %v320 = vadd.f32 %v127, %v319
  %v321 = vpop.f32.mrf.mxu0
  %322 = vmatprep.mubr.f32.mxu0 0.0
  %323 = vmatmul.mubr.f32.gmra.mxu0 %v183
  %v324 = vpop.f32.mrf.mxu0
  %v325 = vadd.f32 %v132, %v324
  %v326 = vpop.f32.mrf.mxu0
  %327 = vmatprep.mubr.f32.mxu0 0.0
  %328 = vmatmul.mubr.f32.gmra.mxu0 %v186
  %v329 = vpop.f32.mrf.mxu0
  %v330 = vadd.f32 %v137, %v329
  %v331 = vpop.f32.mrf.mxu0
  %332 = vdwg.mxu0
  %vm333 = vcmask 64512
  %334 = vst.msk [vmem:[#allocation2] sm:$0xff] %vm333, %v255
  %335 = vst.msk [vmem:[#allocation2 + $0x8] sm:$0xff] %vm333, %v260
  %336 = vst.msk [vmem:[#allocation2 + $0x10] sm:$0xff] %vm333, %v265
  %337 = vst.msk [vmem:[#allocation2 + $0x18] sm:$0xff] %vm333, %v270
  %338 = vst.msk [vmem:[#allocation2 + $0x20] sm:$0xff] %vm333, %v275
  %339 = vst.msk [vmem:[#allocation2 + $0x28] sm:$0xff] %vm333, %v280
  %340 = vst.msk [vmem:[#allocation2 + $0x30] sm:$0xff] %vm333, %v285
  %341 = vst.msk [vmem:[#allocation2 + $0x38] sm:$0xff] %vm333, %v290
  %342 = vst.msk [vmem:[#allocation2 + $0x40] sm:$0xff] %vm333, %v295
  %343 = vst.msk [vmem:[#allocation2 + $0x48] sm:$0xff] %vm333, %v300
  %344 = vst.msk [vmem:[#allocation2 + $0x50] sm:$0xff] %vm333, %v305
  %345 = vst.msk [vmem:[#allocation2 + $0x58] sm:$0xff] %vm333, %v310
  %346 = vst.msk [vmem:[#allocation2 + $0x60] sm:$0xff] %vm333, %v315
  %347 = vst.msk [vmem:[#allocation2 + $0x68] sm:$0xff] %vm333, %v320
  %348 = vst.msk [vmem:[#allocation2 + $0x70] sm:$0xff] %vm333, %v325
  %349 = vst.msk [vmem:[#allocation2 + $0x78] sm:$0xff] %vm333, %v330
  %s350 = scalar_lea.vmem %s0, 32
  %v351 = vld [vmem:[%s350] sm:$0xff]
  %v352 = vld [vmem:[%s350 + $0x8] sm:$0xff]
  %v353 = vld [vmem:[%s350 + $0x10] sm:$0xff]
  %v354 = vld [vmem:[%s350 + $0x18] sm:$0xff]
  %355 = vmatprep.subr.mxu0 0.0
  %356 = vmatpush1.msra.mxu0 0.0
  %357 = vmatprep.subr.mxu0 0.0
  %358 = vmatpush1.msra.mxu0 0.0
  %359 = vmatprep.subr.mxu0 0.0
  %360 = vmatpush1.msra.mxu0 0.0
  %361 = vmatprep.subr.mxu0 0.0
  %362 = vmatpush1.msra.mxu0 0.0
  %363 = vmatprep.subr.mxu0 0.0
  %364 = vmatpush1.msra.mxu0 0.0
  %365 = vmatprep.subr.mxu0 0.0
  %366 = vmatpush1.msra.mxu0 0.0
  %367 = vmatprep.subr.mxu0 0.0
  %368 = vmatpush1.msra.mxu0 0.0
  %369 = vmatprep.subr.mxu0 0.0
  %370 = vmatpush1.msra.mxu0 0.0
  %371 = vmatprep.subr.mxu0 0.0
  %372 = vmatpush1.msra.mxu0 0.0
  %373 = vmatprep.subr.mxu0 0.0
  %374 = vmatpush1.msra.mxu0 0.0
  %375 = vmatprep.subr.mxu0 0.0
  %376 = vmatpush1.msra.mxu0 0.0
  %377 = vmatprep.subr.mxu0 0.0
  %378 = vmatpush1.msra.mxu0 0.0
  %379 = vmatprep.subr.mxu0 0.0
  %380 = vmatpush1.msra.mxu0 %v354
  %381 = vmatprep.subr.mxu0 0.0
  %382 = vmatpush1.msra.mxu0 %v353
  %383 = vmatprep.subr.mxu0 0.0
  %384 = vmatpush1.msra.mxu0 %v352
  %385 = vmatprep.subr.mxu0 0.0
  %386 = vmatpush1.msra.mxu0 %v351
  %387 = vmatprep.subr.mxu0 0.0
  %388 = vmatpush2.msra.mxu0 0.0
  %389 = vmatprep.subr.mxu0 0.0
  %390 = vmatpush2.msra.mxu0 0.0
  %391 = vmatprep.subr.mxu0 0.0
  %392 = vmatpush2.msra.mxu0 0.0
  %393 = vmatprep.subr.mxu0 0.0
  %394 = vmatpush2.msra.mxu0 0.0
  %395 = vmatprep.subr.mxu0 0.0
  %396 = vmatpush2.msra.mxu0 0.0
  %397 = vmatprep.subr.mxu0 0.0
  %398 = vmatpush2.msra.mxu0 0.0
  %399 = vmatprep.subr.mxu0 0.0
  %400 = vmatpush2.msra.mxu0 0.0
  %401 = vmatprep.subr.mxu0 0.0
  %402 = vmatpush2.msra.mxu0 0.0
  %403 = vmatprep.subr.mxu0 0.0
  %404 = vmatpush2.msra.mxu0 0.0
  %405 = vmatprep.subr.mxu0 0.0
  %406 = vmatpush2.msra.mxu0 0.0
  %407 = vmatprep.subr.mxu0 0.0
  %408 = vmatpush2.msra.mxu0 0.0
  %409 = vmatprep.subr.mxu0 0.0
  %410 = vmatpush2.msra.mxu0 0.0
  %411 = vmatprep.subr.mxu0 0.0
  %412 = vmatpush2.msra.mxu0 0.0
  %413 = vmatprep.subr.mxu0 0.0
  %414 = vmatpush2.msra.mxu0 0.0
  %415 = vmatprep.subr.mxu0 0.0
  %416 = vmatpush2.msra.mxu0 0.0
  %417 = vmatprep.subr.mxu0 0.0
  %418 = vmatpush2.msra.mxu0 0.0
  %419 = vmatprep.mubr.f32.mxu0 0.0
  %420 = vmatmul.mubr.f32.gmra.mxu0 %v141
  %v421 = vpop.f32.mrf.mxu0
  %v422 = vadd.f32 %v62, %v421
  %v423 = vpop.f32.mrf.mxu0
  %424 = vmatprep.mubr.f32.mxu0 0.0
  %425 = vmatmul.mubr.f32.gmra.mxu0 %v144
  %v426 = vpop.f32.mrf.mxu0
  %v427 = vadd.f32 %v67, %v426
  %v428 = vpop.f32.mrf.mxu0
  %429 = vmatprep.mubr.f32.mxu0 0.0
  %430 = vmatmul.mubr.f32.gmra.mxu0 %v147
  %v431 = vpop.f32.mrf.mxu0
  %v432 = vadd.f32 %v72, %v431
  %v433 = vpop.f32.mrf.mxu0
  %434 = vmatprep.mubr.f32.mxu0 0.0
  %435 = vmatmul.mubr.f32.gmra.mxu0 %v150
  %v436 = vpop.f32.mrf.mxu0
  %v437 = vadd.f32 %v77, %v436
  %v438 = vpop.f32.mrf.mxu0
  %439 = vmatprep.mubr.f32.mxu0 0.0
  %440 = vmatmul.mubr.f32.gmra.mxu0 %v153
  %v441 = vpop.f32.mrf.mxu0
  %v442 = vadd.f32 %v82, %v441
  %v443 = vpop.f32.mrf.mxu0
  %444 = vmatprep.mubr.f32.mxu0 0.0
  %445 = vmatmul.mubr.f32.gmra.mxu0 %v156
  %v446 = vpop.f32.mrf.mxu0
  %v447 = vadd.f32 %v87, %v446
  %v448 = vpop.f32.mrf.mxu0
  %449 = vmatprep.mubr.f32.mxu0 0.0
  %450 = vmatmul.mubr.f32.gmra.mxu0 %v159
  %v451 = vpop.f32.mrf.mxu0
  %v452 = vadd.f32 %v92, %v451
  %v453 = vpop.f32.mrf.mxu0
  %454 = vmatprep.mubr.f32.mxu0 0.0
  %455 = vmatmul.mubr.f32.gmra.mxu0 %v162
  %v456 = vpop.f32.mrf.mxu0
  %v457 = vadd.f32 %v97, %v456
  %v458 = vpop.f32.mrf.mxu0
  %459 = vmatprep.mubr.f32.mxu0 0.0
  %460 = vmatmul.mubr.f32.gmra.mxu0 %v165
  %v461 = vpop.f32.mrf.mxu0
  %v462 = vadd.f32 %v102, %v461
  %v463 = vpop.f32.mrf.mxu0
  %464 = vmatprep.mubr.f32.mxu0 0.0
  %465 = vmatmul.mubr.f32.gmra.mxu0 %v168
  %v466 = vpop.f32.mrf.mxu0
  %v467 = vadd.f32 %v107, %v466
  %v468 = vpop.f32.mrf.mxu0
  %469 = vmatprep.mubr.f32.mxu0 0.0
  %470 = vmatmul.mubr.f32.gmra.mxu0 %v171
  %v471 = vpop.f32.mrf.mxu0
  %v472 = vadd.f32 %v112, %v471
  %v473 = vpop.f32.mrf.mxu0
  %474 = vmatprep.mubr.f32.mxu0 0.0
  %475 = vmatmul.mubr.f32.gmra.mxu0 %v174
  %v476 = vpop.f32.mrf.mxu0
  %v477 = vadd.f32 %v117, %v476
  %v478 = vpop.f32.mrf.mxu0
  %479 = vmatprep.mubr.f32.mxu0 0.0
  %480 = vmatmul.mubr.f32.gmra.mxu0 %v177
  %v481 = vpop.f32.mrf.mxu0
  %v482 = vadd.f32 %v122, %v481
  %v483 = vpop.f32.mrf.mxu0
  %484 = vmatprep.mubr.f32.mxu0 0.0
  %485 = vmatmul.mubr.f32.gmra.mxu0 %v180
  %v486 = vpop.f32.mrf.mxu0
  %v487 = vadd.f32 %v127, %v486
  %v488 = vpop.f32.mrf.mxu0
  %489 = vmatprep.mubr.f32.mxu0 0.0
  %490 = vmatmul.mubr.f32.gmra.mxu0 %v183
  %v491 = vpop.f32.mrf.mxu0
  %v492 = vadd.f32 %v132, %v491
  %v493 = vpop.f32.mrf.mxu0
  %494 = vmatprep.mubr.f32.mxu0 0.0
  %495 = vmatmul.mubr.f32.gmra.mxu0 %v186
  %v496 = vpop.f32.mrf.mxu0
  %v497 = vadd.f32 %v137, %v496
  %v498 = vpop.f32.mrf.mxu0
  %499 = vdwg.mxu0
  %s500 = scalar_lea.vmem [#allocation2], 128
  %501 = vst.msk [vmem:[%s500] sm:$0xff] %vm333, %v422
  %502 = vst.msk [vmem:[%s500 + $0x8] sm:$0xff] %vm333, %v427
  %503 = vst.msk [vmem:[%s500 + $0x10] sm:$0xff] %vm333, %v432
  %504 = vst.msk [vmem:[%s500 + $0x18] sm:$0xff] %vm333, %v437
  %505 = vst.msk [vmem:[%s500 + $0x20] sm:$0xff] %vm333, %v442
  %506 = vst.msk [vmem:[%s500 + $0x28] sm:$0xff] %vm333, %v447
  %507 = vst.msk [vmem:[%s500 + $0x30] sm:$0xff] %vm333, %v452
  %508 = vst.msk [vmem:[%s500 + $0x38] sm:$0xff] %vm333, %v457
  %509 = vst.msk [vmem:[%s500 + $0x40] sm:$0xff] %vm333, %v462
  %510 = vst.msk [vmem:[%s500 + $0x48] sm:$0xff] %vm333, %v467
  %511 = vst.msk [vmem:[%s500 + $0x50] sm:$0xff] %vm333, %v472
  %512 = vst.msk [vmem:[%s500 + $0x58] sm:$0xff] %vm333, %v477
  %513 = vst.msk [vmem:[%s500 + $0x60] sm:$0xff] %vm333, %v482
  %514 = vst.msk [vmem:[%s500 + $0x68] sm:$0xff] %vm333, %v487
  %515 = vst.msk [vmem:[%s500 + $0x70] sm:$0xff] %vm333, %v492
  %516 = vst.msk [vmem:[%s500 + $0x78] sm:$0xff] %vm333, %v497
  %s517 = scalar_lea.vmem %s0, 64
  %v518 = vld [vmem:[%s517] sm:$0xff]
  %v519 = vld [vmem:[%s517 + $0x8] sm:$0xff]
  %v520 = vld [vmem:[%s517 + $0x10] sm:$0xff]
  %v521 = vld [vmem:[%s517 + $0x18] sm:$0xff]
  %522 = vmatprep.subr.mxu0 0.0
  %523 = vmatpush1.msra.mxu0 0.0
  %524 = vmatprep.subr.mxu0 0.0
  %525 = vmatpush1.msra.mxu0 0.0
  %526 = vmatprep.subr.mxu0 0.0
  %527 = vmatpush1.msra.mxu0 0.0
  %528 = vmatprep.subr.mxu0 0.0
  %529 = vmatpush1.msra.mxu0 0.0
  %530 = vmatprep.subr.mxu0 0.0
  %531 = vmatpush1.msra.mxu0 0.0
  %532 = vmatprep.subr.mxu0 0.0
  %533 = vmatpush1.msra.mxu0 0.0
  %534 = vmatprep.subr.mxu0 0.0
  %535 = vmatpush1.msra.mxu0 0.0
  %536 = vmatprep.subr.mxu0 0.0
  %537 = vmatpush1.msra.mxu0 0.0
  %538 = vmatprep.subr.mxu0 0.0
  %539 = vmatpush1.msra.mxu0 0.0
  %540 = vmatprep.subr.mxu0 0.0
  %541 = vmatpush1.msra.mxu0 0.0
  %542 = vmatprep.subr.mxu0 0.0
  %543 = vmatpush1.msra.mxu0 0.0
  %544 = vmatprep.subr.mxu0 0.0
  %545 = vmatpush1.msra.mxu0 0.0
  %546 = vmatprep.subr.mxu0 0.0
  %547 = vmatpush1.msra.mxu0 %v521
  %548 = vmatprep.subr.mxu0 0.0
  %549 = vmatpush1.msra.mxu0 %v520
  %550 = vmatprep.subr.mxu0 0.0
  %551 = vmatpush1.msra.mxu0 %v519
  %552 = vmatprep.subr.mxu0 0.0
  %553 = vmatpush1.msra.mxu0 %v518
  %554 = vmatprep.subr.mxu0 0.0
  %555 = vmatpush2.msra.mxu0 0.0
  %556 = vmatprep.subr.mxu0 0.0
  %557 = vmatpush2.msra.mxu0 0.0
  %558 = vmatprep.subr.mxu0 0.0
  %559 = vmatpush2.msra.mxu0 0.0
  %560 = vmatprep.subr.mxu0 0.0
  %561 = vmatpush2.msra.mxu0 0.0
  %562 = vmatprep.subr.mxu0 0.0
  %563 = vmatpush2.msra.mxu0 0.0
  %564 = vmatprep.subr.mxu0 0.0
  %565 = vmatpush2.msra.mxu0 0.0
  %566 = vmatprep.subr.mxu0 0.0
  %567 = vmatpush2.msra.mxu0 0.0
  %568 = vmatprep.subr.mxu0 0.0
  %569 = vmatpush2.msra.mxu0 0.0
  %570 = vmatprep.subr.mxu0 0.0
  %571 = vmatpush2.msra.mxu0 0.0
  %572 = vmatprep.subr.mxu0 0.0
  %573 = vmatpush2.msra.mxu0 0.0
  %574 = vmatprep.subr.mxu0 0.0
  %575 = vmatpush2.msra.mxu0 0.0
  %576 = vmatprep.subr.mxu0 0.0
  %577 = vmatpush2.msra.mxu0 0.0
  %578 = vmatprep.subr.mxu0 0.0
  %579 = vmatpush2.msra.mxu0 0.0
  %580 = vmatprep.subr.mxu0 0.0
  %581 = vmatpush2.msra.mxu0 0.0
  %582 = vmatprep.subr.mxu0 0.0
  %583 = vmatpush2.msra.mxu0 0.0
  %584 = vmatprep.subr.mxu0 0.0
  %585 = vmatpush2.msra.mxu0 0.0
  %586 = vmatprep.mubr.f32.mxu0 0.0
  %587 = vmatmul.mubr.f32.gmra.mxu0 %v141
  %v588 = vpop.f32.mrf.mxu0
  %v589 = vadd.f32 %v62, %v588
  %v590 = vpop.f32.mrf.mxu0
  %591 = vmatprep.mubr.f32.mxu0 0.0
  %592 = vmatmul.mubr.f32.gmra.mxu0 %v144
  %v593 = vpop.f32.mrf.mxu0
  %v594 = vadd.f32 %v67, %v593
  %v595 = vpop.f32.mrf.mxu0
  %596 = vmatprep.mubr.f32.mxu0 0.0
  %597 = vmatmul.mubr.f32.gmra.mxu0 %v147
  %v598 = vpop.f32.mrf.mxu0
  %v599 = vadd.f32 %v72, %v598
  %v600 = vpop.f32.mrf.mxu0
  %601 = vmatprep.mubr.f32.mxu0 0.0
  %602 = vmatmul.mubr.f32.gmra.mxu0 %v150
  %v603 = vpop.f32.mrf.mxu0
  %v604 = vadd.f32 %v77, %v603
  %v605 = vpop.f32.mrf.mxu0
  %606 = vmatprep.mubr.f32.mxu0 0.0
  %607 = vmatmul.mubr.f32.gmra.mxu0 %v153
  %v608 = vpop.f32.mrf.mxu0
  %v609 = vadd.f32 %v82, %v608
  %v610 = vpop.f32.mrf.mxu0
  %611 = vmatprep.mubr.f32.mxu0 0.0
  %612 = vmatmul.mubr.f32.gmra.mxu0 %v156
  %v613 = vpop.f32.mrf.mxu0
  %v614 = vadd.f32 %v87, %v613
  %v615 = vpop.f32.mrf.mxu0
  %616 = vmatprep.mubr.f32.mxu0 0.0
  %617 = vmatmul.mubr.f32.gmra.mxu0 %v159
  %v618 = vpop.f32.mrf.mxu0
  %v619 = vadd.f32 %v92, %v618
  %v620 = vpop.f32.mrf.mxu0
  %621 = vmatprep.mubr.f32.mxu0 0.0
  %622 = vmatmul.mubr.f32.gmra.mxu0 %v162
  %v623 = vpop.f32.mrf.mxu0
  %v624 = vadd.f32 %v97, %v623
  %v625 = vpop.f32.mrf.mxu0
  %626 = vmatprep.mubr.f32.mxu0 0.0
  %627 = vmatmul.mubr.f32.gmra.mxu0 %v165
  %v628 = vpop.f32.mrf.mxu0
  %v629 = vadd.f32 %v102, %v628
  %v630 = vpop.f32.mrf.mxu0
  %631 = vmatprep.mubr.f32.mxu0 0.0
  %632 = vmatmul.mubr.f32.gmra.mxu0 %v168
  %v633 = vpop.f32.mrf.mxu0
  %v634 = vadd.f32 %v107, %v633
  %v635 = vpop.f32.mrf.mxu0
  %636 = vmatprep.mubr.f32.mxu0 0.0
  %637 = vmatmul.mubr.f32.gmra.mxu0 %v171
  %v638 = vpop.f32.mrf.mxu0
  %v639 = vadd.f32 %v112, %v638
  %v640 = vpop.f32.mrf.mxu0
  %641 = vmatprep.mubr.f32.mxu0 0.0
  %642 = vmatmul.mubr.f32.gmra.mxu0 %v174
  %v643 = vpop.f32.mrf.mxu0
  %v644 = vadd.f32 %v117, %v643
  %v645 = vpop.f32.mrf.mxu0
  %646 = vmatprep.mubr.f32.mxu0 0.0
  %647 = vmatmul.mubr.f32.gmra.mxu0 %v177
  %v648 = vpop.f32.mrf.mxu0
  %v649 = vadd.f32 %v122, %v648
  %v650 = vpop.f32.mrf.mxu0
  %651 = vmatprep.mubr.f32.mxu0 0.0
  %652 = vmatmul.mubr.f32.gmra.mxu0 %v180
  %v653 = vpop.f32.mrf.mxu0
  %v654 = vadd.f32 %v127, %v653
  %v655 = vpop.f32.mrf.mxu0
  %656 = vmatprep.mubr.f32.mxu0 0.0
  %657 = vmatmul.mubr.f32.gmra.mxu0 %v183
  %v658 = vpop.f32.mrf.mxu0
  %v659 = vadd.f32 %v132, %v658
  %v660 = vpop.f32.mrf.mxu0
  %661 = vmatprep.mubr.f32.mxu0 0.0
  %662 = vmatmul.mubr.f32.gmra.mxu0 %v186
  %v663 = vpop.f32.mrf.mxu0
  %v664 = vadd.f32 %v137, %v663
  %v665 = vpop.f32.mrf.mxu0
  %666 = vdwg.mxu0
  %s667 = scalar_lea.vmem [#allocation2], 256
  %668 = vst.msk [vmem:[%s667] sm:$0xff] %vm333, %v589
  %669 = vst.msk [vmem:[%s667 + $0x8] sm:$0xff] %vm333, %v594
  %670 = vst.msk [vmem:[%s667 + $0x10] sm:$0xff] %vm333, %v599
  %671 = vst.msk [vmem:[%s667 + $0x18] sm:$0xff] %vm333, %v604
  %672 = vst.msk [vmem:[%s667 + $0x20] sm:$0xff] %vm333, %v609
  %673 = vst.msk [vmem:[%s667 + $0x28] sm:$0xff] %vm333, %v614
  %674 = vst.msk [vmem:[%s667 + $0x30] sm:$0xff] %vm333, %v619
  %675 = vst.msk [vmem:[%s667 + $0x38] sm:$0xff] %vm333, %v624
  %676 = vst.msk [vmem:[%s667 + $0x40] sm:$0xff] %vm333, %v629
  %677 = vst.msk [vmem:[%s667 + $0x48] sm:$0xff] %vm333, %v634
  %678 = vst.msk [vmem:[%s667 + $0x50] sm:$0xff] %vm333, %v639
  %679 = vst.msk [vmem:[%s667 + $0x58] sm:$0xff] %vm333, %v644
  %680 = vst.msk [vmem:[%s667 + $0x60] sm:$0xff] %vm333, %v649
  %681 = vst.msk [vmem:[%s667 + $0x68] sm:$0xff] %vm333, %v654
  %682 = vst.msk [vmem:[%s667 + $0x70] sm:$0xff] %vm333, %v659
  %683 = vst.msk [vmem:[%s667 + $0x78] sm:$0xff] %vm333, %v664
  %s684 = scalar_lea.vmem %s0, 96
  %v685 = vld [vmem:[%s684] sm:$0xff]
  %v686 = vld [vmem:[%s684 + $0x8] sm:$0xff]
  %v687 = vld [vmem:[%s684 + $0x10] sm:$0xff]
  %v688 = vld [vmem:[%s684 + $0x18] sm:$0xff]
  %689 = vmatprep.subr.mxu0 0.0
  %690 = vmatpush1.msra.mxu0 0.0
  %691 = vmatprep.subr.mxu0 0.0
  %692 = vmatpush1.msra.mxu0 0.0
  %693 = vmatprep.subr.mxu0 0.0
  %694 = vmatpush1.msra.mxu0 0.0
  %695 = vmatprep.subr.mxu0 0.0
  %696 = vmatpush1.msra.mxu0 0.0
  %697 = vmatprep.subr.mxu0 0.0
  %698 = vmatpush1.msra.mxu0 0.0
  %699 = vmatprep.subr.mxu0 0.0
  %700 = vmatpush1.msra.mxu0 0.0
  %701 = vmatprep.subr.mxu0 0.0
  %702 = vmatpush1.msra.mxu0 0.0
  %703 = vmatprep.subr.mxu0 0.0
  %704 = vmatpush1.msra.mxu0 0.0
  %705 = vmatprep.subr.mxu0 0.0
  %706 = vmatpush1.msra.mxu0 0.0
  %707 = vmatprep.subr.mxu0 0.0
  %708 = vmatpush1.msra.mxu0 0.0
  %709 = vmatprep.subr.mxu0 0.0
  %710 = vmatpush1.msra.mxu0 0.0
  %711 = vmatprep.subr.mxu0 0.0
  %712 = vmatpush1.msra.mxu0 0.0
  %713 = vmatprep.subr.mxu0 0.0
  %714 = vmatpush1.msra.mxu0 %v688
  %715 = vmatprep.subr.mxu0 0.0
  %716 = vmatpush1.msra.mxu0 %v687
  %717 = vmatprep.subr.mxu0 0.0
  %718 = vmatpush1.msra.mxu0 %v686
  %719 = vmatprep.subr.mxu0 0.0
  %720 = vmatpush1.msra.mxu0 %v685
  %721 = vmatprep.subr.mxu0 0.0
  %722 = vmatpush2.msra.mxu0 0.0
  %723 = vmatprep.subr.mxu0 0.0
  %724 = vmatpush2.msra.mxu0 0.0
  %725 = vmatprep.subr.mxu0 0.0
  %726 = vmatpush2.msra.mxu0 0.0
  %727 = vmatprep.subr.mxu0 0.0
  %728 = vmatpush2.msra.mxu0 0.0
  %729 = vmatprep.subr.mxu0 0.0
  %730 = vmatpush2.msra.mxu0 0.0
  %731 = vmatprep.subr.mxu0 0.0
  %732 = vmatpush2.msra.mxu0 0.0
  %733 = vmatprep.subr.mxu0 0.0
  %734 = vmatpush2.msra.mxu0 0.0
  %735 = vmatprep.subr.mxu0 0.0
  %736 = vmatpush2.msra.mxu0 0.0
  %737 = vmatprep.subr.mxu0 0.0
  %738 = vmatpush2.msra.mxu0 0.0
  %739 = vmatprep.subr.mxu0 0.0
  %740 = vmatpush2.msra.mxu0 0.0
  %741 = vmatprep.subr.mxu0 0.0
  %742 = vmatpush2.msra.mxu0 0.0
  %743 = vmatprep.subr.mxu0 0.0
  %744 = vmatpush2.msra.mxu0 0.0
  %745 = vmatprep.subr.mxu0 0.0
  %746 = vmatpush2.msra.mxu0 0.0
  %747 = vmatprep.subr.mxu0 0.0
  %748 = vmatpush2.msra.mxu0 0.0
  %749 = vmatprep.subr.mxu0 0.0
  %750 = vmatpush2.msra.mxu0 0.0
  %751 = vmatprep.subr.mxu0 0.0
  %752 = vmatpush2.msra.mxu0 0.0
  %753 = vmatprep.mubr.f32.mxu0 0.0
  %754 = vmatmul.mubr.f32.gmra.mxu0 %v141
  %v755 = vpop.f32.mrf.mxu0
  %v756 = vadd.f32 %v62, %v755
  %v757 = vpop.f32.mrf.mxu0
  %758 = vmatprep.mubr.f32.mxu0 0.0
  %759 = vmatmul.mubr.f32.gmra.mxu0 %v144
  %v760 = vpop.f32.mrf.mxu0
  %v761 = vadd.f32 %v67, %v760
  %v762 = vpop.f32.mrf.mxu0
  %763 = vmatprep.mubr.f32.mxu0 0.0
  %764 = vmatmul.mubr.f32.gmra.mxu0 %v147
  %v765 = vpop.f32.mrf.mxu0
  %v766 = vadd.f32 %v72, %v765
  %v767 = vpop.f32.mrf.mxu0
  %768 = vmatprep.mubr.f32.mxu0 0.0
  %769 = vmatmul.mubr.f32.gmra.mxu0 %v150
  %v770 = vpop.f32.mrf.mxu0
  %v771 = vadd.f32 %v77, %v770
  %v772 = vpop.f32.mrf.mxu0
  %773 = vmatprep.mubr.f32.mxu0 0.0
  %774 = vmatmul.mubr.f32.gmra.mxu0 %v153
  %v775 = vpop.f32.mrf.mxu0
  %v776 = vadd.f32 %v82, %v775
  %v777 = vpop.f32.mrf.mxu0
  %778 = vmatprep.mubr.f32.mxu0 0.0
  %779 = vmatmul.mubr.f32.gmra.mxu0 %v156
  %v780 = vpop.f32.mrf.mxu0
  %v781 = vadd.f32 %v87, %v780
  %v782 = vpop.f32.mrf.mxu0
  %783 = vmatprep.mubr.f32.mxu0 0.0
  %784 = vmatmul.mubr.f32.gmra.mxu0 %v159
  %v785 = vpop.f32.mrf.mxu0
  %v786 = vadd.f32 %v92, %v785
  %v787 = vpop.f32.mrf.mxu0
  %788 = vmatprep.mubr.f32.mxu0 0.0
  %789 = vmatmul.mubr.f32.gmra.mxu0 %v162
  %v790 = vpop.f32.mrf.mxu0
  %v791 = vadd.f32 %v97, %v790
  %v792 = vpop.f32.mrf.mxu0
  %793 = vmatprep.mubr.f32.mxu0 0.0
  %794 = vmatmul.mubr.f32.gmra.mxu0 %v165
  %v795 = vpop.f32.mrf.mxu0
  %v796 = vadd.f32 %v102, %v795
  %v797 = vpop.f32.mrf.mxu0
  %798 = vmatprep.mubr.f32.mxu0 0.0
  %799 = vmatmul.mubr.f32.gmra.mxu0 %v168
  %v800 = vpop.f32.mrf.mxu0
  %v801 = vadd.f32 %v107, %v800
  %v802 = vpop.f32.mrf.mxu0
  %803 = vmatprep.mubr.f32.mxu0 0.0
  %804 = vmatmul.mubr.f32.gmra.mxu0 %v171
  %v805 = vpop.f32.mrf.mxu0
  %v806 = vadd.f32 %v112, %v805
  %v807 = vpop.f32.mrf.mxu0
  %808 = vmatprep.mubr.f32.mxu0 0.0
  %809 = vmatmul.mubr.f32.gmra.mxu0 %v174
  %v810 = vpop.f32.mrf.mxu0
  %v811 = vadd.f32 %v117, %v810
  %v812 = vpop.f32.mrf.mxu0
  %813 = vmatprep.mubr.f32.mxu0 0.0
  %814 = vmatmul.mubr.f32.gmra.mxu0 %v177
  %v815 = vpop.f32.mrf.mxu0
  %v816 = vadd.f32 %v122, %v815
  %v817 = vpop.f32.mrf.mxu0
  %818 = vmatprep.mubr.f32.mxu0 0.0
  %819 = vmatmul.mubr.f32.gmra.mxu0 %v180
  %v820 = vpop.f32.mrf.mxu0
  %v821 = vadd.f32 %v127, %v820
  %v822 = vpop.f32.mrf.mxu0
  %823 = vmatprep.mubr.f32.mxu0 0.0
  %824 = vmatmul.mubr.f32.gmra.mxu0 %v183
  %v825 = vpop.f32.mrf.mxu0
  %v826 = vadd.f32 %v132, %v825
  %v827 = vpop.f32.mrf.mxu0
  %828 = vmatprep.mubr.f32.mxu0 0.0
  %829 = vmatmul.mubr.f32.gmra.mxu0 %v186
  %v830 = vpop.f32.mrf.mxu0
  %v831 = vadd.f32 %v137, %v830
  %v832 = vpop.f32.mrf.mxu0
  %833 = vdwg.mxu0
  %s834 = scalar_lea.vmem [#allocation2], 384
  %835 = vst.msk [vmem:[%s834] sm:$0xff] %vm333, %v756
  %836 = vst.msk [vmem:[%s834 + $0x8] sm:$0xff] %vm333, %v761
  %837 = vst.msk [vmem:[%s834 + $0x10] sm:$0xff] %vm333, %v766
  %838 = vst.msk [vmem:[%s834 + $0x18] sm:$0xff] %vm333, %v771
  %839 = vst.msk [vmem:[%s834 + $0x20] sm:$0xff] %vm333, %v776
  %840 = vst.msk [vmem:[%s834 + $0x28] sm:$0xff] %vm333, %v781
  %841 = vst.msk [vmem:[%s834 + $0x30] sm:$0xff] %vm333, %v786
  %842 = vst.msk [vmem:[%s834 + $0x38] sm:$0xff] %vm333, %v791
  %843 = vst.msk [vmem:[%s834 + $0x40] sm:$0xff] %vm333, %v796
  %844 = vst.msk [vmem:[%s834 + $0x48] sm:$0xff] %vm333, %v801
  %845 = vst.msk [vmem:[%s834 + $0x50] sm:$0xff] %vm333, %v806
  %846 = vst.msk [vmem:[%s834 + $0x58] sm:$0xff] %vm333, %v811
  %847 = vst.msk [vmem:[%s834 + $0x60] sm:$0xff] %vm333, %v816
  %848 = vst.msk [vmem:[%s834 + $0x68] sm:$0xff] %vm333, %v821
  %849 = vst.msk [vmem:[%s834 + $0x70] sm:$0xff] %vm333, %v826
  %850 = vst.msk [vmem:[%s834 + $0x78] sm:$0xff] %vm333, %v831
  %s851 = scalar_lea.vmem %s0, 128
  %v852 = vld [vmem:[%s851] sm:$0xff]
  %v853 = vld [vmem:[%s851 + $0x8] sm:$0xff]
  %v854 = vld [vmem:[%s851 + $0x10] sm:$0xff]
  %v855 = vld [vmem:[%s851 + $0x18] sm:$0xff]
  %856 = vmatprep.subr.mxu0 0.0
  %857 = vmatpush1.msra.mxu0 0.0
  %858 = vmatprep.subr.mxu0 0.0
  %859 = vmatpush1.msra.mxu0 0.0
  %860 = vmatprep.subr.mxu0 0.0
  %861 = vmatpush1.msra.mxu0 0.0
  %862 = vmatprep.subr.mxu0 0.0
  %863 = vmatpush1.msra.mxu0 0.0
  %864 = vmatprep.subr.mxu0 0.0
  %865 = vmatpush1.msra.mxu0 0.0
  %866 = vmatprep.subr.mxu0 0.0
  %867 = vmatpush1.msra.mxu0 0.0
  %868 = vmatprep.subr.mxu0 0.0
  %869 = vmatpush1.msra.mxu0 0.0
  %870 = vmatprep.subr.mxu0 0.0
  %871 = vmatpush1.msra.mxu0 0.0
  %872 = vmatprep.subr.mxu0 0.0
  %873 = vmatpush1.msra.mxu0 0.0
  %874 = vmatprep.subr.mxu0 0.0
  %875 = vmatpush1.msra.mxu0 0.0
  %876 = vmatprep.subr.mxu0 0.0
  %877 = vmatpush1.msra.mxu0 0.0
  %878 = vmatprep.subr.mxu0 0.0
  %879 = vmatpush1.msra.mxu0 0.0
  %880 = vmatprep.subr.mxu0 0.0
  %881 = vmatpush1.msra.mxu0 %v855
  %882 = vmatprep.subr.mxu0 0.0
  %883 = vmatpush1.msra.mxu0 %v854
  %884 = vmatprep.subr.mxu0 0.0
  %885 = vmatpush1.msra.mxu0 %v853
  %886 = vmatprep.subr.mxu0 0.0
  %887 = vmatpush1.msra.mxu0 %v852
  %888 = vmatprep.subr.mxu0 0.0
  %889 = vmatpush2.msra.mxu0 0.0
  %890 = vmatprep.subr.mxu0 0.0
  %891 = vmatpush2.msra.mxu0 0.0
  %892 = vmatprep.subr.mxu0 0.0
  %893 = vmatpush2.msra.mxu0 0.0
  %894 = vmatprep.subr.mxu0 0.0
  %895 = vmatpush2.msra.mxu0 0.0
  %896 = vmatprep.subr.mxu0 0.0
  %897 = vmatpush2.msra.mxu0 0.0
  %898 = vmatprep.subr.mxu0 0.0
  %899 = vmatpush2.msra.mxu0 0.0
  %900 = vmatprep.subr.mxu0 0.0
  %901 = vmatpush2.msra.mxu0 0.0
  %902 = vmatprep.subr.mxu0 0.0
  %903 = vmatpush2.msra.mxu0 0.0
  %904 = vmatprep.subr.mxu0 0.0
  %905 = vmatpush2.msra.mxu0 0.0
  %906 = vmatprep.subr.mxu0 0.0
  %907 = vmatpush2.msra.mxu0 0.0
  %908 = vmatprep.subr.mxu0 0.0
  %909 = vmatpush2.msra.mxu0 0.0
  %910 = vmatprep.subr.mxu0 0.0
  %911 = vmatpush2.msra.mxu0 0.0
  %912 = vmatprep.subr.mxu0 0.0
  %913 = vmatpush2.msra.mxu0 0.0
  %914 = vmatprep.subr.mxu0 0.0
  %915 = vmatpush2.msra.mxu0 0.0
  %916 = vmatprep.subr.mxu0 0.0
  %917 = vmatpush2.msra.mxu0 0.0
  %918 = vmatprep.subr.mxu0 0.0
  %919 = vmatpush2.msra.mxu0 0.0
  %920 = vmatprep.mubr.f32.mxu0 0.0
  %921 = vmatmul.mubr.f32.gmra.mxu0 %v141
  %v922 = vpop.f32.mrf.mxu0
  %v923 = vadd.f32 %v62, %v922
  %v924 = vpop.f32.mrf.mxu0
  %925 = vmatprep.mubr.f32.mxu0 0.0
  %926 = vmatmul.mubr.f32.gmra.mxu0 %v144
  %v927 = vpop.f32.mrf.mxu0
  %v928 = vadd.f32 %v67, %v927
  %v929 = vpop.f32.mrf.mxu0
  %930 = vmatprep.mubr.f32.mxu0 0.0
  %931 = vmatmul.mubr.f32.gmra.mxu0 %v147
  %v932 = vpop.f32.mrf.mxu0
  %v933 = vadd.f32 %v72, %v932
  %v934 = vpop.f32.mrf.mxu0
  %935 = vmatprep.mubr.f32.mxu0 0.0
  %936 = vmatmul.mubr.f32.gmra.mxu0 %v150
  %v937 = vpop.f32.mrf.mxu0
  %v938 = vadd.f32 %v77, %v937
  %v939 = vpop.f32.mrf.mxu0
  %940 = vmatprep.mubr.f32.mxu0 0.0
  %941 = vmatmul.mubr.f32.gmra.mxu0 %v153
  %v942 = vpop.f32.mrf.mxu0
  %v943 = vadd.f32 %v82, %v942
  %v944 = vpop.f32.mrf.mxu0
  %945 = vmatprep.mubr.f32.mxu0 0.0
  %946 = vmatmul.mubr.f32.gmra.mxu0 %v156
  %v947 = vpop.f32.mrf.mxu0
  %v948 = vadd.f32 %v87, %v947
  %v949 = vpop.f32.mrf.mxu0
  %950 = vmatprep.mubr.f32.mxu0 0.0
  %951 = vmatmul.mubr.f32.gmra.mxu0 %v159
  %v952 = vpop.f32.mrf.mxu0
  %v953 = vadd.f32 %v92, %v952
  %v954 = vpop.f32.mrf.mxu0
  %955 = vmatprep.mubr.f32.mxu0 0.0
  %956 = vmatmul.mubr.f32.gmra.mxu0 %v162
  %v957 = vpop.f32.mrf.mxu0
  %v958 = vadd.f32 %v97, %v957
  %v959 = vpop.f32.mrf.mxu0
  %960 = vmatprep.mubr.f32.mxu0 0.0
  %961 = vmatmul.mubr.f32.gmra.mxu0 %v165
  %v962 = vpop.f32.mrf.mxu0
  %v963 = vadd.f32 %v102, %v962
  %v964 = vpop.f32.mrf.mxu0
  %965 = vmatprep.mubr.f32.mxu0 0.0
  %966 = vmatmul.mubr.f32.gmra.mxu0 %v168
  %v967 = vpop.f32.mrf.mxu0
  %v968 = vadd.f32 %v107, %v967
  %v969 = vpop.f32.mrf.mxu0
  %970 = vmatprep.mubr.f32.mxu0 0.0
  %971 = vmatmul.mubr.f32.gmra.mxu0 %v171
  %v972 = vpop.f32.mrf.mxu0
  %v973 = vadd.f32 %v112, %v972
  %v974 = vpop.f32.mrf.mxu0
  %975 = vmatprep.mubr.f32.mxu0 0.0
  %976 = vmatmul.mubr.f32.gmra.mxu0 %v174
  %v977 = vpop.f32.mrf.mxu0
  %v978 = vadd.f32 %v117, %v977
  %v979 = vpop.f32.mrf.mxu0
  %980 = vmatprep.mubr.f32.mxu0 0.0
  %981 = vmatmul.mubr.f32.gmra.mxu0 %v177
  %v982 = vpop.f32.mrf.mxu0
  %v983 = vadd.f32 %v122, %v982
  %v984 = vpop.f32.mrf.mxu0
  %985 = vmatprep.mubr.f32.mxu0 0.0
  %986 = vmatmul.mubr.f32.gmra.mxu0 %v180
  %v987 = vpop.f32.mrf.mxu0
  %v988 = vadd.f32 %v127, %v987
  %v989 = vpop.f32.mrf.mxu0
  %990 = vmatprep.mubr.f32.mxu0 0.0
  %991 = vmatmul.mubr.f32.gmra.mxu0 %v183
  %v992 = vpop.f32.mrf.mxu0
  %v993 = vadd.f32 %v132, %v992
  %v994 = vpop.f32.mrf.mxu0
  %995 = vmatprep.mubr.f32.mxu0 0.0
  %996 = vmatmul.mubr.f32.gmra.mxu0 %v186
  %v997 = vpop.f32.mrf.mxu0
  %v998 = vadd.f32 %v137, %v997
  %v999 = vpop.f32.mrf.mxu0
  %1000 = vdwg.mxu0
  %s1001 = scalar_lea.vmem [#allocation2], 512
  %1002 = vst.msk [vmem:[%s1001] sm:$0xff] %vm333, %v923
  %1003 = vst.msk [vmem:[%s1001 + $0x8] sm:$0xff] %vm333, %v928
  %1004 = vst.msk [vmem:[%s1001 + $0x10] sm:$0xff] %vm333, %v933
  %1005 = vst.msk [vmem:[%s1001 + $0x18] sm:$0xff] %vm333, %v938
  %1006 = vst.msk [vmem:[%s1001 + $0x20] sm:$0xff] %vm333, %v943
  %1007 = vst.msk [vmem:[%s1001 + $0x28] sm:$0xff] %vm333, %v948
  %1008 = vst.msk [vmem:[%s1001 + $0x30] sm:$0xff] %vm333, %v953
  %1009 = vst.msk [vmem:[%s1001 + $0x38] sm:$0xff] %vm333, %v958
  %1010 = vst.msk [vmem:[%s1001 + $0x40] sm:$0xff] %vm333, %v963
  %1011 = vst.msk [vmem:[%s1001 + $0x48] sm:$0xff] %vm333, %v968
  %1012 = vst.msk [vmem:[%s1001 + $0x50] sm:$0xff] %vm333, %v973
  %1013 = vst.msk [vmem:[%s1001 + $0x58] sm:$0xff] %vm333, %v978
  %1014 = vst.msk [vmem:[%s1001 + $0x60] sm:$0xff] %vm333, %v983
  %1015 = vst.msk [vmem:[%s1001 + $0x68] sm:$0xff] %vm333, %v988
  %1016 = vst.msk [vmem:[%s1001 + $0x70] sm:$0xff] %vm333, %v993
  %1017 = vst.msk [vmem:[%s1001 + $0x78] sm:$0xff] %vm333, %v998
  %s1018 = scalar_lea.vmem %s0, 160
  %v1019 = vld [vmem:[%s1018] sm:$0xff]
  %v1020 = vld [vmem:[%s1018 + $0x8] sm:$0xff]
  %v1021 = vld [vmem:[%s1018 + $0x10] sm:$0xff]
  %v1022 = vld [vmem:[%s1018 + $0x18] sm:$0xff]
  %1023 = vmatprep.subr.mxu0 0.0
  %1024 = vmatpush1.msra.mxu0 0.0
  %1025 = vmatprep.subr.mxu0 0.0
  %1026 = vmatpush1.msra.mxu0 0.0
  %1027 = vmatprep.subr.mxu0 0.0
  %1028 = vmatpush1.msra.mxu0 0.0
  %1029 = vmatprep.subr.mxu0 0.0
  %1030 = vmatpush1.msra.mxu0 0.0
  %1031 = vmatprep.subr.mxu0 0.0
  %1032 = vmatpush1.msra.mxu0 0.0
  %1033 = vmatprep.subr.mxu0 0.0
  %1034 = vmatpush1.msra.mxu0 0.0
  %1035 = vmatprep.subr.mxu0 0.0
  %1036 = vmatpush1.msra.mxu0 0.0
  %1037 = vmatprep.subr.mxu0 0.0
  %1038 = vmatpush1.msra.mxu0 0.0
  %1039 = vmatprep.subr.mxu0 0.0
  %1040 = vmatpush1.msra.mxu0 0.0
  %1041 = vmatprep.subr.mxu0 0.0
  %1042 = vmatpush1.msra.mxu0 0.0
  %1043 = vmatprep.subr.mxu0 0.0
  %1044 = vmatpush1.msra.mxu0 0.0
  %1045 = vmatprep.subr.mxu0 0.0
  %1046 = vmatpush1.msra.mxu0 0.0
  %1047 = vmatprep.subr.mxu0 0.0
  %1048 = vmatpush1.msra.mxu0 %v1022
  %1049 = vmatprep.subr.mxu0 0.0
  %1050 = vmatpush1.msra.mxu0 %v1021
  %1051 = vmatprep.subr.mxu0 0.0
  %1052 = vmatpush1.msra.mxu0 %v1020
  %1053 = vmatprep.subr.mxu0 0.0
  %1054 = vmatpush1.msra.mxu0 %v1019
  %1055 = vmatprep.subr.mxu0 0.0
  %1056 = vmatpush2.msra.mxu0 0.0
  %1057 = vmatprep.subr.mxu0 0.0
  %1058 = vmatpush2.msra.mxu0 0.0
  %1059 = vmatprep.subr.mxu0 0.0
  %1060 = vmatpush2.msra.mxu0 0.0
  %1061 = vmatprep.subr.mxu0 0.0
  %1062 = vmatpush2.msra.mxu0 0.0
  %1063 = vmatprep.subr.mxu0 0.0
  %1064 = vmatpush2.msra.mxu0 0.0
  %1065 = vmatprep.subr.mxu0 0.0
  %1066 = vmatpush2.msra.mxu0 0.0
  %1067 = vmatprep.subr.mxu0 0.0
  %1068 = vmatpush2.msra.mxu0 0.0
  %1069 = vmatprep.subr.mxu0 0.0
  %1070 = vmatpush2.msra.mxu0 0.0
  %1071 = vmatprep.subr.mxu0 0.0
  %1072 = vmatpush2.msra.mxu0 0.0
  %1073 = vmatprep.subr.mxu0 0.0
  %1074 = vmatpush2.msra.mxu0 0.0
  %1075 = vmatprep.subr.mxu0 0.0
  %1076 = vmatpush2.msra.mxu0 0.0
  %1077 = vmatprep.subr.mxu0 0.0
  %1078 = vmatpush2.msra.mxu0 0.0
  %1079 = vmatprep.subr.mxu0 0.0
  %1080 = vmatpush2.msra.mxu0 0.0
  %1081 = vmatprep.subr.mxu0 0.0
  %1082 = vmatpush2.msra.mxu0 0.0
  %1083 = vmatprep.subr.mxu0 0.0
  %1084 = vmatpush2.msra.mxu0 0.0
  %1085 = vmatprep.subr.mxu0 0.0
  %1086 = vmatpush2.msra.mxu0 0.0
  %1087 = vmatprep.mubr.f32.mxu0 0.0
  %1088 = vmatmul.mubr.f32.gmra.mxu0 %v141
  %v1089 = vpop.f32.mrf.mxu0
  %v1090 = vadd.f32 %v62, %v1089
  %v1091 = vpop.f32.mrf.mxu0
  %1092 = vmatprep.mubr.f32.mxu0 0.0
  %1093 = vmatmul.mubr.f32.gmra.mxu0 %v144
  %v1094 = vpop.f32.mrf.mxu0
  %v1095 = vadd.f32 %v67, %v1094
  %v1096 = vpop.f32.mrf.mxu0
  %1097 = vmatprep.mubr.f32.mxu0 0.0
  %1098 = vmatmul.mubr.f32.gmra.mxu0 %v147
  %v1099 = vpop.f32.mrf.mxu0
  %v1100 = vadd.f32 %v72, %v1099
  %v1101 = vpop.f32.mrf.mxu0
  %1102 = vmatprep.mubr.f32.mxu0 0.0
  %1103 = vmatmul.mubr.f32.gmra.mxu0 %v150
  %v1104 = vpop.f32.mrf.mxu0
  %v1105 = vadd.f32 %v77, %v1104
  %v1106 = vpop.f32.mrf.mxu0
  %1107 = vmatprep.mubr.f32.mxu0 0.0
  %1108 = vmatmul.mubr.f32.gmra.mxu0 %v153
  %v1109 = vpop.f32.mrf.mxu0
  %v1110 = vadd.f32 %v82, %v1109
  %v1111 = vpop.f32.mrf.mxu0
  %1112 = vmatprep.mubr.f32.mxu0 0.0
  %1113 = vmatmul.mubr.f32.gmra.mxu0 %v156
  %v1114 = vpop.f32.mrf.mxu0
  %v1115 = vadd.f32 %v87, %v1114
  %v1116 = vpop.f32.mrf.mxu0
  %1117 = vmatprep.mubr.f32.mxu0 0.0
  %1118 = vmatmul.mubr.f32.gmra.mxu0 %v159
  %v1119 = vpop.f32.mrf.mxu0
  %v1120 = vadd.f32 %v92, %v1119
  %v1121 = vpop.f32.mrf.mxu0
  %1122 = vmatprep.mubr.f32.mxu0 0.0
  %1123 = vmatmul.mubr.f32.gmra.mxu0 %v162
  %v1124 = vpop.f32.mrf.mxu0
  %v1125 = vadd.f32 %v97, %v1124
  %v1126 = vpop.f32.mrf.mxu0
  %1127 = vmatprep.mubr.f32.mxu0 0.0
  %1128 = vmatmul.mubr.f32.gmra.mxu0 %v165
  %v1129 = vpop.f32.mrf.mxu0
  %v1130 = vadd.f32 %v102, %v1129
  %v1131 = vpop.f32.mrf.mxu0
  %1132 = vmatprep.mubr.f32.mxu0 0.0
  %1133 = vmatmul.mubr.f32.gmra.mxu0 %v168
  %v1134 = vpop.f32.mrf.mxu0
  %v1135 = vadd.f32 %v107, %v1134
  %v1136 = vpop.f32.mrf.mxu0
  %1137 = vmatprep.mubr.f32.mxu0 0.0
  %1138 = vmatmul.mubr.f32.gmra.mxu0 %v171
  %v1139 = vpop.f32.mrf.mxu0
  %v1140 = vadd.f32 %v112, %v1139
  %v1141 = vpop.f32.mrf.mxu0
  %1142 = vmatprep.mubr.f32.mxu0 0.0
  %1143 = vmatmul.mubr.f32.gmra.mxu0 %v174
  %v1144 = vpop.f32.mrf.mxu0
  %v1145 = vadd.f32 %v117, %v1144
  %v1146 = vpop.f32.mrf.mxu0
  %1147 = vmatprep.mubr.f32.mxu0 0.0
  %1148 = vmatmul.mubr.f32.gmra.mxu0 %v177
  %v1149 = vpop.f32.mrf.mxu0
  %v1150 = vadd.f32 %v122, %v1149
  %v1151 = vpop.f32.mrf.mxu0
  %1152 = vmatprep.mubr.f32.mxu0 0.0
  %1153 = vmatmul.mubr.f32.gmra.mxu0 %v180
  %v1154 = vpop.f32.mrf.mxu0
  %v1155 = vadd.f32 %v127, %v1154
  %v1156 = vpop.f32.mrf.mxu0
  %1157 = vmatprep.mubr.f32.mxu0 0.0
  %1158 = vmatmul.mubr.f32.gmra.mxu0 %v183
  %v1159 = vpop.f32.mrf.mxu0
  %v1160 = vadd.f32 %v132, %v1159
  %v1161 = vpop.f32.mrf.mxu0
  %1162 = vmatprep.mubr.f32.mxu0 0.0
  %1163 = vmatmul.mubr.f32.gmra.mxu0 %v186
  %v1164 = vpop.f32.mrf.mxu0
  %v1165 = vadd.f32 %v137, %v1164
  %v1166 = vpop.f32.mrf.mxu0
  %1167 = vdwg.mxu0
  %s1168 = scalar_lea.vmem [#allocation2], 640
  %1169 = vst.msk [vmem:[%s1168] sm:$0xff] %vm333, %v1090
  %1170 = vst.msk [vmem:[%s1168 + $0x8] sm:$0xff] %vm333, %v1095
  %1171 = vst.msk [vmem:[%s1168 + $0x10] sm:$0xff] %vm333, %v1100
  %1172 = vst.msk [vmem:[%s1168 + $0x18] sm:$0xff] %vm333, %v1105
  %1173 = vst.msk [vmem:[%s1168 + $0x20] sm:$0xff] %vm333, %v1110
  %1174 = vst.msk [vmem:[%s1168 + $0x28] sm:$0xff] %vm333, %v1115
  %1175 = vst.msk [vmem:[%s1168 + $0x30] sm:$0xff] %vm333, %v1120
  %1176 = vst.msk [vmem:[%s1168 + $0x38] sm:$0xff] %vm333, %v1125
  %1177 = vst.msk [vmem:[%s1168 + $0x40] sm:$0xff] %vm333, %v1130
  %1178 = vst.msk [vmem:[%s1168 + $0x48] sm:$0xff] %vm333, %v1135
  %1179 = vst.msk [vmem:[%s1168 + $0x50] sm:$0xff] %vm333, %v1140
  %1180 = vst.msk [vmem:[%s1168 + $0x58] sm:$0xff] %vm333, %v1145
  %1181 = vst.msk [vmem:[%s1168 + $0x60] sm:$0xff] %vm333, %v1150
  %1182 = vst.msk [vmem:[%s1168 + $0x68] sm:$0xff] %vm333, %v1155
  %1183 = vst.msk [vmem:[%s1168 + $0x70] sm:$0xff] %vm333, %v1160
  %1184 = vst.msk [vmem:[%s1168 + $0x78] sm:$0xff] %vm333, %v1165
  %s1185 = scalar_lea.vmem %s0, 192
  %v1186 = vld [vmem:[%s1185] sm:$0xff]
  %v1187 = vld [vmem:[%s1185 + $0x8] sm:$0xff]
  %v1188 = vld [vmem:[%s1185 + $0x10] sm:$0xff]
  %v1189 = vld [vmem:[%s1185 + $0x18] sm:$0xff]
  %1190 = vmatprep.subr.mxu0 0.0
  %1191 = vmatpush1.msra.mxu0 0.0
  %1192 = vmatprep.subr.mxu0 0.0
  %1193 = vmatpush1.msra.mxu0 0.0
  %1194 = vmatprep.subr.mxu0 0.0
  %1195 = vmatpush1.msra.mxu0 0.0
  %1196 = vmatprep.subr.mxu0 0.0
  %1197 = vmatpush1.msra.mxu0 0.0
  %1198 = vmatprep.subr.mxu0 0.0
  %1199 = vmatpush1.msra.mxu0 0.0
  %1200 = vmatprep.subr.mxu0 0.0
  %1201 = vmatpush1.msra.mxu0 0.0
  %1202 = vmatprep.subr.mxu0 0.0
  %1203 = vmatpush1.msra.mxu0 0.0
  %1204 = vmatprep.subr.mxu0 0.0
  %1205 = vmatpush1.msra.mxu0 0.0
  %1206 = vmatprep.subr.mxu0 0.0
  %1207 = vmatpush1.msra.mxu0 0.0
  %1208 = vmatprep.subr.mxu0 0.0
  %1209 = vmatpush1.msra.mxu0 0.0
  %1210 = vmatprep.subr.mxu0 0.0
  %1211 = vmatpush1.msra.mxu0 0.0
  %1212 = vmatprep.subr.mxu0 0.0
  %1213 = vmatpush1.msra.mxu0 0.0
  %1214 = vmatprep.subr.mxu0 0.0
  %1215 = vmatpush1.msra.mxu0 %v1189
  %1216 = vmatprep.subr.mxu0 0.0
  %1217 = vmatpush1.msra.mxu0 %v1188
  %1218 = vmatprep.subr.mxu0 0.0
  %1219 = vmatpush1.msra.mxu0 %v1187
  %1220 = vmatprep.subr.mxu0 0.0
  %1221 = vmatpush1.msra.mxu0 %v1186
  %1222 = vmatprep.subr.mxu0 0.0
  %1223 = vmatpush2.msra.mxu0 0.0
  %1224 = vmatprep.subr.mxu0 0.0
  %1225 = vmatpush2.msra.mxu0 0.0
  %1226 = vmatprep.subr.mxu0 0.0
  %1227 = vmatpush2.msra.mxu0 0.0
  %1228 = vmatprep.subr.mxu0 0.0
  %1229 = vmatpush2.msra.mxu0 0.0
  %1230 = vmatprep.subr.mxu0 0.0
  %1231 = vmatpush2.msra.mxu0 0.0
  %1232 = vmatprep.subr.mxu0 0.0
  %1233 = vmatpush2.msra.mxu0 0.0
  %1234 = vmatprep.subr.mxu0 0.0
  %1235 = vmatpush2.msra.mxu0 0.0
  %1236 = vmatprep.subr.mxu0 0.0
  %1237 = vmatpush2.msra.mxu0 0.0
  %1238 = vmatprep.subr.mxu0 0.0
  %1239 = vmatpush2.msra.mxu0 0.0
  %1240 = vmatprep.subr.mxu0 0.0
  %1241 = vmatpush2.msra.mxu0 0.0
  %1242 = vmatprep.subr.mxu0 0.0
  %1243 = vmatpush2.msra.mxu0 0.0
  %1244 = vmatprep.subr.mxu0 0.0
  %1245 = vmatpush2.msra.mxu0 0.0
  %1246 = vmatprep.subr.mxu0 0.0
  %1247 = vmatpush2.msra.mxu0 0.0
  %1248 = vmatprep.subr.mxu0 0.0
  %1249 = vmatpush2.msra.mxu0 0.0
  %1250 = vmatprep.subr.mxu0 0.0
  %1251 = vmatpush2.msra.mxu0 0.0
  %1252 = vmatprep.subr.mxu0 0.0
  %1253 = vmatpush2.msra.mxu0 0.0
  %1254 = vmatprep.mubr.f32.mxu0 0.0
  %1255 = vmatmul.mubr.f32.gmra.mxu0 %v141
  %v1256 = vpop.f32.mrf.mxu0
  %v1257 = vadd.f32 %v62, %v1256
  %v1258 = vpop.f32.mrf.mxu0
  %1259 = vmatprep.mubr.f32.mxu0 0.0
  %1260 = vmatmul.mubr.f32.gmra.mxu0 %v144
  %v1261 = vpop.f32.mrf.mxu0
  %v1262 = vadd.f32 %v67, %v1261
  %v1263 = vpop.f32.mrf.mxu0
  %1264 = vmatprep.mubr.f32.mxu0 0.0
  %1265 = vmatmul.mubr.f32.gmra.mxu0 %v147
  %v1266 = vpop.f32.mrf.mxu0
  %v1267 = vadd.f32 %v72, %v1266
  %v1268 = vpop.f32.mrf.mxu0
  %1269 = vmatprep.mubr.f32.mxu0 0.0
  %1270 = vmatmul.mubr.f32.gmra.mxu0 %v150
  %v1271 = vpop.f32.mrf.mxu0
  %v1272 = vadd.f32 %v77, %v1271
  %v1273 = vpop.f32.mrf.mxu0
  %1274 = vmatprep.mubr.f32.mxu0 0.0
  %1275 = vmatmul.mubr.f32.gmra.mxu0 %v153
  %v1276 = vpop.f32.mrf.mxu0
  %v1277 = vadd.f32 %v82, %v1276
  %v1278 = vpop.f32.mrf.mxu0
  %1279 = vmatprep.mubr.f32.mxu0 0.0
  %1280 = vmatmul.mubr.f32.gmra.mxu0 %v156
  %v1281 = vpop.f32.mrf.mxu0
  %v1282 = vadd.f32 %v87, %v1281
  %v1283 = vpop.f32.mrf.mxu0
  %1284 = vmatprep.mubr.f32.mxu0 0.0
  %1285 = vmatmul.mubr.f32.gmra.mxu0 %v159
  %v1286 = vpop.f32.mrf.mxu0
  %v1287 = vadd.f32 %v92, %v1286
  %v1288 = vpop.f32.mrf.mxu0
  %1289 = vmatprep.mubr.f32.mxu0 0.0
  %1290 = vmatmul.mubr.f32.gmra.mxu0 %v162
  %v1291 = vpop.f32.mrf.mxu0
  %v1292 = vadd.f32 %v97, %v1291
  %v1293 = vpop.f32.mrf.mxu0
  %1294 = vmatprep.mubr.f32.mxu0 0.0
  %1295 = vmatmul.mubr.f32.gmra.mxu0 %v165
  %v1296 = vpop.f32.mrf.mxu0
  %v1297 = vadd.f32 %v102, %v1296
  %v1298 = vpop.f32.mrf.mxu0
  %1299 = vmatprep.mubr.f32.mxu0 0.0
  %1300 = vmatmul.mubr.f32.gmra.mxu0 %v168
  %v1301 = vpop.f32.mrf.mxu0
  %v1302 = vadd.f32 %v107, %v1301
  %v1303 = vpop.f32.mrf.mxu0
  %1304 = vmatprep.mubr.f32.mxu0 0.0
  %1305 = vmatmul.mubr.f32.gmra.mxu0 %v171
  %v1306 = vpop.f32.mrf.mxu0
  %v1307 = vadd.f32 %v112, %v1306
  %v1308 = vpop.f32.mrf.mxu0
  %1309 = vmatprep.mubr.f32.mxu0 0.0
  %1310 = vmatmul.mubr.f32.gmra.mxu0 %v174
  %v1311 = vpop.f32.mrf.mxu0
  %v1312 = vadd.f32 %v117, %v1311
  %v1313 = vpop.f32.mrf.mxu0
  %1314 = vmatprep.mubr.f32.mxu0 0.0
  %1315 = vmatmul.mubr.f32.gmra.mxu0 %v177
  %v1316 = vpop.f32.mrf.mxu0
  %v1317 = vadd.f32 %v122, %v1316
  %v1318 = vpop.f32.mrf.mxu0
  %1319 = vmatprep.mubr.f32.mxu0 0.0
  %1320 = vmatmul.mubr.f32.gmra.mxu0 %v180
  %v1321 = vpop.f32.mrf.mxu0
  %v1322 = vadd.f32 %v127, %v1321
  %v1323 = vpop.f32.mrf.mxu0
  %1324 = vmatprep.mubr.f32.mxu0 0.0
  %1325 = vmatmul.mubr.f32.gmra.mxu0 %v183
  %v1326 = vpop.f32.mrf.mxu0
  %v1327 = vadd.f32 %v132, %v1326
  %v1328 = vpop.f32.mrf.mxu0
  %1329 = vmatprep.mubr.f32.mxu0 0.0
  %1330 = vmatmul.mubr.f32.gmra.mxu0 %v186
  %v1331 = vpop.f32.mrf.mxu0
  %v1332 = vadd.f32 %v137, %v1331
  %v1333 = vpop.f32.mrf.mxu0
  %1334 = vdwg.mxu0
  %s1335 = scalar_lea.vmem [#allocation2], 768
  %1336 = vst.msk [vmem:[%s1335] sm:$0xff] %vm333, %v1257
  %1337 = vst.msk [vmem:[%s1335 + $0x8] sm:$0xff] %vm333, %v1262
  %1338 = vst.msk [vmem:[%s1335 + $0x10] sm:$0xff] %vm333, %v1267
  %1339 = vst.msk [vmem:[%s1335 + $0x18] sm:$0xff] %vm333, %v1272
  %1340 = vst.msk [vmem:[%s1335 + $0x20] sm:$0xff] %vm333, %v1277
  %1341 = vst.msk [vmem:[%s1335 + $0x28] sm:$0xff] %vm333, %v1282
  %1342 = vst.msk [vmem:[%s1335 + $0x30] sm:$0xff] %vm333, %v1287
  %1343 = vst.msk [vmem:[%s1335 + $0x38] sm:$0xff] %vm333, %v1292
  %1344 = vst.msk [vmem:[%s1335 + $0x40] sm:$0xff] %vm333, %v1297
  %1345 = vst.msk [vmem:[%s1335 + $0x48] sm:$0xff] %vm333, %v1302
  %1346 = vst.msk [vmem:[%s1335 + $0x50] sm:$0xff] %vm333, %v1307
  %1347 = vst.msk [vmem:[%s1335 + $0x58] sm:$0xff] %vm333, %v1312
  %1348 = vst.msk [vmem:[%s1335 + $0x60] sm:$0xff] %vm333, %v1317
  %1349 = vst.msk [vmem:[%s1335 + $0x68] sm:$0xff] %vm333, %v1322
  %1350 = vst.msk [vmem:[%s1335 + $0x70] sm:$0xff] %vm333, %v1327
  %1351 = vst.msk [vmem:[%s1335 + $0x78] sm:$0xff] %vm333, %v1332
  %s1352 = scalar_lea.vmem %s0, 224
  %v1353 = vld [vmem:[%s1352] sm:$0xff]
  %v1354 = vld [vmem:[%s1352 + $0x8] sm:$0xff]
  %v1355 = vld [vmem:[%s1352 + $0x10] sm:$0xff]
  %v1356 = vld [vmem:[%s1352 + $0x18] sm:$0xff]
  %1357 = vmatprep.subr.mxu0 0.0
  %1358 = vmatpush1.msra.mxu0 0.0
  %1359 = vmatprep.subr.mxu0 0.0
  %1360 = vmatpush1.msra.mxu0 0.0
  %1361 = vmatprep.subr.mxu0 0.0
  %1362 = vmatpush1.msra.mxu0 0.0
  %1363 = vmatprep.subr.mxu0 0.0
  %1364 = vmatpush1.msra.mxu0 0.0
  %1365 = vmatprep.subr.mxu0 0.0
  %1366 = vmatpush1.msra.mxu0 0.0
  %1367 = vmatprep.subr.mxu0 0.0
  %1368 = vmatpush1.msra.mxu0 0.0
  %1369 = vmatprep.subr.mxu0 0.0
  %1370 = vmatpush1.msra.mxu0 0.0
  %1371 = vmatprep.subr.mxu0 0.0
  %1372 = vmatpush1.msra.mxu0 0.0
  %1373 = vmatprep.subr.mxu0 0.0
  %1374 = vmatpush1.msra.mxu0 0.0
  %1375 = vmatprep.subr.mxu0 0.0
  %1376 = vmatpush1.msra.mxu0 0.0
  %1377 = vmatprep.subr.mxu0 0.0
  %1378 = vmatpush1.msra.mxu0 0.0
  %1379 = vmatprep.subr.mxu0 0.0
  %1380 = vmatpush1.msra.mxu0 0.0
  %1381 = vmatprep.subr.mxu0 0.0
  %1382 = vmatpush1.msra.mxu0 %v1356
  %1383 = vmatprep.subr.mxu0 0.0
  %1384 = vmatpush1.msra.mxu0 %v1355
  %1385 = vmatprep.subr.mxu0 0.0
  %1386 = vmatpush1.msra.mxu0 %v1354
  %1387 = vmatprep.subr.mxu0 0.0
  %1388 = vmatpush1.msra.mxu0 %v1353
  %1389 = vmatprep.subr.mxu0 0.0
  %1390 = vmatpush2.msra.mxu0 0.0
  %1391 = vmatprep.subr.mxu0 0.0
  %1392 = vmatpush2.msra.mxu0 0.0
  %1393 = vmatprep.subr.mxu0 0.0
  %1394 = vmatpush2.msra.mxu0 0.0
  %1395 = vmatprep.subr.mxu0 0.0
  %1396 = vmatpush2.msra.mxu0 0.0
  %1397 = vmatprep.subr.mxu0 0.0
  %1398 = vmatpush2.msra.mxu0 0.0
  %1399 = vmatprep.subr.mxu0 0.0
  %1400 = vmatpush2.msra.mxu0 0.0
  %1401 = vmatprep.subr.mxu0 0.0
  %1402 = vmatpush2.msra.mxu0 0.0
  %1403 = vmatprep.subr.mxu0 0.0
  %1404 = vmatpush2.msra.mxu0 0.0
  %1405 = vmatprep.subr.mxu0 0.0
  %1406 = vmatpush2.msra.mxu0 0.0
  %1407 = vmatprep.subr.mxu0 0.0
  %1408 = vmatpush2.msra.mxu0 0.0
  %1409 = vmatprep.subr.mxu0 0.0
  %1410 = vmatpush2.msra.mxu0 0.0
  %1411 = vmatprep.subr.mxu0 0.0
  %1412 = vmatpush2.msra.mxu0 0.0
  %1413 = vmatprep.subr.mxu0 0.0
  %1414 = vmatpush2.msra.mxu0 0.0
  %1415 = vmatprep.subr.mxu0 0.0
  %1416 = vmatpush2.msra.mxu0 0.0
  %1417 = vmatprep.subr.mxu0 0.0
  %1418 = vmatpush2.msra.mxu0 0.0
  %1419 = vmatprep.subr.mxu0 0.0
  %1420 = vmatpush2.msra.mxu0 0.0
  %1421 = vmatprep.mubr.f32.mxu0 0.0
  %1422 = vmatmul.mubr.f32.gmra.mxu0 %v141
  %v1423 = vpop.f32.mrf.mxu0
  %v1424 = vadd.f32 %v62, %v1423
  %v1425 = vpop.f32.mrf.mxu0
  %1426 = vmatprep.mubr.f32.mxu0 0.0
  %1427 = vmatmul.mubr.f32.gmra.mxu0 %v144
  %v1428 = vpop.f32.mrf.mxu0
  %v1429 = vadd.f32 %v67, %v1428
  %v1430 = vpop.f32.mrf.mxu0
  %1431 = vmatprep.mubr.f32.mxu0 0.0
  %1432 = vmatmul.mubr.f32.gmra.mxu0 %v147
  %v1433 = vpop.f32.mrf.mxu0
  %v1434 = vadd.f32 %v72, %v1433
  %v1435 = vpop.f32.mrf.mxu0
  %1436 = vmatprep.mubr.f32.mxu0 0.0
  %1437 = vmatmul.mubr.f32.gmra.mxu0 %v150
  %v1438 = vpop.f32.mrf.mxu0
  %v1439 = vadd.f32 %v77, %v1438
  %v1440 = vpop.f32.mrf.mxu0
  %1441 = vmatprep.mubr.f32.mxu0 0.0
  %1442 = vmatmul.mubr.f32.gmra.mxu0 %v153
  %v1443 = vpop.f32.mrf.mxu0
  %v1444 = vadd.f32 %v82, %v1443
  %v1445 = vpop.f32.mrf.mxu0
  %1446 = vmatprep.mubr.f32.mxu0 0.0
  %1447 = vmatmul.mubr.f32.gmra.mxu0 %v156
  %v1448 = vpop.f32.mrf.mxu0
  %v1449 = vadd.f32 %v87, %v1448
  %v1450 = vpop.f32.mrf.mxu0
  %1451 = vmatprep.mubr.f32.mxu0 0.0
  %1452 = vmatmul.mubr.f32.gmra.mxu0 %v159
  %v1453 = vpop.f32.mrf.mxu0
  %v1454 = vadd.f32 %v92, %v1453
  %v1455 = vpop.f32.mrf.mxu0
  %1456 = vmatprep.mubr.f32.mxu0 0.0
  %1457 = vmatmul.mubr.f32.gmra.mxu0 %v162
  %v1458 = vpop.f32.mrf.mxu0
  %v1459 = vadd.f32 %v97, %v1458
  %v1460 = vpop.f32.mrf.mxu0
  %1461 = vmatprep.mubr.f32.mxu0 0.0
  %1462 = vmatmul.mubr.f32.gmra.mxu0 %v165
  %v1463 = vpop.f32.mrf.mxu0
  %v1464 = vadd.f32 %v102, %v1463
  %v1465 = vpop.f32.mrf.mxu0
  %1466 = vmatprep.mubr.f32.mxu0 0.0
  %1467 = vmatmul.mubr.f32.gmra.mxu0 %v168
  %v1468 = vpop.f32.mrf.mxu0
  %v1469 = vadd.f32 %v107, %v1468
  %v1470 = vpop.f32.mrf.mxu0
  %1471 = vmatprep.mubr.f32.mxu0 0.0
  %1472 = vmatmul.mubr.f32.gmra.mxu0 %v171
  %v1473 = vpop.f32.mrf.mxu0
  %v1474 = vadd.f32 %v112, %v1473
  %v1475 = vpop.f32.mrf.mxu0
  %1476 = vmatprep.mubr.f32.mxu0 0.0
  %1477 = vmatmul.mubr.f32.gmra.mxu0 %v174
  %v1478 = vpop.f32.mrf.mxu0
  %v1479 = vadd.f32 %v117, %v1478
  %v1480 = vpop.f32.mrf.mxu0
  %1481 = vmatprep.mubr.f32.mxu0 0.0
  %1482 = vmatmul.mubr.f32.gmra.mxu0 %v177
  %v1483 = vpop.f32.mrf.mxu0
  %v1484 = vadd.f32 %v122, %v1483
  %v1485 = vpop.f32.mrf.mxu0
  %1486 = vmatprep.mubr.f32.mxu0 0.0
  %1487 = vmatmul.mubr.f32.gmra.mxu0 %v180
  %v1488 = vpop.f32.mrf.mxu0
  %v1489 = vadd.f32 %v127, %v1488
  %v1490 = vpop.f32.mrf.mxu0
  %1491 = vmatprep.mubr.f32.mxu0 0.0
  %1492 = vmatmul.mubr.f32.gmra.mxu0 %v183
  %v1493 = vpop.f32.mrf.mxu0
  %v1494 = vadd.f32 %v132, %v1493
  %v1495 = vpop.f32.mrf.mxu0
  %1496 = vmatprep.mubr.f32.mxu0 0.0
  %1497 = vmatmul.mubr.f32.gmra.mxu0 %v186
  %v1498 = vpop.f32.mrf.mxu0
  %v1499 = vadd.f32 %v137, %v1498
  %v1500 = vpop.f32.mrf.mxu0
  %1501 = vdwg.mxu0
  %s1502 = scalar_lea.vmem [#allocation2], 896
  %1503 = vst.msk [vmem:[%s1502] sm:$0xff] %vm333, %v1424
  %1504 = vst.msk [vmem:[%s1502 + $0x8] sm:$0xff] %vm333, %v1429
  %1505 = vst.msk [vmem:[%s1502 + $0x10] sm:$0xff] %vm333, %v1434
  %1506 = vst.msk [vmem:[%s1502 + $0x18] sm:$0xff] %vm333, %v1439
  %1507 = vst.msk [vmem:[%s1502 + $0x20] sm:$0xff] %vm333, %v1444
  %1508 = vst.msk [vmem:[%s1502 + $0x28] sm:$0xff] %vm333, %v1449
  %1509 = vst.msk [vmem:[%s1502 + $0x30] sm:$0xff] %vm333, %v1454
  %1510 = vst.msk [vmem:[%s1502 + $0x38] sm:$0xff] %vm333, %v1459
  %1511 = vst.msk [vmem:[%s1502 + $0x40] sm:$0xff] %vm333, %v1464
  %1512 = vst.msk [vmem:[%s1502 + $0x48] sm:$0xff] %vm333, %v1469
  %1513 = vst.msk [vmem:[%s1502 + $0x50] sm:$0xff] %vm333, %v1474
  %1514 = vst.msk [vmem:[%s1502 + $0x58] sm:$0xff] %vm333, %v1479
  %1515 = vst.msk [vmem:[%s1502 + $0x60] sm:$0xff] %vm333, %v1484
  %1516 = vst.msk [vmem:[%s1502 + $0x68] sm:$0xff] %vm333, %v1489
  %1517 = vst.msk [vmem:[%s1502 + $0x70] sm:$0xff] %vm333, %v1494
  %1518 = vst.msk [vmem:[%s1502 + $0x78] sm:$0xff] %vm333, %v1499
  %v1519 = vld [vmem:[%s1] sm:$0xff]
  %v1520 = vld [vmem:[%s1 + $0x8] sm:$0xff]
  %v1521 = vld [vmem:[%s1 + $0x10] sm:$0xff]
  %v1522 = vld [vmem:[%s1 + $0x18] sm:$0xff]
  %1523 = vmatprep.subr.mxu0 0.0
  %1524 = vmatpush1.msra.mxu0 0.0
  %1525 = vmatprep.subr.mxu0 0.0
  %1526 = vmatpush1.msra.mxu0 0.0
  %1527 = vmatprep.subr.mxu0 0.0
  %1528 = vmatpush1.msra.mxu0 0.0
  %1529 = vmatprep.subr.mxu0 0.0
  %1530 = vmatpush1.msra.mxu0 0.0
  %1531 = vmatprep.subr.mxu0 0.0
  %1532 = vmatpush1.msra.mxu0 0.0
  %1533 = vmatprep.subr.mxu0 0.0
  %1534 = vmatpush1.msra.mxu0 0.0
  %1535 = vmatprep.subr.mxu0 0.0
  %1536 = vmatpush1.msra.mxu0 0.0
  %1537 = vmatprep.subr.mxu0 0.0
  %1538 = vmatpush1.msra.mxu0 0.0
  %1539 = vmatprep.subr.mxu0 0.0
  %1540 = vmatpush1.msra.mxu0 0.0
  %1541 = vmatprep.subr.mxu0 0.0
  %1542 = vmatpush1.msra.mxu0 0.0
  %1543 = vmatprep.subr.mxu0 0.0
  %1544 = vmatpush1.msra.mxu0 0.0
  %1545 = vmatprep.subr.mxu0 0.0
  %1546 = vmatpush1.msra.mxu0 0.0
  %1547 = vmatprep.subr.mxu0 0.0
  %1548 = vmatpush1.msra.mxu0 %v1522
  %1549 = vmatprep.subr.mxu0 0.0
  %1550 = vmatpush1.msra.mxu0 %v1521
  %1551 = vmatprep.subr.mxu0 0.0
  %1552 = vmatpush1.msra.mxu0 %v1520
  %1553 = vmatprep.subr.mxu0 0.0
  %1554 = vmatpush1.msra.mxu0 %v1519
  %1555 = vmatprep.subr.mxu0 0.0
  %1556 = vmatpush2.msra.mxu0 0.0
  %1557 = vmatprep.subr.mxu0 0.0
  %1558 = vmatpush2.msra.mxu0 0.0
  %1559 = vmatprep.subr.mxu0 0.0
  %1560 = vmatpush2.msra.mxu0 0.0
  %1561 = vmatprep.subr.mxu0 0.0
  %1562 = vmatpush2.msra.mxu0 0.0
  %1563 = vmatprep.subr.mxu0 0.0
  %1564 = vmatpush2.msra.mxu0 0.0
  %1565 = vmatprep.subr.mxu0 0.0
  %1566 = vmatpush2.msra.mxu0 0.0
  %1567 = vmatprep.subr.mxu0 0.0
  %1568 = vmatpush2.msra.mxu0 0.0
  %1569 = vmatprep.subr.mxu0 0.0
  %1570 = vmatpush2.msra.mxu0 0.0
  %1571 = vmatprep.subr.mxu0 0.0
  %1572 = vmatpush2.msra.mxu0 0.0
  %1573 = vmatprep.subr.mxu0 0.0
  %1574 = vmatpush2.msra.mxu0 0.0
  %1575 = vmatprep.subr.mxu0 0.0
  %1576 = vmatpush2.msra.mxu0 0.0
  %1577 = vmatprep.subr.mxu0 0.0
  %1578 = vmatpush2.msra.mxu0 0.0
  %1579 = vmatprep.subr.mxu0 0.0
  %1580 = vmatpush2.msra.mxu0 0.0
  %1581 = vmatprep.subr.mxu0 0.0
  %1582 = vmatpush2.msra.mxu0 0.0
  %1583 = vmatprep.subr.mxu0 0.0
  %1584 = vmatpush2.msra.mxu0 0.0
  %1585 = vmatprep.subr.mxu0 0.0
  %1586 = vmatpush2.msra.mxu0 0.0
  %1587 = vmatprep.mubr.f32.mxu0 0.0
  %1588 = vmatmul.mubr.f32.gmra.mxu0 %v141
  %v1589 = vpop.f32.mrf.mxu0
  %v1590 = vadd.f32 %v62, %v1589
  %v1591 = vpop.f32.mrf.mxu0
  %1592 = vmatprep.mubr.f32.mxu0 0.0
  %1593 = vmatmul.mubr.f32.gmra.mxu0 %v144
  %v1594 = vpop.f32.mrf.mxu0
  %v1595 = vadd.f32 %v67, %v1594
  %v1596 = vpop.f32.mrf.mxu0
  %1597 = vmatprep.mubr.f32.mxu0 0.0
  %1598 = vmatmul.mubr.f32.gmra.mxu0 %v147
  %v1599 = vpop.f32.mrf.mxu0
  %v1600 = vadd.f32 %v72, %v1599
  %v1601 = vpop.f32.mrf.mxu0
  %1602 = vmatprep.mubr.f32.mxu0 0.0
  %1603 = vmatmul.mubr.f32.gmra.mxu0 %v150
  %v1604 = vpop.f32.mrf.mxu0
  %v1605 = vadd.f32 %v77, %v1604
  %v1606 = vpop.f32.mrf.mxu0
  %1607 = vmatprep.mubr.f32.mxu0 0.0
  %1608 = vmatmul.mubr.f32.gmra.mxu0 %v153
  %v1609 = vpop.f32.mrf.mxu0
  %v1610 = vadd.f32 %v82, %v1609
  %v1611 = vpop.f32.mrf.mxu0
  %1612 = vmatprep.mubr.f32.mxu0 0.0
  %1613 = vmatmul.mubr.f32.gmra.mxu0 %v156
  %v1614 = vpop.f32.mrf.mxu0
  %v1615 = vadd.f32 %v87, %v1614
  %v1616 = vpop.f32.mrf.mxu0
  %1617 = vmatprep.mubr.f32.mxu0 0.0
  %1618 = vmatmul.mubr.f32.gmra.mxu0 %v159
  %v1619 = vpop.f32.mrf.mxu0
  %v1620 = vadd.f32 %v92, %v1619
  %v1621 = vpop.f32.mrf.mxu0
  %1622 = vmatprep.mubr.f32.mxu0 0.0
  %1623 = vmatmul.mubr.f32.gmra.mxu0 %v162
  %v1624 = vpop.f32.mrf.mxu0
  %v1625 = vadd.f32 %v97, %v1624
  %v1626 = vpop.f32.mrf.mxu0
  %1627 = vmatprep.mubr.f32.mxu0 0.0
  %1628 = vmatmul.mubr.f32.gmra.mxu0 %v165
  %v1629 = vpop.f32.mrf.mxu0
  %v1630 = vadd.f32 %v102, %v1629
  %v1631 = vpop.f32.mrf.mxu0
  %1632 = vmatprep.mubr.f32.mxu0 0.0
  %1633 = vmatmul.mubr.f32.gmra.mxu0 %v168
  %v1634 = vpop.f32.mrf.mxu0
  %v1635 = vadd.f32 %v107, %v1634
  %v1636 = vpop.f32.mrf.mxu0
  %1637 = vmatprep.mubr.f32.mxu0 0.0
  %1638 = vmatmul.mubr.f32.gmra.mxu0 %v171
  %v1639 = vpop.f32.mrf.mxu0
  %v1640 = vadd.f32 %v112, %v1639
  %v1641 = vpop.f32.mrf.mxu0
  %1642 = vmatprep.mubr.f32.mxu0 0.0
  %1643 = vmatmul.mubr.f32.gmra.mxu0 %v174
  %v1644 = vpop.f32.mrf.mxu0
  %v1645 = vadd.f32 %v117, %v1644
  %v1646 = vpop.f32.mrf.mxu0
  %1647 = vmatprep.mubr.f32.mxu0 0.0
  %1648 = vmatmul.mubr.f32.gmra.mxu0 %v177
  %v1649 = vpop.f32.mrf.mxu0
  %v1650 = vadd.f32 %v122, %v1649
  %v1651 = vpop.f32.mrf.mxu0
  %1652 = vmatprep.mubr.f32.mxu0 0.0
  %1653 = vmatmul.mubr.f32.gmra.mxu0 %v180
  %v1654 = vpop.f32.mrf.mxu0
  %v1655 = vadd.f32 %v127, %v1654
  %v1656 = vpop.f32.mrf.mxu0
  %1657 = vmatprep.mubr.f32.mxu0 0.0
  %1658 = vmatmul.mubr.f32.gmra.mxu0 %v183
  %v1659 = vpop.f32.mrf.mxu0
  %v1660 = vadd.f32 %v132, %v1659
  %v1661 = vpop.f32.mrf.mxu0
  %1662 = vmatprep.mubr.f32.mxu0 0.0
  %1663 = vmatmul.mubr.f32.gmra.mxu0 %v186
  %v1664 = vpop.f32.mrf.mxu0
  %v1665 = vadd.f32 %v137, %v1664
  %v1666 = vpop.f32.mrf.mxu0
  %1667 = vdwg.mxu0
  %s1668 = scalar_lea.vmem [#allocation2], 1024
  %1669 = vst.msk [vmem:[%s1668] sm:$0xff] %vm333, %v1590
  %1670 = vst.msk [vmem:[%s1668 + $0x8] sm:$0xff] %vm333, %v1595
  %1671 = vst.msk [vmem:[%s1668 + $0x10] sm:$0xff] %vm333, %v1600
  %1672 = vst.msk [vmem:[%s1668 + $0x18] sm:$0xff] %vm333, %v1605
  %1673 = vst.msk [vmem:[%s1668 + $0x20] sm:$0xff] %vm333, %v1610
  %1674 = vst.msk [vmem:[%s1668 + $0x28] sm:$0xff] %vm333, %v1615
  %1675 = vst.msk [vmem:[%s1668 + $0x30] sm:$0xff] %vm333, %v1620
  %1676 = vst.msk [vmem:[%s1668 + $0x38] sm:$0xff] %vm333, %v1625
  %1677 = vst.msk [vmem:[%s1668 + $0x40] sm:$0xff] %vm333, %v1630
  %1678 = vst.msk [vmem:[%s1668 + $0x48] sm:$0xff] %vm333, %v1635
  %1679 = vst.msk [vmem:[%s1668 + $0x50] sm:$0xff] %vm333, %v1640
  %1680 = vst.msk [vmem:[%s1668 + $0x58] sm:$0xff] %vm333, %v1645
  %1681 = vst.msk [vmem:[%s1668 + $0x60] sm:$0xff] %vm333, %v1650
  %1682 = vst.msk [vmem:[%s1668 + $0x68] sm:$0xff] %vm333, %v1655
  %1683 = vst.msk [vmem:[%s1668 + $0x70] sm:$0xff] %vm333, %v1660
  %1684 = vst.msk [vmem:[%s1668 + $0x78] sm:$0xff] %vm333, %v1665
  %v1685 = vld [vmem:[#allocation2] sm:$0xff]
  %v1686 = vld [vmem:[#allocation2 + $0x80] sm:$0xff]
  %v1687 = vld [vmem:[#allocation2 + $0x100] sm:$0xff]
  %v1688 = vld [vmem:[#allocation2 + $0x180] sm:$0xff]
  %v1689 = vld [vmem:[#allocation2 + $0x200] sm:$0xff]
  %v1690 = vld [vmem:[#allocation2 + $0x280] sm:$0xff]
  %v1691 = vld [vmem:[#allocation2 + $0x300] sm:$0xff]
  %v1692 = vld [vmem:[#allocation2 + $0x380] sm:$0xff]
  %v1693 = vld [vmem:[#allocation2 + $0x400] sm:$0xff]
  %v1694 = vld [vmem:[#allocation2 + $0x20] sm:$0xff]
  %v1695 = vld [vmem:[#allocation2 + $0xa0] sm:$0xff]
  %v1696 = vld [vmem:[#allocation2 + $0x120] sm:$0xff]
  %v1697 = vld [vmem:[#allocation2 + $0x1a0] sm:$0xff]
  %v1698 = vld [vmem:[#allocation2 + $0x220] sm:$0xff]
  %v1699 = vld [vmem:[#allocation2 + $0x2a0] sm:$0xff]
  %v1700 = vld [vmem:[#allocation2 + $0x320] sm:$0xff]
  %v1701 = vld [vmem:[#allocation2 + $0x3a0] sm:$0xff]
  %v1702 = vld [vmem:[#allocation2 + $0x420] sm:$0xff]
  %v1703 = vld [vmem:[#allocation2 + $0x40] sm:$0xff]
  %v1704 = vld [vmem:[#allocation2 + $0x48] sm:$0xff]
  %v1705 = vld [vmem:[#allocation2 + $0xc0] sm:$0xff]
  %v1706 = vld [vmem:[#allocation2 + $0xc8] sm:$0xff]
  %v1707 = vld [vmem:[#allocation2 + $0x140] sm:$0xff]
  %v1708 = vld [vmem:[#allocation2 + $0x148] sm:$0xff]
  %v1709 = vld [vmem:[#allocation2 + $0x1c0] sm:$0xff]
  %v1710 = vld [vmem:[#allocation2 + $0x1c8] sm:$0xff]
  %v1711 = vld [vmem:[#allocation2 + $0x240] sm:$0xff]
  %v1712 = vld [vmem:[#allocation2 + $0x248] sm:$0xff]
  %v1713 = vld [vmem:[#allocation2 + $0x2c0] sm:$0xff]
  %v1714 = vld [vmem:[#allocation2 + $0x2c8] sm:$0xff]
  %v1715 = vld [vmem:[#allocation2 + $0x340] sm:$0xff]
  %v1716 = vld [vmem:[#allocation2 + $0x348] sm:$0xff]
  %v1717 = vld [vmem:[#allocation2 + $0x3c0] sm:$0xff]
  %v1718 = vld [vmem:[#allocation2 + $0x3c8] sm:$0xff]
  %v1719 = vld [vmem:[#allocation2 + $0x440] sm:$0xff]
  %v1720 = vld [vmem:[#allocation2 + $0x448] sm:$0xff]
  %v1721 = vlaneseq
  %v1722 = vshrl.u32 %v1721, 7
  %v1723 = vsub.s32 0, %v1722
  %v1724 = vrot.slane %v1685, %v1723
  %v1725 = vlaneseq
  %v1726 = vshrl.u32 %v1725, 7
  %v1727 = vsub.s32 0, %v1726
  %v1728 = vrot.slane %v1686, %v1727
  %v1729 = vlaneseq
  %v1730 = vshrl.u32 %v1729, 7
  %v1731 = vsub.s32 0, %v1730
  %v1732 = vrot.slane %v1687, %v1731
  %v1733 = vlaneseq
  %v1734 = vshrl.u32 %v1733, 7
  %v1735 = vsub.s32 0, %v1734
  %v1736 = vrot.slane %v1688, %v1735
  %v1737 = vlaneseq
  %v1738 = vshrl.u32 %v1737, 7
  %v1739 = vsub.s32 0, %v1738
  %v1740 = vrot.slane %v1689, %v1739
  %v1741 = vlaneseq
  %v1742 = vshrl.u32 %v1741, 7
  %v1743 = vsub.s32 0, %v1742
  %v1744 = vrot.slane %v1690, %v1743
  %v1745 = vlaneseq
  %v1746 = vshrl.u32 %v1745, 7
  %v1747 = vsub.s32 0, %v1746
  %v1748 = vrot.slane %v1691, %v1747
  %v1749 = vlaneseq
  %v1750 = vshrl.u32 %v1749, 7
  %v1751 = vsub.s32 0, %v1750
  %v1752 = vrot.slane %v1692, %v1751
  %v1753 = vlaneseq
  %v1754 = vshrl.u32 %v1753, 7
  %v1755 = vsub.s32 0, %v1754
  %v1756 = vrot.slane %v1693, %v1755
  %v1766 = vrot.slane %v1695, 7
  %vm1767 = vcmask 1041409
  %v1768 = vsel %vm1767, %v1766, %v1694
  %v1769 = vrot.slane %v1696, 6
  %vm1770 = vcmask 1042434
  %v1771 = vsel %vm1770, %v1769, %v1768
  %v1772 = vrot.slane %v1697, 5
  %vm1773 = vcmask 1043459
  %v1774 = vsel %vm1773, %v1772, %v1771
  %v1775 = vrot.slane %v1698, 4
  %vm1776 = vcmask 1044484
  %v1777 = vsel %vm1776, %v1775, %v1774
  %v1778 = vrot.slane %v1699, 3
  %vm1779 = vcmask 1045509
  %v1780 = vsel %vm1779, %v1778, %v1777
  %v1781 = vrot.slane %v1700, 2
  %vm1782 = vcmask 1046534
  %v1783 = vsel %vm1782, %v1781, %v1780
  %v1784 = vrot.slane %v1701, 1
  %vm1785 = vcmask 1047559
  %v1786 = vsel %vm1785, %v1784, %v1783
  %v1789 = vmul.f32 %v1724, %v1786
  %v1790 = vmul.f32 %v1724, %v1702
  %v1791 = vmul.f32 %v1728, %v1786
  %v1792 = vmul.f32 %v1728, %v1702
  %v1793 = vmul.f32 %v1732, %v1786
  %v1794 = vmul.f32 %v1732, %v1702
  %v1795 = vmul.f32 %v1736, %v1786
  %v1796 = vmul.f32 %v1736, %v1702
  %v1797 = vmul.f32 %v1740, %v1786
  %v1798 = vmul.f32 %v1740, %v1702
  %v1799 = vmul.f32 %v1744, %v1786
  %v1800 = vmul.f32 %v1744, %v1702
  %v1801 = vmul.f32 %v1748, %v1786
  %v1802 = vmul.f32 %v1748, %v1702
  %v1803 = vmul.f32 %v1752, %v1786
  %v1804 = vmul.f32 %v1752, %v1702
  %v1805 = vmul.f32 %v1756, %v1786
  %v1806 = vmul.f32 %v1756, %v1702
  %v1807 = vlaneseq
  %v1808 = vshrl.u32 %v1807, 7
  %v1809 = vsub.s32 1, %v1808
  %v1810 = vrot.slane %v1685, %v1809
  %v1811 = vlaneseq
  %v1812 = vshrl.u32 %v1811, 7
  %v1813 = vsub.s32 1, %v1812
  %v1814 = vrot.slane %v1686, %v1813
  %v1815 = vlaneseq
  %v1816 = vshrl.u32 %v1815, 7
  %v1817 = vsub.s32 1, %v1816
  %v1818 = vrot.slane %v1687, %v1817
  %v1819 = vlaneseq
  %v1820 = vshrl.u32 %v1819, 7
  %v1821 = vsub.s32 1, %v1820
  %v1822 = vrot.slane %v1688, %v1821
  %v1823 = vlaneseq
  %v1824 = vshrl.u32 %v1823, 7
  %v1825 = vsub.s32 1, %v1824
  %v1826 = vrot.slane %v1689, %v1825
  %v1827 = vlaneseq
  %v1828 = vshrl.u32 %v1827, 7
  %v1829 = vsub.s32 1, %v1828
  %v1830 = vrot.slane %v1690, %v1829
  %v1831 = vlaneseq
  %v1832 = vshrl.u32 %v1831, 7
  %v1833 = vsub.s32 1, %v1832
  %v1834 = vrot.slane %v1691, %v1833
  %v1835 = vlaneseq
  %v1836 = vshrl.u32 %v1835, 7
  %v1837 = vsub.s32 1, %v1836
  %v1838 = vrot.slane %v1692, %v1837
  %v1839 = vlaneseq
  %v1840 = vshrl.u32 %v1839, 7
  %v1841 = vsub.s32 1, %v1840
  %v1842 = vrot.slane %v1693, %v1841
  %v1843 = vrot.slane %v1694, 1
  %v1844 = vsel %vm1767, %v1695, %v1843
  %v1845 = vrot.slane %v1696, 7
  %v1846 = vsel %vm1770, %v1845, %v1844
  %v1847 = vrot.slane %v1697, 6
  %v1848 = vsel %vm1773, %v1847, %v1846
  %v1849 = vrot.slane %v1698, 5
  %v1850 = vsel %vm1776, %v1849, %v1848
  %v1851 = vrot.slane %v1699, 4
  %v1852 = vsel %vm1779, %v1851, %v1850
  %v1853 = vrot.slane %v1700, 3
  %v1854 = vsel %vm1782, %v1853, %v1852
  %v1855 = vrot.slane %v1701, 2
  %v1856 = vsel %vm1785, %v1855, %v1854
  %v1857 = vrot.slane %v1702, 1
  %v1860 = vmul.f32 %v1810, %v1856
  %v1861 = vmul.f32 %v1810, %v1857
  %v1862 = vmul.f32 %v1814, %v1856
  %v1863 = vmul.f32 %v1814, %v1857
  %v1864 = vmul.f32 %v1818, %v1856
  %v1865 = vmul.f32 %v1818, %v1857
  %v1866 = vmul.f32 %v1822, %v1856
  %v1867 = vmul.f32 %v1822, %v1857
  %v1868 = vmul.f32 %v1826, %v1856
  %v1869 = vmul.f32 %v1826, %v1857
  %v1870 = vmul.f32 %v1830, %v1856
  %v1871 = vmul.f32 %v1830, %v1857
  %v1872 = vmul.f32 %v1834, %v1856
  %v1873 = vmul.f32 %v1834, %v1857
  %v1874 = vmul.f32 %v1838, %v1856
  %v1875 = vmul.f32 %v1838, %v1857
  %v1876 = vmul.f32 %v1842, %v1856
  %v1877 = vmul.f32 %v1842, %v1857
  %v1878 = vadd.f32 %v1789, %v1860
  %v1879 = vadd.f32 %v1790, %v1861
  %v1880 = vadd.f32 %v1791, %v1862
  %v1881 = vadd.f32 %v1792, %v1863
  %v1882 = vadd.f32 %v1793, %v1864
  %v1883 = vadd.f32 %v1794, %v1865
  %v1884 = vadd.f32 %v1795, %v1866
  %v1885 = vadd.f32 %v1796, %v1867
  %v1886 = vadd.f32 %v1797, %v1868
  %v1887 = vadd.f32 %v1798, %v1869
  %v1888 = vadd.f32 %v1799, %v1870
  %v1889 = vadd.f32 %v1800, %v1871
  %v1890 = vadd.f32 %v1801, %v1872
  %v1891 = vadd.f32 %v1802, %v1873
  %v1892 = vadd.f32 %v1803, %v1874
  %v1893 = vadd.f32 %v1804, %v1875
  %v1894 = vadd.f32 %v1805, %v1876
  %v1895 = vadd.f32 %v1806, %v1877
  %v1896 = vlaneseq
  %v1897 = vshrl.u32 %v1896, 7
  %v1898 = vsub.s32 2, %v1897
  %v1899 = vrot.slane %v1685, %v1898
  %v1900 = vlaneseq
  %v1901 = vshrl.u32 %v1900, 7
  %v1902 = vsub.s32 2, %v1901
  %v1903 = vrot.slane %v1686, %v1902
  %v1904 = vlaneseq
  %v1905 = vshrl.u32 %v1904, 7
  %v1906 = vsub.s32 2, %v1905
  %v1907 = vrot.slane %v1687, %v1906
  %v1908 = vlaneseq
  %v1909 = vshrl.u32 %v1908, 7
  %v1910 = vsub.s32 2, %v1909
  %v1911 = vrot.slane %v1688, %v1910
  %v1912 = vlaneseq
  %v1913 = vshrl.u32 %v1912, 7
  %v1914 = vsub.s32 2, %v1913
  %v1915 = vrot.slane %v1689, %v1914
  %v1916 = vlaneseq
  %v1917 = vshrl.u32 %v1916, 7
  %v1918 = vsub.s32 2, %v1917
  %v1919 = vrot.slane %v1690, %v1918
  %v1920 = vlaneseq
  %v1921 = vshrl.u32 %v1920, 7
  %v1922 = vsub.s32 2, %v1921
  %v1923 = vrot.slane %v1691, %v1922
  %v1924 = vlaneseq
  %v1925 = vshrl.u32 %v1924, 7
  %v1926 = vsub.s32 2, %v1925
  %v1927 = vrot.slane %v1692, %v1926
  %v1928 = vlaneseq
  %v1929 = vshrl.u32 %v1928, 7
  %v1930 = vsub.s32 2, %v1929
  %v1931 = vrot.slane %v1693, %v1930
  %v1932 = vrot.slane %v1694, 2
  %v1933 = vrot.slane %v1695, 1
  %v1934 = vsel %vm1767, %v1933, %v1932
  %v1935 = vsel %vm1770, %v1696, %v1934
  %v1936 = vrot.slane %v1697, 7
  %v1937 = vsel %vm1773, %v1936, %v1935
  %v1938 = vrot.slane %v1698, 6
  %v1939 = vsel %vm1776, %v1938, %v1937
  %v1940 = vrot.slane %v1699, 5
  %v1941 = vsel %vm1779, %v1940, %v1939
  %v1942 = vrot.slane %v1700, 4
  %v1943 = vsel %vm1782, %v1942, %v1941
  %v1944 = vrot.slane %v1701, 3
  %v1945 = vsel %vm1785, %v1944, %v1943
  %v1946 = vrot.slane %v1702, 2
  %v1949 = vmul.f32 %v1899, %v1945
  %v1950 = vmul.f32 %v1899, %v1946
  %v1951 = vmul.f32 %v1903, %v1945
  %v1952 = vmul.f32 %v1903, %v1946
  %v1953 = vmul.f32 %v1907, %v1945
  %v1954 = vmul.f32 %v1907, %v1946
  %v1955 = vmul.f32 %v1911, %v1945
  %v1956 = vmul.f32 %v1911, %v1946
  %v1957 = vmul.f32 %v1915, %v1945
  %v1958 = vmul.f32 %v1915, %v1946
  %v1959 = vmul.f32 %v1919, %v1945
  %v1960 = vmul.f32 %v1919, %v1946
  %v1961 = vmul.f32 %v1923, %v1945
  %v1962 = vmul.f32 %v1923, %v1946
  %v1963 = vmul.f32 %v1927, %v1945
  %v1964 = vmul.f32 %v1927, %v1946
  %v1965 = vmul.f32 %v1931, %v1945
  %v1966 = vmul.f32 %v1931, %v1946
  %v1967 = vadd.f32 %v1878, %v1949
  %v1968 = vadd.f32 %v1879, %v1950
  %v1969 = vadd.f32 %v1880, %v1951
  %v1970 = vadd.f32 %v1881, %v1952
  %v1971 = vadd.f32 %v1882, %v1953
  %v1972 = vadd.f32 %v1883, %v1954
  %v1973 = vadd.f32 %v1884, %v1955
  %v1974 = vadd.f32 %v1885, %v1956
  %v1975 = vadd.f32 %v1886, %v1957
  %v1976 = vadd.f32 %v1887, %v1958
  %v1977 = vadd.f32 %v1888, %v1959
  %v1978 = vadd.f32 %v1889, %v1960
  %v1979 = vadd.f32 %v1890, %v1961
  %v1980 = vadd.f32 %v1891, %v1962
  %v1981 = vadd.f32 %v1892, %v1963
  %v1982 = vadd.f32 %v1893, %v1964
  %v1983 = vadd.f32 %v1894, %v1965
  %v1984 = vadd.f32 %v1895, %v1966
  %v1985 = vlaneseq
  %v1986 = vshrl.u32 %v1985, 7
  %v1987 = vsub.s32 3, %v1986
  %v1988 = vrot.slane %v1685, %v1987
  %v1989 = vlaneseq
  %v1990 = vshrl.u32 %v1989, 7
  %v1991 = vsub.s32 3, %v1990
  %v1992 = vrot.slane %v1686, %v1991
  %v1993 = vlaneseq
  %v1994 = vshrl.u32 %v1993, 7
  %v1995 = vsub.s32 3, %v1994
  %v1996 = vrot.slane %v1687, %v1995
  %v1997 = vlaneseq
  %v1998 = vshrl.u32 %v1997, 7
  %v1999 = vsub.s32 3, %v1998
  %v2000 = vrot.slane %v1688, %v1999
  %v2001 = vlaneseq
  %v2002 = vshrl.u32 %v2001, 7
  %v2003 = vsub.s32 3, %v2002
  %v2004 = vrot.slane %v1689, %v2003
  %v2005 = vlaneseq
  %v2006 = vshrl.u32 %v2005, 7
  %v2007 = vsub.s32 3, %v2006
  %v2008 = vrot.slane %v1690, %v2007
  %v2009 = vlaneseq
  %v2010 = vshrl.u32 %v2009, 7
  %v2011 = vsub.s32 3, %v2010
  %v2012 = vrot.slane %v1691, %v2011
  %v2013 = vlaneseq
  %v2014 = vshrl.u32 %v2013, 7
  %v2015 = vsub.s32 3, %v2014
  %v2016 = vrot.slane %v1692, %v2015
  %v2017 = vlaneseq
  %v2018 = vshrl.u32 %v2017, 7
  %v2019 = vsub.s32 3, %v2018
  %v2020 = vrot.slane %v1693, %v2019
  %v2021 = vrot.slane %v1694, 3
  %v2022 = vrot.slane %v1695, 2
  %v2023 = vsel %vm1767, %v2022, %v2021
  %v2024 = vrot.slane %v1696, 1
  %v2025 = vsel %vm1770, %v2024, %v2023
  %v2026 = vsel %vm1773, %v1697, %v2025
  %v2027 = vrot.slane %v1698, 7
  %v2028 = vsel %vm1776, %v2027, %v2026
  %v2029 = vrot.slane %v1699, 6
  %v2030 = vsel %vm1779, %v2029, %v2028
  %v2031 = vrot.slane %v1700, 5
  %v2032 = vsel %vm1782, %v2031, %v2030
  %v2033 = vrot.slane %v1701, 4
  %v2034 = vsel %vm1785, %v2033, %v2032
  %v2035 = vrot.slane %v1702, 3
  %v2038 = vmul.f32 %v1988, %v2034
  %v2039 = vmul.f32 %v1988, %v2035
  %v2040 = vmul.f32 %v1992, %v2034
  %v2041 = vmul.f32 %v1992, %v2035
  %v2042 = vmul.f32 %v1996, %v2034
  %v2043 = vmul.f32 %v1996, %v2035
  %v2044 = vmul.f32 %v2000, %v2034
  %v2045 = vmul.f32 %v2000, %v2035
  %v2046 = vmul.f32 %v2004, %v2034
  %v2047 = vmul.f32 %v2004, %v2035
  %v2048 = vmul.f32 %v2008, %v2034
  %v2049 = vmul.f32 %v2008, %v2035
  %v2050 = vmul.f32 %v2012, %v2034
  %v2051 = vmul.f32 %v2012, %v2035
  %v2052 = vmul.f32 %v2016, %v2034
  %v2053 = vmul.f32 %v2016, %v2035
  %v2054 = vmul.f32 %v2020, %v2034
  %v2055 = vmul.f32 %v2020, %v2035
  %v2056 = vadd.f32 %v1967, %v2038
  %v2057 = vadd.f32 %v1968, %v2039
  %v2058 = vadd.f32 %v1969, %v2040
  %v2059 = vadd.f32 %v1970, %v2041
  %v2060 = vadd.f32 %v1971, %v2042
  %v2061 = vadd.f32 %v1972, %v2043
  %v2062 = vadd.f32 %v1973, %v2044
  %v2063 = vadd.f32 %v1974, %v2045
  %v2064 = vadd.f32 %v1975, %v2046
  %v2065 = vadd.f32 %v1976, %v2047
  %v2066 = vadd.f32 %v1977, %v2048
  %v2067 = vadd.f32 %v1978, %v2049
  %v2068 = vadd.f32 %v1979, %v2050
  %v2069 = vadd.f32 %v1980, %v2051
  %v2070 = vadd.f32 %v1981, %v2052
  %v2071 = vadd.f32 %v1982, %v2053
  %v2072 = vadd.f32 %v1983, %v2054
  %v2073 = vadd.f32 %v1984, %v2055
  %v2074 = vlaneseq
  %v2075 = vshrl.u32 %v2074, 7
  %v2076 = vsub.s32 4, %v2075
  %v2077 = vrot.slane %v1685, %v2076
  %v2078 = vlaneseq
  %v2079 = vshrl.u32 %v2078, 7
  %v2080 = vsub.s32 4, %v2079
  %v2081 = vrot.slane %v1686, %v2080
  %v2082 = vlaneseq
  %v2083 = vshrl.u32 %v2082, 7
  %v2084 = vsub.s32 4, %v2083
  %v2085 = vrot.slane %v1687, %v2084
  %v2086 = vlaneseq
  %v2087 = vshrl.u32 %v2086, 7
  %v2088 = vsub.s32 4, %v2087
  %v2089 = vrot.slane %v1688, %v2088
  %v2090 = vlaneseq
  %v2091 = vshrl.u32 %v2090, 7
  %v2092 = vsub.s32 4, %v2091
  %v2093 = vrot.slane %v1689, %v2092
  %v2094 = vlaneseq
  %v2095 = vshrl.u32 %v2094, 7
  %v2096 = vsub.s32 4, %v2095
  %v2097 = vrot.slane %v1690, %v2096
  %v2098 = vlaneseq
  %v2099 = vshrl.u32 %v2098, 7
  %v2100 = vsub.s32 4, %v2099
  %v2101 = vrot.slane %v1691, %v2100
  %v2102 = vlaneseq
  %v2103 = vshrl.u32 %v2102, 7
  %v2104 = vsub.s32 4, %v2103
  %v2105 = vrot.slane %v1692, %v2104
  %v2106 = vlaneseq
  %v2107 = vshrl.u32 %v2106, 7
  %v2108 = vsub.s32 4, %v2107
  %v2109 = vrot.slane %v1693, %v2108
  %v2110 = vrot.slane %v1694, 4
  %v2111 = vrot.slane %v1695, 3
  %v2112 = vsel %vm1767, %v2111, %v2110
  %v2113 = vrot.slane %v1696, 2
  %v2114 = vsel %vm1770, %v2113, %v2112
  %v2115 = vrot.slane %v1697, 1
  %v2116 = vsel %vm1773, %v2115, %v2114
  %v2117 = vsel %vm1776, %v1698, %v2116
  %v2118 = vrot.slane %v1699, 7
  %v2119 = vsel %vm1779, %v2118, %v2117
  %v2120 = vrot.slane %v1700, 6
  %v2121 = vsel %vm1782, %v2120, %v2119
  %v2122 = vrot.slane %v1701, 5
  %v2123 = vsel %vm1785, %v2122, %v2121
  %v2124 = vrot.slane %v1702, 4
  %v2127 = vmul.f32 %v2077, %v2123
  %v2128 = vmul.f32 %v2077, %v2124
  %v2129 = vmul.f32 %v2081, %v2123
  %v2130 = vmul.f32 %v2081, %v2124
  %v2131 = vmul.f32 %v2085, %v2123
  %v2132 = vmul.f32 %v2085, %v2124
  %v2133 = vmul.f32 %v2089, %v2123
  %v2134 = vmul.f32 %v2089, %v2124
  %v2135 = vmul.f32 %v2093, %v2123
  %v2136 = vmul.f32 %v2093, %v2124
  %v2137 = vmul.f32 %v2097, %v2123
  %v2138 = vmul.f32 %v2097, %v2124
  %v2139 = vmul.f32 %v2101, %v2123
  %v2140 = vmul.f32 %v2101, %v2124
  %v2141 = vmul.f32 %v2105, %v2123
  %v2142 = vmul.f32 %v2105, %v2124
  %v2143 = vmul.f32 %v2109, %v2123
  %v2144 = vmul.f32 %v2109, %v2124
  %v2145 = vadd.f32 %v2056, %v2127
  %v2146 = vadd.f32 %v2057, %v2128
  %v2147 = vadd.f32 %v2058, %v2129
  %v2148 = vadd.f32 %v2059, %v2130
  %v2149 = vadd.f32 %v2060, %v2131
  %v2150 = vadd.f32 %v2061, %v2132
  %v2151 = vadd.f32 %v2062, %v2133
  %v2152 = vadd.f32 %v2063, %v2134
  %v2153 = vadd.f32 %v2064, %v2135
  %v2154 = vadd.f32 %v2065, %v2136
  %v2155 = vadd.f32 %v2066, %v2137
  %v2156 = vadd.f32 %v2067, %v2138
  %v2157 = vadd.f32 %v2068, %v2139
  %v2158 = vadd.f32 %v2069, %v2140
  %v2159 = vadd.f32 %v2070, %v2141
  %v2160 = vadd.f32 %v2071, %v2142
  %v2161 = vadd.f32 %v2072, %v2143
  %v2162 = vadd.f32 %v2073, %v2144
  %v2163 = vlaneseq
  %v2164 = vshrl.u32 %v2163, 7
  %v2165 = vsub.s32 5, %v2164
  %v2166 = vrot.slane %v1685, %v2165
  %v2167 = vlaneseq
  %v2168 = vshrl.u32 %v2167, 7
  %v2169 = vsub.s32 5, %v2168
  %v2170 = vrot.slane %v1686, %v2169
  %v2171 = vlaneseq
  %v2172 = vshrl.u32 %v2171, 7
  %v2173 = vsub.s32 5, %v2172
  %v2174 = vrot.slane %v1687, %v2173
  %v2175 = vlaneseq
  %v2176 = vshrl.u32 %v2175, 7
  %v2177 = vsub.s32 5, %v2176
  %v2178 = vrot.slane %v1688, %v2177
  %v2179 = vlaneseq
  %v2180 = vshrl.u32 %v2179, 7
  %v2181 = vsub.s32 5, %v2180
  %v2182 = vrot.slane %v1689, %v2181
  %v2183 = vlaneseq
  %v2184 = vshrl.u32 %v2183, 7
  %v2185 = vsub.s32 5, %v2184
  %v2186 = vrot.slane %v1690, %v2185
  %v2187 = vlaneseq
  %v2188 = vshrl.u32 %v2187, 7
  %v2189 = vsub.s32 5, %v2188
  %v2190 = vrot.slane %v1691, %v2189
  %v2191 = vlaneseq
  %v2192 = vshrl.u32 %v2191, 7
  %v2193 = vsub.s32 5, %v2192
  %v2194 = vrot.slane %v1692, %v2193
  %v2195 = vlaneseq
  %v2196 = vshrl.u32 %v2195, 7
  %v2197 = vsub.s32 5, %v2196
  %v2198 = vrot.slane %v1693, %v2197
  %v2199 = vrot.slane %v1694, 5
  %v2200 = vrot.slane %v1695, 4
  %v2201 = vsel %vm1767, %v2200, %v2199
  %v2202 = vrot.slane %v1696, 3
  %v2203 = vsel %vm1770, %v2202, %v2201
  %v2204 = vrot.slane %v1697, 2
  %v2205 = vsel %vm1773, %v2204, %v2203
  %v2206 = vrot.slane %v1698, 1
  %v2207 = vsel %vm1776, %v2206, %v2205
  %v2208 = vsel %vm1779, %v1699, %v2207
  %v2209 = vrot.slane %v1700, 7
  %v2210 = vsel %vm1782, %v2209, %v2208
  %v2211 = vrot.slane %v1701, 6
  %v2212 = vsel %vm1785, %v2211, %v2210
  %v2213 = vrot.slane %v1702, 5
  %v2216 = vmul.f32 %v2166, %v2212
  %v2217 = vmul.f32 %v2166, %v2213
  %v2218 = vmul.f32 %v2170, %v2212
  %v2219 = vmul.f32 %v2170, %v2213
  %v2220 = vmul.f32 %v2174, %v2212
  %v2221 = vmul.f32 %v2174, %v2213
  %v2222 = vmul.f32 %v2178, %v2212
  %v2223 = vmul.f32 %v2178, %v2213
  %v2224 = vmul.f32 %v2182, %v2212
  %v2225 = vmul.f32 %v2182, %v2213
  %v2226 = vmul.f32 %v2186, %v2212
  %v2227 = vmul.f32 %v2186, %v2213
  %v2228 = vmul.f32 %v2190, %v2212
  %v2229 = vmul.f32 %v2190, %v2213
  %v2230 = vmul.f32 %v2194, %v2212
  %v2231 = vmul.f32 %v2194, %v2213
  %v2232 = vmul.f32 %v2198, %v2212
  %v2233 = vmul.f32 %v2198, %v2213
  %v2234 = vadd.f32 %v2145, %v2216
  %v2235 = vadd.f32 %v2146, %v2217
  %v2236 = vadd.f32 %v2147, %v2218
  %v2237 = vadd.f32 %v2148, %v2219
  %v2238 = vadd.f32 %v2149, %v2220
  %v2239 = vadd.f32 %v2150, %v2221
  %v2240 = vadd.f32 %v2151, %v2222
  %v2241 = vadd.f32 %v2152, %v2223
  %v2242 = vadd.f32 %v2153, %v2224
  %v2243 = vadd.f32 %v2154, %v2225
  %v2244 = vadd.f32 %v2155, %v2226
  %v2245 = vadd.f32 %v2156, %v2227
  %v2246 = vadd.f32 %v2157, %v2228
  %v2247 = vadd.f32 %v2158, %v2229
  %v2248 = vadd.f32 %v2159, %v2230
  %v2249 = vadd.f32 %v2160, %v2231
  %v2250 = vadd.f32 %v2161, %v2232
  %v2251 = vadd.f32 %v2162, %v2233
  %v2252 = vlaneseq
  %v2253 = vshrl.u32 %v2252, 7
  %v2254 = vsub.s32 6, %v2253
  %v2255 = vrot.slane %v1685, %v2254
  %v2256 = vlaneseq
  %v2257 = vshrl.u32 %v2256, 7
  %v2258 = vsub.s32 6, %v2257
  %v2259 = vrot.slane %v1686, %v2258
  %v2260 = vlaneseq
  %v2261 = vshrl.u32 %v2260, 7
  %v2262 = vsub.s32 6, %v2261
  %v2263 = vrot.slane %v1687, %v2262
  %v2264 = vlaneseq
  %v2265 = vshrl.u32 %v2264, 7
  %v2266 = vsub.s32 6, %v2265
  %v2267 = vrot.slane %v1688, %v2266
  %v2268 = vlaneseq
  %v2269 = vshrl.u32 %v2268, 7
  %v2270 = vsub.s32 6, %v2269
  %v2271 = vrot.slane %v1689, %v2270
  %v2272 = vlaneseq
  %v2273 = vshrl.u32 %v2272, 7
  %v2274 = vsub.s32 6, %v2273
  %v2275 = vrot.slane %v1690, %v2274
  %v2276 = vlaneseq
  %v2277 = vshrl.u32 %v2276, 7
  %v2278 = vsub.s32 6, %v2277
  %v2279 = vrot.slane %v1691, %v2278
  %v2280 = vlaneseq
  %v2281 = vshrl.u32 %v2280, 7
  %v2282 = vsub.s32 6, %v2281
  %v2283 = vrot.slane %v1692, %v2282
  %v2284 = vlaneseq
  %v2285 = vshrl.u32 %v2284, 7
  %v2286 = vsub.s32 6, %v2285
  %v2287 = vrot.slane %v1693, %v2286
  %v2288 = vrot.slane %v1694, 6
  %v2289 = vrot.slane %v1695, 5
  %v2290 = vsel %vm1767, %v2289, %v2288
  %v2291 = vrot.slane %v1696, 4
  %v2292 = vsel %vm1770, %v2291, %v2290
  %v2293 = vrot.slane %v1697, 3
  %v2294 = vsel %vm1773, %v2293, %v2292
  %v2295 = vrot.slane %v1698, 2
  %v2296 = vsel %vm1776, %v2295, %v2294
  %v2297 = vrot.slane %v1699, 1
  %v2298 = vsel %vm1779, %v2297, %v2296
  %v2299 = vsel %vm1782, %v1700, %v2298
  %v2300 = vrot.slane %v1701, 7
  %v2301 = vsel %vm1785, %v2300, %v2299
  %v2302 = vrot.slane %v1702, 6
  %v2305 = vmul.f32 %v2255, %v2301
  %v2306 = vmul.f32 %v2255, %v2302
  %v2307 = vmul.f32 %v2259, %v2301
  %v2308 = vmul.f32 %v2259, %v2302
  %v2309 = vmul.f32 %v2263, %v2301
  %v2310 = vmul.f32 %v2263, %v2302
  %v2311 = vmul.f32 %v2267, %v2301
  %v2312 = vmul.f32 %v2267, %v2302
  %v2313 = vmul.f32 %v2271, %v2301
  %v2314 = vmul.f32 %v2271, %v2302
  %v2315 = vmul.f32 %v2275, %v2301
  %v2316 = vmul.f32 %v2275, %v2302
  %v2317 = vmul.f32 %v2279, %v2301
  %v2318 = vmul.f32 %v2279, %v2302
  %v2319 = vmul.f32 %v2283, %v2301
  %v2320 = vmul.f32 %v2283, %v2302
  %v2321 = vmul.f32 %v2287, %v2301
  %v2322 = vmul.f32 %v2287, %v2302
  %v2323 = vadd.f32 %v2234, %v2305
  %v2324 = vadd.f32 %v2235, %v2306
  %v2325 = vadd.f32 %v2236, %v2307
  %v2326 = vadd.f32 %v2237, %v2308
  %v2327 = vadd.f32 %v2238, %v2309
  %v2328 = vadd.f32 %v2239, %v2310
  %v2329 = vadd.f32 %v2240, %v2311
  %v2330 = vadd.f32 %v2241, %v2312
  %v2331 = vadd.f32 %v2242, %v2313
  %v2332 = vadd.f32 %v2243, %v2314
  %v2333 = vadd.f32 %v2244, %v2315
  %v2334 = vadd.f32 %v2245, %v2316
  %v2335 = vadd.f32 %v2246, %v2317
  %v2336 = vadd.f32 %v2247, %v2318
  %v2337 = vadd.f32 %v2248, %v2319
  %v2338 = vadd.f32 %v2249, %v2320
  %v2339 = vadd.f32 %v2250, %v2321
  %v2340 = vadd.f32 %v2251, %v2322
  %v2341 = vlaneseq
  %v2342 = vshrl.u32 %v2341, 7
  %v2343 = vsub.s32 7, %v2342
  %v2344 = vrot.slane %v1685, %v2343
  %v2345 = vlaneseq
  %v2346 = vshrl.u32 %v2345, 7
  %v2347 = vsub.s32 7, %v2346
  %v2348 = vrot.slane %v1686, %v2347
  %v2349 = vlaneseq
  %v2350 = vshrl.u32 %v2349, 7
  %v2351 = vsub.s32 7, %v2350
  %v2352 = vrot.slane %v1687, %v2351
  %v2353 = vlaneseq
  %v2354 = vshrl.u32 %v2353, 7
  %v2355 = vsub.s32 7, %v2354
  %v2356 = vrot.slane %v1688, %v2355
  %v2357 = vlaneseq
  %v2358 = vshrl.u32 %v2357, 7
  %v2359 = vsub.s32 7, %v2358
  %v2360 = vrot.slane %v1689, %v2359
  %v2361 = vlaneseq
  %v2362 = vshrl.u32 %v2361, 7
  %v2363 = vsub.s32 7, %v2362
  %v2364 = vrot.slane %v1690, %v2363
  %v2365 = vlaneseq
  %v2366 = vshrl.u32 %v2365, 7
  %v2367 = vsub.s32 7, %v2366
  %v2368 = vrot.slane %v1691, %v2367
  %v2369 = vlaneseq
  %v2370 = vshrl.u32 %v2369, 7
  %v2371 = vsub.s32 7, %v2370
  %v2372 = vrot.slane %v1692, %v2371
  %v2373 = vlaneseq
  %v2374 = vshrl.u32 %v2373, 7
  %v2375 = vsub.s32 7, %v2374
  %v2376 = vrot.slane %v1693, %v2375
  %v2377 = vrot.slane %v1694, 7
  %v2378 = vrot.slane %v1695, 6
  %v2379 = vsel %vm1767, %v2378, %v2377
  %v2380 = vrot.slane %v1696, 5
  %v2381 = vsel %vm1770, %v2380, %v2379
  %v2382 = vrot.slane %v1697, 4
  %v2383 = vsel %vm1773, %v2382, %v2381
  %v2384 = vrot.slane %v1698, 3
  %v2385 = vsel %vm1776, %v2384, %v2383
  %v2386 = vrot.slane %v1699, 2
  %v2387 = vsel %vm1779, %v2386, %v2385
  %v2388 = vrot.slane %v1700, 1
  %v2389 = vsel %vm1782, %v2388, %v2387
  %v2390 = vsel %vm1785, %v1701, %v2389
  %v2391 = vrot.slane %v1702, 7
  %v2394 = vmul.f32 %v2344, %v2390
  %v2395 = vmul.f32 %v2344, %v2391
  %v2396 = vmul.f32 %v2348, %v2390
  %v2397 = vmul.f32 %v2348, %v2391
  %v2398 = vmul.f32 %v2352, %v2390
  %v2399 = vmul.f32 %v2352, %v2391
  %v2400 = vmul.f32 %v2356, %v2390
  %v2401 = vmul.f32 %v2356, %v2391
  %v2402 = vmul.f32 %v2360, %v2390
  %v2403 = vmul.f32 %v2360, %v2391
  %v2404 = vmul.f32 %v2364, %v2390
  %v2405 = vmul.f32 %v2364, %v2391
  %v2406 = vmul.f32 %v2368, %v2390
  %v2407 = vmul.f32 %v2368, %v2391
  %v2408 = vmul.f32 %v2372, %v2390
  %v2409 = vmul.f32 %v2372, %v2391
  %v2410 = vmul.f32 %v2376, %v2390
  %v2411 = vmul.f32 %v2376, %v2391
  %v2412 = vadd.f32 %v2323, %v2394
  %v2413 = vadd.f32 %v2324, %v2395
  %v2414 = vadd.f32 %v2325, %v2396
  %v2415 = vadd.f32 %v2326, %v2397
  %v2416 = vadd.f32 %v2327, %v2398
  %v2417 = vadd.f32 %v2328, %v2399
  %v2418 = vadd.f32 %v2329, %v2400
  %v2419 = vadd.f32 %v2330, %v2401
  %v2420 = vadd.f32 %v2331, %v2402
  %v2421 = vadd.f32 %v2332, %v2403
  %v2422 = vadd.f32 %v2333, %v2404
  %v2423 = vadd.f32 %v2334, %v2405
  %v2424 = vadd.f32 %v2335, %v2406
  %v2425 = vadd.f32 %v2336, %v2407
  %v2426 = vadd.f32 %v2337, %v2408
  %v2427 = vadd.f32 %v2338, %v2409
  %v2428 = vadd.f32 %v2339, %v2410
  %v2429 = vadd.f32 %v2340, %v2411
  %v2430 = vmul.f32 %v2412, 0.35355338
  %v2431 = vmul.f32 %v2413, 0.35355338
  %v2432 = vmul.f32 %v2414, 0.35355338
  %v2433 = vmul.f32 %v2415, 0.35355338
  %v2434 = vmul.f32 %v2416, 0.35355338
  %v2435 = vmul.f32 %v2417, 0.35355338
  %v2436 = vmul.f32 %v2418, 0.35355338
  %v2437 = vmul.f32 %v2419, 0.35355338
  %v2438 = vmul.f32 %v2420, 0.35355338
  %v2439 = vmul.f32 %v2421, 0.35355338
  %v2440 = vmul.f32 %v2422, 0.35355338
  %v2441 = vmul.f32 %v2423, 0.35355338
  %v2442 = vmul.f32 %v2424, 0.35355338
  %v2443 = vmul.f32 %v2425, 0.35355338
  %v2444 = vmul.f32 %v2426, 0.35355338
  %v2445 = vmul.f32 %v2427, 0.35355338
  %v2446 = vmul.f32 %v2428, 0.35355338
  %v2447 = vmul.f32 %v2429, 0.35355338
  %v2457 = vrot.slane %v2430, 1
  %v2458 = vrot.slane %v2432, 1
  %v2459 = vrot.slane %v2434, 1
  %v2460 = vrot.slane %v2436, 1
  %v2461 = vrot.slane %v2438, 1
  %v2462 = vrot.slane %v2440, 1
  %v2463 = vrot.slane %v2442, 1
  %v2464 = vrot.slane %v2444, 1
  %v2465 = vrot.slane %v2446, 1
  %v2475 = vmax.f32 %v2430, %v2457
  %v2476 = vmax.f32 %v2432, %v2458
  %v2477 = vmax.f32 %v2434, %v2459
  %v2478 = vmax.f32 %v2436, %v2460
  %v2479 = vmax.f32 %v2438, %v2461
  %v2480 = vmax.f32 %v2440, %v2462
  %v2481 = vmax.f32 %v2442, %v2463
  %v2482 = vmax.f32 %v2444, %v2464
  %v2483 = vmax.f32 %v2446, %v2465
  %v2484 = vrot.slane %v2430, 2
  %v2485 = vrot.slane %v2432, 2
  %v2486 = vrot.slane %v2434, 2
  %v2487 = vrot.slane %v2436, 2
  %v2488 = vrot.slane %v2438, 2
  %v2489 = vrot.slane %v2440, 2
  %v2490 = vrot.slane %v2442, 2
  %v2491 = vrot.slane %v2444, 2
  %v2492 = vrot.slane %v2446, 2
  %v2502 = vmax.f32 %v2475, %v2484
  %v2503 = vmax.f32 %v2476, %v2485
  %v2504 = vmax.f32 %v2477, %v2486
  %v2505 = vmax.f32 %v2478, %v2487
  %v2506 = vmax.f32 %v2479, %v2488
  %v2507 = vmax.f32 %v2480, %v2489
  %v2508 = vmax.f32 %v2481, %v2490
  %v2509 = vmax.f32 %v2482, %v2491
  %v2510 = vmax.f32 %v2483, %v2492
  %v2511 = vrot.slane %v2430, 3
  %v2512 = vrot.slane %v2432, 3
  %v2513 = vrot.slane %v2434, 3
  %v2514 = vrot.slane %v2436, 3
  %v2515 = vrot.slane %v2438, 3
  %v2516 = vrot.slane %v2440, 3
  %v2517 = vrot.slane %v2442, 3
  %v2518 = vrot.slane %v2444, 3
  %v2519 = vrot.slane %v2446, 3
  %v2529 = vmax.f32 %v2502, %v2511
  %v2530 = vmax.f32 %v2503, %v2512
  %v2531 = vmax.f32 %v2504, %v2513
  %v2532 = vmax.f32 %v2505, %v2514
  %v2533 = vmax.f32 %v2506, %v2515
  %v2534 = vmax.f32 %v2507, %v2516
  %v2535 = vmax.f32 %v2508, %v2517
  %v2536 = vmax.f32 %v2509, %v2518
  %v2537 = vmax.f32 %v2510, %v2519
  %v2538 = vrot.slane %v2430, 4
  %v2539 = vrot.slane %v2432, 4
  %v2540 = vrot.slane %v2434, 4
  %v2541 = vrot.slane %v2436, 4
  %v2542 = vrot.slane %v2438, 4
  %v2543 = vrot.slane %v2440, 4
  %v2544 = vrot.slane %v2442, 4
  %v2545 = vrot.slane %v2444, 4
  %v2546 = vrot.slane %v2446, 4
  %v2556 = vmax.f32 %v2529, %v2538
  %v2557 = vmax.f32 %v2530, %v2539
  %v2558 = vmax.f32 %v2531, %v2540
  %v2559 = vmax.f32 %v2532, %v2541
  %v2560 = vmax.f32 %v2533, %v2542
  %v2561 = vmax.f32 %v2534, %v2543
  %v2562 = vmax.f32 %v2535, %v2544
  %v2563 = vmax.f32 %v2536, %v2545
  %v2564 = vmax.f32 %v2537, %v2546
  %v2565 = vrot.slane %v2430, 5
  %v2566 = vrot.slane %v2432, 5
  %v2567 = vrot.slane %v2434, 5
  %v2568 = vrot.slane %v2436, 5
  %v2569 = vrot.slane %v2438, 5
  %v2570 = vrot.slane %v2440, 5
  %v2571 = vrot.slane %v2442, 5
  %v2572 = vrot.slane %v2444, 5
  %v2573 = vrot.slane %v2446, 5
  %v2583 = vmax.f32 %v2556, %v2565
  %v2584 = vmax.f32 %v2557, %v2566
  %v2585 = vmax.f32 %v2558, %v2567
  %v2586 = vmax.f32 %v2559, %v2568
  %v2587 = vmax.f32 %v2560, %v2569
  %v2588 = vmax.f32 %v2561, %v2570
  %v2589 = vmax.f32 %v2562, %v2571
  %v2590 = vmax.f32 %v2563, %v2572
  %v2591 = vmax.f32 %v2564, %v2573
  %v2592 = vrot.slane %v2430, 6
  %v2593 = vrot.slane %v2432, 6
  %v2594 = vrot.slane %v2434, 6
  %v2595 = vrot.slane %v2436, 6
  %v2596 = vrot.slane %v2438, 6
  %v2597 = vrot.slane %v2440, 6
  %v2598 = vrot.slane %v2442, 6
  %v2599 = vrot.slane %v2444, 6
  %v2600 = vrot.slane %v2446, 6
  %v2610 = vmax.f32 %v2583, %v2592
  %v2611 = vmax.f32 %v2584, %v2593
  %v2612 = vmax.f32 %v2585, %v2594
  %v2613 = vmax.f32 %v2586, %v2595
  %v2614 = vmax.f32 %v2587, %v2596
  %v2615 = vmax.f32 %v2588, %v2597
  %v2616 = vmax.f32 %v2589, %v2598
  %v2617 = vmax.f32 %v2590, %v2599
  %v2618 = vmax.f32 %v2591, %v2600
  %v2619 = vrot.slane %v2430, 7
  %v2620 = vrot.slane %v2432, 7
  %v2621 = vrot.slane %v2434, 7
  %v2622 = vrot.slane %v2436, 7
  %v2623 = vrot.slane %v2438, 7
  %v2624 = vrot.slane %v2440, 7
  %v2625 = vrot.slane %v2442, 7
  %v2626 = vrot.slane %v2444, 7
  %v2627 = vrot.slane %v2446, 7
  %v2637 = vmax.f32 %v2610, %v2619
  %v2638 = vmax.f32 %v2611, %v2620
  %v2639 = vmax.f32 %v2612, %v2621
  %v2640 = vmax.f32 %v2613, %v2622
  %v2641 = vmax.f32 %v2614, %v2623
  %v2642 = vmax.f32 %v2615, %v2624
  %v2643 = vmax.f32 %v2616, %v2625
  %v2644 = vmax.f32 %v2617, %v2626
  %v2645 = vmax.f32 %v2618, %v2627
  %v2646 = vmax.f32 %v2637, %v2431
  %v2647 = vmax.f32 %v2638, %v2433
  %v2648 = vmax.f32 %v2639, %v2435
  %v2649 = vmax.f32 %v2640, %v2437
  %v2650 = vmax.f32 %v2641, %v2439
  %v2651 = vmax.f32 %v2642, %v2441
  %v2652 = vmax.f32 %v2643, %v2443
  %v2653 = vmax.f32 %v2644, %v2445
  %v2654 = vmax.f32 %v2645, %v2447
  %v2655 = vlaneseq
  %v2656 = vshrl.u32 %v2655, 7
  %v2657 = vsub.s32 0, %v2656
  %v2658 = vrot.slane %v2646, %v2657
  %v2659 = vlaneseq
  %v2660 = vshrl.u32 %v2659, 7
  %v2661 = vsub.s32 0, %v2660
  %v2662 = vrot.slane %v2647, %v2661
  %v2663 = vlaneseq
  %v2664 = vshrl.u32 %v2663, 7
  %v2665 = vsub.s32 0, %v2664
  %v2666 = vrot.slane %v2648, %v2665
  %v2667 = vlaneseq
  %v2668 = vshrl.u32 %v2667, 7
  %v2669 = vsub.s32 0, %v2668
  %v2670 = vrot.slane %v2649, %v2669
  %v2671 = vlaneseq
  %v2672 = vshrl.u32 %v2671, 7
  %v2673 = vsub.s32 0, %v2672
  %v2674 = vrot.slane %v2650, %v2673
  %v2675 = vlaneseq
  %v2676 = vshrl.u32 %v2675, 7
  %v2677 = vsub.s32 0, %v2676
  %v2678 = vrot.slane %v2651, %v2677
  %v2679 = vlaneseq
  %v2680 = vshrl.u32 %v2679, 7
  %v2681 = vsub.s32 0, %v2680
  %v2682 = vrot.slane %v2652, %v2681
  %v2683 = vlaneseq
  %v2684 = vshrl.u32 %v2683, 7
  %v2685 = vsub.s32 0, %v2684
  %v2686 = vrot.slane %v2653, %v2685
  %v2687 = vlaneseq
  %v2688 = vshrl.u32 %v2687, 7
  %v2689 = vsub.s32 0, %v2688
  %v2690 = vrot.slane %v2654, %v2689
  %v2691 = vsub.f32 %v2430, %v2658
  %v2692 = vsub.f32 %v2431, %v2658
  %v2693 = vsub.f32 %v2432, %v2662
  %v2694 = vsub.f32 %v2433, %v2662
  %v2695 = vsub.f32 %v2434, %v2666
  %v2696 = vsub.f32 %v2435, %v2666
  %v2697 = vsub.f32 %v2436, %v2670
  %v2698 = vsub.f32 %v2437, %v2670
  %v2699 = vsub.f32 %v2438, %v2674
  %v2700 = vsub.f32 %v2439, %v2674
  %v2701 = vsub.f32 %v2440, %v2678
  %v2702 = vsub.f32 %v2441, %v2678
  %v2703 = vsub.f32 %v2442, %v2682
  %v2704 = vsub.f32 %v2443, %v2682
  %v2705 = vsub.f32 %v2444, %v2686
  %v2706 = vsub.f32 %v2445, %v2686
  %v2707 = vsub.f32 %v2446, %v2690
  %v2708 = vsub.f32 %v2447, %v2690
  %v2709 = vmul.f32 %v2691, 1.442695
  %v2710 = vpow.pop %v2709
  %v2711 = vmul.f32 %v2692, 1.442695
  %v2712 = vpow.pop %v2711
  %v2713 = vmul.f32 %v2693, 1.442695
  %v2714 = vpow.pop %v2713
  %v2715 = vmul.f32 %v2694, 1.442695
  %v2716 = vpow.pop %v2715
  %v2717 = vmul.f32 %v2695, 1.442695
  %v2718 = vpow.pop %v2717
  %v2719 = vmul.f32 %v2696, 1.442695
  %v2720 = vpow.pop %v2719
  %v2721 = vmul.f32 %v2697, 1.442695
  %v2722 = vpow.pop %v2721
  %v2723 = vmul.f32 %v2698, 1.442695
  %v2724 = vpow.pop %v2723
  %v2725 = vmul.f32 %v2699, 1.442695
  %v2726 = vpow.pop %v2725
  %v2727 = vmul.f32 %v2700, 1.442695
  %v2728 = vpow.pop %v2727
  %v2729 = vmul.f32 %v2701, 1.442695
  %v2730 = vpow.pop %v2729
  %v2731 = vmul.f32 %v2702, 1.442695
  %v2732 = vpow.pop %v2731
  %v2733 = vmul.f32 %v2703, 1.442695
  %v2734 = vpow.pop %v2733
  %v2735 = vmul.f32 %v2704, 1.442695
  %v2736 = vpow.pop %v2735
  %v2737 = vmul.f32 %v2705, 1.442695
  %v2738 = vpow.pop %v2737
  %v2739 = vmul.f32 %v2706, 1.442695
  %v2740 = vpow.pop %v2739
  %v2741 = vmul.f32 %v2707, 1.442695
  %v2742 = vpow.pop %v2741
  %v2743 = vmul.f32 %v2708, 1.442695
  %v2744 = vpow.pop %v2743
  %v2754 = vrot.slane %v2710, 1
  %v2755 = vrot.slane %v2714, 1
  %v2756 = vrot.slane %v2718, 1
  %v2757 = vrot.slane %v2722, 1
  %v2758 = vrot.slane %v2726, 1
  %v2759 = vrot.slane %v2730, 1
  %v2760 = vrot.slane %v2734, 1
  %v2761 = vrot.slane %v2738, 1
  %v2762 = vrot.slane %v2742, 1
  %v2772 = vadd.f32 %v2710, %v2754
  %v2773 = vadd.f32 %v2714, %v2755
  %v2774 = vadd.f32 %v2718, %v2756
  %v2775 = vadd.f32 %v2722, %v2757
  %v2776 = vadd.f32 %v2726, %v2758
  %v2777 = vadd.f32 %v2730, %v2759
  %v2778 = vadd.f32 %v2734, %v2760
  %v2779 = vadd.f32 %v2738, %v2761
  %v2780 = vadd.f32 %v2742, %v2762
  %v2781 = vrot.slane %v2710, 2
  %v2782 = vrot.slane %v2714, 2
  %v2783 = vrot.slane %v2718, 2
  %v2784 = vrot.slane %v2722, 2
  %v2785 = vrot.slane %v2726, 2
  %v2786 = vrot.slane %v2730, 2
  %v2787 = vrot.slane %v2734, 2
  %v2788 = vrot.slane %v2738, 2
  %v2789 = vrot.slane %v2742, 2
  %v2799 = vadd.f32 %v2772, %v2781
  %v2800 = vadd.f32 %v2773, %v2782
  %v2801 = vadd.f32 %v2774, %v2783
  %v2802 = vadd.f32 %v2775, %v2784
  %v2803 = vadd.f32 %v2776, %v2785
  %v2804 = vadd.f32 %v2777, %v2786
  %v2805 = vadd.f32 %v2778, %v2787
  %v2806 = vadd.f32 %v2779, %v2788
  %v2807 = vadd.f32 %v2780, %v2789
  %v2808 = vrot.slane %v2710, 3
  %v2809 = vrot.slane %v2714, 3
  %v2810 = vrot.slane %v2718, 3
  %v2811 = vrot.slane %v2722, 3
  %v2812 = vrot.slane %v2726, 3
  %v2813 = vrot.slane %v2730, 3
  %v2814 = vrot.slane %v2734, 3
  %v2815 = vrot.slane %v2738, 3
  %v2816 = vrot.slane %v2742, 3
  %v2826 = vadd.f32 %v2799, %v2808
  %v2827 = vadd.f32 %v2800, %v2809
  %v2828 = vadd.f32 %v2801, %v2810
  %v2829 = vadd.f32 %v2802, %v2811
  %v2830 = vadd.f32 %v2803, %v2812
  %v2831 = vadd.f32 %v2804, %v2813
  %v2832 = vadd.f32 %v2805, %v2814
  %v2833 = vadd.f32 %v2806, %v2815
  %v2834 = vadd.f32 %v2807, %v2816
  %v2835 = vrot.slane %v2710, 4
  %v2836 = vrot.slane %v2714, 4
  %v2837 = vrot.slane %v2718, 4
  %v2838 = vrot.slane %v2722, 4
  %v2839 = vrot.slane %v2726, 4
  %v2840 = vrot.slane %v2730, 4
  %v2841 = vrot.slane %v2734, 4
  %v2842 = vrot.slane %v2738, 4
  %v2843 = vrot.slane %v2742, 4
  %v2853 = vadd.f32 %v2826, %v2835
  %v2854 = vadd.f32 %v2827, %v2836
  %v2855 = vadd.f32 %v2828, %v2837
  %v2856 = vadd.f32 %v2829, %v2838
  %v2857 = vadd.f32 %v2830, %v2839
  %v2858 = vadd.f32 %v2831, %v2840
  %v2859 = vadd.f32 %v2832, %v2841
  %v2860 = vadd.f32 %v2833, %v2842
  %v2861 = vadd.f32 %v2834, %v2843
  %v2862 = vrot.slane %v2710, 5
  %v2863 = vrot.slane %v2714, 5
  %v2864 = vrot.slane %v2718, 5
  %v2865 = vrot.slane %v2722, 5
  %v2866 = vrot.slane %v2726, 5
  %v2867 = vrot.slane %v2730, 5
  %v2868 = vrot.slane %v2734, 5
  %v2869 = vrot.slane %v2738, 5
  %v2870 = vrot.slane %v2742, 5
  %v2880 = vadd.f32 %v2853, %v2862
  %v2881 = vadd.f32 %v2854, %v2863
  %v2882 = vadd.f32 %v2855, %v2864
  %v2883 = vadd.f32 %v2856, %v2865
  %v2884 = vadd.f32 %v2857, %v2866
  %v2885 = vadd.f32 %v2858, %v2867
  %v2886 = vadd.f32 %v2859, %v2868
  %v2887 = vadd.f32 %v2860, %v2869
  %v2888 = vadd.f32 %v2861, %v2870
  %v2889 = vrot.slane %v2710, 6
  %v2890 = vrot.slane %v2714, 6
  %v2891 = vrot.slane %v2718, 6
  %v2892 = vrot.slane %v2722, 6
  %v2893 = vrot.slane %v2726, 6
  %v2894 = vrot.slane %v2730, 6
  %v2895 = vrot.slane %v2734, 6
  %v2896 = vrot.slane %v2738, 6
  %v2897 = vrot.slane %v2742, 6
  %v2907 = vadd.f32 %v2880, %v2889
  %v2908 = vadd.f32 %v2881, %v2890
  %v2909 = vadd.f32 %v2882, %v2891
  %v2910 = vadd.f32 %v2883, %v2892
  %v2911 = vadd.f32 %v2884, %v2893
  %v2912 = vadd.f32 %v2885, %v2894
  %v2913 = vadd.f32 %v2886, %v2895
  %v2914 = vadd.f32 %v2887, %v2896
  %v2915 = vadd.f32 %v2888, %v2897
  %v2916 = vrot.slane %v2710, 7
  %v2917 = vrot.slane %v2714, 7
  %v2918 = vrot.slane %v2718, 7
  %v2919 = vrot.slane %v2722, 7
  %v2920 = vrot.slane %v2726, 7
  %v2921 = vrot.slane %v2730, 7
  %v2922 = vrot.slane %v2734, 7
  %v2923 = vrot.slane %v2738, 7
  %v2924 = vrot.slane %v2742, 7
  %v2934 = vadd.f32 %v2907, %v2916
  %v2935 = vadd.f32 %v2908, %v2917
  %v2936 = vadd.f32 %v2909, %v2918
  %v2937 = vadd.f32 %v2910, %v2919
  %v2938 = vadd.f32 %v2911, %v2920
  %v2939 = vadd.f32 %v2912, %v2921
  %v2940 = vadd.f32 %v2913, %v2922
  %v2941 = vadd.f32 %v2914, %v2923
  %v2942 = vadd.f32 %v2915, %v2924
  %v2943 = vadd.f32 %v2934, %v2712
  %v2944 = vadd.f32 %v2935, %v2716
  %v2945 = vadd.f32 %v2936, %v2720
  %v2946 = vadd.f32 %v2937, %v2724
  %v2947 = vadd.f32 %v2938, %v2728
  %v2948 = vadd.f32 %v2939, %v2732
  %v2949 = vadd.f32 %v2940, %v2736
  %v2950 = vadd.f32 %v2941, %v2740
  %v2951 = vadd.f32 %v2942, %v2744
  %v2952 = vrcp.pop %v2943
  %v2953 = vrcp.pop %v2944
  %v2954 = vrcp.pop %v2945
  %v2955 = vrcp.pop %v2946
  %v2956 = vrcp.pop %v2947
  %v2957 = vrcp.pop %v2948
  %v2958 = vrcp.pop %v2949
  %v2959 = vrcp.pop %v2950
  %v2960 = vrcp.pop %v2951
  %v2961 = vmul.f32 %v2710, %v2952
  %v2962 = vmul.f32 %v2714, %v2953
  %v2963 = vmul.f32 %v2718, %v2954
  %v2964 = vmul.f32 %v2722, %v2955
  %v2965 = vmul.f32 %v2726, %v2956
  %v2966 = vmul.f32 %v2730, %v2957
  %v2967 = vmul.f32 %v2734, %v2958
  %v2968 = vmul.f32 %v2738, %v2959
  %v2969 = vmul.f32 %v2742, %v2960
  %v2970 = vlaneseq
  %v2971 = vshrl.u32 %v2970, 7
  %v2972 = vsub.s32 0, %v2971
  %v2973 = vrot.slane %v2961, %v2972
  %v2974 = vlaneseq
  %v2975 = vshrl.u32 %v2974, 7
  %v2976 = vsub.s32 0, %v2975
  %v2977 = vrot.slane %v2962, %v2976
  %v2978 = vlaneseq
  %v2979 = vshrl.u32 %v2978, 7
  %v2980 = vsub.s32 0, %v2979
  %v2981 = vrot.slane %v2963, %v2980
  %v2982 = vlaneseq
  %v2983 = vshrl.u32 %v2982, 7
  %v2984 = vsub.s32 0, %v2983
  %v2985 = vrot.slane %v2964, %v2984
  %v2986 = vlaneseq
  %v2987 = vshrl.u32 %v2986, 7
  %v2988 = vsub.s32 0, %v2987
  %v2989 = vrot.slane %v2965, %v2988
  %v2990 = vlaneseq
  %v2991 = vshrl.u32 %v2990, 7
  %v2992 = vsub.s32 0, %v2991
  %v2993 = vrot.slane %v2966, %v2992
  %v2994 = vlaneseq
  %v2995 = vshrl.u32 %v2994, 7
  %v2996 = vsub.s32 0, %v2995
  %v2997 = vrot.slane %v2967, %v2996
  %v2998 = vlaneseq
  %v2999 = vshrl.u32 %v2998, 7
  %v3000 = vsub.s32 0, %v2999
  %v3001 = vrot.slane %v2968, %v3000
  %v3002 = vlaneseq
  %v3003 = vshrl.u32 %v3002, 7
  %v3004 = vsub.s32 0, %v3003
  %v3005 = vrot.slane %v2969, %v3004
  %v3006 = vmul.f32 %v2973, %v1703
  %v3007 = vmul.f32 %v2973, %v1704
  %v3008 = vmul.f32 %v2977, %v1703
  %v3009 = vmul.f32 %v2977, %v1704
  %v3010 = vmul.f32 %v2981, %v1703
  %v3011 = vmul.f32 %v2981, %v1704
  %v3012 = vmul.f32 %v2985, %v1703
  %v3013 = vmul.f32 %v2985, %v1704
  %v3014 = vmul.f32 %v2989, %v1703
  %v3015 = vmul.f32 %v2989, %v1704
  %v3016 = vmul.f32 %v2993, %v1703
  %v3017 = vmul.f32 %v2993, %v1704
  %v3018 = vmul.f32 %v2997, %v1703
  %v3019 = vmul.f32 %v2997, %v1704
  %v3020 = vmul.f32 %v3001, %v1703
  %v3021 = vmul.f32 %v3001, %v1704
  %v3022 = vmul.f32 %v3005, %v1703
  %v3023 = vmul.f32 %v3005, %v1704
  %v3033 = vrot.slane %v2952, 7
  %v3034 = vrot.slane %v2953, 7
  %v3035 = vrot.slane %v2954, 7
  %v3036 = vrot.slane %v2955, 7
  %v3037 = vrot.slane %v2956, 7
  %v3038 = vrot.slane %v2957, 7
  %v3039 = vrot.slane %v2958, 7
  %v3040 = vrot.slane %v2959, 7
  %v3041 = vrot.slane %v2960, 7
  %v3051 = vmul.f32 %v2710, %v3033
  %v3052 = vmul.f32 %v2714, %v3034
  %v3053 = vmul.f32 %v2718, %v3035
  %v3054 = vmul.f32 %v2722, %v3036
  %v3055 = vmul.f32 %v2726, %v3037
  %v3056 = vmul.f32 %v2730, %v3038
  %v3057 = vmul.f32 %v2734, %v3039
  %v3058 = vmul.f32 %v2738, %v3040
  %v3059 = vmul.f32 %v2742, %v3041
  %v3060 = vlaneseq
  %v3061 = vshrl.u32 %v3060, 7
  %v3062 = vsub.s32 1, %v3061
  %v3063 = vrot.slane %v3051, %v3062
  %v3064 = vlaneseq
  %v3065 = vshrl.u32 %v3064, 7
  %v3066 = vsub.s32 1, %v3065
  %v3067 = vrot.slane %v3052, %v3066
  %v3068 = vlaneseq
  %v3069 = vshrl.u32 %v3068, 7
  %v3070 = vsub.s32 1, %v3069
  %v3071 = vrot.slane %v3053, %v3070
  %v3072 = vlaneseq
  %v3073 = vshrl.u32 %v3072, 7
  %v3074 = vsub.s32 1, %v3073
  %v3075 = vrot.slane %v3054, %v3074
  %v3076 = vlaneseq
  %v3077 = vshrl.u32 %v3076, 7
  %v3078 = vsub.s32 1, %v3077
  %v3079 = vrot.slane %v3055, %v3078
  %v3080 = vlaneseq
  %v3081 = vshrl.u32 %v3080, 7
  %v3082 = vsub.s32 1, %v3081
  %v3083 = vrot.slane %v3056, %v3082
  %v3084 = vlaneseq
  %v3085 = vshrl.u32 %v3084, 7
  %v3086 = vsub.s32 1, %v3085
  %v3087 = vrot.slane %v3057, %v3086
  %v3088 = vlaneseq
  %v3089 = vshrl.u32 %v3088, 7
  %v3090 = vsub.s32 1, %v3089
  %v3091 = vrot.slane %v3058, %v3090
  %v3092 = vlaneseq
  %v3093 = vshrl.u32 %v3092, 7
  %v3094 = vsub.s32 1, %v3093
  %v3095 = vrot.slane %v3059, %v3094
  %v3096 = vmul.f32 %v3063, %v1705
  %v3097 = vmul.f32 %v3063, %v1706
  %v3098 = vmul.f32 %v3067, %v1705
  %v3099 = vmul.f32 %v3067, %v1706
  %v3100 = vmul.f32 %v3071, %v1705
  %v3101 = vmul.f32 %v3071, %v1706
  %v3102 = vmul.f32 %v3075, %v1705
  %v3103 = vmul.f32 %v3075, %v1706
  %v3104 = vmul.f32 %v3079, %v1705
  %v3105 = vmul.f32 %v3079, %v1706
  %v3106 = vmul.f32 %v3083, %v1705
  %v3107 = vmul.f32 %v3083, %v1706
  %v3108 = vmul.f32 %v3087, %v1705
  %v3109 = vmul.f32 %v3087, %v1706
  %v3110 = vmul.f32 %v3091, %v1705
  %v3111 = vmul.f32 %v3091, %v1706
  %v3112 = vmul.f32 %v3095, %v1705
  %v3113 = vmul.f32 %v3095, %v1706
  %v3114 = vadd.f32 %v3006, %v3096
  %v3115 = vadd.f32 %v3007, %v3097
  %v3116 = vadd.f32 %v3008, %v3098
  %v3117 = vadd.f32 %v3009, %v3099
  %v3118 = vadd.f32 %v3010, %v3100
  %v3119 = vadd.f32 %v3011, %v3101
  %v3120 = vadd.f32 %v3012, %v3102
  %v3121 = vadd.f32 %v3013, %v3103
  %v3122 = vadd.f32 %v3014, %v3104
  %v3123 = vadd.f32 %v3015, %v3105
  %v3124 = vadd.f32 %v3016, %v3106
  %v3125 = vadd.f32 %v3017, %v3107
  %v3126 = vadd.f32 %v3018, %v3108
  %v3127 = vadd.f32 %v3019, %v3109
  %v3128 = vadd.f32 %v3020, %v3110
  %v3129 = vadd.f32 %v3021, %v3111
  %v3130 = vadd.f32 %v3022, %v3112
  %v3131 = vadd.f32 %v3023, %v3113
  %v3132 = vrot.slane %v2952, 6
  %v3133 = vrot.slane %v2953, 6
  %v3134 = vrot.slane %v2954, 6
  %v3135 = vrot.slane %v2955, 6
  %v3136 = vrot.slane %v2956, 6
  %v3137 = vrot.slane %v2957, 6
  %v3138 = vrot.slane %v2958, 6
  %v3139 = vrot.slane %v2959, 6
  %v3140 = vrot.slane %v2960, 6
  %v3150 = vmul.f32 %v2710, %v3132
  %v3151 = vmul.f32 %v2714, %v3133
  %v3152 = vmul.f32 %v2718, %v3134
  %v3153 = vmul.f32 %v2722, %v3135
  %v3154 = vmul.f32 %v2726, %v3136
  %v3155 = vmul.f32 %v2730, %v3137
  %v3156 = vmul.f32 %v2734, %v3138
  %v3157 = vmul.f32 %v2738, %v3139
  %v3158 = vmul.f32 %v2742, %v3140
  %v3159 = vlaneseq
  %v3160 = vshrl.u32 %v3159, 7
  %v3161 = vsub.s32 2, %v3160
  %v3162 = vrot.slane %v3150, %v3161
  %v3163 = vlaneseq
  %v3164 = vshrl.u32 %v3163, 7
  %v3165 = vsub.s32 2, %v3164
  %v3166 = vrot.slane %v3151, %v3165
  %v3167 = vlaneseq
  %v3168 = vshrl.u32 %v3167, 7
  %v3169 = vsub.s32 2, %v3168
  %v3170 = vrot.slane %v3152, %v3169
  %v3171 = vlaneseq
  %v3172 = vshrl.u32 %v3171, 7
  %v3173 = vsub.s32 2, %v3172
  %v3174 = vrot.slane %v3153, %v3173
  %v3175 = vlaneseq
  %v3176 = vshrl.u32 %v3175, 7
  %v3177 = vsub.s32 2, %v3176
  %v3178 = vrot.slane %v3154, %v3177
  %v3179 = vlaneseq
  %v3180 = vshrl.u32 %v3179, 7
  %v3181 = vsub.s32 2, %v3180
  %v3182 = vrot.slane %v3155, %v3181
  %v3183 = vlaneseq
  %v3184 = vshrl.u32 %v3183, 7
  %v3185 = vsub.s32 2, %v3184
  %v3186 = vrot.slane %v3156, %v3185
  %v3187 = vlaneseq
  %v3188 = vshrl.u32 %v3187, 7
  %v3189 = vsub.s32 2, %v3188
  %v3190 = vrot.slane %v3157, %v3189
  %v3191 = vlaneseq
  %v3192 = vshrl.u32 %v3191, 7
  %v3193 = vsub.s32 2, %v3192
  %v3194 = vrot.slane %v3158, %v3193
  %v3195 = vmul.f32 %v3162, %v1707
  %v3196 = vmul.f32 %v3162, %v1708
  %v3197 = vmul.f32 %v3166, %v1707
  %v3198 = vmul.f32 %v3166, %v1708
  %v3199 = vmul.f32 %v3170, %v1707
  %v3200 = vmul.f32 %v3170, %v1708
  %v3201 = vmul.f32 %v3174, %v1707
  %v3202 = vmul.f32 %v3174, %v1708
  %v3203 = vmul.f32 %v3178, %v1707
  %v3204 = vmul.f32 %v3178, %v1708
  %v3205 = vmul.f32 %v3182, %v1707
  %v3206 = vmul.f32 %v3182, %v1708
  %v3207 = vmul.f32 %v3186, %v1707
  %v3208 = vmul.f32 %v3186, %v1708
  %v3209 = vmul.f32 %v3190, %v1707
  %v3210 = vmul.f32 %v3190, %v1708
  %v3211 = vmul.f32 %v3194, %v1707
  %v3212 = vmul.f32 %v3194, %v1708
  %v3213 = vadd.f32 %v3114, %v3195
  %v3214 = vadd.f32 %v3115, %v3196
  %v3215 = vadd.f32 %v3116, %v3197
  %v3216 = vadd.f32 %v3117, %v3198
  %v3217 = vadd.f32 %v3118, %v3199
  %v3218 = vadd.f32 %v3119, %v3200
  %v3219 = vadd.f32 %v3120, %v3201
  %v3220 = vadd.f32 %v3121, %v3202
  %v3221 = vadd.f32 %v3122, %v3203
  %v3222 = vadd.f32 %v3123, %v3204
  %v3223 = vadd.f32 %v3124, %v3205
  %v3224 = vadd.f32 %v3125, %v3206
  %v3225 = vadd.f32 %v3126, %v3207
  %v3226 = vadd.f32 %v3127, %v3208
  %v3227 = vadd.f32 %v3128, %v3209
  %v3228 = vadd.f32 %v3129, %v3210
  %v3229 = vadd.f32 %v3130, %v3211
  %v3230 = vadd.f32 %v3131, %v3212
  %v3231 = vrot.slane %v2952, 5
  %v3232 = vrot.slane %v2953, 5
  %v3233 = vrot.slane %v2954, 5
  %v3234 = vrot.slane %v2955, 5
  %v3235 = vrot.slane %v2956, 5
  %v3236 = vrot.slane %v2957, 5
  %v3237 = vrot.slane %v2958, 5
  %v3238 = vrot.slane %v2959, 5
  %v3239 = vrot.slane %v2960, 5
  %v3249 = vmul.f32 %v2710, %v3231
  %v3250 = vmul.f32 %v2714, %v3232
  %v3251 = vmul.f32 %v2718, %v3233
  %v3252 = vmul.f32 %v2722, %v3234
  %v3253 = vmul.f32 %v2726, %v3235
  %v3254 = vmul.f32 %v2730, %v3236
  %v3255 = vmul.f32 %v2734, %v3237
  %v3256 = vmul.f32 %v2738, %v3238
  %v3257 = vmul.f32 %v2742, %v3239
  %v3258 = vlaneseq
  %v3259 = vshrl.u32 %v3258, 7
  %v3260 = vsub.s32 3, %v3259
  %v3261 = vrot.slane %v3249, %v3260
  %v3262 = vlaneseq
  %v3263 = vshrl.u32 %v3262, 7
  %v3264 = vsub.s32 3, %v3263
  %v3265 = vrot.slane %v3250, %v3264
  %v3266 = vlaneseq
  %v3267 = vshrl.u32 %v3266, 7
  %v3268 = vsub.s32 3, %v3267
  %v3269 = vrot.slane %v3251, %v3268
  %v3270 = vlaneseq
  %v3271 = vshrl.u32 %v3270, 7
  %v3272 = vsub.s32 3, %v3271
  %v3273 = vrot.slane %v3252, %v3272
  %v3274 = vlaneseq
  %v3275 = vshrl.u32 %v3274, 7
  %v3276 = vsub.s32 3, %v3275
  %v3277 = vrot.slane %v3253, %v3276
  %v3278 = vlaneseq
  %v3279 = vshrl.u32 %v3278, 7
  %v3280 = vsub.s32 3, %v3279
  %v3281 = vrot.slane %v3254, %v3280
  %v3282 = vlaneseq
  %v3283 = vshrl.u32 %v3282, 7
  %v3284 = vsub.s32 3, %v3283
  %v3285 = vrot.slane %v3255, %v3284
  %v3286 = vlaneseq
  %v3287 = vshrl.u32 %v3286, 7
  %v3288 = vsub.s32 3, %v3287
  %v3289 = vrot.slane %v3256, %v3288
  %v3290 = vlaneseq
  %v3291 = vshrl.u32 %v3290, 7
  %v3292 = vsub.s32 3, %v3291
  %v3293 = vrot.slane %v3257, %v3292
  %v3294 = vmul.f32 %v3261, %v1709
  %v3295 = vmul.f32 %v3261, %v1710
  %v3296 = vmul.f32 %v3265, %v1709
  %v3297 = vmul.f32 %v3265, %v1710
  %v3298 = vmul.f32 %v3269, %v1709
  %v3299 = vmul.f32 %v3269, %v1710
  %v3300 = vmul.f32 %v3273, %v1709
  %v3301 = vmul.f32 %v3273, %v1710
  %v3302 = vmul.f32 %v3277, %v1709
  %v3303 = vmul.f32 %v3277, %v1710
  %v3304 = vmul.f32 %v3281, %v1709
  %v3305 = vmul.f32 %v3281, %v1710
  %v3306 = vmul.f32 %v3285, %v1709
  %v3307 = vmul.f32 %v3285, %v1710
  %v3308 = vmul.f32 %v3289, %v1709
  %v3309 = vmul.f32 %v3289, %v1710
  %v3310 = vmul.f32 %v3293, %v1709
  %v3311 = vmul.f32 %v3293, %v1710
  %v3312 = vadd.f32 %v3213, %v3294
  %v3313 = vadd.f32 %v3214, %v3295
  %v3314 = vadd.f32 %v3215, %v3296
  %v3315 = vadd.f32 %v3216, %v3297
  %v3316 = vadd.f32 %v3217, %v3298
  %v3317 = vadd.f32 %v3218, %v3299
  %v3318 = vadd.f32 %v3219, %v3300
  %v3319 = vadd.f32 %v3220, %v3301
  %v3320 = vadd.f32 %v3221, %v3302
  %v3321 = vadd.f32 %v3222, %v3303
  %v3322 = vadd.f32 %v3223, %v3304
  %v3323 = vadd.f32 %v3224, %v3305
  %v3324 = vadd.f32 %v3225, %v3306
  %v3325 = vadd.f32 %v3226, %v3307
  %v3326 = vadd.f32 %v3227, %v3308
  %v3327 = vadd.f32 %v3228, %v3309
  %v3328 = vadd.f32 %v3229, %v3310
  %v3329 = vadd.f32 %v3230, %v3311
  %v3330 = vrot.slane %v2952, 4
  %v3331 = vrot.slane %v2953, 4
  %v3332 = vrot.slane %v2954, 4
  %v3333 = vrot.slane %v2955, 4
  %v3334 = vrot.slane %v2956, 4
  %v3335 = vrot.slane %v2957, 4
  %v3336 = vrot.slane %v2958, 4
  %v3337 = vrot.slane %v2959, 4
  %v3338 = vrot.slane %v2960, 4
  %v3348 = vmul.f32 %v2710, %v3330
  %v3349 = vmul.f32 %v2714, %v3331
  %v3350 = vmul.f32 %v2718, %v3332
  %v3351 = vmul.f32 %v2722, %v3333
  %v3352 = vmul.f32 %v2726, %v3334
  %v3353 = vmul.f32 %v2730, %v3335
  %v3354 = vmul.f32 %v2734, %v3336
  %v3355 = vmul.f32 %v2738, %v3337
  %v3356 = vmul.f32 %v2742, %v3338
  %v3357 = vlaneseq
  %v3358 = vshrl.u32 %v3357, 7
  %v3359 = vsub.s32 4, %v3358
  %v3360 = vrot.slane %v3348, %v3359
  %v3361 = vlaneseq
  %v3362 = vshrl.u32 %v3361, 7
  %v3363 = vsub.s32 4, %v3362
  %v3364 = vrot.slane %v3349, %v3363
  %v3365 = vlaneseq
  %v3366 = vshrl.u32 %v3365, 7
  %v3367 = vsub.s32 4, %v3366
  %v3368 = vrot.slane %v3350, %v3367
  %v3369 = vlaneseq
  %v3370 = vshrl.u32 %v3369, 7
  %v3371 = vsub.s32 4, %v3370
  %v3372 = vrot.slane %v3351, %v3371
  %v3373 = vlaneseq
  %v3374 = vshrl.u32 %v3373, 7
  %v3375 = vsub.s32 4, %v3374
  %v3376 = vrot.slane %v3352, %v3375
  %v3377 = vlaneseq
  %v3378 = vshrl.u32 %v3377, 7
  %v3379 = vsub.s32 4, %v3378
  %v3380 = vrot.slane %v3353, %v3379
  %v3381 = vlaneseq
  %v3382 = vshrl.u32 %v3381, 7
  %v3383 = vsub.s32 4, %v3382
  %v3384 = vrot.slane %v3354, %v3383
  %v3385 = vlaneseq
  %v3386 = vshrl.u32 %v3385, 7
  %v3387 = vsub.s32 4, %v3386
  %v3388 = vrot.slane %v3355, %v3387
  %v3389 = vlaneseq
  %v3390 = vshrl.u32 %v3389, 7
  %v3391 = vsub.s32 4, %v3390
  %v3392 = vrot.slane %v3356, %v3391
  %v3393 = vmul.f32 %v3360, %v1711
  %v3394 = vmul.f32 %v3360, %v1712
  %v3395 = vmul.f32 %v3364, %v1711
  %v3396 = vmul.f32 %v3364, %v1712
  %v3397 = vmul.f32 %v3368, %v1711
  %v3398 = vmul.f32 %v3368, %v1712
  %v3399 = vmul.f32 %v3372, %v1711
  %v3400 = vmul.f32 %v3372, %v1712
  %v3401 = vmul.f32 %v3376, %v1711
  %v3402 = vmul.f32 %v3376, %v1712
  %v3403 = vmul.f32 %v3380, %v1711
  %v3404 = vmul.f32 %v3380, %v1712
  %v3405 = vmul.f32 %v3384, %v1711
  %v3406 = vmul.f32 %v3384, %v1712
  %v3407 = vmul.f32 %v3388, %v1711
  %v3408 = vmul.f32 %v3388, %v1712
  %v3409 = vmul.f32 %v3392, %v1711
  %v3410 = vmul.f32 %v3392, %v1712
  %v3411 = vadd.f32 %v3312, %v3393
  %v3412 = vadd.f32 %v3313, %v3394
  %v3413 = vadd.f32 %v3314, %v3395
  %v3414 = vadd.f32 %v3315, %v3396
  %v3415 = vadd.f32 %v3316, %v3397
  %v3416 = vadd.f32 %v3317, %v3398
  %v3417 = vadd.f32 %v3318, %v3399
  %v3418 = vadd.f32 %v3319, %v3400
  %v3419 = vadd.f32 %v3320, %v3401
  %v3420 = vadd.f32 %v3321, %v3402
  %v3421 = vadd.f32 %v3322, %v3403
  %v3422 = vadd.f32 %v3323, %v3404
  %v3423 = vadd.f32 %v3324, %v3405
  %v3424 = vadd.f32 %v3325, %v3406
  %v3425 = vadd.f32 %v3326, %v3407
  %v3426 = vadd.f32 %v3327, %v3408
  %v3427 = vadd.f32 %v3328, %v3409
  %v3428 = vadd.f32 %v3329, %v3410
  %v3429 = vrot.slane %v2952, 3
  %v3430 = vrot.slane %v2953, 3
  %v3431 = vrot.slane %v2954, 3
  %v3432 = vrot.slane %v2955, 3
  %v3433 = vrot.slane %v2956, 3
  %v3434 = vrot.slane %v2957, 3
  %v3435 = vrot.slane %v2958, 3
  %v3436 = vrot.slane %v2959, 3
  %v3437 = vrot.slane %v2960, 3
  %v3447 = vmul.f32 %v2710, %v3429
  %v3448 = vmul.f32 %v2714, %v3430
  %v3449 = vmul.f32 %v2718, %v3431
  %v3450 = vmul.f32 %v2722, %v3432
  %v3451 = vmul.f32 %v2726, %v3433
  %v3452 = vmul.f32 %v2730, %v3434
  %v3453 = vmul.f32 %v2734, %v3435
  %v3454 = vmul.f32 %v2738, %v3436
  %v3455 = vmul.f32 %v2742, %v3437
  %v3456 = vlaneseq
  %v3457 = vshrl.u32 %v3456, 7
  %v3458 = vsub.s32 5, %v3457
  %v3459 = vrot.slane %v3447, %v3458
  %v3460 = vlaneseq
  %v3461 = vshrl.u32 %v3460, 7
  %v3462 = vsub.s32 5, %v3461
  %v3463 = vrot.slane %v3448, %v3462
  %v3464 = vlaneseq
  %v3465 = vshrl.u32 %v3464, 7
  %v3466 = vsub.s32 5, %v3465
  %v3467 = vrot.slane %v3449, %v3466
  %v3468 = vlaneseq
  %v3469 = vshrl.u32 %v3468, 7
  %v3470 = vsub.s32 5, %v3469
  %v3471 = vrot.slane %v3450, %v3470
  %v3472 = vlaneseq
  %v3473 = vshrl.u32 %v3472, 7
  %v3474 = vsub.s32 5, %v3473
  %v3475 = vrot.slane %v3451, %v3474
  %v3476 = vlaneseq
  %v3477 = vshrl.u32 %v3476, 7
  %v3478 = vsub.s32 5, %v3477
  %v3479 = vrot.slane %v3452, %v3478
  %v3480 = vlaneseq
  %v3481 = vshrl.u32 %v3480, 7
  %v3482 = vsub.s32 5, %v3481
  %v3483 = vrot.slane %v3453, %v3482
  %v3484 = vlaneseq
  %v3485 = vshrl.u32 %v3484, 7
  %v3486 = vsub.s32 5, %v3485
  %v3487 = vrot.slane %v3454, %v3486
  %v3488 = vlaneseq
  %v3489 = vshrl.u32 %v3488, 7
  %v3490 = vsub.s32 5, %v3489
  %v3491 = vrot.slane %v3455, %v3490
  %v3492 = vmul.f32 %v3459, %v1713
  %v3493 = vmul.f32 %v3459, %v1714
  %v3494 = vmul.f32 %v3463, %v1713
  %v3495 = vmul.f32 %v3463, %v1714
  %v3496 = vmul.f32 %v3467, %v1713
  %v3497 = vmul.f32 %v3467, %v1714
  %v3498 = vmul.f32 %v3471, %v1713
  %v3499 = vmul.f32 %v3471, %v1714
  %v3500 = vmul.f32 %v3475, %v1713
  %v3501 = vmul.f32 %v3475, %v1714
  %v3502 = vmul.f32 %v3479, %v1713
  %v3503 = vmul.f32 %v3479, %v1714
  %v3504 = vmul.f32 %v3483, %v1713
  %v3505 = vmul.f32 %v3483, %v1714
  %v3506 = vmul.f32 %v3487, %v1713
  %v3507 = vmul.f32 %v3487, %v1714
  %v3508 = vmul.f32 %v3491, %v1713
  %v3509 = vmul.f32 %v3491, %v1714
  %v3510 = vadd.f32 %v3411, %v3492
  %v3511 = vadd.f32 %v3412, %v3493
  %v3512 = vadd.f32 %v3413, %v3494
  %v3513 = vadd.f32 %v3414, %v3495
  %v3514 = vadd.f32 %v3415, %v3496
  %v3515 = vadd.f32 %v3416, %v3497
  %v3516 = vadd.f32 %v3417, %v3498
  %v3517 = vadd.f32 %v3418, %v3499
  %v3518 = vadd.f32 %v3419, %v3500
  %v3519 = vadd.f32 %v3420, %v3501
  %v3520 = vadd.f32 %v3421, %v3502
  %v3521 = vadd.f32 %v3422, %v3503
  %v3522 = vadd.f32 %v3423, %v3504
  %v3523 = vadd.f32 %v3424, %v3505
  %v3524 = vadd.f32 %v3425, %v3506
  %v3525 = vadd.f32 %v3426, %v3507
  %v3526 = vadd.f32 %v3427, %v3508
  %v3527 = vadd.f32 %v3428, %v3509
  %v3528 = vrot.slane %v2952, 2
  %v3529 = vrot.slane %v2953, 2
  %v3530 = vrot.slane %v2954, 2
  %v3531 = vrot.slane %v2955, 2
  %v3532 = vrot.slane %v2956, 2
  %v3533 = vrot.slane %v2957, 2
  %v3534 = vrot.slane %v2958, 2
  %v3535 = vrot.slane %v2959, 2
  %v3536 = vrot.slane %v2960, 2
  %v3546 = vmul.f32 %v2710, %v3528
  %v3547 = vmul.f32 %v2714, %v3529
  %v3548 = vmul.f32 %v2718, %v3530
  %v3549 = vmul.f32 %v2722, %v3531
  %v3550 = vmul.f32 %v2726, %v3532
  %v3551 = vmul.f32 %v2730, %v3533
  %v3552 = vmul.f32 %v2734, %v3534
  %v3553 = vmul.f32 %v2738, %v3535
  %v3554 = vmul.f32 %v2742, %v3536
  %v3555 = vlaneseq
  %v3556 = vshrl.u32 %v3555, 7
  %v3557 = vsub.s32 6, %v3556
  %v3558 = vrot.slane %v3546, %v3557
  %v3559 = vlaneseq
  %v3560 = vshrl.u32 %v3559, 7
  %v3561 = vsub.s32 6, %v3560
  %v3562 = vrot.slane %v3547, %v3561
  %v3563 = vlaneseq
  %v3564 = vshrl.u32 %v3563, 7
  %v3565 = vsub.s32 6, %v3564
  %v3566 = vrot.slane %v3548, %v3565
  %v3567 = vlaneseq
  %v3568 = vshrl.u32 %v3567, 7
  %v3569 = vsub.s32 6, %v3568
  %v3570 = vrot.slane %v3549, %v3569
  %v3571 = vlaneseq
  %v3572 = vshrl.u32 %v3571, 7
  %v3573 = vsub.s32 6, %v3572
  %v3574 = vrot.slane %v3550, %v3573
  %v3575 = vlaneseq
  %v3576 = vshrl.u32 %v3575, 7
  %v3577 = vsub.s32 6, %v3576
  %v3578 = vrot.slane %v3551, %v3577
  %v3579 = vlaneseq
  %v3580 = vshrl.u32 %v3579, 7
  %v3581 = vsub.s32 6, %v3580
  %v3582 = vrot.slane %v3552, %v3581
  %v3583 = vlaneseq
  %v3584 = vshrl.u32 %v3583, 7
  %v3585 = vsub.s32 6, %v3584
  %v3586 = vrot.slane %v3553, %v3585
  %v3587 = vlaneseq
  %v3588 = vshrl.u32 %v3587, 7
  %v3589 = vsub.s32 6, %v3588
  %v3590 = vrot.slane %v3554, %v3589
  %v3591 = vmul.f32 %v3558, %v1715
  %v3592 = vmul.f32 %v3558, %v1716
  %v3593 = vmul.f32 %v3562, %v1715
  %v3594 = vmul.f32 %v3562, %v1716
  %v3595 = vmul.f32 %v3566, %v1715
  %v3596 = vmul.f32 %v3566, %v1716
  %v3597 = vmul.f32 %v3570, %v1715
  %v3598 = vmul.f32 %v3570, %v1716
  %v3599 = vmul.f32 %v3574, %v1715
  %v3600 = vmul.f32 %v3574, %v1716
  %v3601 = vmul.f32 %v3578, %v1715
  %v3602 = vmul.f32 %v3578, %v1716
  %v3603 = vmul.f32 %v3582, %v1715
  %v3604 = vmul.f32 %v3582, %v1716
  %v3605 = vmul.f32 %v3586, %v1715
  %v3606 = vmul.f32 %v3586, %v1716
  %v3607 = vmul.f32 %v3590, %v1715
  %v3608 = vmul.f32 %v3590, %v1716
  %v3609 = vadd.f32 %v3510, %v3591
  %v3610 = vadd.f32 %v3511, %v3592
  %v3611 = vadd.f32 %v3512, %v3593
  %v3612 = vadd.f32 %v3513, %v3594
  %v3613 = vadd.f32 %v3514, %v3595
  %v3614 = vadd.f32 %v3515, %v3596
  %v3615 = vadd.f32 %v3516, %v3597
  %v3616 = vadd.f32 %v3517, %v3598
  %v3617 = vadd.f32 %v3518, %v3599
  %v3618 = vadd.f32 %v3519, %v3600
  %v3619 = vadd.f32 %v3520, %v3601
  %v3620 = vadd.f32 %v3521, %v3602
  %v3621 = vadd.f32 %v3522, %v3603
  %v3622 = vadd.f32 %v3523, %v3604
  %v3623 = vadd.f32 %v3524, %v3605
  %v3624 = vadd.f32 %v3525, %v3606
  %v3625 = vadd.f32 %v3526, %v3607
  %v3626 = vadd.f32 %v3527, %v3608
  %v3627 = vrot.slane %v2952, 1
  %v3628 = vrot.slane %v2953, 1
  %v3629 = vrot.slane %v2954, 1
  %v3630 = vrot.slane %v2955, 1
  %v3631 = vrot.slane %v2956, 1
  %v3632 = vrot.slane %v2957, 1
  %v3633 = vrot.slane %v2958, 1
  %v3634 = vrot.slane %v2959, 1
  %v3635 = vrot.slane %v2960, 1
  %v3645 = vmul.f32 %v2710, %v3627
  %v3646 = vmul.f32 %v2714, %v3628
  %v3647 = vmul.f32 %v2718, %v3629
  %v3648 = vmul.f32 %v2722, %v3630
  %v3649 = vmul.f32 %v2726, %v3631
  %v3650 = vmul.f32 %v2730, %v3632
  %v3651 = vmul.f32 %v2734, %v3633
  %v3652 = vmul.f32 %v2738, %v3634
  %v3653 = vmul.f32 %v2742, %v3635
  %v3654 = vlaneseq
  %v3655 = vshrl.u32 %v3654, 7
  %v3656 = vsub.s32 7, %v3655
  %v3657 = vrot.slane %v3645, %v3656
  %v3658 = vlaneseq
  %v3659 = vshrl.u32 %v3658, 7
  %v3660 = vsub.s32 7, %v3659
  %v3661 = vrot.slane %v3646, %v3660
  %v3662 = vlaneseq
  %v3663 = vshrl.u32 %v3662, 7
  %v3664 = vsub.s32 7, %v3663
  %v3665 = vrot.slane %v3647, %v3664
  %v3666 = vlaneseq
  %v3667 = vshrl.u32 %v3666, 7
  %v3668 = vsub.s32 7, %v3667
  %v3669 = vrot.slane %v3648, %v3668
  %v3670 = vlaneseq
  %v3671 = vshrl.u32 %v3670, 7
  %v3672 = vsub.s32 7, %v3671
  %v3673 = vrot.slane %v3649, %v3672
  %v3674 = vlaneseq
  %v3675 = vshrl.u32 %v3674, 7
  %v3676 = vsub.s32 7, %v3675
  %v3677 = vrot.slane %v3650, %v3676
  %v3678 = vlaneseq
  %v3679 = vshrl.u32 %v3678, 7
  %v3680 = vsub.s32 7, %v3679
  %v3681 = vrot.slane %v3651, %v3680
  %v3682 = vlaneseq
  %v3683 = vshrl.u32 %v3682, 7
  %v3684 = vsub.s32 7, %v3683
  %v3685 = vrot.slane %v3652, %v3684
  %v3686 = vlaneseq
  %v3687 = vshrl.u32 %v3686, 7
  %v3688 = vsub.s32 7, %v3687
  %v3689 = vrot.slane %v3653, %v3688
  %v3690 = vmul.f32 %v3657, %v1717
  %v3691 = vmul.f32 %v3657, %v1718
  %v3692 = vmul.f32 %v3661, %v1717
  %v3693 = vmul.f32 %v3661, %v1718
  %v3694 = vmul.f32 %v3665, %v1717
  %v3695 = vmul.f32 %v3665, %v1718
  %v3696 = vmul.f32 %v3669, %v1717
  %v3697 = vmul.f32 %v3669, %v1718
  %v3698 = vmul.f32 %v3673, %v1717
  %v3699 = vmul.f32 %v3673, %v1718
  %v3700 = vmul.f32 %v3677, %v1717
  %v3701 = vmul.f32 %v3677, %v1718
  %v3702 = vmul.f32 %v3681, %v1717
  %v3703 = vmul.f32 %v3681, %v1718
  %v3704 = vmul.f32 %v3685, %v1717
  %v3705 = vmul.f32 %v3685, %v1718
  %v3706 = vmul.f32 %v3689, %v1717
  %v3707 = vmul.f32 %v3689, %v1718
  %v3708 = vadd.f32 %v3609, %v3690
  %v3709 = vadd.f32 %v3610, %v3691
  %v3710 = vadd.f32 %v3611, %v3692
  %v3711 = vadd.f32 %v3612, %v3693
  %v3712 = vadd.f32 %v3613, %v3694
  %v3713 = vadd.f32 %v3614, %v3695
  %v3714 = vadd.f32 %v3615, %v3696
  %v3715 = vadd.f32 %v3616, %v3697
  %v3716 = vadd.f32 %v3617, %v3698
  %v3717 = vadd.f32 %v3618, %v3699
  %v3718 = vadd.f32 %v3619, %v3700
  %v3719 = vadd.f32 %v3620, %v3701
  %v3720 = vadd.f32 %v3621, %v3702
  %v3721 = vadd.f32 %v3622, %v3703
  %v3722 = vadd.f32 %v3623, %v3704
  %v3723 = vadd.f32 %v3624, %v3705
  %v3724 = vadd.f32 %v3625, %v3706
  %v3725 = vadd.f32 %v3626, %v3707
  %v3726 = vmul.f32 %v2712, %v2952
  %v3727 = vmul.f32 %v2716, %v2953
  %v3728 = vmul.f32 %v2720, %v2954
  %v3729 = vmul.f32 %v2724, %v2955
  %v3730 = vmul.f32 %v2728, %v2956
  %v3731 = vmul.f32 %v2732, %v2957
  %v3732 = vmul.f32 %v2736, %v2958
  %v3733 = vmul.f32 %v2740, %v2959
  %v3734 = vmul.f32 %v2744, %v2960
  %v3735 = vlaneseq
  %v3736 = vshrl.u32 %v3735, 7
  %v3737 = vsub.s32 0, %v3736
  %v3738 = vrot.slane %v3726, %v3737
  %v3739 = vlaneseq
  %v3740 = vshrl.u32 %v3739, 7
  %v3741 = vsub.s32 0, %v3740
  %v3742 = vrot.slane %v3727, %v3741
  %v3743 = vlaneseq
  %v3744 = vshrl.u32 %v3743, 7
  %v3745 = vsub.s32 0, %v3744
  %v3746 = vrot.slane %v3728, %v3745
  %v3747 = vlaneseq
  %v3748 = vshrl.u32 %v3747, 7
  %v3749 = vsub.s32 0, %v3748
  %v3750 = vrot.slane %v3729, %v3749
  %v3751 = vlaneseq
  %v3752 = vshrl.u32 %v3751, 7
  %v3753 = vsub.s32 0, %v3752
  %v3754 = vrot.slane %v3730, %v3753
  %v3755 = vlaneseq
  %v3756 = vshrl.u32 %v3755, 7
  %v3757 = vsub.s32 0, %v3756
  %v3758 = vrot.slane %v3731, %v3757
  %v3759 = vlaneseq
  %v3760 = vshrl.u32 %v3759, 7
  %v3761 = vsub.s32 0, %v3760
  %v3762 = vrot.slane %v3732, %v3761
  %v3763 = vlaneseq
  %v3764 = vshrl.u32 %v3763, 7
  %v3765 = vsub.s32 0, %v3764
  %v3766 = vrot.slane %v3733, %v3765
  %v3767 = vlaneseq
  %v3768 = vshrl.u32 %v3767, 7
  %v3769 = vsub.s32 0, %v3768
  %v3770 = vrot.slane %v3734, %v3769
  %v3771 = vmul.f32 %v3738, %v1719
  %v3772 = vmul.f32 %v3738, %v1720
  %v3773 = vmul.f32 %v3742, %v1719
  %v3774 = vmul.f32 %v3742, %v1720
  %v3775 = vmul.f32 %v3746, %v1719
  %v3776 = vmul.f32 %v3746, %v1720
  %v3777 = vmul.f32 %v3750, %v1719
  %v3778 = vmul.f32 %v3750, %v1720
  %v3779 = vmul.f32 %v3754, %v1719
  %v3780 = vmul.f32 %v3754, %v1720
  %v3781 = vmul.f32 %v3758, %v1719
  %v3782 = vmul.f32 %v3758, %v1720
  %v3783 = vmul.f32 %v3762, %v1719
  %v3784 = vmul.f32 %v3762, %v1720
  %v3785 = vmul.f32 %v3766, %v1719
  %v3786 = vmul.f32 %v3766, %v1720
  %v3787 = vmul.f32 %v3770, %v1719
  %v3788 = vmul.f32 %v3770, %v1720
  %v3789 = vadd.f32 %v3708, %v3771
  %v3790 = vadd.f32 %v3709, %v3772
  %v3791 = vadd.f32 %v3710, %v3773
  %v3792 = vadd.f32 %v3711, %v3774
  %v3793 = vadd.f32 %v3712, %v3775
  %v3794 = vadd.f32 %v3713, %v3776
  %v3795 = vadd.f32 %v3714, %v3777
  %v3796 = vadd.f32 %v3715, %v3778
  %v3797 = vadd.f32 %v3716, %v3779
  %v3798 = vadd.f32 %v3717, %v3780
  %v3799 = vadd.f32 %v3718, %v3781
  %v3800 = vadd.f32 %v3719, %v3782
  %v3801 = vadd.f32 %v3720, %v3783
  %v3802 = vadd.f32 %v3721, %v3784
  %v3803 = vadd.f32 %v3722, %v3785
  %v3804 = vadd.f32 %v3723, %v3786
  %v3805 = vadd.f32 %v3724, %v3787
  %v3806 = vadd.f32 %v3725, %v3788
  %v3807 = vld [vmem:[#allocation2 + $0x8] sm:$0xff]
  %v3808 = vld [vmem:[#allocation2 + $0x88] sm:$0xff]
  %v3809 = vld [vmem:[#allocation2 + $0x108] sm:$0xff]
  %v3810 = vld [vmem:[#allocation2 + $0x188] sm:$0xff]
  %v3811 = vld [vmem:[#allocation2 + $0x208] sm:$0xff]
  %v3812 = vld [vmem:[#allocation2 + $0x288] sm:$0xff]
  %v3813 = vld [vmem:[#allocation2 + $0x308] sm:$0xff]
  %v3814 = vld [vmem:[#allocation2 + $0x388] sm:$0xff]
  %v3815 = vld [vmem:[#allocation2 + $0x408] sm:$0xff]
  %v3816 = vld [vmem:[#allocation2 + $0x28] sm:$0xff]
  %v3817 = vld [vmem:[#allocation2 + $0xa8] sm:$0xff]
  %v3818 = vld [vmem:[#allocation2 + $0x128] sm:$0xff]
  %v3819 = vld [vmem:[#allocation2 + $0x1a8] sm:$0xff]
  %v3820 = vld [vmem:[#allocation2 + $0x228] sm:$0xff]
  %v3821 = vld [vmem:[#allocation2 + $0x2a8] sm:$0xff]
  %v3822 = vld [vmem:[#allocation2 + $0x328] sm:$0xff]
  %v3823 = vld [vmem:[#allocation2 + $0x3a8] sm:$0xff]
  %v3824 = vld [vmem:[#allocation2 + $0x428] sm:$0xff]
  %v3825 = vld [vmem:[#allocation2 + $0x50] sm:$0xff]
  %v3826 = vld [vmem:[#allocation2 + $0x58] sm:$0xff]
  %v3827 = vld [vmem:[#allocation2 + $0xd0] sm:$0xff]
  %v3828 = vld [vmem:[#allocation2 + $0xd8] sm:$0xff]
  %v3829 = vld [vmem:[#allocation2 + $0x150] sm:$0xff]
  %v3830 = vld [vmem:[#allocation2 + $0x158] sm:$0xff]
  %v3831 = vld [vmem:[#allocation2 + $0x1d0] sm:$0xff]
  %v3832 = vld [vmem:[#allocation2 + $0x1d8] sm:$0xff]
  %v3833 = vld [vmem:[#allocation2 + $0x250] sm:$0xff]
  %v3834 = vld [vmem:[#allocation2 + $0x258] sm:$0xff]
  %v3835 = vld [vmem:[#allocation2 + $0x2d0] sm:$0xff]
  %v3836 = vld [vmem:[#allocation2 + $0x2d8] sm:$0xff]
  %v3837 = vld [vmem:[#allocation2 + $0x350] sm:$0xff]
  %v3838 = vld [vmem:[#allocation2 + $0x358] sm:$0xff]
  %v3839 = vld [vmem:[#allocation2 + $0x3d0] sm:$0xff]
  %v3840 = vld [vmem:[#allocation2 + $0x3d8] sm:$0xff]
  %v3841 = vld [vmem:[#allocation2 + $0x450] sm:$0xff]
  %v3842 = vld [vmem:[#allocation2 + $0x458] sm:$0xff]
  %v3843 = vlaneseq
  %v3844 = vshrl.u32 %v3843, 7
  %v3845 = vsub.s32 0, %v3844
  %v3846 = vrot.slane %v3807, %v3845
  %v3847 = vlaneseq
  %v3848 = vshrl.u32 %v3847, 7
  %v3849 = vsub.s32 0, %v3848
  %v3850 = vrot.slane %v3808, %v3849
  %v3851 = vlaneseq
  %v3852 = vshrl.u32 %v3851, 7
  %v3853 = vsub.s32 0, %v3852
  %v3854 = vrot.slane %v3809, %v3853
  %v3855 = vlaneseq
  %v3856 = vshrl.u32 %v3855, 7
  %v3857 = vsub.s32 0, %v3856
  %v3858 = vrot.slane %v3810, %v3857
  %v3859 = vlaneseq
  %v3860 = vshrl.u32 %v3859, 7
  %v3861 = vsub.s32 0, %v3860
  %v3862 = vrot.slane %v3811, %v3861
  %v3863 = vlaneseq
  %v3864 = vshrl.u32 %v3863, 7
  %v3865 = vsub.s32 0, %v3864
  %v3866 = vrot.slane %v3812, %v3865
  %v3867 = vlaneseq
  %v3868 = vshrl.u32 %v3867, 7
  %v3869 = vsub.s32 0, %v3868
  %v3870 = vrot.slane %v3813, %v3869
  %v3871 = vlaneseq
  %v3872 = vshrl.u32 %v3871, 7
  %v3873 = vsub.s32 0, %v3872
  %v3874 = vrot.slane %v3814, %v3873
  %v3875 = vlaneseq
  %v3876 = vshrl.u32 %v3875, 7
  %v3877 = vsub.s32 0, %v3876
  %v3878 = vrot.slane %v3815, %v3877
  %v3888 = vrot.slane %v3817, 7
  %v3889 = vsel %vm1767, %v3888, %v3816
  %v3890 = vrot.slane %v3818, 6
  %v3891 = vsel %vm1770, %v3890, %v3889
  %v3892 = vrot.slane %v3819, 5
  %v3893 = vsel %vm1773, %v3892, %v3891
  %v3894 = vrot.slane %v3820, 4
  %v3895 = vsel %vm1776, %v3894, %v3893
  %v3896 = vrot.slane %v3821, 3
  %v3897 = vsel %vm1779, %v3896, %v3895
  %v3898 = vrot.slane %v3822, 2
  %v3899 = vsel %vm1782, %v3898, %v3897
  %v3900 = vrot.slane %v3823, 1
  %v3901 = vsel %vm1785, %v3900, %v3899
  %v3904 = vmul.f32 %v3846, %v3901
  %v3905 = vmul.f32 %v3846, %v3824
  %v3906 = vmul.f32 %v3850, %v3901
  %v3907 = vmul.f32 %v3850, %v3824
  %v3908 = vmul.f32 %v3854, %v3901
  %v3909 = vmul.f32 %v3854, %v3824
  %v3910 = vmul.f32 %v3858, %v3901
  %v3911 = vmul.f32 %v3858, %v3824
  %v3912 = vmul.f32 %v3862, %v3901
  %v3913 = vmul.f32 %v3862, %v3824
  %v3914 = vmul.f32 %v3866, %v3901
  %v3915 = vmul.f32 %v3866, %v3824
  %v3916 = vmul.f32 %v3870, %v3901
  %v3917 = vmul.f32 %v3870, %v3824
  %v3918 = vmul.f32 %v3874, %v3901
  %v3919 = vmul.f32 %v3874, %v3824
  %v3920 = vmul.f32 %v3878, %v3901
  %v3921 = vmul.f32 %v3878, %v3824
  %v3922 = vlaneseq
  %v3923 = vshrl.u32 %v3922, 7
  %v3924 = vsub.s32 1, %v3923
  %v3925 = vrot.slane %v3807, %v3924
  %v3926 = vlaneseq
  %v3927 = vshrl.u32 %v3926, 7
  %v3928 = vsub.s32 1, %v3927
  %v3929 = vrot.slane %v3808, %v3928
  %v3930 = vlaneseq
  %v3931 = vshrl.u32 %v3930, 7
  %v3932 = vsub.s32 1, %v3931
  %v3933 = vrot.slane %v3809, %v3932
  %v3934 = vlaneseq
  %v3935 = vshrl.u32 %v3934, 7
  %v3936 = vsub.s32 1, %v3935
  %v3937 = vrot.slane %v3810, %v3936
  %v3938 = vlaneseq
  %v3939 = vshrl.u32 %v3938, 7
  %v3940 = vsub.s32 1, %v3939
  %v3941 = vrot.slane %v3811, %v3940
  %v3942 = vlaneseq
  %v3943 = vshrl.u32 %v3942, 7
  %v3944 = vsub.s32 1, %v3943
  %v3945 = vrot.slane %v3812, %v3944
  %v3946 = vlaneseq
  %v3947 = vshrl.u32 %v3946, 7
  %v3948 = vsub.s32 1, %v3947
  %v3949 = vrot.slane %v3813, %v3948
  %v3950 = vlaneseq
  %v3951 = vshrl.u32 %v3950, 7
  %v3952 = vsub.s32 1, %v3951
  %v3953 = vrot.slane %v3814, %v3952
  %v3954 = vlaneseq
  %v3955 = vshrl.u32 %v3954, 7
  %v3956 = vsub.s32 1, %v3955
  %v3957 = vrot.slane %v3815, %v3956
  %v3958 = vrot.slane %v3816, 1
  %v3959 = vsel %vm1767, %v3817, %v3958
  %v3960 = vrot.slane %v3818, 7
  %v3961 = vsel %vm1770, %v3960, %v3959
  %v3962 = vrot.slane %v3819, 6
  %v3963 = vsel %vm1773, %v3962, %v3961
  %v3964 = vrot.slane %v3820, 5
  %v3965 = vsel %vm1776, %v3964, %v3963
  %v3966 = vrot.slane %v3821, 4
  %v3967 = vsel %vm1779, %v3966, %v3965
  %v3968 = vrot.slane %v3822, 3
  %v3969 = vsel %vm1782, %v3968, %v3967
  %v3970 = vrot.slane %v3823, 2
  %v3971 = vsel %vm1785, %v3970, %v3969
  %v3972 = vrot.slane %v3824, 1
  %v3975 = vmul.f32 %v3925, %v3971
  %v3976 = vmul.f32 %v3925, %v3972
  %v3977 = vmul.f32 %v3929, %v3971
  %v3978 = vmul.f32 %v3929, %v3972
  %v3979 = vmul.f32 %v3933, %v3971
  %v3980 = vmul.f32 %v3933, %v3972
  %v3981 = vmul.f32 %v3937, %v3971
  %v3982 = vmul.f32 %v3937, %v3972
  %v3983 = vmul.f32 %v3941, %v3971
  %v3984 = vmul.f32 %v3941, %v3972
  %v3985 = vmul.f32 %v3945, %v3971
  %v3986 = vmul.f32 %v3945, %v3972
  %v3987 = vmul.f32 %v3949, %v3971
  %v3988 = vmul.f32 %v3949, %v3972
  %v3989 = vmul.f32 %v3953, %v3971
  %v3990 = vmul.f32 %v3953, %v3972
  %v3991 = vmul.f32 %v3957, %v3971
  %v3992 = vmul.f32 %v3957, %v3972
  %v3993 = vadd.f32 %v3904, %v3975
  %v3994 = vadd.f32 %v3905, %v3976
  %v3995 = vadd.f32 %v3906, %v3977
  %v3996 = vadd.f32 %v3907, %v3978
  %v3997 = vadd.f32 %v3908, %v3979
  %v3998 = vadd.f32 %v3909, %v3980
  %v3999 = vadd.f32 %v3910, %v3981
  %v4000 = vadd.f32 %v3911, %v3982
  %v4001 = vadd.f32 %v3912, %v3983
  %v4002 = vadd.f32 %v3913, %v3984
  %v4003 = vadd.f32 %v3914, %v3985
  %v4004 = vadd.f32 %v3915, %v3986
  %v4005 = vadd.f32 %v3916, %v3987
  %v4006 = vadd.f32 %v3917, %v3988
  %v4007 = vadd.f32 %v3918, %v3989
  %v4008 = vadd.f32 %v3919, %v3990
  %v4009 = vadd.f32 %v3920, %v3991
  %v4010 = vadd.f32 %v3921, %v3992
  %v4011 = vlaneseq
  %v4012 = vshrl.u32 %v4011, 7
  %v4013 = vsub.s32 2, %v4012
  %v4014 = vrot.slane %v3807, %v4013
  %v4015 = vlaneseq
  %v4016 = vshrl.u32 %v4015, 7
  %v4017 = vsub.s32 2, %v4016
  %v4018 = vrot.slane %v3808, %v4017
  %v4019 = vlaneseq
  %v4020 = vshrl.u32 %v4019, 7
  %v4021 = vsub.s32 2, %v4020
  %v4022 = vrot.slane %v3809, %v4021
  %v4023 = vlaneseq
  %v4024 = vshrl.u32 %v4023, 7
  %v4025 = vsub.s32 2, %v4024
  %v4026 = vrot.slane %v3810, %v4025
  %v4027 = vlaneseq
  %v4028 = vshrl.u32 %v4027, 7
  %v4029 = vsub.s32 2, %v4028
  %v4030 = vrot.slane %v3811, %v4029
  %v4031 = vlaneseq
  %v4032 = vshrl.u32 %v4031, 7
  %v4033 = vsub.s32 2, %v4032
  %v4034 = vrot.slane %v3812, %v4033
  %v4035 = vlaneseq
  %v4036 = vshrl.u32 %v4035, 7
  %v4037 = vsub.s32 2, %v4036
  %v4038 = vrot.slane %v3813, %v4037
  %v4039 = vlaneseq
  %v4040 = vshrl.u32 %v4039, 7
  %v4041 = vsub.s32 2, %v4040
  %v4042 = vrot.slane %v3814, %v4041
  %v4043 = vlaneseq
  %v4044 = vshrl.u32 %v4043, 7
  %v4045 = vsub.s32 2, %v4044
  %v4046 = vrot.slane %v3815, %v4045
  %v4047 = vrot.slane %v3816, 2
  %v4048 = vrot.slane %v3817, 1
  %v4049 = vsel %vm1767, %v4048, %v4047
  %v4050 = vsel %vm1770, %v3818, %v4049
  %v4051 = vrot.slane %v3819, 7
  %v4052 = vsel %vm1773, %v4051, %v4050
  %v4053 = vrot.slane %v3820, 6
  %v4054 = vsel %vm1776, %v4053, %v4052
  %v4055 = vrot.slane %v3821, 5
  %v4056 = vsel %vm1779, %v4055, %v4054
  %v4057 = vrot.slane %v3822, 4
  %v4058 = vsel %vm1782, %v4057, %v4056
  %v4059 = vrot.slane %v3823, 3
  %v4060 = vsel %vm1785, %v4059, %v4058
  %v4061 = vrot.slane %v3824, 2
  %v4064 = vmul.f32 %v4014, %v4060
  %v4065 = vmul.f32 %v4014, %v4061
  %v4066 = vmul.f32 %v4018, %v4060
  %v4067 = vmul.f32 %v4018, %v4061
  %v4068 = vmul.f32 %v4022, %v4060
  %v4069 = vmul.f32 %v4022, %v4061
  %v4070 = vmul.f32 %v4026, %v4060
  %v4071 = vmul.f32 %v4026, %v4061
  %v4072 = vmul.f32 %v4030, %v4060
  %v4073 = vmul.f32 %v4030, %v4061
  %v4074 = vmul.f32 %v4034, %v4060
  %v4075 = vmul.f32 %v4034, %v4061
  %v4076 = vmul.f32 %v4038, %v4060
  %v4077 = vmul.f32 %v4038, %v4061
  %v4078 = vmul.f32 %v4042, %v4060
  %v4079 = vmul.f32 %v4042, %v4061
  %v4080 = vmul.f32 %v4046, %v4060
  %v4081 = vmul.f32 %v4046, %v4061
  %v4082 = vadd.f32 %v3993, %v4064
  %v4083 = vadd.f32 %v3994, %v4065
  %v4084 = vadd.f32 %v3995, %v4066
  %v4085 = vadd.f32 %v3996, %v4067
  %v4086 = vadd.f32 %v3997, %v4068
  %v4087 = vadd.f32 %v3998, %v4069
  %v4088 = vadd.f32 %v3999, %v4070
  %v4089 = vadd.f32 %v4000, %v4071
  %v4090 = vadd.f32 %v4001, %v4072
  %v4091 = vadd.f32 %v4002, %v4073
  %v4092 = vadd.f32 %v4003, %v4074
  %v4093 = vadd.f32 %v4004, %v4075
  %v4094 = vadd.f32 %v4005, %v4076
  %v4095 = vadd.f32 %v4006, %v4077
  %v4096 = vadd.f32 %v4007, %v4078
  %v4097 = vadd.f32 %v4008, %v4079
  %v4098 = vadd.f32 %v4009, %v4080
  %v4099 = vadd.f32 %v4010, %v4081
  %v4100 = vlaneseq
  %v4101 = vshrl.u32 %v4100, 7
  %v4102 = vsub.s32 3, %v4101
  %v4103 = vrot.slane %v3807, %v4102
  %v4104 = vlaneseq
  %v4105 = vshrl.u32 %v4104, 7
  %v4106 = vsub.s32 3, %v4105
  %v4107 = vrot.slane %v3808, %v4106
  %v4108 = vlaneseq
  %v4109 = vshrl.u32 %v4108, 7
  %v4110 = vsub.s32 3, %v4109
  %v4111 = vrot.slane %v3809, %v4110
  %v4112 = vlaneseq
  %v4113 = vshrl.u32 %v4112, 7
  %v4114 = vsub.s32 3, %v4113
  %v4115 = vrot.slane %v3810, %v4114
  %v4116 = vlaneseq
  %v4117 = vshrl.u32 %v4116, 7
  %v4118 = vsub.s32 3, %v4117
  %v4119 = vrot.slane %v3811, %v4118
  %v4120 = vlaneseq
  %v4121 = vshrl.u32 %v4120, 7
  %v4122 = vsub.s32 3, %v4121
  %v4123 = vrot.slane %v3812, %v4122
  %v4124 = vlaneseq
  %v4125 = vshrl.u32 %v4124, 7
  %v4126 = vsub.s32 3, %v4125
  %v4127 = vrot.slane %v3813, %v4126
  %v4128 = vlaneseq
  %v4129 = vshrl.u32 %v4128, 7
  %v4130 = vsub.s32 3, %v4129
  %v4131 = vrot.slane %v3814, %v4130
  %v4132 = vlaneseq
  %v4133 = vshrl.u32 %v4132, 7
  %v4134 = vsub.s32 3, %v4133
  %v4135 = vrot.slane %v3815, %v4134
  %v4136 = vrot.slane %v3816, 3
  %v4137 = vrot.slane %v3817, 2
  %v4138 = vsel %vm1767, %v4137, %v4136
  %v4139 = vrot.slane %v3818, 1
  %v4140 = vsel %vm1770, %v4139, %v4138
  %v4141 = vsel %vm1773, %v3819, %v4140
  %v4142 = vrot.slane %v3820, 7
  %v4143 = vsel %vm1776, %v4142, %v4141
  %v4144 = vrot.slane %v3821, 6
  %v4145 = vsel %vm1779, %v4144, %v4143
  %v4146 = vrot.slane %v3822, 5
  %v4147 = vsel %vm1782, %v4146, %v4145
  %v4148 = vrot.slane %v3823, 4
  %v4149 = vsel %vm1785, %v4148, %v4147
  %v4150 = vrot.slane %v3824, 3
  %v4153 = vmul.f32 %v4103, %v4149
  %v4154 = vmul.f32 %v4103, %v4150
  %v4155 = vmul.f32 %v4107, %v4149
  %v4156 = vmul.f32 %v4107, %v4150
  %v4157 = vmul.f32 %v4111, %v4149
  %v4158 = vmul.f32 %v4111, %v4150
  %v4159 = vmul.f32 %v4115, %v4149
  %v4160 = vmul.f32 %v4115, %v4150
  %v4161 = vmul.f32 %v4119, %v4149
  %v4162 = vmul.f32 %v4119, %v4150
  %v4163 = vmul.f32 %v4123, %v4149
  %v4164 = vmul.f32 %v4123, %v4150
  %v4165 = vmul.f32 %v4127, %v4149
  %v4166 = vmul.f32 %v4127, %v4150
  %v4167 = vmul.f32 %v4131, %v4149
  %v4168 = vmul.f32 %v4131, %v4150
  %v4169 = vmul.f32 %v4135, %v4149
  %v4170 = vmul.f32 %v4135, %v4150
  %v4171 = vadd.f32 %v4082, %v4153
  %v4172 = vadd.f32 %v4083, %v4154
  %v4173 = vadd.f32 %v4084, %v4155
  %v4174 = vadd.f32 %v4085, %v4156
  %v4175 = vadd.f32 %v4086, %v4157
  %v4176 = vadd.f32 %v4087, %v4158
  %v4177 = vadd.f32 %v4088, %v4159
  %v4178 = vadd.f32 %v4089, %v4160
  %v4179 = vadd.f32 %v4090, %v4161
  %v4180 = vadd.f32 %v4091, %v4162
  %v4181 = vadd.f32 %v4092, %v4163
  %v4182 = vadd.f32 %v4093, %v4164
  %v4183 = vadd.f32 %v4094, %v4165
  %v4184 = vadd.f32 %v4095, %v4166
  %v4185 = vadd.f32 %v4096, %v4167
  %v4186 = vadd.f32 %v4097, %v4168
  %v4187 = vadd.f32 %v4098, %v4169
  %v4188 = vadd.f32 %v4099, %v4170
  %v4189 = vlaneseq
  %v4190 = vshrl.u32 %v4189, 7
  %v4191 = vsub.s32 4, %v4190
  %v4192 = vrot.slane %v3807, %v4191
  %v4193 = vlaneseq
  %v4194 = vshrl.u32 %v4193, 7
  %v4195 = vsub.s32 4, %v4194
  %v4196 = vrot.slane %v3808, %v4195
  %v4197 = vlaneseq
  %v4198 = vshrl.u32 %v4197, 7
  %v4199 = vsub.s32 4, %v4198
  %v4200 = vrot.slane %v3809, %v4199
  %v4201 = vlaneseq
  %v4202 = vshrl.u32 %v4201, 7
  %v4203 = vsub.s32 4, %v4202
  %v4204 = vrot.slane %v3810, %v4203
  %v4205 = vlaneseq
  %v4206 = vshrl.u32 %v4205, 7
  %v4207 = vsub.s32 4, %v4206
  %v4208 = vrot.slane %v3811, %v4207
  %v4209 = vlaneseq
  %v4210 = vshrl.u32 %v4209, 7
  %v4211 = vsub.s32 4, %v4210
  %v4212 = vrot.slane %v3812, %v4211
  %v4213 = vlaneseq
  %v4214 = vshrl.u32 %v4213, 7
  %v4215 = vsub.s32 4, %v4214
  %v4216 = vrot.slane %v3813, %v4215
  %v4217 = vlaneseq
  %v4218 = vshrl.u32 %v4217, 7
  %v4219 = vsub.s32 4, %v4218
  %v4220 = vrot.slane %v3814, %v4219
  %v4221 = vlaneseq
  %v4222 = vshrl.u32 %v4221, 7
  %v4223 = vsub.s32 4, %v4222
  %v4224 = vrot.slane %v3815, %v4223
  %v4225 = vrot.slane %v3816, 4
  %v4226 = vrot.slane %v3817, 3
  %v4227 = vsel %vm1767, %v4226, %v4225
  %v4228 = vrot.slane %v3818, 2
  %v4229 = vsel %vm1770, %v4228, %v4227
  %v4230 = vrot.slane %v3819, 1
  %v4231 = vsel %vm1773, %v4230, %v4229
  %v4232 = vsel %vm1776, %v3820, %v4231
  %v4233 = vrot.slane %v3821, 7
  %v4234 = vsel %vm1779, %v4233, %v4232
  %v4235 = vrot.slane %v3822, 6
  %v4236 = vsel %vm1782, %v4235, %v4234
  %v4237 = vrot.slane %v3823, 5
  %v4238 = vsel %vm1785, %v4237, %v4236
  %v4239 = vrot.slane %v3824, 4
  %v4242 = vmul.f32 %v4192, %v4238
  %v4243 = vmul.f32 %v4192, %v4239
  %v4244 = vmul.f32 %v4196, %v4238
  %v4245 = vmul.f32 %v4196, %v4239
  %v4246 = vmul.f32 %v4200, %v4238
  %v4247 = vmul.f32 %v4200, %v4239
  %v4248 = vmul.f32 %v4204, %v4238
  %v4249 = vmul.f32 %v4204, %v4239
  %v4250 = vmul.f32 %v4208, %v4238
  %v4251 = vmul.f32 %v4208, %v4239
  %v4252 = vmul.f32 %v4212, %v4238
  %v4253 = vmul.f32 %v4212, %v4239
  %v4254 = vmul.f32 %v4216, %v4238
  %v4255 = vmul.f32 %v4216, %v4239
  %v4256 = vmul.f32 %v4220, %v4238
  %v4257 = vmul.f32 %v4220, %v4239
  %v4258 = vmul.f32 %v4224, %v4238
  %v4259 = vmul.f32 %v4224, %v4239
  %v4260 = vadd.f32 %v4171, %v4242
  %v4261 = vadd.f32 %v4172, %v4243
  %v4262 = vadd.f32 %v4173, %v4244
  %v4263 = vadd.f32 %v4174, %v4245
  %v4264 = vadd.f32 %v4175, %v4246
  %v4265 = vadd.f32 %v4176, %v4247
  %v4266 = vadd.f32 %v4177, %v4248
  %v4267 = vadd.f32 %v4178, %v4249
  %v4268 = vadd.f32 %v4179, %v4250
  %v4269 = vadd.f32 %v4180, %v4251
  %v4270 = vadd.f32 %v4181, %v4252
  %v4271 = vadd.f32 %v4182, %v4253
  %v4272 = vadd.f32 %v4183, %v4254
  %v4273 = vadd.f32 %v4184, %v4255
  %v4274 = vadd.f32 %v4185, %v4256
  %v4275 = vadd.f32 %v4186, %v4257
  %v4276 = vadd.f32 %v4187, %v4258
  %v4277 = vadd.f32 %v4188, %v4259
  %v4278 = vlaneseq
  %v4279 = vshrl.u32 %v4278, 7
  %v4280 = vsub.s32 5, %v4279
  %v4281 = vrot.slane %v3807, %v4280
  %v4282 = vlaneseq
  %v4283 = vshrl.u32 %v4282, 7
  %v4284 = vsub.s32 5, %v4283
  %v4285 = vrot.slane %v3808, %v4284
  %v4286 = vlaneseq
  %v4287 = vshrl.u32 %v4286, 7
  %v4288 = vsub.s32 5, %v4287
  %v4289 = vrot.slane %v3809, %v4288
  %v4290 = vlaneseq
  %v4291 = vshrl.u32 %v4290, 7
  %v4292 = vsub.s32 5, %v4291
  %v4293 = vrot.slane %v3810, %v4292
  %v4294 = vlaneseq
  %v4295 = vshrl.u32 %v4294, 7
  %v4296 = vsub.s32 5, %v4295
  %v4297 = vrot.slane %v3811, %v4296
  %v4298 = vlaneseq
  %v4299 = vshrl.u32 %v4298, 7
  %v4300 = vsub.s32 5, %v4299
  %v4301 = vrot.slane %v3812, %v4300
  %v4302 = vlaneseq
  %v4303 = vshrl.u32 %v4302, 7
  %v4304 = vsub.s32 5, %v4303
  %v4305 = vrot.slane %v3813, %v4304
  %v4306 = vlaneseq
  %v4307 = vshrl.u32 %v4306, 7
  %v4308 = vsub.s32 5, %v4307
  %v4309 = vrot.slane %v3814, %v4308
  %v4310 = vlaneseq
  %v4311 = vshrl.u32 %v4310, 7
  %v4312 = vsub.s32 5, %v4311
  %v4313 = vrot.slane %v3815, %v4312
  %v4314 = vrot.slane %v3816, 5
  %v4315 = vrot.slane %v3817, 4
  %v4316 = vsel %vm1767, %v4315, %v4314
  %v4317 = vrot.slane %v3818, 3
  %v4318 = vsel %vm1770, %v4317, %v4316
  %v4319 = vrot.slane %v3819, 2
  %v4320 = vsel %vm1773, %v4319, %v4318
  %v4321 = vrot.slane %v3820, 1
  %v4322 = vsel %vm1776, %v4321, %v4320
  %v4323 = vsel %vm1779, %v3821, %v4322
  %v4324 = vrot.slane %v3822, 7
  %v4325 = vsel %vm1782, %v4324, %v4323
  %v4326 = vrot.slane %v3823, 6
  %v4327 = vsel %vm1785, %v4326, %v4325
  %v4328 = vrot.slane %v3824, 5
  %v4331 = vmul.f32 %v4281, %v4327
  %v4332 = vmul.f32 %v4281, %v4328
  %v4333 = vmul.f32 %v4285, %v4327
  %v4334 = vmul.f32 %v4285, %v4328
  %v4335 = vmul.f32 %v4289, %v4327
  %v4336 = vmul.f32 %v4289, %v4328
  %v4337 = vmul.f32 %v4293, %v4327
  %v4338 = vmul.f32 %v4293, %v4328
  %v4339 = vmul.f32 %v4297, %v4327
  %v4340 = vmul.f32 %v4297, %v4328
  %v4341 = vmul.f32 %v4301, %v4327
  %v4342 = vmul.f32 %v4301, %v4328
  %v4343 = vmul.f32 %v4305, %v4327
  %v4344 = vmul.f32 %v4305, %v4328
  %v4345 = vmul.f32 %v4309, %v4327
  %v4346 = vmul.f32 %v4309, %v4328
  %v4347 = vmul.f32 %v4313, %v4327
  %v4348 = vmul.f32 %v4313, %v4328
  %v4349 = vadd.f32 %v4260, %v4331
  %v4350 = vadd.f32 %v4261, %v4332
  %v4351 = vadd.f32 %v4262, %v4333
  %v4352 = vadd.f32 %v4263, %v4334
  %v4353 = vadd.f32 %v4264, %v4335
  %v4354 = vadd.f32 %v4265, %v4336
  %v4355 = vadd.f32 %v4266, %v4337
  %v4356 = vadd.f32 %v4267, %v4338
  %v4357 = vadd.f32 %v4268, %v4339
  %v4358 = vadd.f32 %v4269, %v4340
  %v4359 = vadd.f32 %v4270, %v4341
  %v4360 = vadd.f32 %v4271, %v4342
  %v4361 = vadd.f32 %v4272, %v4343
  %v4362 = vadd.f32 %v4273, %v4344
  %v4363 = vadd.f32 %v4274, %v4345
  %v4364 = vadd.f32 %v4275, %v4346
  %v4365 = vadd.f32 %v4276, %v4347
  %v4366 = vadd.f32 %v4277, %v4348
  %v4367 = vlaneseq
  %v4368 = vshrl.u32 %v4367, 7
  %v4369 = vsub.s32 6, %v4368
  %v4370 = vrot.slane %v3807, %v4369
  %v4371 = vlaneseq
  %v4372 = vshrl.u32 %v4371, 7
  %v4373 = vsub.s32 6, %v4372
  %v4374 = vrot.slane %v3808, %v4373
  %v4375 = vlaneseq
  %v4376 = vshrl.u32 %v4375, 7
  %v4377 = vsub.s32 6, %v4376
  %v4378 = vrot.slane %v3809, %v4377
  %v4379 = vlaneseq
  %v4380 = vshrl.u32 %v4379, 7
  %v4381 = vsub.s32 6, %v4380
  %v4382 = vrot.slane %v3810, %v4381
  %v4383 = vlaneseq
  %v4384 = vshrl.u32 %v4383, 7
  %v4385 = vsub.s32 6, %v4384
  %v4386 = vrot.slane %v3811, %v4385
  %v4387 = vlaneseq
  %v4388 = vshrl.u32 %v4387, 7
  %v4389 = vsub.s32 6, %v4388
  %v4390 = vrot.slane %v3812, %v4389
  %v4391 = vlaneseq
  %v4392 = vshrl.u32 %v4391, 7
  %v4393 = vsub.s32 6, %v4392
  %v4394 = vrot.slane %v3813, %v4393
  %v4395 = vlaneseq
  %v4396 = vshrl.u32 %v4395, 7
  %v4397 = vsub.s32 6, %v4396
  %v4398 = vrot.slane %v3814, %v4397
  %v4399 = vlaneseq
  %v4400 = vshrl.u32 %v4399, 7
  %v4401 = vsub.s32 6, %v4400
  %v4402 = vrot.slane %v3815, %v4401
  %v4403 = vrot.slane %v3816, 6
  %v4404 = vrot.slane %v3817, 5
  %v4405 = vsel %vm1767, %v4404, %v4403
  %v4406 = vrot.slane %v3818, 4
  %v4407 = vsel %vm1770, %v4406, %v4405
  %v4408 = vrot.slane %v3819, 3
  %v4409 = vsel %vm1773, %v4408, %v4407
  %v4410 = vrot.slane %v3820, 2
  %v4411 = vsel %vm1776, %v4410, %v4409
  %v4412 = vrot.slane %v3821, 1
  %v4413 = vsel %vm1779, %v4412, %v4411
  %v4414 = vsel %vm1782, %v3822, %v4413
  %v4415 = vrot.slane %v3823, 7
  %v4416 = vsel %vm1785, %v4415, %v4414
  %v4417 = vrot.slane %v3824, 6
  %v4420 = vmul.f32 %v4370, %v4416
  %v4421 = vmul.f32 %v4370, %v4417
  %v4422 = vmul.f32 %v4374, %v4416
  %v4423 = vmul.f32 %v4374, %v4417
  %v4424 = vmul.f32 %v4378, %v4416
  %v4425 = vmul.f32 %v4378, %v4417
  %v4426 = vmul.f32 %v4382, %v4416
  %v4427 = vmul.f32 %v4382, %v4417
  %v4428 = vmul.f32 %v4386, %v4416
  %v4429 = vmul.f32 %v4386, %v4417
  %v4430 = vmul.f32 %v4390, %v4416
  %v4431 = vmul.f32 %v4390, %v4417
  %v4432 = vmul.f32 %v4394, %v4416
  %v4433 = vmul.f32 %v4394, %v4417
  %v4434 = vmul.f32 %v4398, %v4416
  %v4435 = vmul.f32 %v4398, %v4417
  %v4436 = vmul.f32 %v4402, %v4416
  %v4437 = vmul.f32 %v4402, %v4417
  %v4438 = vadd.f32 %v4349, %v4420
  %v4439 = vadd.f32 %v4350, %v4421
  %v4440 = vadd.f32 %v4351, %v4422
  %v4441 = vadd.f32 %v4352, %v4423
  %v4442 = vadd.f32 %v4353, %v4424
  %v4443 = vadd.f32 %v4354, %v4425
  %v4444 = vadd.f32 %v4355, %v4426
  %v4445 = vadd.f32 %v4356, %v4427
  %v4446 = vadd.f32 %v4357, %v4428
  %v4447 = vadd.f32 %v4358, %v4429
  %v4448 = vadd.f32 %v4359, %v4430
  %v4449 = vadd.f32 %v4360, %v4431
  %v4450 = vadd.f32 %v4361, %v4432
  %v4451 = vadd.f32 %v4362, %v4433
  %v4452 = vadd.f32 %v4363, %v4434
  %v4453 = vadd.f32 %v4364, %v4435
  %v4454 = vadd.f32 %v4365, %v4436
  %v4455 = vadd.f32 %v4366, %v4437
  %v4456 = vlaneseq
  %v4457 = vshrl.u32 %v4456, 7
  %v4458 = vsub.s32 7, %v4457
  %v4459 = vrot.slane %v3807, %v4458
  %v4460 = vlaneseq
  %v4461 = vshrl.u32 %v4460, 7
  %v4462 = vsub.s32 7, %v4461
  %v4463 = vrot.slane %v3808, %v4462
  %v4464 = vlaneseq
  %v4465 = vshrl.u32 %v4464, 7
  %v4466 = vsub.s32 7, %v4465
  %v4467 = vrot.slane %v3809, %v4466
  %v4468 = vlaneseq
  %v4469 = vshrl.u32 %v4468, 7
  %v4470 = vsub.s32 7, %v4469
  %v4471 = vrot.slane %v3810, %v4470
  %v4472 = vlaneseq
  %v4473 = vshrl.u32 %v4472, 7
  %v4474 = vsub.s32 7, %v4473
  %v4475 = vrot.slane %v3811, %v4474
  %v4476 = vlaneseq
  %v4477 = vshrl.u32 %v4476, 7
  %v4478 = vsub.s32 7, %v4477
  %v4479 = vrot.slane %v3812, %v4478
  %v4480 = vlaneseq
  %v4481 = vshrl.u32 %v4480, 7
  %v4482 = vsub.s32 7, %v4481
  %v4483 = vrot.slane %v3813, %v4482
  %v4484 = vlaneseq
  %v4485 = vshrl.u32 %v4484, 7
  %v4486 = vsub.s32 7, %v4485
  %v4487 = vrot.slane %v3814, %v4486
  %v4488 = vlaneseq
  %v4489 = vshrl.u32 %v4488, 7
  %v4490 = vsub.s32 7, %v4489
  %v4491 = vrot.slane %v3815, %v4490
  %v4492 = vrot.slane %v3816, 7
  %v4493 = vrot.slane %v3817, 6
  %v4494 = vsel %vm1767, %v4493, %v4492
  %v4495 = vrot.slane %v3818, 5
  %v4496 = vsel %vm1770, %v4495, %v4494
  %v4497 = vrot.slane %v3819, 4
  %v4498 = vsel %vm1773, %v4497, %v4496
  %v4499 = vrot.slane %v3820, 3
  %v4500 = vsel %vm1776, %v4499, %v4498
  %v4501 = vrot.slane %v3821, 2
  %v4502 = vsel %vm1779, %v4501, %v4500
  %v4503 = vrot.slane %v3822, 1
  %v4504 = vsel %vm1782, %v4503, %v4502
  %v4505 = vsel %vm1785, %v3823, %v4504
  %v4506 = vrot.slane %v3824, 7
  %v4509 = vmul.f32 %v4459, %v4505
  %v4510 = vmul.f32 %v4459, %v4506
  %v4511 = vmul.f32 %v4463, %v4505
  %v4512 = vmul.f32 %v4463, %v4506
  %v4513 = vmul.f32 %v4467, %v4505
  %v4514 = vmul.f32 %v4467, %v4506
  %v4515 = vmul.f32 %v4471, %v4505
  %v4516 = vmul.f32 %v4471, %v4506
  %v4517 = vmul.f32 %v4475, %v4505
  %v4518 = vmul.f32 %v4475, %v4506
  %v4519 = vmul.f32 %v4479, %v4505
  %v4520 = vmul.f32 %v4479, %v4506
  %v4521 = vmul.f32 %v4483, %v4505
  %v4522 = vmul.f32 %v4483, %v4506
  %v4523 = vmul.f32 %v4487, %v4505
  %v4524 = vmul.f32 %v4487, %v4506
  %v4525 = vmul.f32 %v4491, %v4505
  %v4526 = vmul.f32 %v4491, %v4506
  %v4527 = vadd.f32 %v4438, %v4509
  %v4528 = vadd.f32 %v4439, %v4510
  %v4529 = vadd.f32 %v4440, %v4511
  %v4530 = vadd.f32 %v4441, %v4512
  %v4531 = vadd.f32 %v4442, %v4513
  %v4532 = vadd.f32 %v4443, %v4514
  %v4533 = vadd.f32 %v4444, %v4515
  %v4534 = vadd.f32 %v4445, %v4516
  %v4535 = vadd.f32 %v4446, %v4517
  %v4536 = vadd.f32 %v4447, %v4518
  %v4537 = vadd.f32 %v4448, %v4519
  %v4538 = vadd.f32 %v4449, %v4520
  %v4539 = vadd.f32 %v4450, %v4521
  %v4540 = vadd.f32 %v4451, %v4522
  %v4541 = vadd.f32 %v4452, %v4523
  %v4542 = vadd.f32 %v4453, %v4524
  %v4543 = vadd.f32 %v4454, %v4525
  %v4544 = vadd.f32 %v4455, %v4526
  %v4545 = vmul.f32 %v4527, 0.35355338
  %v4546 = vmul.f32 %v4528, 0.35355338
  %v4547 = vmul.f32 %v4529, 0.35355338
  %v4548 = vmul.f32 %v4530, 0.35355338
  %v4549 = vmul.f32 %v4531, 0.35355338
  %v4550 = vmul.f32 %v4532, 0.35355338
  %v4551 = vmul.f32 %v4533, 0.35355338
  %v4552 = vmul.f32 %v4534, 0.35355338
  %v4553 = vmul.f32 %v4535, 0.35355338
  %v4554 = vmul.f32 %v4536, 0.35355338
  %v4555 = vmul.f32 %v4537, 0.35355338
  %v4556 = vmul.f32 %v4538, 0.35355338
  %v4557 = vmul.f32 %v4539, 0.35355338
  %v4558 = vmul.f32 %v4540, 0.35355338
  %v4559 = vmul.f32 %v4541, 0.35355338
  %v4560 = vmul.f32 %v4542, 0.35355338
  %v4561 = vmul.f32 %v4543, 0.35355338
  %v4562 = vmul.f32 %v4544, 0.35355338
  %v4572 = vrot.slane %v4545, 1
  %v4573 = vrot.slane %v4547, 1
  %v4574 = vrot.slane %v4549, 1
  %v4575 = vrot.slane %v4551, 1
  %v4576 = vrot.slane %v4553, 1
  %v4577 = vrot.slane %v4555, 1
  %v4578 = vrot.slane %v4557, 1
  %v4579 = vrot.slane %v4559, 1
  %v4580 = vrot.slane %v4561, 1
  %v4590 = vmax.f32 %v4545, %v4572
  %v4591 = vmax.f32 %v4547, %v4573
  %v4592 = vmax.f32 %v4549, %v4574
  %v4593 = vmax.f32 %v4551, %v4575
  %v4594 = vmax.f32 %v4553, %v4576
  %v4595 = vmax.f32 %v4555, %v4577
  %v4596 = vmax.f32 %v4557, %v4578
  %v4597 = vmax.f32 %v4559, %v4579
  %v4598 = vmax.f32 %v4561, %v4580
  %v4599 = vrot.slane %v4545, 2
  %v4600 = vrot.slane %v4547, 2
  %v4601 = vrot.slane %v4549, 2
  %v4602 = vrot.slane %v4551, 2
  %v4603 = vrot.slane %v4553, 2
  %v4604 = vrot.slane %v4555, 2
  %v4605 = vrot.slane %v4557, 2
  %v4606 = vrot.slane %v4559, 2
  %v4607 = vrot.slane %v4561, 2
  %v4617 = vmax.f32 %v4590, %v4599
  %v4618 = vmax.f32 %v4591, %v4600
  %v4619 = vmax.f32 %v4592, %v4601
  %v4620 = vmax.f32 %v4593, %v4602
  %v4621 = vmax.f32 %v4594, %v4603
  %v4622 = vmax.f32 %v4595, %v4604
  %v4623 = vmax.f32 %v4596, %v4605
  %v4624 = vmax.f32 %v4597, %v4606
  %v4625 = vmax.f32 %v4598, %v4607
  %v4626 = vrot.slane %v4545, 3
  %v4627 = vrot.slane %v4547, 3
  %v4628 = vrot.slane %v4549, 3
  %v4629 = vrot.slane %v4551, 3
  %v4630 = vrot.slane %v4553, 3
  %v4631 = vrot.slane %v4555, 3
  %v4632 = vrot.slane %v4557, 3
  %v4633 = vrot.slane %v4559, 3
  %v4634 = vrot.slane %v4561, 3
  %v4644 = vmax.f32 %v4617, %v4626
  %v4645 = vmax.f32 %v4618, %v4627
  %v4646 = vmax.f32 %v4619, %v4628
  %v4647 = vmax.f32 %v4620, %v4629
  %v4648 = vmax.f32 %v4621, %v4630
  %v4649 = vmax.f32 %v4622, %v4631
  %v4650 = vmax.f32 %v4623, %v4632
  %v4651 = vmax.f32 %v4624, %v4633
  %v4652 = vmax.f32 %v4625, %v4634
  %v4653 = vrot.slane %v4545, 4
  %v4654 = vrot.slane %v4547, 4
  %v4655 = vrot.slane %v4549, 4
  %v4656 = vrot.slane %v4551, 4
  %v4657 = vrot.slane %v4553, 4
  %v4658 = vrot.slane %v4555, 4
  %v4659 = vrot.slane %v4557, 4
  %v4660 = vrot.slane %v4559, 4
  %v4661 = vrot.slane %v4561, 4
  %v4671 = vmax.f32 %v4644, %v4653
  %v4672 = vmax.f32 %v4645, %v4654
  %v4673 = vmax.f32 %v4646, %v4655
  %v4674 = vmax.f32 %v4647, %v4656
  %v4675 = vmax.f32 %v4648, %v4657
  %v4676 = vmax.f32 %v4649, %v4658
  %v4677 = vmax.f32 %v4650, %v4659
  %v4678 = vmax.f32 %v4651, %v4660
  %v4679 = vmax.f32 %v4652, %v4661
  %v4680 = vrot.slane %v4545, 5
  %v4681 = vrot.slane %v4547, 5
  %v4682 = vrot.slane %v4549, 5
  %v4683 = vrot.slane %v4551, 5
  %v4684 = vrot.slane %v4553, 5
  %v4685 = vrot.slane %v4555, 5
  %v4686 = vrot.slane %v4557, 5
  %v4687 = vrot.slane %v4559, 5
  %v4688 = vrot.slane %v4561, 5
  %v4698 = vmax.f32 %v4671, %v4680
  %v4699 = vmax.f32 %v4672, %v4681
  %v4700 = vmax.f32 %v4673, %v4682
  %v4701 = vmax.f32 %v4674, %v4683
  %v4702 = vmax.f32 %v4675, %v4684
  %v4703 = vmax.f32 %v4676, %v4685
  %v4704 = vmax.f32 %v4677, %v4686
  %v4705 = vmax.f32 %v4678, %v4687
  %v4706 = vmax.f32 %v4679, %v4688
  %v4707 = vrot.slane %v4545, 6
  %v4708 = vrot.slane %v4547, 6
  %v4709 = vrot.slane %v4549, 6
  %v4710 = vrot.slane %v4551, 6
  %v4711 = vrot.slane %v4553, 6
  %v4712 = vrot.slane %v4555, 6
  %v4713 = vrot.slane %v4557, 6
  %v4714 = vrot.slane %v4559, 6
  %v4715 = vrot.slane %v4561, 6
  %v4725 = vmax.f32 %v4698, %v4707
  %v4726 = vmax.f32 %v4699, %v4708
  %v4727 = vmax.f32 %v4700, %v4709
  %v4728 = vmax.f32 %v4701, %v4710
  %v4729 = vmax.f32 %v4702, %v4711
  %v4730 = vmax.f32 %v4703, %v4712
  %v4731 = vmax.f32 %v4704, %v4713
  %v4732 = vmax.f32 %v4705, %v4714
  %v4733 = vmax.f32 %v4706, %v4715
  %v4734 = vrot.slane %v4545, 7
  %v4735 = vrot.slane %v4547, 7
  %v4736 = vrot.slane %v4549, 7
  %v4737 = vrot.slane %v4551, 7
  %v4738 = vrot.slane %v4553, 7
  %v4739 = vrot.slane %v4555, 7
  %v4740 = vrot.slane %v4557, 7
  %v4741 = vrot.slane %v4559, 7
  %v4742 = vrot.slane %v4561, 7
  %v4752 = vmax.f32 %v4725, %v4734
  %v4753 = vmax.f32 %v4726, %v4735
  %v4754 = vmax.f32 %v4727, %v4736
  %v4755 = vmax.f32 %v4728, %v4737
  %v4756 = vmax.f32 %v4729, %v4738
  %v4757 = vmax.f32 %v4730, %v4739
  %v4758 = vmax.f32 %v4731, %v4740
  %v4759 = vmax.f32 %v4732, %v4741
  %v4760 = vmax.f32 %v4733, %v4742
  %v4761 = vmax.f32 %v4752, %v4546
  %v4762 = vmax.f32 %v4753, %v4548
  %v4763 = vmax.f32 %v4754, %v4550
  %v4764 = vmax.f32 %v4755, %v4552
  %v4765 = vmax.f32 %v4756, %v4554
  %v4766 = vmax.f32 %v4757, %v4556
  %v4767 = vmax.f32 %v4758, %v4558
  %v4768 = vmax.f32 %v4759, %v4560
  %v4769 = vmax.f32 %v4760, %v4562
  %v4770 = vlaneseq
  %v4771 = vshrl.u32 %v4770, 7
  %v4772 = vsub.s32 0, %v4771
  %v4773 = vrot.slane %v4761, %v4772
  %v4774 = vlaneseq
  %v4775 = vshrl.u32 %v4774, 7
  %v4776 = vsub.s32 0, %v4775
  %v4777 = vrot.slane %v4762, %v4776
  %v4778 = vlaneseq
  %v4779 = vshrl.u32 %v4778, 7
  %v4780 = vsub.s32 0, %v4779
  %v4781 = vrot.slane %v4763, %v4780
  %v4782 = vlaneseq
  %v4783 = vshrl.u32 %v4782, 7
  %v4784 = vsub.s32 0, %v4783
  %v4785 = vrot.slane %v4764, %v4784
  %v4786 = vlaneseq
  %v4787 = vshrl.u32 %v4786, 7
  %v4788 = vsub.s32 0, %v4787
  %v4789 = vrot.slane %v4765, %v4788
  %v4790 = vlaneseq
  %v4791 = vshrl.u32 %v4790, 7
  %v4792 = vsub.s32 0, %v4791
  %v4793 = vrot.slane %v4766, %v4792
  %v4794 = vlaneseq
  %v4795 = vshrl.u32 %v4794, 7
  %v4796 = vsub.s32 0, %v4795
  %v4797 = vrot.slane %v4767, %v4796
  %v4798 = vlaneseq
  %v4799 = vshrl.u32 %v4798, 7
  %v4800 = vsub.s32 0, %v4799
  %v4801 = vrot.slane %v4768, %v4800
  %v4802 = vlaneseq
  %v4803 = vshrl.u32 %v4802, 7
  %v4804 = vsub.s32 0, %v4803
  %v4805 = vrot.slane %v4769, %v4804
  %v4806 = vsub.f32 %v4545, %v4773
  %v4807 = vsub.f32 %v4546, %v4773
  %v4808 = vsub.f32 %v4547, %v4777
  %v4809 = vsub.f32 %v4548, %v4777
  %v4810 = vsub.f32 %v4549, %v4781
  %v4811 = vsub.f32 %v4550, %v4781
  %v4812 = vsub.f32 %v4551, %v4785
  %v4813 = vsub.f32 %v4552, %v4785
  %v4814 = vsub.f32 %v4553, %v4789
  %v4815 = vsub.f32 %v4554, %v4789
  %v4816 = vsub.f32 %v4555, %v4793
  %v4817 = vsub.f32 %v4556, %v4793
  %v4818 = vsub.f32 %v4557, %v4797
  %v4819 = vsub.f32 %v4558, %v4797
  %v4820 = vsub.f32 %v4559, %v4801
  %v4821 = vsub.f32 %v4560, %v4801
  %v4822 = vsub.f32 %v4561, %v4805
  %v4823 = vsub.f32 %v4562, %v4805
  %v4824 = vmul.f32 %v4806, 1.442695
  %v4825 = vpow.pop %v4824
  %v4826 = vmul.f32 %v4807, 1.442695
  %v4827 = vpow.pop %v4826
  %v4828 = vmul.f32 %v4808, 1.442695
  %v4829 = vpow.pop %v4828
  %v4830 = vmul.f32 %v4809, 1.442695
  %v4831 = vpow.pop %v4830
  %v4832 = vmul.f32 %v4810, 1.442695
  %v4833 = vpow.pop %v4832
  %v4834 = vmul.f32 %v4811, 1.442695
  %v4835 = vpow.pop %v4834
  %v4836 = vmul.f32 %v4812, 1.442695
  %v4837 = vpow.pop %v4836
  %v4838 = vmul.f32 %v4813, 1.442695
  %v4839 = vpow.pop %v4838
  %v4840 = vmul.f32 %v4814, 1.442695
  %v4841 = vpow.pop %v4840
  %v4842 = vmul.f32 %v4815, 1.442695
  %v4843 = vpow.pop %v4842
  %v4844 = vmul.f32 %v4816, 1.442695
  %v4845 = vpow.pop %v4844
  %v4846 = vmul.f32 %v4817, 1.442695
  %v4847 = vpow.pop %v4846
  %v4848 = vmul.f32 %v4818, 1.442695
  %v4849 = vpow.pop %v4848
  %v4850 = vmul.f32 %v4819, 1.442695
  %v4851 = vpow.pop %v4850
  %v4852 = vmul.f32 %v4820, 1.442695
  %v4853 = vpow.pop %v4852
  %v4854 = vmul.f32 %v4821, 1.442695
  %v4855 = vpow.pop %v4854
  %v4856 = vmul.f32 %v4822, 1.442695
  %v4857 = vpow.pop %v4856
  %v4858 = vmul.f32 %v4823, 1.442695
  %v4859 = vpow.pop %v4858
  %v4869 = vrot.slane %v4825, 1
  %v4870 = vrot.slane %v4829, 1
  %v4871 = vrot.slane %v4833, 1
  %v4872 = vrot.slane %v4837, 1
  %v4873 = vrot.slane %v4841, 1
  %v4874 = vrot.slane %v4845, 1
  %v4875 = vrot.slane %v4849, 1
  %v4876 = vrot.slane %v4853, 1
  %v4877 = vrot.slane %v4857, 1
  %v4887 = vadd.f32 %v4825, %v4869
  %v4888 = vadd.f32 %v4829, %v4870
  %v4889 = vadd.f32 %v4833, %v4871
  %v4890 = vadd.f32 %v4837, %v4872
  %v4891 = vadd.f32 %v4841, %v4873
  %v4892 = vadd.f32 %v4845, %v4874
  %v4893 = vadd.f32 %v4849, %v4875
  %v4894 = vadd.f32 %v4853, %v4876
  %v4895 = vadd.f32 %v4857, %v4877
  %v4896 = vrot.slane %v4825, 2
  %v4897 = vrot.slane %v4829, 2
  %v4898 = vrot.slane %v4833, 2
  %v4899 = vrot.slane %v4837, 2
  %v4900 = vrot.slane %v4841, 2
  %v4901 = vrot.slane %v4845, 2
  %v4902 = vrot.slane %v4849, 2
  %v4903 = vrot.slane %v4853, 2
  %v4904 = vrot.slane %v4857, 2
  %v4914 = vadd.f32 %v4887, %v4896
  %v4915 = vadd.f32 %v4888, %v4897
  %v4916 = vadd.f32 %v4889, %v4898
  %v4917 = vadd.f32 %v4890, %v4899
  %v4918 = vadd.f32 %v4891, %v4900
  %v4919 = vadd.f32 %v4892, %v4901
  %v4920 = vadd.f32 %v4893, %v4902
  %v4921 = vadd.f32 %v4894, %v4903
  %v4922 = vadd.f32 %v4895, %v4904
  %v4923 = vrot.slane %v4825, 3
  %v4924 = vrot.slane %v4829, 3
  %v4925 = vrot.slane %v4833, 3
  %v4926 = vrot.slane %v4837, 3
  %v4927 = vrot.slane %v4841, 3
  %v4928 = vrot.slane %v4845, 3
  %v4929 = vrot.slane %v4849, 3
  %v4930 = vrot.slane %v4853, 3
  %v4931 = vrot.slane %v4857, 3
  %v4941 = vadd.f32 %v4914, %v4923
  %v4942 = vadd.f32 %v4915, %v4924
  %v4943 = vadd.f32 %v4916, %v4925
  %v4944 = vadd.f32 %v4917, %v4926
  %v4945 = vadd.f32 %v4918, %v4927
  %v4946 = vadd.f32 %v4919, %v4928
  %v4947 = vadd.f32 %v4920, %v4929
  %v4948 = vadd.f32 %v4921, %v4930
  %v4949 = vadd.f32 %v4922, %v4931
  %v4950 = vrot.slane %v4825, 4
  %v4951 = vrot.slane %v4829, 4
  %v4952 = vrot.slane %v4833, 4
  %v4953 = vrot.slane %v4837, 4
  %v4954 = vrot.slane %v4841, 4
  %v4955 = vrot.slane %v4845, 4
  %v4956 = vrot.slane %v4849, 4
  %v4957 = vrot.slane %v4853, 4
  %v4958 = vrot.slane %v4857, 4
  %v4968 = vadd.f32 %v4941, %v4950
  %v4969 = vadd.f32 %v4942, %v4951
  %v4970 = vadd.f32 %v4943, %v4952
  %v4971 = vadd.f32 %v4944, %v4953
  %v4972 = vadd.f32 %v4945, %v4954
  %v4973 = vadd.f32 %v4946, %v4955
  %v4974 = vadd.f32 %v4947, %v4956
  %v4975 = vadd.f32 %v4948, %v4957
  %v4976 = vadd.f32 %v4949, %v4958
  %v4977 = vrot.slane %v4825, 5
  %v4978 = vrot.slane %v4829, 5
  %v4979 = vrot.slane %v4833, 5
  %v4980 = vrot.slane %v4837, 5
  %v4981 = vrot.slane %v4841, 5
  %v4982 = vrot.slane %v4845, 5
  %v4983 = vrot.slane %v4849, 5
  %v4984 = vrot.slane %v4853, 5
  %v4985 = vrot.slane %v4857, 5
  %v4995 = vadd.f32 %v4968, %v4977
  %v4996 = vadd.f32 %v4969, %v4978
  %v4997 = vadd.f32 %v4970, %v4979
  %v4998 = vadd.f32 %v4971, %v4980
  %v4999 = vadd.f32 %v4972, %v4981
  %v5000 = vadd.f32 %v4973, %v4982
  %v5001 = vadd.f32 %v4974, %v4983
  %v5002 = vadd.f32 %v4975, %v4984
  %v5003 = vadd.f32 %v4976, %v4985
  %v5004 = vrot.slane %v4825, 6
  %v5005 = vrot.slane %v4829, 6
  %v5006 = vrot.slane %v4833, 6
  %v5007 = vrot.slane %v4837, 6
  %v5008 = vrot.slane %v4841, 6
  %v5009 = vrot.slane %v4845, 6
  %v5010 = vrot.slane %v4849, 6
  %v5011 = vrot.slane %v4853, 6
  %v5012 = vrot.slane %v4857, 6
  %v5022 = vadd.f32 %v4995, %v5004
  %v5023 = vadd.f32 %v4996, %v5005
  %v5024 = vadd.f32 %v4997, %v5006
  %v5025 = vadd.f32 %v4998, %v5007
  %v5026 = vadd.f32 %v4999, %v5008
  %v5027 = vadd.f32 %v5000, %v5009
  %v5028 = vadd.f32 %v5001, %v5010
  %v5029 = vadd.f32 %v5002, %v5011
  %v5030 = vadd.f32 %v5003, %v5012
  %v5031 = vrot.slane %v4825, 7
  %v5032 = vrot.slane %v4829, 7
  %v5033 = vrot.slane %v4833, 7
  %v5034 = vrot.slane %v4837, 7
  %v5035 = vrot.slane %v4841, 7
  %v5036 = vrot.slane %v4845, 7
  %v5037 = vrot.slane %v4849, 7
  %v5038 = vrot.slane %v4853, 7
  %v5039 = vrot.slane %v4857, 7
  %v5049 = vadd.f32 %v5022, %v5031
  %v5050 = vadd.f32 %v5023, %v5032
  %v5051 = vadd.f32 %v5024, %v5033
  %v5052 = vadd.f32 %v5025, %v5034
  %v5053 = vadd.f32 %v5026, %v5035
  %v5054 = vadd.f32 %v5027, %v5036
  %v5055 = vadd.f32 %v5028, %v5037
  %v5056 = vadd.f32 %v5029, %v5038
  %v5057 = vadd.f32 %v5030, %v5039
  %v5058 = vadd.f32 %v5049, %v4827
  %v5059 = vadd.f32 %v5050, %v4831
  %v5060 = vadd.f32 %v5051, %v4835
  %v5061 = vadd.f32 %v5052, %v4839
  %v5062 = vadd.f32 %v5053, %v4843
  %v5063 = vadd.f32 %v5054, %v4847
  %v5064 = vadd.f32 %v5055, %v4851
  %v5065 = vadd.f32 %v5056, %v4855
  %v5066 = vadd.f32 %v5057, %v4859
  %v5067 = vrcp.pop %v5058
  %v5068 = vrcp.pop %v5059
  %v5069 = vrcp.pop %v5060
  %v5070 = vrcp.pop %v5061
  %v5071 = vrcp.pop %v5062
  %v5072 = vrcp.pop %v5063
  %v5073 = vrcp.pop %v5064
  %v5074 = vrcp.pop %v5065
  %v5075 = vrcp.pop %v5066
  %v5076 = vmul.f32 %v4825, %v5067
  %v5077 = vmul.f32 %v4829, %v5068
  %v5078 = vmul.f32 %v4833, %v5069
  %v5079 = vmul.f32 %v4837, %v5070
  %v5080 = vmul.f32 %v4841, %v5071
  %v5081 = vmul.f32 %v4845, %v5072
  %v5082 = vmul.f32 %v4849, %v5073
  %v5083 = vmul.f32 %v4853, %v5074
  %v5084 = vmul.f32 %v4857, %v5075
  %v5085 = vlaneseq
  %v5086 = vshrl.u32 %v5085, 7
  %v5087 = vsub.s32 0, %v5086
  %v5088 = vrot.slane %v5076, %v5087
  %v5089 = vlaneseq
  %v5090 = vshrl.u32 %v5089, 7
  %v5091 = vsub.s32 0, %v5090
  %v5092 = vrot.slane %v5077, %v5091
  %v5093 = vlaneseq
  %v5094 = vshrl.u32 %v5093, 7
  %v5095 = vsub.s32 0, %v5094
  %v5096 = vrot.slane %v5078, %v5095
  %v5097 = vlaneseq
  %v5098 = vshrl.u32 %v5097, 7
  %v5099 = vsub.s32 0, %v5098
  %v5100 = vrot.slane %v5079, %v5099
  %v5101 = vlaneseq
  %v5102 = vshrl.u32 %v5101, 7
  %v5103 = vsub.s32 0, %v5102
  %v5104 = vrot.slane %v5080, %v5103
  %v5105 = vlaneseq
  %v5106 = vshrl.u32 %v5105, 7
  %v5107 = vsub.s32 0, %v5106
  %v5108 = vrot.slane %v5081, %v5107
  %v5109 = vlaneseq
  %v5110 = vshrl.u32 %v5109, 7
  %v5111 = vsub.s32 0, %v5110
  %v5112 = vrot.slane %v5082, %v5111
  %v5113 = vlaneseq
  %v5114 = vshrl.u32 %v5113, 7
  %v5115 = vsub.s32 0, %v5114
  %v5116 = vrot.slane %v5083, %v5115
  %v5117 = vlaneseq
  %v5118 = vshrl.u32 %v5117, 7
  %v5119 = vsub.s32 0, %v5118
  %v5120 = vrot.slane %v5084, %v5119
  %v5121 = vmul.f32 %v5088, %v3825
  %v5122 = vmul.f32 %v5088, %v3826
  %v5123 = vmul.f32 %v5092, %v3825
  %v5124 = vmul.f32 %v5092, %v3826
  %v5125 = vmul.f32 %v5096, %v3825
  %v5126 = vmul.f32 %v5096, %v3826
  %v5127 = vmul.f32 %v5100, %v3825
  %v5128 = vmul.f32 %v5100, %v3826
  %v5129 = vmul.f32 %v5104, %v3825
  %v5130 = vmul.f32 %v5104, %v3826
  %v5131 = vmul.f32 %v5108, %v3825
  %v5132 = vmul.f32 %v5108, %v3826
  %v5133 = vmul.f32 %v5112, %v3825
  %v5134 = vmul.f32 %v5112, %v3826
  %v5135 = vmul.f32 %v5116, %v3825
  %v5136 = vmul.f32 %v5116, %v3826
  %v5137 = vmul.f32 %v5120, %v3825
  %v5138 = vmul.f32 %v5120, %v3826
  %v5139 = vadd.f32 %v3789, %v5121
  %v5140 = vadd.f32 %v3790, %v5122
  %v5141 = vadd.f32 %v3791, %v5123
  %v5142 = vadd.f32 %v3792, %v5124
  %v5143 = vadd.f32 %v3793, %v5125
  %v5144 = vadd.f32 %v3794, %v5126
  %v5145 = vadd.f32 %v3795, %v5127
  %v5146 = vadd.f32 %v3796, %v5128
  %v5147 = vadd.f32 %v3797, %v5129
  %v5148 = vadd.f32 %v3798, %v5130
  %v5149 = vadd.f32 %v3799, %v5131
  %v5150 = vadd.f32 %v3800, %v5132
  %v5151 = vadd.f32 %v3801, %v5133
  %v5152 = vadd.f32 %v3802, %v5134
  %v5153 = vadd.f32 %v3803, %v5135
  %v5154 = vadd.f32 %v3804, %v5136
  %v5155 = vadd.f32 %v3805, %v5137
  %v5156 = vadd.f32 %v3806, %v5138
  %v5166 = vrot.slane %v5067, 7
  %v5167 = vrot.slane %v5068, 7
  %v5168 = vrot.slane %v5069, 7
  %v5169 = vrot.slane %v5070, 7
  %v5170 = vrot.slane %v5071, 7
  %v5171 = vrot.slane %v5072, 7
  %v5172 = vrot.slane %v5073, 7
  %v5173 = vrot.slane %v5074, 7
  %v5174 = vrot.slane %v5075, 7
  %v5184 = vmul.f32 %v4825, %v5166
  %v5185 = vmul.f32 %v4829, %v5167
  %v5186 = vmul.f32 %v4833, %v5168
  %v5187 = vmul.f32 %v4837, %v5169
  %v5188 = vmul.f32 %v4841, %v5170
  %v5189 = vmul.f32 %v4845, %v5171
  %v5190 = vmul.f32 %v4849, %v5172
  %v5191 = vmul.f32 %v4853, %v5173
  %v5192 = vmul.f32 %v4857, %v5174
  %v5193 = vlaneseq
  %v5194 = vshrl.u32 %v5193, 7
  %v5195 = vsub.s32 1, %v5194
  %v5196 = vrot.slane %v5184, %v5195
  %v5197 = vlaneseq
  %v5198 = vshrl.u32 %v5197, 7
  %v5199 = vsub.s32 1, %v5198
  %v5200 = vrot.slane %v5185, %v5199
  %v5201 = vlaneseq
  %v5202 = vshrl.u32 %v5201, 7
  %v5203 = vsub.s32 1, %v5202
  %v5204 = vrot.slane %v5186, %v5203
  %v5205 = vlaneseq
  %v5206 = vshrl.u32 %v5205, 7
  %v5207 = vsub.s32 1, %v5206
  %v5208 = vrot.slane %v5187, %v5207
  %v5209 = vlaneseq
  %v5210 = vshrl.u32 %v5209, 7
  %v5211 = vsub.s32 1, %v5210
  %v5212 = vrot.slane %v5188, %v5211
  %v5213 = vlaneseq
  %v5214 = vshrl.u32 %v5213, 7
  %v5215 = vsub.s32 1, %v5214
  %v5216 = vrot.slane %v5189, %v5215
  %v5217 = vlaneseq
  %v5218 = vshrl.u32 %v5217, 7
  %v5219 = vsub.s32 1, %v5218
  %v5220 = vrot.slane %v5190, %v5219
  %v5221 = vlaneseq
  %v5222 = vshrl.u32 %v5221, 7
  %v5223 = vsub.s32 1, %v5222
  %v5224 = vrot.slane %v5191, %v5223
  %v5225 = vlaneseq
  %v5226 = vshrl.u32 %v5225, 7
  %v5227 = vsub.s32 1, %v5226
  %v5228 = vrot.slane %v5192, %v5227
  %v5229 = vmul.f32 %v5196, %v3827
  %v5230 = vmul.f32 %v5196, %v3828
  %v5231 = vmul.f32 %v5200, %v3827
  %v5232 = vmul.f32 %v5200, %v3828
  %v5233 = vmul.f32 %v5204, %v3827
  %v5234 = vmul.f32 %v5204, %v3828
  %v5235 = vmul.f32 %v5208, %v3827
  %v5236 = vmul.f32 %v5208, %v3828
  %v5237 = vmul.f32 %v5212, %v3827
  %v5238 = vmul.f32 %v5212, %v3828
  %v5239 = vmul.f32 %v5216, %v3827
  %v5240 = vmul.f32 %v5216, %v3828
  %v5241 = vmul.f32 %v5220, %v3827
  %v5242 = vmul.f32 %v5220, %v3828
  %v5243 = vmul.f32 %v5224, %v3827
  %v5244 = vmul.f32 %v5224, %v3828
  %v5245 = vmul.f32 %v5228, %v3827
  %v5246 = vmul.f32 %v5228, %v3828
  %v5247 = vadd.f32 %v5139, %v5229
  %v5248 = vadd.f32 %v5140, %v5230
  %v5249 = vadd.f32 %v5141, %v5231
  %v5250 = vadd.f32 %v5142, %v5232
  %v5251 = vadd.f32 %v5143, %v5233
  %v5252 = vadd.f32 %v5144, %v5234
  %v5253 = vadd.f32 %v5145, %v5235
  %v5254 = vadd.f32 %v5146, %v5236
  %v5255 = vadd.f32 %v5147, %v5237
  %v5256 = vadd.f32 %v5148, %v5238
  %v5257 = vadd.f32 %v5149, %v5239
  %v5258 = vadd.f32 %v5150, %v5240
  %v5259 = vadd.f32 %v5151, %v5241
  %v5260 = vadd.f32 %v5152, %v5242
  %v5261 = vadd.f32 %v5153, %v5243
  %v5262 = vadd.f32 %v5154, %v5244
  %v5263 = vadd.f32 %v5155, %v5245
  %v5264 = vadd.f32 %v5156, %v5246
  %v5265 = vrot.slane %v5067, 6
  %v5266 = vrot.slane %v5068, 6
  %v5267 = vrot.slane %v5069, 6
  %v5268 = vrot.slane %v5070, 6
  %v5269 = vrot.slane %v5071, 6
  %v5270 = vrot.slane %v5072, 6
  %v5271 = vrot.slane %v5073, 6
  %v5272 = vrot.slane %v5074, 6
  %v5273 = vrot.slane %v5075, 6
  %v5283 = vmul.f32 %v4825, %v5265
  %v5284 = vmul.f32 %v4829, %v5266
  %v5285 = vmul.f32 %v4833, %v5267
  %v5286 = vmul.f32 %v4837, %v5268
  %v5287 = vmul.f32 %v4841, %v5269
  %v5288 = vmul.f32 %v4845, %v5270
  %v5289 = vmul.f32 %v4849, %v5271
  %v5290 = vmul.f32 %v4853, %v5272
  %v5291 = vmul.f32 %v4857, %v5273
  %v5292 = vlaneseq
  %v5293 = vshrl.u32 %v5292, 7
  %v5294 = vsub.s32 2, %v5293
  %v5295 = vrot.slane %v5283, %v5294
  %v5296 = vlaneseq
  %v5297 = vshrl.u32 %v5296, 7
  %v5298 = vsub.s32 2, %v5297
  %v5299 = vrot.slane %v5284, %v5298
  %v5300 = vlaneseq
  %v5301 = vshrl.u32 %v5300, 7
  %v5302 = vsub.s32 2, %v5301
  %v5303 = vrot.slane %v5285, %v5302
  %v5304 = vlaneseq
  %v5305 = vshrl.u32 %v5304, 7
  %v5306 = vsub.s32 2, %v5305
  %v5307 = vrot.slane %v5286, %v5306
  %v5308 = vlaneseq
  %v5309 = vshrl.u32 %v5308, 7
  %v5310 = vsub.s32 2, %v5309
  %v5311 = vrot.slane %v5287, %v5310
  %v5312 = vlaneseq
  %v5313 = vshrl.u32 %v5312, 7
  %v5314 = vsub.s32 2, %v5313
  %v5315 = vrot.slane %v5288, %v5314
  %v5316 = vlaneseq
  %v5317 = vshrl.u32 %v5316, 7
  %v5318 = vsub.s32 2, %v5317
  %v5319 = vrot.slane %v5289, %v5318
  %v5320 = vlaneseq
  %v5321 = vshrl.u32 %v5320, 7
  %v5322 = vsub.s32 2, %v5321
  %v5323 = vrot.slane %v5290, %v5322
  %v5324 = vlaneseq
  %v5325 = vshrl.u32 %v5324, 7
  %v5326 = vsub.s32 2, %v5325
  %v5327 = vrot.slane %v5291, %v5326
  %v5328 = vmul.f32 %v5295, %v3829
  %v5329 = vmul.f32 %v5295, %v3830
  %v5330 = vmul.f32 %v5299, %v3829
  %v5331 = vmul.f32 %v5299, %v3830
  %v5332 = vmul.f32 %v5303, %v3829
  %v5333 = vmul.f32 %v5303, %v3830
  %v5334 = vmul.f32 %v5307, %v3829
  %v5335 = vmul.f32 %v5307, %v3830
  %v5336 = vmul.f32 %v5311, %v3829
  %v5337 = vmul.f32 %v5311, %v3830
  %v5338 = vmul.f32 %v5315, %v3829
  %v5339 = vmul.f32 %v5315, %v3830
  %v5340 = vmul.f32 %v5319, %v3829
  %v5341 = vmul.f32 %v5319, %v3830
  %v5342 = vmul.f32 %v5323, %v3829
  %v5343 = vmul.f32 %v5323, %v3830
  %v5344 = vmul.f32 %v5327, %v3829
  %v5345 = vmul.f32 %v5327, %v3830
  %v5346 = vadd.f32 %v5247, %v5328
  %v5347 = vadd.f32 %v5248, %v5329
  %v5348 = vadd.f32 %v5249, %v5330
  %v5349 = vadd.f32 %v5250, %v5331
  %v5350 = vadd.f32 %v5251, %v5332
  %v5351 = vadd.f32 %v5252, %v5333
  %v5352 = vadd.f32 %v5253, %v5334
  %v5353 = vadd.f32 %v5254, %v5335
  %v5354 = vadd.f32 %v5255, %v5336
  %v5355 = vadd.f32 %v5256, %v5337
  %v5356 = vadd.f32 %v5257, %v5338
  %v5357 = vadd.f32 %v5258, %v5339
  %v5358 = vadd.f32 %v5259, %v5340
  %v5359 = vadd.f32 %v5260, %v5341
  %v5360 = vadd.f32 %v5261, %v5342
  %v5361 = vadd.f32 %v5262, %v5343
  %v5362 = vadd.f32 %v5263, %v5344
  %v5363 = vadd.f32 %v5264, %v5345
  %v5364 = vrot.slane %v5067, 5
  %v5365 = vrot.slane %v5068, 5
  %v5366 = vrot.slane %v5069, 5
  %v5367 = vrot.slane %v5070, 5
  %v5368 = vrot.slane %v5071, 5
  %v5369 = vrot.slane %v5072, 5
  %v5370 = vrot.slane %v5073, 5
  %v5371 = vrot.slane %v5074, 5
  %v5372 = vrot.slane %v5075, 5
  %v5382 = vmul.f32 %v4825, %v5364
  %v5383 = vmul.f32 %v4829, %v5365
  %v5384 = vmul.f32 %v4833, %v5366
  %v5385 = vmul.f32 %v4837, %v5367
  %v5386 = vmul.f32 %v4841, %v5368
  %v5387 = vmul.f32 %v4845, %v5369
  %v5388 = vmul.f32 %v4849, %v5370
  %v5389 = vmul.f32 %v4853, %v5371
  %v5390 = vmul.f32 %v4857, %v5372
  %v5391 = vlaneseq
  %v5392 = vshrl.u32 %v5391, 7
  %v5393 = vsub.s32 3, %v5392
  %v5394 = vrot.slane %v5382, %v5393
  %v5395 = vlaneseq
  %v5396 = vshrl.u32 %v5395, 7
  %v5397 = vsub.s32 3, %v5396
  %v5398 = vrot.slane %v5383, %v5397
  %v5399 = vlaneseq
  %v5400 = vshrl.u32 %v5399, 7
  %v5401 = vsub.s32 3, %v5400
  %v5402 = vrot.slane %v5384, %v5401
  %v5403 = vlaneseq
  %v5404 = vshrl.u32 %v5403, 7
  %v5405 = vsub.s32 3, %v5404
  %v5406 = vrot.slane %v5385, %v5405
  %v5407 = vlaneseq
  %v5408 = vshrl.u32 %v5407, 7
  %v5409 = vsub.s32 3, %v5408
  %v5410 = vrot.slane %v5386, %v5409
  %v5411 = vlaneseq
  %v5412 = vshrl.u32 %v5411, 7
  %v5413 = vsub.s32 3, %v5412
  %v5414 = vrot.slane %v5387, %v5413
  %v5415 = vlaneseq
  %v5416 = vshrl.u32 %v5415, 7
  %v5417 = vsub.s32 3, %v5416
  %v5418 = vrot.slane %v5388, %v5417
  %v5419 = vlaneseq
  %v5420 = vshrl.u32 %v5419, 7
  %v5421 = vsub.s32 3, %v5420
  %v5422 = vrot.slane %v5389, %v5421
  %v5423 = vlaneseq
  %v5424 = vshrl.u32 %v5423, 7
  %v5425 = vsub.s32 3, %v5424
  %v5426 = vrot.slane %v5390, %v5425
  %v5427 = vmul.f32 %v5394, %v3831
  %v5428 = vmul.f32 %v5394, %v3832
  %v5429 = vmul.f32 %v5398, %v3831
  %v5430 = vmul.f32 %v5398, %v3832
  %v5431 = vmul.f32 %v5402, %v3831
  %v5432 = vmul.f32 %v5402, %v3832
  %v5433 = vmul.f32 %v5406, %v3831
  %v5434 = vmul.f32 %v5406, %v3832
  %v5435 = vmul.f32 %v5410, %v3831
  %v5436 = vmul.f32 %v5410, %v3832
  %v5437 = vmul.f32 %v5414, %v3831
  %v5438 = vmul.f32 %v5414, %v3832
  %v5439 = vmul.f32 %v5418, %v3831
  %v5440 = vmul.f32 %v5418, %v3832
  %v5441 = vmul.f32 %v5422, %v3831
  %v5442 = vmul.f32 %v5422, %v3832
  %v5443 = vmul.f32 %v5426, %v3831
  %v5444 = vmul.f32 %v5426, %v3832
  %v5445 = vadd.f32 %v5346, %v5427
  %v5446 = vadd.f32 %v5347, %v5428
  %v5447 = vadd.f32 %v5348, %v5429
  %v5448 = vadd.f32 %v5349, %v5430
  %v5449 = vadd.f32 %v5350, %v5431
  %v5450 = vadd.f32 %v5351, %v5432
  %v5451 = vadd.f32 %v5352, %v5433
  %v5452 = vadd.f32 %v5353, %v5434
  %v5453 = vadd.f32 %v5354, %v5435
  %v5454 = vadd.f32 %v5355, %v5436
  %v5455 = vadd.f32 %v5356, %v5437
  %v5456 = vadd.f32 %v5357, %v5438
  %v5457 = vadd.f32 %v5358, %v5439
  %v5458 = vadd.f32 %v5359, %v5440
  %v5459 = vadd.f32 %v5360, %v5441
  %v5460 = vadd.f32 %v5361, %v5442
  %v5461 = vadd.f32 %v5362, %v5443
  %v5462 = vadd.f32 %v5363, %v5444
  %v5463 = vrot.slane %v5067, 4
  %v5464 = vrot.slane %v5068, 4
  %v5465 = vrot.slane %v5069, 4
  %v5466 = vrot.slane %v5070, 4
  %v5467 = vrot.slane %v5071, 4
  %v5468 = vrot.slane %v5072, 4
  %v5469 = vrot.slane %v5073, 4
  %v5470 = vrot.slane %v5074, 4
  %v5471 = vrot.slane %v5075, 4
  %v5481 = vmul.f32 %v4825, %v5463
  %v5482 = vmul.f32 %v4829, %v5464
  %v5483 = vmul.f32 %v4833, %v5465
  %v5484 = vmul.f32 %v4837, %v5466
  %v5485 = vmul.f32 %v4841, %v5467
  %v5486 = vmul.f32 %v4845, %v5468
  %v5487 = vmul.f32 %v4849, %v5469
  %v5488 = vmul.f32 %v4853, %v5470
  %v5489 = vmul.f32 %v4857, %v5471
  %v5490 = vlaneseq
  %v5491 = vshrl.u32 %v5490, 7
  %v5492 = vsub.s32 4, %v5491
  %v5493 = vrot.slane %v5481, %v5492
  %v5494 = vlaneseq
  %v5495 = vshrl.u32 %v5494, 7
  %v5496 = vsub.s32 4, %v5495
  %v5497 = vrot.slane %v5482, %v5496
  %v5498 = vlaneseq
  %v5499 = vshrl.u32 %v5498, 7
  %v5500 = vsub.s32 4, %v5499
  %v5501 = vrot.slane %v5483, %v5500
  %v5502 = vlaneseq
  %v5503 = vshrl.u32 %v5502, 7
  %v5504 = vsub.s32 4, %v5503
  %v5505 = vrot.slane %v5484, %v5504
  %v5506 = vlaneseq
  %v5507 = vshrl.u32 %v5506, 7
  %v5508 = vsub.s32 4, %v5507
  %v5509 = vrot.slane %v5485, %v5508
  %v5510 = vlaneseq
  %v5511 = vshrl.u32 %v5510, 7
  %v5512 = vsub.s32 4, %v5511
  %v5513 = vrot.slane %v5486, %v5512
  %v5514 = vlaneseq
  %v5515 = vshrl.u32 %v5514, 7
  %v5516 = vsub.s32 4, %v5515
  %v5517 = vrot.slane %v5487, %v5516
  %v5518 = vlaneseq
  %v5519 = vshrl.u32 %v5518, 7
  %v5520 = vsub.s32 4, %v5519
  %v5521 = vrot.slane %v5488, %v5520
  %v5522 = vlaneseq
  %v5523 = vshrl.u32 %v5522, 7
  %v5524 = vsub.s32 4, %v5523
  %v5525 = vrot.slane %v5489, %v5524
  %v5526 = vmul.f32 %v5493, %v3833
  %v5527 = vmul.f32 %v5493, %v3834
  %v5528 = vmul.f32 %v5497, %v3833
  %v5529 = vmul.f32 %v5497, %v3834
  %v5530 = vmul.f32 %v5501, %v3833
  %v5531 = vmul.f32 %v5501, %v3834
  %v5532 = vmul.f32 %v5505, %v3833
  %v5533 = vmul.f32 %v5505, %v3834
  %v5534 = vmul.f32 %v5509, %v3833
  %v5535 = vmul.f32 %v5509, %v3834
  %v5536 = vmul.f32 %v5513, %v3833
  %v5537 = vmul.f32 %v5513, %v3834
  %v5538 = vmul.f32 %v5517, %v3833
  %v5539 = vmul.f32 %v5517, %v3834
  %v5540 = vmul.f32 %v5521, %v3833
  %v5541 = vmul.f32 %v5521, %v3834
  %v5542 = vmul.f32 %v5525, %v3833
  %v5543 = vmul.f32 %v5525, %v3834
  %v5544 = vadd.f32 %v5445, %v5526
  %v5545 = vadd.f32 %v5446, %v5527
  %v5546 = vadd.f32 %v5447, %v5528
  %v5547 = vadd.f32 %v5448, %v5529
  %v5548 = vadd.f32 %v5449, %v5530
  %v5549 = vadd.f32 %v5450, %v5531
  %v5550 = vadd.f32 %v5451, %v5532
  %v5551 = vadd.f32 %v5452, %v5533
  %v5552 = vadd.f32 %v5453, %v5534
  %v5553 = vadd.f32 %v5454, %v5535
  %v5554 = vadd.f32 %v5455, %v5536
  %v5555 = vadd.f32 %v5456, %v5537
  %v5556 = vadd.f32 %v5457, %v5538
  %v5557 = vadd.f32 %v5458, %v5539
  %v5558 = vadd.f32 %v5459, %v5540
  %v5559 = vadd.f32 %v5460, %v5541
  %v5560 = vadd.f32 %v5461, %v5542
  %v5561 = vadd.f32 %v5462, %v5543
  %v5562 = vrot.slane %v5067, 3
  %v5563 = vrot.slane %v5068, 3
  %v5564 = vrot.slane %v5069, 3
  %v5565 = vrot.slane %v5070, 3
  %v5566 = vrot.slane %v5071, 3
  %v5567 = vrot.slane %v5072, 3
  %v5568 = vrot.slane %v5073, 3
  %v5569 = vrot.slane %v5074, 3
  %v5570 = vrot.slane %v5075, 3
  %v5580 = vmul.f32 %v4825, %v5562
  %v5581 = vmul.f32 %v4829, %v5563
  %v5582 = vmul.f32 %v4833, %v5564
  %v5583 = vmul.f32 %v4837, %v5565
  %v5584 = vmul.f32 %v4841, %v5566
  %v5585 = vmul.f32 %v4845, %v5567
  %v5586 = vmul.f32 %v4849, %v5568
  %v5587 = vmul.f32 %v4853, %v5569
  %v5588 = vmul.f32 %v4857, %v5570
  %v5589 = vlaneseq
  %v5590 = vshrl.u32 %v5589, 7
  %v5591 = vsub.s32 5, %v5590
  %v5592 = vrot.slane %v5580, %v5591
  %v5593 = vlaneseq
  %v5594 = vshrl.u32 %v5593, 7
  %v5595 = vsub.s32 5, %v5594
  %v5596 = vrot.slane %v5581, %v5595
  %v5597 = vlaneseq
  %v5598 = vshrl.u32 %v5597, 7
  %v5599 = vsub.s32 5, %v5598
  %v5600 = vrot.slane %v5582, %v5599
  %v5601 = vlaneseq
  %v5602 = vshrl.u32 %v5601, 7
  %v5603 = vsub.s32 5, %v5602
  %v5604 = vrot.slane %v5583, %v5603
  %v5605 = vlaneseq
  %v5606 = vshrl.u32 %v5605, 7
  %v5607 = vsub.s32 5, %v5606
  %v5608 = vrot.slane %v5584, %v5607
  %v5609 = vlaneseq
  %v5610 = vshrl.u32 %v5609, 7
  %v5611 = vsub.s32 5, %v5610
  %v5612 = vrot.slane %v5585, %v5611
  %v5613 = vlaneseq
  %v5614 = vshrl.u32 %v5613, 7
  %v5615 = vsub.s32 5, %v5614
  %v5616 = vrot.slane %v5586, %v5615
  %v5617 = vlaneseq
  %v5618 = vshrl.u32 %v5617, 7
  %v5619 = vsub.s32 5, %v5618
  %v5620 = vrot.slane %v5587, %v5619
  %v5621 = vlaneseq
  %v5622 = vshrl.u32 %v5621, 7
  %v5623 = vsub.s32 5, %v5622
  %v5624 = vrot.slane %v5588, %v5623
  %v5625 = vmul.f32 %v5592, %v3835
  %v5626 = vmul.f32 %v5592, %v3836
  %v5627 = vmul.f32 %v5596, %v3835
  %v5628 = vmul.f32 %v5596, %v3836
  %v5629 = vmul.f32 %v5600, %v3835
  %v5630 = vmul.f32 %v5600, %v3836
  %v5631 = vmul.f32 %v5604, %v3835
  %v5632 = vmul.f32 %v5604, %v3836
  %v5633 = vmul.f32 %v5608, %v3835
  %v5634 = vmul.f32 %v5608, %v3836
  %v5635 = vmul.f32 %v5612, %v3835
  %v5636 = vmul.f32 %v5612, %v3836
  %v5637 = vmul.f32 %v5616, %v3835
  %v5638 = vmul.f32 %v5616, %v3836
  %v5639 = vmul.f32 %v5620, %v3835
  %v5640 = vmul.f32 %v5620, %v3836
  %v5641 = vmul.f32 %v5624, %v3835
  %v5642 = vmul.f32 %v5624, %v3836
  %v5643 = vadd.f32 %v5544, %v5625
  %v5644 = vadd.f32 %v5545, %v5626
  %v5645 = vadd.f32 %v5546, %v5627
  %v5646 = vadd.f32 %v5547, %v5628
  %v5647 = vadd.f32 %v5548, %v5629
  %v5648 = vadd.f32 %v5549, %v5630
  %v5649 = vadd.f32 %v5550, %v5631
  %v5650 = vadd.f32 %v5551, %v5632
  %v5651 = vadd.f32 %v5552, %v5633
  %v5652 = vadd.f32 %v5553, %v5634
  %v5653 = vadd.f32 %v5554, %v5635
  %v5654 = vadd.f32 %v5555, %v5636
  %v5655 = vadd.f32 %v5556, %v5637
  %v5656 = vadd.f32 %v5557, %v5638
  %v5657 = vadd.f32 %v5558, %v5639
  %v5658 = vadd.f32 %v5559, %v5640
  %v5659 = vadd.f32 %v5560, %v5641
  %v5660 = vadd.f32 %v5561, %v5642
  %v5661 = vrot.slane %v5067, 2
  %v5662 = vrot.slane %v5068, 2
  %v5663 = vrot.slane %v5069, 2
  %v5664 = vrot.slane %v5070, 2
  %v5665 = vrot.slane %v5071, 2
  %v5666 = vrot.slane %v5072, 2
  %v5667 = vrot.slane %v5073, 2
  %v5668 = vrot.slane %v5074, 2
  %v5669 = vrot.slane %v5075, 2
  %v5679 = vmul.f32 %v4825, %v5661
  %v5680 = vmul.f32 %v4829, %v5662
  %v5681 = vmul.f32 %v4833, %v5663
  %v5682 = vmul.f32 %v4837, %v5664
  %v5683 = vmul.f32 %v4841, %v5665
  %v5684 = vmul.f32 %v4845, %v5666
  %v5685 = vmul.f32 %v4849, %v5667
  %v5686 = vmul.f32 %v4853, %v5668
  %v5687 = vmul.f32 %v4857, %v5669
  %v5688 = vlaneseq
  %v5689 = vshrl.u32 %v5688, 7
  %v5690 = vsub.s32 6, %v5689
  %v5691 = vrot.slane %v5679, %v5690
  %v5692 = vlaneseq
  %v5693 = vshrl.u32 %v5692, 7
  %v5694 = vsub.s32 6, %v5693
  %v5695 = vrot.slane %v5680, %v5694
  %v5696 = vlaneseq
  %v5697 = vshrl.u32 %v5696, 7
  %v5698 = vsub.s32 6, %v5697
  %v5699 = vrot.slane %v5681, %v5698
  %v5700 = vlaneseq
  %v5701 = vshrl.u32 %v5700, 7
  %v5702 = vsub.s32 6, %v5701
  %v5703 = vrot.slane %v5682, %v5702
  %v5704 = vlaneseq
  %v5705 = vshrl.u32 %v5704, 7
  %v5706 = vsub.s32 6, %v5705
  %v5707 = vrot.slane %v5683, %v5706
  %v5708 = vlaneseq
  %v5709 = vshrl.u32 %v5708, 7
  %v5710 = vsub.s32 6, %v5709
  %v5711 = vrot.slane %v5684, %v5710
  %v5712 = vlaneseq
  %v5713 = vshrl.u32 %v5712, 7
  %v5714 = vsub.s32 6, %v5713
  %v5715 = vrot.slane %v5685, %v5714
  %v5716 = vlaneseq
  %v5717 = vshrl.u32 %v5716, 7
  %v5718 = vsub.s32 6, %v5717
  %v5719 = vrot.slane %v5686, %v5718
  %v5720 = vlaneseq
  %v5721 = vshrl.u32 %v5720, 7
  %v5722 = vsub.s32 6, %v5721
  %v5723 = vrot.slane %v5687, %v5722
  %v5724 = vmul.f32 %v5691, %v3837
  %v5725 = vmul.f32 %v5691, %v3838
  %v5726 = vmul.f32 %v5695, %v3837
  %v5727 = vmul.f32 %v5695, %v3838
  %v5728 = vmul.f32 %v5699, %v3837
  %v5729 = vmul.f32 %v5699, %v3838
  %v5730 = vmul.f32 %v5703, %v3837
  %v5731 = vmul.f32 %v5703, %v3838
  %v5732 = vmul.f32 %v5707, %v3837
  %v5733 = vmul.f32 %v5707, %v3838
  %v5734 = vmul.f32 %v5711, %v3837
  %v5735 = vmul.f32 %v5711, %v3838
  %v5736 = vmul.f32 %v5715, %v3837
  %v5737 = vmul.f32 %v5715, %v3838
  %v5738 = vmul.f32 %v5719, %v3837
  %v5739 = vmul.f32 %v5719, %v3838
  %v5740 = vmul.f32 %v5723, %v3837
  %v5741 = vmul.f32 %v5723, %v3838
  %v5742 = vadd.f32 %v5643, %v5724
  %v5743 = vadd.f32 %v5644, %v5725
  %v5744 = vadd.f32 %v5645, %v5726
  %v5745 = vadd.f32 %v5646, %v5727
  %v5746 = vadd.f32 %v5647, %v5728
  %v5747 = vadd.f32 %v5648, %v5729
  %v5748 = vadd.f32 %v5649, %v5730
  %v5749 = vadd.f32 %v5650, %v5731
  %v5750 = vadd.f32 %v5651, %v5732
  %v5751 = vadd.f32 %v5652, %v5733
  %v5752 = vadd.f32 %v5653, %v5734
  %v5753 = vadd.f32 %v5654, %v5735
  %v5754 = vadd.f32 %v5655, %v5736
  %v5755 = vadd.f32 %v5656, %v5737
  %v5756 = vadd.f32 %v5657, %v5738
  %v5757 = vadd.f32 %v5658, %v5739
  %v5758 = vadd.f32 %v5659, %v5740
  %v5759 = vadd.f32 %v5660, %v5741
  %v5760 = vrot.slane %v5067, 1
  %v5761 = vrot.slane %v5068, 1
  %v5762 = vrot.slane %v5069, 1
  %v5763 = vrot.slane %v5070, 1
  %v5764 = vrot.slane %v5071, 1
  %v5765 = vrot.slane %v5072, 1
  %v5766 = vrot.slane %v5073, 1
  %v5767 = vrot.slane %v5074, 1
  %v5768 = vrot.slane %v5075, 1
  %v5778 = vmul.f32 %v4825, %v5760
  %v5779 = vmul.f32 %v4829, %v5761
  %v5780 = vmul.f32 %v4833, %v5762
  %v5781 = vmul.f32 %v4837, %v5763
  %v5782 = vmul.f32 %v4841, %v5764
  %v5783 = vmul.f32 %v4845, %v5765
  %v5784 = vmul.f32 %v4849, %v5766
  %v5785 = vmul.f32 %v4853, %v5767
  %v5786 = vmul.f32 %v4857, %v5768
  %v5787 = vlaneseq
  %v5788 = vshrl.u32 %v5787, 7
  %v5789 = vsub.s32 7, %v5788
  %v5790 = vrot.slane %v5778, %v5789
  %v5791 = vlaneseq
  %v5792 = vshrl.u32 %v5791, 7
  %v5793 = vsub.s32 7, %v5792
  %v5794 = vrot.slane %v5779, %v5793
  %v5795 = vlaneseq
  %v5796 = vshrl.u32 %v5795, 7
  %v5797 = vsub.s32 7, %v5796
  %v5798 = vrot.slane %v5780, %v5797
  %v5799 = vlaneseq
  %v5800 = vshrl.u32 %v5799, 7
  %v5801 = vsub.s32 7, %v5800
  %v5802 = vrot.slane %v5781, %v5801
  %v5803 = vlaneseq
  %v5804 = vshrl.u32 %v5803, 7
  %v5805 = vsub.s32 7, %v5804
  %v5806 = vrot.slane %v5782, %v5805
  %v5807 = vlaneseq
  %v5808 = vshrl.u32 %v5807, 7
  %v5809 = vsub.s32 7, %v5808
  %v5810 = vrot.slane %v5783, %v5809
  %v5811 = vlaneseq
  %v5812 = vshrl.u32 %v5811, 7
  %v5813 = vsub.s32 7, %v5812
  %v5814 = vrot.slane %v5784, %v5813
  %v5815 = vlaneseq
  %v5816 = vshrl.u32 %v5815, 7
  %v5817 = vsub.s32 7, %v5816
  %v5818 = vrot.slane %v5785, %v5817
  %v5819 = vlaneseq
  %v5820 = vshrl.u32 %v5819, 7
  %v5821 = vsub.s32 7, %v5820
  %v5822 = vrot.slane %v5786, %v5821
  %v5823 = vmul.f32 %v5790, %v3839
  %v5824 = vmul.f32 %v5790, %v3840
  %v5825 = vmul.f32 %v5794, %v3839
  %v5826 = vmul.f32 %v5794, %v3840
  %v5827 = vmul.f32 %v5798, %v3839
  %v5828 = vmul.f32 %v5798, %v3840
  %v5829 = vmul.f32 %v5802, %v3839
  %v5830 = vmul.f32 %v5802, %v3840
  %v5831 = vmul.f32 %v5806, %v3839
  %v5832 = vmul.f32 %v5806, %v3840
  %v5833 = vmul.f32 %v5810, %v3839
  %v5834 = vmul.f32 %v5810, %v3840
  %v5835 = vmul.f32 %v5814, %v3839
  %v5836 = vmul.f32 %v5814, %v3840
  %v5837 = vmul.f32 %v5818, %v3839
  %v5838 = vmul.f32 %v5818, %v3840
  %v5839 = vmul.f32 %v5822, %v3839
  %v5840 = vmul.f32 %v5822, %v3840
  %v5841 = vadd.f32 %v5742, %v5823
  %v5842 = vadd.f32 %v5743, %v5824
  %v5843 = vadd.f32 %v5744, %v5825
  %v5844 = vadd.f32 %v5745, %v5826
  %v5845 = vadd.f32 %v5746, %v5827
  %v5846 = vadd.f32 %v5747, %v5828
  %v5847 = vadd.f32 %v5748, %v5829
  %v5848 = vadd.f32 %v5749, %v5830
  %v5849 = vadd.f32 %v5750, %v5831
  %v5850 = vadd.f32 %v5751, %v5832
  %v5851 = vadd.f32 %v5752, %v5833
  %v5852 = vadd.f32 %v5753, %v5834
  %v5853 = vadd.f32 %v5754, %v5835
  %v5854 = vadd.f32 %v5755, %v5836
  %v5855 = vadd.f32 %v5756, %v5837
  %v5856 = vadd.f32 %v5757, %v5838
  %v5857 = vadd.f32 %v5758, %v5839
  %v5858 = vadd.f32 %v5759, %v5840
  %v5859 = vmul.f32 %v4827, %v5067
  %v5860 = vmul.f32 %v4831, %v5068
  %v5861 = vmul.f32 %v4835, %v5069
  %v5862 = vmul.f32 %v4839, %v5070
  %v5863 = vmul.f32 %v4843, %v5071
  %v5864 = vmul.f32 %v4847, %v5072
  %v5865 = vmul.f32 %v4851, %v5073
  %v5866 = vmul.f32 %v4855, %v5074
  %v5867 = vmul.f32 %v4859, %v5075
  %v5868 = vlaneseq
  %v5869 = vshrl.u32 %v5868, 7
  %v5870 = vsub.s32 0, %v5869
  %v5871 = vrot.slane %v5859, %v5870
  %v5872 = vlaneseq
  %v5873 = vshrl.u32 %v5872, 7
  %v5874 = vsub.s32 0, %v5873
  %v5875 = vrot.slane %v5860, %v5874
  %v5876 = vlaneseq
  %v5877 = vshrl.u32 %v5876, 7
  %v5878 = vsub.s32 0, %v5877
  %v5879 = vrot.slane %v5861, %v5878
  %v5880 = vlaneseq
  %v5881 = vshrl.u32 %v5880, 7
  %v5882 = vsub.s32 0, %v5881
  %v5883 = vrot.slane %v5862, %v5882
  %v5884 = vlaneseq
  %v5885 = vshrl.u32 %v5884, 7
  %v5886 = vsub.s32 0, %v5885
  %v5887 = vrot.slane %v5863, %v5886
  %v5888 = vlaneseq
  %v5889 = vshrl.u32 %v5888, 7
  %v5890 = vsub.s32 0, %v5889
  %v5891 = vrot.slane %v5864, %v5890
  %v5892 = vlaneseq
  %v5893 = vshrl.u32 %v5892, 7
  %v5894 = vsub.s32 0, %v5893
  %v5895 = vrot.slane %v5865, %v5894
  %v5896 = vlaneseq
  %v5897 = vshrl.u32 %v5896, 7
  %v5898 = vsub.s32 0, %v5897
  %v5899 = vrot.slane %v5866, %v5898
  %v5900 = vlaneseq
  %v5901 = vshrl.u32 %v5900, 7
  %v5902 = vsub.s32 0, %v5901
  %v5903 = vrot.slane %v5867, %v5902
  %v5904 = vmul.f32 %v5871, %v3841
  %v5905 = vmul.f32 %v5871, %v3842
  %v5906 = vmul.f32 %v5875, %v3841
  %v5907 = vmul.f32 %v5875, %v3842
  %v5908 = vmul.f32 %v5879, %v3841
  %v5909 = vmul.f32 %v5879, %v3842
  %v5910 = vmul.f32 %v5883, %v3841
  %v5911 = vmul.f32 %v5883, %v3842
  %v5912 = vmul.f32 %v5887, %v3841
  %v5913 = vmul.f32 %v5887, %v3842
  %v5914 = vmul.f32 %v5891, %v3841
  %v5915 = vmul.f32 %v5891, %v3842
  %v5916 = vmul.f32 %v5895, %v3841
  %v5917 = vmul.f32 %v5895, %v3842
  %v5918 = vmul.f32 %v5899, %v3841
  %v5919 = vmul.f32 %v5899, %v3842
  %v5920 = vmul.f32 %v5903, %v3841
  %v5921 = vmul.f32 %v5903, %v3842
  %v5922 = vadd.f32 %v5841, %v5904
  %v5923 = vadd.f32 %v5842, %v5905
  %v5924 = vadd.f32 %v5843, %v5906
  %v5925 = vadd.f32 %v5844, %v5907
  %v5926 = vadd.f32 %v5845, %v5908
  %v5927 = vadd.f32 %v5846, %v5909
  %v5928 = vadd.f32 %v5847, %v5910
  %v5929 = vadd.f32 %v5848, %v5911
  %v5930 = vadd.f32 %v5849, %v5912
  %v5931 = vadd.f32 %v5850, %v5913
  %v5932 = vadd.f32 %v5851, %v5914
  %v5933 = vadd.f32 %v5852, %v5915
  %v5934 = vadd.f32 %v5853, %v5916
  %v5935 = vadd.f32 %v5854, %v5917
  %v5936 = vadd.f32 %v5855, %v5918
  %v5937 = vadd.f32 %v5856, %v5919
  %v5938 = vadd.f32 %v5857, %v5920
  %v5939 = vadd.f32 %v5858, %v5921
  %v5940 = vld [vmem:[#allocation2 + $0x10] sm:$0xff]
  %v5941 = vld [vmem:[#allocation2 + $0x90] sm:$0xff]
  %v5942 = vld [vmem:[#allocation2 + $0x110] sm:$0xff]
  %v5943 = vld [vmem:[#allocation2 + $0x190] sm:$0xff]
  %v5944 = vld [vmem:[#allocation2 + $0x210] sm:$0xff]
  %v5945 = vld [vmem:[#allocation2 + $0x290] sm:$0xff]
  %v5946 = vld [vmem:[#allocation2 + $0x310] sm:$0xff]
  %v5947 = vld [vmem:[#allocation2 + $0x390] sm:$0xff]
  %v5948 = vld [vmem:[#allocation2 + $0x410] sm:$0xff]
  %v5949 = vld [vmem:[#allocation2 + $0x30] sm:$0xff]
  %v5950 = vld [vmem:[#allocation2 + $0xb0] sm:$0xff]
  %v5951 = vld [vmem:[#allocation2 + $0x130] sm:$0xff]
  %v5952 = vld [vmem:[#allocation2 + $0x1b0] sm:$0xff]
  %v5953 = vld [vmem:[#allocation2 + $0x230] sm:$0xff]
  %v5954 = vld [vmem:[#allocation2 + $0x2b0] sm:$0xff]
  %v5955 = vld [vmem:[#allocation2 + $0x330] sm:$0xff]
  %v5956 = vld [vmem:[#allocation2 + $0x3b0] sm:$0xff]
  %v5957 = vld [vmem:[#allocation2 + $0x430] sm:$0xff]
  %v5958 = vld [vmem:[#allocation2 + $0x60] sm:$0xff]
  %v5959 = vld [vmem:[#allocation2 + $0x68] sm:$0xff]
  %v5960 = vld [vmem:[#allocation2 + $0xe0] sm:$0xff]
  %v5961 = vld [vmem:[#allocation2 + $0xe8] sm:$0xff]
  %v5962 = vld [vmem:[#allocation2 + $0x160] sm:$0xff]
  %v5963 = vld [vmem:[#allocation2 + $0x168] sm:$0xff]
  %v5964 = vld [vmem:[#allocation2 + $0x1e0] sm:$0xff]
  %v5965 = vld [vmem:[#allocation2 + $0x1e8] sm:$0xff]
  %v5966 = vld [vmem:[#allocation2 + $0x260] sm:$0xff]
  %v5967 = vld [vmem:[#allocation2 + $0x268] sm:$0xff]
  %v5968 = vld [vmem:[#allocation2 + $0x2e0] sm:$0xff]
  %v5969 = vld [vmem:[#allocation2 + $0x2e8] sm:$0xff]
  %v5970 = vld [vmem:[#allocation2 + $0x360] sm:$0xff]
  %v5971 = vld [vmem:[#allocation2 + $0x368] sm:$0xff]
  %v5972 = vld [vmem:[#allocation2 + $0x3e0] sm:$0xff]
  %v5973 = vld [vmem:[#allocation2 + $0x3e8] sm:$0xff]
  %v5974 = vld [vmem:[#allocation2 + $0x460] sm:$0xff]
  %v5975 = vld [vmem:[#allocation2 + $0x468] sm:$0xff]
  %v5976 = vlaneseq
  %v5977 = vshrl.u32 %v5976, 7
  %v5978 = vsub.s32 0, %v5977
  %v5979 = vrot.slane %v5940, %v5978
  %v5980 = vlaneseq
  %v5981 = vshrl.u32 %v5980, 7
  %v5982 = vsub.s32 0, %v5981
  %v5983 = vrot.slane %v5941, %v5982
  %v5984 = vlaneseq
  %v5985 = vshrl.u32 %v5984, 7
  %v5986 = vsub.s32 0, %v5985
  %v5987 = vrot.slane %v5942, %v5986
  %v5988 = vlaneseq
  %v5989 = vshrl.u32 %v5988, 7
  %v5990 = vsub.s32 0, %v5989
  %v5991 = vrot.slane %v5943, %v5990
  %v5992 = vlaneseq
  %v5993 = vshrl.u32 %v5992, 7
  %v5994 = vsub.s32 0, %v5993
  %v5995 = vrot.slane %v5944, %v5994
  %v5996 = vlaneseq
  %v5997 = vshrl.u32 %v5996, 7
  %v5998 = vsub.s32 0, %v5997
  %v5999 = vrot.slane %v5945, %v5998
  %v6000 = vlaneseq
  %v6001 = vshrl.u32 %v6000, 7
  %v6002 = vsub.s32 0, %v6001
  %v6003 = vrot.slane %v5946, %v6002
  %v6004 = vlaneseq
  %v6005 = vshrl.u32 %v6004, 7
  %v6006 = vsub.s32 0, %v6005
  %v6007 = vrot.slane %v5947, %v6006
  %v6008 = vlaneseq
  %v6009 = vshrl.u32 %v6008, 7
  %v6010 = vsub.s32 0, %v6009
  %v6011 = vrot.slane %v5948, %v6010
  %v6021 = vrot.slane %v5950, 7
  %v6022 = vsel %vm1767, %v6021, %v5949
  %v6023 = vrot.slane %v5951, 6
  %v6024 = vsel %vm1770, %v6023, %v6022
  %v6025 = vrot.slane %v5952, 5
  %v6026 = vsel %vm1773, %v6025, %v6024
  %v6027 = vrot.slane %v5953, 4
  %v6028 = vsel %vm1776, %v6027, %v6026
  %v6029 = vrot.slane %v5954, 3
  %v6030 = vsel %vm1779, %v6029, %v6028
  %v6031 = vrot.slane %v5955, 2
  %v6032 = vsel %vm1782, %v6031, %v6030
  %v6033 = vrot.slane %v5956, 1
  %v6034 = vsel %vm1785, %v6033, %v6032
  %v6037 = vmul.f32 %v5979, %v6034
  %v6038 = vmul.f32 %v5979, %v5957
  %v6039 = vmul.f32 %v5983, %v6034
  %v6040 = vmul.f32 %v5983, %v5957
  %v6041 = vmul.f32 %v5987, %v6034
  %v6042 = vmul.f32 %v5987, %v5957
  %v6043 = vmul.f32 %v5991, %v6034
  %v6044 = vmul.f32 %v5991, %v5957
  %v6045 = vmul.f32 %v5995, %v6034
  %v6046 = vmul.f32 %v5995, %v5957
  %v6047 = vmul.f32 %v5999, %v6034
  %v6048 = vmul.f32 %v5999, %v5957
  %v6049 = vmul.f32 %v6003, %v6034
  %v6050 = vmul.f32 %v6003, %v5957
  %v6051 = vmul.f32 %v6007, %v6034
  %v6052 = vmul.f32 %v6007, %v5957
  %v6053 = vmul.f32 %v6011, %v6034
  %v6054 = vmul.f32 %v6011, %v5957
  %v6055 = vlaneseq
  %v6056 = vshrl.u32 %v6055, 7
  %v6057 = vsub.s32 1, %v6056
  %v6058 = vrot.slane %v5940, %v6057
  %v6059 = vlaneseq
  %v6060 = vshrl.u32 %v6059, 7
  %v6061 = vsub.s32 1, %v6060
  %v6062 = vrot.slane %v5941, %v6061
  %v6063 = vlaneseq
  %v6064 = vshrl.u32 %v6063, 7
  %v6065 = vsub.s32 1, %v6064
  %v6066 = vrot.slane %v5942, %v6065
  %v6067 = vlaneseq
  %v6068 = vshrl.u32 %v6067, 7
  %v6069 = vsub.s32 1, %v6068
  %v6070 = vrot.slane %v5943, %v6069
  %v6071 = vlaneseq
  %v6072 = vshrl.u32 %v6071, 7
  %v6073 = vsub.s32 1, %v6072
  %v6074 = vrot.slane %v5944, %v6073
  %v6075 = vlaneseq
  %v6076 = vshrl.u32 %v6075, 7
  %v6077 = vsub.s32 1, %v6076
  %v6078 = vrot.slane %v5945, %v6077
  %v6079 = vlaneseq
  %v6080 = vshrl.u32 %v6079, 7
  %v6081 = vsub.s32 1, %v6080
  %v6082 = vrot.slane %v5946, %v6081
  %v6083 = vlaneseq
  %v6084 = vshrl.u32 %v6083, 7
  %v6085 = vsub.s32 1, %v6084
  %v6086 = vrot.slane %v5947, %v6085
  %v6087 = vlaneseq
  %v6088 = vshrl.u32 %v6087, 7
  %v6089 = vsub.s32 1, %v6088
  %v6090 = vrot.slane %v5948, %v6089
  %v6091 = vrot.slane %v5949, 1
  %v6092 = vsel %vm1767, %v5950, %v6091
  %v6093 = vrot.slane %v5951, 7
  %v6094 = vsel %vm1770, %v6093, %v6092
  %v6095 = vrot.slane %v5952, 6
  %v6096 = vsel %vm1773, %v6095, %v6094
  %v6097 = vrot.slane %v5953, 5
  %v6098 = vsel %vm1776, %v6097, %v6096
  %v6099 = vrot.slane %v5954, 4
  %v6100 = vsel %vm1779, %v6099, %v6098
  %v6101 = vrot.slane %v5955, 3
  %v6102 = vsel %vm1782, %v6101, %v6100
  %v6103 = vrot.slane %v5956, 2
  %v6104 = vsel %vm1785, %v6103, %v6102
  %v6105 = vrot.slane %v5957, 1
  %v6108 = vmul.f32 %v6058, %v6104
  %v6109 = vmul.f32 %v6058, %v6105
  %v6110 = vmul.f32 %v6062, %v6104
  %v6111 = vmul.f32 %v6062, %v6105
  %v6112 = vmul.f32 %v6066, %v6104
  %v6113 = vmul.f32 %v6066, %v6105
  %v6114 = vmul.f32 %v6070, %v6104
  %v6115 = vmul.f32 %v6070, %v6105
  %v6116 = vmul.f32 %v6074, %v6104
  %v6117 = vmul.f32 %v6074, %v6105
  %v6118 = vmul.f32 %v6078, %v6104
  %v6119 = vmul.f32 %v6078, %v6105
  %v6120 = vmul.f32 %v6082, %v6104
  %v6121 = vmul.f32 %v6082, %v6105
  %v6122 = vmul.f32 %v6086, %v6104
  %v6123 = vmul.f32 %v6086, %v6105
  %v6124 = vmul.f32 %v6090, %v6104
  %v6125 = vmul.f32 %v6090, %v6105
  %v6126 = vadd.f32 %v6037, %v6108
  %v6127 = vadd.f32 %v6038, %v6109
  %v6128 = vadd.f32 %v6039, %v6110
  %v6129 = vadd.f32 %v6040, %v6111
  %v6130 = vadd.f32 %v6041, %v6112
  %v6131 = vadd.f32 %v6042, %v6113
  %v6132 = vadd.f32 %v6043, %v6114
  %v6133 = vadd.f32 %v6044, %v6115
  %v6134 = vadd.f32 %v6045, %v6116
  %v6135 = vadd.f32 %v6046, %v6117
  %v6136 = vadd.f32 %v6047, %v6118
  %v6137 = vadd.f32 %v6048, %v6119
  %v6138 = vadd.f32 %v6049, %v6120
  %v6139 = vadd.f32 %v6050, %v6121
  %v6140 = vadd.f32 %v6051, %v6122
  %v6141 = vadd.f32 %v6052, %v6123
  %v6142 = vadd.f32 %v6053, %v6124
  %v6143 = vadd.f32 %v6054, %v6125
  %v6144 = vlaneseq
  %v6145 = vshrl.u32 %v6144, 7
  %v6146 = vsub.s32 2, %v6145
  %v6147 = vrot.slane %v5940, %v6146
  %v6148 = vlaneseq
  %v6149 = vshrl.u32 %v6148, 7
  %v6150 = vsub.s32 2, %v6149
  %v6151 = vrot.slane %v5941, %v6150
  %v6152 = vlaneseq
  %v6153 = vshrl.u32 %v6152, 7
  %v6154 = vsub.s32 2, %v6153
  %v6155 = vrot.slane %v5942, %v6154
  %v6156 = vlaneseq
  %v6157 = vshrl.u32 %v6156, 7
  %v6158 = vsub.s32 2, %v6157
  %v6159 = vrot.slane %v5943, %v6158
  %v6160 = vlaneseq
  %v6161 = vshrl.u32 %v6160, 7
  %v6162 = vsub.s32 2, %v6161
  %v6163 = vrot.slane %v5944, %v6162
  %v6164 = vlaneseq
  %v6165 = vshrl.u32 %v6164, 7
  %v6166 = vsub.s32 2, %v6165
  %v6167 = vrot.slane %v5945, %v6166
  %v6168 = vlaneseq
  %v6169 = vshrl.u32 %v6168, 7
  %v6170 = vsub.s32 2, %v6169
  %v6171 = vrot.slane %v5946, %v6170
  %v6172 = vlaneseq
  %v6173 = vshrl.u32 %v6172, 7
  %v6174 = vsub.s32 2, %v6173
  %v6175 = vrot.slane %v5947, %v6174
  %v6176 = vlaneseq
  %v6177 = vshrl.u32 %v6176, 7
  %v6178 = vsub.s32 2, %v6177
  %v6179 = vrot.slane %v5948, %v6178
  %v6180 = vrot.slane %v5949, 2
  %v6181 = vrot.slane %v5950, 1
  %v6182 = vsel %vm1767, %v6181, %v6180
  %v6183 = vsel %vm1770, %v5951, %v6182
  %v6184 = vrot.slane %v5952, 7
  %v6185 = vsel %vm1773, %v6184, %v6183
  %v6186 = vrot.slane %v5953, 6
  %v6187 = vsel %vm1776, %v6186, %v6185
  %v6188 = vrot.slane %v5954, 5
  %v6189 = vsel %vm1779, %v6188, %v6187
  %v6190 = vrot.slane %v5955, 4
  %v6191 = vsel %vm1782, %v6190, %v6189
  %v6192 = vrot.slane %v5956, 3
  %v6193 = vsel %vm1785, %v6192, %v6191
  %v6194 = vrot.slane %v5957, 2
  %v6197 = vmul.f32 %v6147, %v6193
  %v6198 = vmul.f32 %v6147, %v6194
  %v6199 = vmul.f32 %v6151, %v6193
  %v6200 = vmul.f32 %v6151, %v6194
  %v6201 = vmul.f32 %v6155, %v6193
  %v6202 = vmul.f32 %v6155, %v6194
  %v6203 = vmul.f32 %v6159, %v6193
  %v6204 = vmul.f32 %v6159, %v6194
  %v6205 = vmul.f32 %v6163, %v6193
  %v6206 = vmul.f32 %v6163, %v6194
  %v6207 = vmul.f32 %v6167, %v6193
  %v6208 = vmul.f32 %v6167, %v6194
  %v6209 = vmul.f32 %v6171, %v6193
  %v6210 = vmul.f32 %v6171, %v6194
  %v6211 = vmul.f32 %v6175, %v6193
  %v6212 = vmul.f32 %v6175, %v6194
  %v6213 = vmul.f32 %v6179, %v6193
  %v6214 = vmul.f32 %v6179, %v6194
  %v6215 = vadd.f32 %v6126, %v6197
  %v6216 = vadd.f32 %v6127, %v6198
  %v6217 = vadd.f32 %v6128, %v6199
  %v6218 = vadd.f32 %v6129, %v6200
  %v6219 = vadd.f32 %v6130, %v6201
  %v6220 = vadd.f32 %v6131, %v6202
  %v6221 = vadd.f32 %v6132, %v6203
  %v6222 = vadd.f32 %v6133, %v6204
  %v6223 = vadd.f32 %v6134, %v6205
  %v6224 = vadd.f32 %v6135, %v6206
  %v6225 = vadd.f32 %v6136, %v6207
  %v6226 = vadd.f32 %v6137, %v6208
  %v6227 = vadd.f32 %v6138, %v6209
  %v6228 = vadd.f32 %v6139, %v6210
  %v6229 = vadd.f32 %v6140, %v6211
  %v6230 = vadd.f32 %v6141, %v6212
  %v6231 = vadd.f32 %v6142, %v6213
  %v6232 = vadd.f32 %v6143, %v6214
  %v6233 = vlaneseq
  %v6234 = vshrl.u32 %v6233, 7
  %v6235 = vsub.s32 3, %v6234
  %v6236 = vrot.slane %v5940, %v6235
  %v6237 = vlaneseq
  %v6238 = vshrl.u32 %v6237, 7
  %v6239 = vsub.s32 3, %v6238
  %v6240 = vrot.slane %v5941, %v6239
  %v6241 = vlaneseq
  %v6242 = vshrl.u32 %v6241, 7
  %v6243 = vsub.s32 3, %v6242
  %v6244 = vrot.slane %v5942, %v6243
  %v6245 = vlaneseq
  %v6246 = vshrl.u32 %v6245, 7
  %v6247 = vsub.s32 3, %v6246
  %v6248 = vrot.slane %v5943, %v6247
  %v6249 = vlaneseq
  %v6250 = vshrl.u32 %v6249, 7
  %v6251 = vsub.s32 3, %v6250
  %v6252 = vrot.slane %v5944, %v6251
  %v6253 = vlaneseq
  %v6254 = vshrl.u32 %v6253, 7
  %v6255 = vsub.s32 3, %v6254
  %v6256 = vrot.slane %v5945, %v6255
  %v6257 = vlaneseq
  %v6258 = vshrl.u32 %v6257, 7
  %v6259 = vsub.s32 3, %v6258
  %v6260 = vrot.slane %v5946, %v6259
  %v6261 = vlaneseq
  %v6262 = vshrl.u32 %v6261, 7
  %v6263 = vsub.s32 3, %v6262
  %v6264 = vrot.slane %v5947, %v6263
  %v6265 = vlaneseq
  %v6266 = vshrl.u32 %v6265, 7
  %v6267 = vsub.s32 3, %v6266
  %v6268 = vrot.slane %v5948, %v6267
  %v6269 = vrot.slane %v5949, 3
  %v6270 = vrot.slane %v5950, 2
  %v6271 = vsel %vm1767, %v6270, %v6269
  %v6272 = vrot.slane %v5951, 1
  %v6273 = vsel %vm1770, %v6272, %v6271
  %v6274 = vsel %vm1773, %v5952, %v6273
  %v6275 = vrot.slane %v5953, 7
  %v6276 = vsel %vm1776, %v6275, %v6274
  %v6277 = vrot.slane %v5954, 6
  %v6278 = vsel %vm1779, %v6277, %v6276
  %v6279 = vrot.slane %v5955, 5
  %v6280 = vsel %vm1782, %v6279, %v6278
  %v6281 = vrot.slane %v5956, 4
  %v6282 = vsel %vm1785, %v6281, %v6280
  %v6283 = vrot.slane %v5957, 3
  %v6286 = vmul.f32 %v6236, %v6282
  %v6287 = vmul.f32 %v6236, %v6283
  %v6288 = vmul.f32 %v6240, %v6282
  %v6289 = vmul.f32 %v6240, %v6283
  %v6290 = vmul.f32 %v6244, %v6282
  %v6291 = vmul.f32 %v6244, %v6283
  %v6292 = vmul.f32 %v6248, %v6282
  %v6293 = vmul.f32 %v6248, %v6283
  %v6294 = vmul.f32 %v6252, %v6282
  %v6295 = vmul.f32 %v6252, %v6283
  %v6296 = vmul.f32 %v6256, %v6282
  %v6297 = vmul.f32 %v6256, %v6283
  %v6298 = vmul.f32 %v6260, %v6282
  %v6299 = vmul.f32 %v6260, %v6283
  %v6300 = vmul.f32 %v6264, %v6282
  %v6301 = vmul.f32 %v6264, %v6283
  %v6302 = vmul.f32 %v6268, %v6282
  %v6303 = vmul.f32 %v6268, %v6283
  %v6304 = vadd.f32 %v6215, %v6286
  %v6305 = vadd.f32 %v6216, %v6287
  %v6306 = vadd.f32 %v6217, %v6288
  %v6307 = vadd.f32 %v6218, %v6289
  %v6308 = vadd.f32 %v6219, %v6290
  %v6309 = vadd.f32 %v6220, %v6291
  %v6310 = vadd.f32 %v6221, %v6292
  %v6311 = vadd.f32 %v6222, %v6293
  %v6312 = vadd.f32 %v6223, %v6294
  %v6313 = vadd.f32 %v6224, %v6295
  %v6314 = vadd.f32 %v6225, %v6296
  %v6315 = vadd.f32 %v6226, %v6297
  %v6316 = vadd.f32 %v6227, %v6298
  %v6317 = vadd.f32 %v6228, %v6299
  %v6318 = vadd.f32 %v6229, %v6300
  %v6319 = vadd.f32 %v6230, %v6301
  %v6320 = vadd.f32 %v6231, %v6302
  %v6321 = vadd.f32 %v6232, %v6303
  %v6322 = vlaneseq
  %v6323 = vshrl.u32 %v6322, 7
  %v6324 = vsub.s32 4, %v6323
  %v6325 = vrot.slane %v5940, %v6324
  %v6326 = vlaneseq
  %v6327 = vshrl.u32 %v6326, 7
  %v6328 = vsub.s32 4, %v6327
  %v6329 = vrot.slane %v5941, %v6328
  %v6330 = vlaneseq
  %v6331 = vshrl.u32 %v6330, 7
  %v6332 = vsub.s32 4, %v6331
  %v6333 = vrot.slane %v5942, %v6332
  %v6334 = vlaneseq
  %v6335 = vshrl.u32 %v6334, 7
  %v6336 = vsub.s32 4, %v6335
  %v6337 = vrot.slane %v5943, %v6336
  %v6338 = vlaneseq
  %v6339 = vshrl.u32 %v6338, 7
  %v6340 = vsub.s32 4, %v6339
  %v6341 = vrot.slane %v5944, %v6340
  %v6342 = vlaneseq
  %v6343 = vshrl.u32 %v6342, 7
  %v6344 = vsub.s32 4, %v6343
  %v6345 = vrot.slane %v5945, %v6344
  %v6346 = vlaneseq
  %v6347 = vshrl.u32 %v6346, 7
  %v6348 = vsub.s32 4, %v6347
  %v6349 = vrot.slane %v5946, %v6348
  %v6350 = vlaneseq
  %v6351 = vshrl.u32 %v6350, 7
  %v6352 = vsub.s32 4, %v6351
  %v6353 = vrot.slane %v5947, %v6352
  %v6354 = vlaneseq
  %v6355 = vshrl.u32 %v6354, 7
  %v6356 = vsub.s32 4, %v6355
  %v6357 = vrot.slane %v5948, %v6356
  %v6358 = vrot.slane %v5949, 4
  %v6359 = vrot.slane %v5950, 3
  %v6360 = vsel %vm1767, %v6359, %v6358
  %v6361 = vrot.slane %v5951, 2
  %v6362 = vsel %vm1770, %v6361, %v6360
  %v6363 = vrot.slane %v5952, 1
  %v6364 = vsel %vm1773, %v6363, %v6362
  %v6365 = vsel %vm1776, %v5953, %v6364
  %v6366 = vrot.slane %v5954, 7
  %v6367 = vsel %vm1779, %v6366, %v6365
  %v6368 = vrot.slane %v5955, 6
  %v6369 = vsel %vm1782, %v6368, %v6367
  %v6370 = vrot.slane %v5956, 5
  %v6371 = vsel %vm1785, %v6370, %v6369
  %v6372 = vrot.slane %v5957, 4
  %v6375 = vmul.f32 %v6325, %v6371
  %v6376 = vmul.f32 %v6325, %v6372
  %v6377 = vmul.f32 %v6329, %v6371
  %v6378 = vmul.f32 %v6329, %v6372
  %v6379 = vmul.f32 %v6333, %v6371
  %v6380 = vmul.f32 %v6333, %v6372
  %v6381 = vmul.f32 %v6337, %v6371
  %v6382 = vmul.f32 %v6337, %v6372
  %v6383 = vmul.f32 %v6341, %v6371
  %v6384 = vmul.f32 %v6341, %v6372
  %v6385 = vmul.f32 %v6345, %v6371
  %v6386 = vmul.f32 %v6345, %v6372
  %v6387 = vmul.f32 %v6349, %v6371
  %v6388 = vmul.f32 %v6349, %v6372
  %v6389 = vmul.f32 %v6353, %v6371
  %v6390 = vmul.f32 %v6353, %v6372
  %v6391 = vmul.f32 %v6357, %v6371
  %v6392 = vmul.f32 %v6357, %v6372
  %v6393 = vadd.f32 %v6304, %v6375
  %v6394 = vadd.f32 %v6305, %v6376
  %v6395 = vadd.f32 %v6306, %v6377
  %v6396 = vadd.f32 %v6307, %v6378
  %v6397 = vadd.f32 %v6308, %v6379
  %v6398 = vadd.f32 %v6309, %v6380
  %v6399 = vadd.f32 %v6310, %v6381
  %v6400 = vadd.f32 %v6311, %v6382
  %v6401 = vadd.f32 %v6312, %v6383
  %v6402 = vadd.f32 %v6313, %v6384
  %v6403 = vadd.f32 %v6314, %v6385
  %v6404 = vadd.f32 %v6315, %v6386
  %v6405 = vadd.f32 %v6316, %v6387
  %v6406 = vadd.f32 %v6317, %v6388
  %v6407 = vadd.f32 %v6318, %v6389
  %v6408 = vadd.f32 %v6319, %v6390
  %v6409 = vadd.f32 %v6320, %v6391
  %v6410 = vadd.f32 %v6321, %v6392
  %v6411 = vlaneseq
  %v6412 = vshrl.u32 %v6411, 7
  %v6413 = vsub.s32 5, %v6412
  %v6414 = vrot.slane %v5940, %v6413
  %v6415 = vlaneseq
  %v6416 = vshrl.u32 %v6415, 7
  %v6417 = vsub.s32 5, %v6416
  %v6418 = vrot.slane %v5941, %v6417
  %v6419 = vlaneseq
  %v6420 = vshrl.u32 %v6419, 7
  %v6421 = vsub.s32 5, %v6420
  %v6422 = vrot.slane %v5942, %v6421
  %v6423 = vlaneseq
  %v6424 = vshrl.u32 %v6423, 7
  %v6425 = vsub.s32 5, %v6424
  %v6426 = vrot.slane %v5943, %v6425
  %v6427 = vlaneseq
  %v6428 = vshrl.u32 %v6427, 7
  %v6429 = vsub.s32 5, %v6428
  %v6430 = vrot.slane %v5944, %v6429
  %v6431 = vlaneseq
  %v6432 = vshrl.u32 %v6431, 7
  %v6433 = vsub.s32 5, %v6432
  %v6434 = vrot.slane %v5945, %v6433
  %v6435 = vlaneseq
  %v6436 = vshrl.u32 %v6435, 7
  %v6437 = vsub.s32 5, %v6436
  %v6438 = vrot.slane %v5946, %v6437
  %v6439 = vlaneseq
  %v6440 = vshrl.u32 %v6439, 7
  %v6441 = vsub.s32 5, %v6440
  %v6442 = vrot.slane %v5947, %v6441
  %v6443 = vlaneseq
  %v6444 = vshrl.u32 %v6443, 7
  %v6445 = vsub.s32 5, %v6444
  %v6446 = vrot.slane %v5948, %v6445
  %v6447 = vrot.slane %v5949, 5
  %v6448 = vrot.slane %v5950, 4
  %v6449 = vsel %vm1767, %v6448, %v6447
  %v6450 = vrot.slane %v5951, 3
  %v6451 = vsel %vm1770, %v6450, %v6449
  %v6452 = vrot.slane %v5952, 2
  %v6453 = vsel %vm1773, %v6452, %v6451
  %v6454 = vrot.slane %v5953, 1
  %v6455 = vsel %vm1776, %v6454, %v6453
  %v6456 = vsel %vm1779, %v5954, %v6455
  %v6457 = vrot.slane %v5955, 7
  %v6458 = vsel %vm1782, %v6457, %v6456
  %v6459 = vrot.slane %v5956, 6
  %v6460 = vsel %vm1785, %v6459, %v6458
  %v6461 = vrot.slane %v5957, 5
  %v6464 = vmul.f32 %v6414, %v6460
  %v6465 = vmul.f32 %v6414, %v6461
  %v6466 = vmul.f32 %v6418, %v6460
  %v6467 = vmul.f32 %v6418, %v6461
  %v6468 = vmul.f32 %v6422, %v6460
  %v6469 = vmul.f32 %v6422, %v6461
  %v6470 = vmul.f32 %v6426, %v6460
  %v6471 = vmul.f32 %v6426, %v6461
  %v6472 = vmul.f32 %v6430, %v6460
  %v6473 = vmul.f32 %v6430, %v6461
  %v6474 = vmul.f32 %v6434, %v6460
  %v6475 = vmul.f32 %v6434, %v6461
  %v6476 = vmul.f32 %v6438, %v6460
  %v6477 = vmul.f32 %v6438, %v6461
  %v6478 = vmul.f32 %v6442, %v6460
  %v6479 = vmul.f32 %v6442, %v6461
  %v6480 = vmul.f32 %v6446, %v6460
  %v6481 = vmul.f32 %v6446, %v6461
  %v6482 = vadd.f32 %v6393, %v6464
  %v6483 = vadd.f32 %v6394, %v6465
  %v6484 = vadd.f32 %v6395, %v6466
  %v6485 = vadd.f32 %v6396, %v6467
  %v6486 = vadd.f32 %v6397, %v6468
  %v6487 = vadd.f32 %v6398, %v6469
  %v6488 = vadd.f32 %v6399, %v6470
  %v6489 = vadd.f32 %v6400, %v6471
  %v6490 = vadd.f32 %v6401, %v6472
  %v6491 = vadd.f32 %v6402, %v6473
  %v6492 = vadd.f32 %v6403, %v6474
  %v6493 = vadd.f32 %v6404, %v6475
  %v6494 = vadd.f32 %v6405, %v6476
  %v6495 = vadd.f32 %v6406, %v6477
  %v6496 = vadd.f32 %v6407, %v6478
  %v6497 = vadd.f32 %v6408, %v6479
  %v6498 = vadd.f32 %v6409, %v6480
  %v6499 = vadd.f32 %v6410, %v6481
  %v6500 = vlaneseq
  %v6501 = vshrl.u32 %v6500, 7
  %v6502 = vsub.s32 6, %v6501
  %v6503 = vrot.slane %v5940, %v6502
  %v6504 = vlaneseq
  %v6505 = vshrl.u32 %v6504, 7
  %v6506 = vsub.s32 6, %v6505
  %v6507 = vrot.slane %v5941, %v6506
  %v6508 = vlaneseq
  %v6509 = vshrl.u32 %v6508, 7
  %v6510 = vsub.s32 6, %v6509
  %v6511 = vrot.slane %v5942, %v6510
  %v6512 = vlaneseq
  %v6513 = vshrl.u32 %v6512, 7
  %v6514 = vsub.s32 6, %v6513
  %v6515 = vrot.slane %v5943, %v6514
  %v6516 = vlaneseq
  %v6517 = vshrl.u32 %v6516, 7
  %v6518 = vsub.s32 6, %v6517
  %v6519 = vrot.slane %v5944, %v6518
  %v6520 = vlaneseq
  %v6521 = vshrl.u32 %v6520, 7
  %v6522 = vsub.s32 6, %v6521
  %v6523 = vrot.slane %v5945, %v6522
  %v6524 = vlaneseq
  %v6525 = vshrl.u32 %v6524, 7
  %v6526 = vsub.s32 6, %v6525
  %v6527 = vrot.slane %v5946, %v6526
  %v6528 = vlaneseq
  %v6529 = vshrl.u32 %v6528, 7
  %v6530 = vsub.s32 6, %v6529
  %v6531 = vrot.slane %v5947, %v6530
  %v6532 = vlaneseq
  %v6533 = vshrl.u32 %v6532, 7
  %v6534 = vsub.s32 6, %v6533
  %v6535 = vrot.slane %v5948, %v6534
  %v6536 = vrot.slane %v5949, 6
  %v6537 = vrot.slane %v5950, 5
  %v6538 = vsel %vm1767, %v6537, %v6536
  %v6539 = vrot.slane %v5951, 4
  %v6540 = vsel %vm1770, %v6539, %v6538
  %v6541 = vrot.slane %v5952, 3
  %v6542 = vsel %vm1773, %v6541, %v6540
  %v6543 = vrot.slane %v5953, 2
  %v6544 = vsel %vm1776, %v6543, %v6542
  %v6545 = vrot.slane %v5954, 1
  %v6546 = vsel %vm1779, %v6545, %v6544
  %v6547 = vsel %vm1782, %v5955, %v6546
  %v6548 = vrot.slane %v5956, 7
  %v6549 = vsel %vm1785, %v6548, %v6547
  %v6550 = vrot.slane %v5957, 6
  %v6553 = vmul.f32 %v6503, %v6549
  %v6554 = vmul.f32 %v6503, %v6550
  %v6555 = vmul.f32 %v6507, %v6549
  %v6556 = vmul.f32 %v6507, %v6550
  %v6557 = vmul.f32 %v6511, %v6549
  %v6558 = vmul.f32 %v6511, %v6550
  %v6559 = vmul.f32 %v6515, %v6549
  %v6560 = vmul.f32 %v6515, %v6550
  %v6561 = vmul.f32 %v6519, %v6549
  %v6562 = vmul.f32 %v6519, %v6550
  %v6563 = vmul.f32 %v6523, %v6549
  %v6564 = vmul.f32 %v6523, %v6550
  %v6565 = vmul.f32 %v6527, %v6549
  %v6566 = vmul.f32 %v6527, %v6550
  %v6567 = vmul.f32 %v6531, %v6549
  %v6568 = vmul.f32 %v6531, %v6550
  %v6569 = vmul.f32 %v6535, %v6549
  %v6570 = vmul.f32 %v6535, %v6550
  %v6571 = vadd.f32 %v6482, %v6553
  %v6572 = vadd.f32 %v6483, %v6554
  %v6573 = vadd.f32 %v6484, %v6555
  %v6574 = vadd.f32 %v6485, %v6556
  %v6575 = vadd.f32 %v6486, %v6557
  %v6576 = vadd.f32 %v6487, %v6558
  %v6577 = vadd.f32 %v6488, %v6559
  %v6578 = vadd.f32 %v6489, %v6560
  %v6579 = vadd.f32 %v6490, %v6561
  %v6580 = vadd.f32 %v6491, %v6562
  %v6581 = vadd.f32 %v6492, %v6563
  %v6582 = vadd.f32 %v6493, %v6564
  %v6583 = vadd.f32 %v6494, %v6565
  %v6584 = vadd.f32 %v6495, %v6566
  %v6585 = vadd.f32 %v6496, %v6567
  %v6586 = vadd.f32 %v6497, %v6568
  %v6587 = vadd.f32 %v6498, %v6569
  %v6588 = vadd.f32 %v6499, %v6570
  %v6589 = vlaneseq
  %v6590 = vshrl.u32 %v6589, 7
  %v6591 = vsub.s32 7, %v6590
  %v6592 = vrot.slane %v5940, %v6591
  %v6593 = vlaneseq
  %v6594 = vshrl.u32 %v6593, 7
  %v6595 = vsub.s32 7, %v6594
  %v6596 = vrot.slane %v5941, %v6595
  %v6597 = vlaneseq
  %v6598 = vshrl.u32 %v6597, 7
  %v6599 = vsub.s32 7, %v6598
  %v6600 = vrot.slane %v5942, %v6599
  %v6601 = vlaneseq
  %v6602 = vshrl.u32 %v6601, 7
  %v6603 = vsub.s32 7, %v6602
  %v6604 = vrot.slane %v5943, %v6603
  %v6605 = vlaneseq
  %v6606 = vshrl.u32 %v6605, 7
  %v6607 = vsub.s32 7, %v6606
  %v6608 = vrot.slane %v5944, %v6607
  %v6609 = vlaneseq
  %v6610 = vshrl.u32 %v6609, 7
  %v6611 = vsub.s32 7, %v6610
  %v6612 = vrot.slane %v5945, %v6611
  %v6613 = vlaneseq
  %v6614 = vshrl.u32 %v6613, 7
  %v6615 = vsub.s32 7, %v6614
  %v6616 = vrot.slane %v5946, %v6615
  %v6617 = vlaneseq
  %v6618 = vshrl.u32 %v6617, 7
  %v6619 = vsub.s32 7, %v6618
  %v6620 = vrot.slane %v5947, %v6619
  %v6621 = vlaneseq
  %v6622 = vshrl.u32 %v6621, 7
  %v6623 = vsub.s32 7, %v6622
  %v6624 = vrot.slane %v5948, %v6623
  %v6625 = vrot.slane %v5949, 7
  %v6626 = vrot.slane %v5950, 6
  %v6627 = vsel %vm1767, %v6626, %v6625
  %v6628 = vrot.slane %v5951, 5
  %v6629 = vsel %vm1770, %v6628, %v6627
  %v6630 = vrot.slane %v5952, 4
  %v6631 = vsel %vm1773, %v6630, %v6629
  %v6632 = vrot.slane %v5953, 3
  %v6633 = vsel %vm1776, %v6632, %v6631
  %v6634 = vrot.slane %v5954, 2
  %v6635 = vsel %vm1779, %v6634, %v6633
  %v6636 = vrot.slane %v5955, 1
  %v6637 = vsel %vm1782, %v6636, %v6635
  %v6638 = vsel %vm1785, %v5956, %v6637
  %v6639 = vrot.slane %v5957, 7
  %v6642 = vmul.f32 %v6592, %v6638
  %v6643 = vmul.f32 %v6592, %v6639
  %v6644 = vmul.f32 %v6596, %v6638
  %v6645 = vmul.f32 %v6596, %v6639
  %v6646 = vmul.f32 %v6600, %v6638
  %v6647 = vmul.f32 %v6600, %v6639
  %v6648 = vmul.f32 %v6604, %v6638
  %v6649 = vmul.f32 %v6604, %v6639
  %v6650 = vmul.f32 %v6608, %v6638
  %v6651 = vmul.f32 %v6608, %v6639
  %v6652 = vmul.f32 %v6612, %v6638
  %v6653 = vmul.f32 %v6612, %v6639
  %v6654 = vmul.f32 %v6616, %v6638
  %v6655 = vmul.f32 %v6616, %v6639
  %v6656 = vmul.f32 %v6620, %v6638
  %v6657 = vmul.f32 %v6620, %v6639
  %v6658 = vmul.f32 %v6624, %v6638
  %v6659 = vmul.f32 %v6624, %v6639
  %v6660 = vadd.f32 %v6571, %v6642
  %v6661 = vadd.f32 %v6572, %v6643
  %v6662 = vadd.f32 %v6573, %v6644
  %v6663 = vadd.f32 %v6574, %v6645
  %v6664 = vadd.f32 %v6575, %v6646
  %v6665 = vadd.f32 %v6576, %v6647
  %v6666 = vadd.f32 %v6577, %v6648
  %v6667 = vadd.f32 %v6578, %v6649
  %v6668 = vadd.f32 %v6579, %v6650
  %v6669 = vadd.f32 %v6580, %v6651
  %v6670 = vadd.f32 %v6581, %v6652
  %v6671 = vadd.f32 %v6582, %v6653
  %v6672 = vadd.f32 %v6583, %v6654
  %v6673 = vadd.f32 %v6584, %v6655
  %v6674 = vadd.f32 %v6585, %v6656
  %v6675 = vadd.f32 %v6586, %v6657
  %v6676 = vadd.f32 %v6587, %v6658
  %v6677 = vadd.f32 %v6588, %v6659
  %v6678 = vmul.f32 %v6660, 0.35355338
  %v6679 = vmul.f32 %v6661, 0.35355338
  %v6680 = vmul.f32 %v6662, 0.35355338
  %v6681 = vmul.f32 %v6663, 0.35355338
  %v6682 = vmul.f32 %v6664, 0.35355338
  %v6683 = vmul.f32 %v6665, 0.35355338
  %v6684 = vmul.f32 %v6666, 0.35355338
  %v6685 = vmul.f32 %v6667, 0.35355338
  %v6686 = vmul.f32 %v6668, 0.35355338
  %v6687 = vmul.f32 %v6669, 0.35355338
  %v6688 = vmul.f32 %v6670, 0.35355338
  %v6689 = vmul.f32 %v6671, 0.35355338
  %v6690 = vmul.f32 %v6672, 0.35355338
  %v6691 = vmul.f32 %v6673, 0.35355338
  %v6692 = vmul.f32 %v6674, 0.35355338
  %v6693 = vmul.f32 %v6675, 0.35355338
  %v6694 = vmul.f32 %v6676, 0.35355338
  %v6695 = vmul.f32 %v6677, 0.35355338
  %v6705 = vrot.slane %v6678, 1
  %v6706 = vrot.slane %v6680, 1
  %v6707 = vrot.slane %v6682, 1
  %v6708 = vrot.slane %v6684, 1
  %v6709 = vrot.slane %v6686, 1
  %v6710 = vrot.slane %v6688, 1
  %v6711 = vrot.slane %v6690, 1
  %v6712 = vrot.slane %v6692, 1
  %v6713 = vrot.slane %v6694, 1
  %v6723 = vmax.f32 %v6678, %v6705
  %v6724 = vmax.f32 %v6680, %v6706
  %v6725 = vmax.f32 %v6682, %v6707
  %v6726 = vmax.f32 %v6684, %v6708
  %v6727 = vmax.f32 %v6686, %v6709
  %v6728 = vmax.f32 %v6688, %v6710
  %v6729 = vmax.f32 %v6690, %v6711
  %v6730 = vmax.f32 %v6692, %v6712
  %v6731 = vmax.f32 %v6694, %v6713
  %v6732 = vrot.slane %v6678, 2
  %v6733 = vrot.slane %v6680, 2
  %v6734 = vrot.slane %v6682, 2
  %v6735 = vrot.slane %v6684, 2
  %v6736 = vrot.slane %v6686, 2
  %v6737 = vrot.slane %v6688, 2
  %v6738 = vrot.slane %v6690, 2
  %v6739 = vrot.slane %v6692, 2
  %v6740 = vrot.slane %v6694, 2
  %v6750 = vmax.f32 %v6723, %v6732
  %v6751 = vmax.f32 %v6724, %v6733
  %v6752 = vmax.f32 %v6725, %v6734
  %v6753 = vmax.f32 %v6726, %v6735
  %v6754 = vmax.f32 %v6727, %v6736
  %v6755 = vmax.f32 %v6728, %v6737
  %v6756 = vmax.f32 %v6729, %v6738
  %v6757 = vmax.f32 %v6730, %v6739
  %v6758 = vmax.f32 %v6731, %v6740
  %v6759 = vrot.slane %v6678, 3
  %v6760 = vrot.slane %v6680, 3
  %v6761 = vrot.slane %v6682, 3
  %v6762 = vrot.slane %v6684, 3
  %v6763 = vrot.slane %v6686, 3
  %v6764 = vrot.slane %v6688, 3
  %v6765 = vrot.slane %v6690, 3
  %v6766 = vrot.slane %v6692, 3
  %v6767 = vrot.slane %v6694, 3
  %v6777 = vmax.f32 %v6750, %v6759
  %v6778 = vmax.f32 %v6751, %v6760
  %v6779 = vmax.f32 %v6752, %v6761
  %v6780 = vmax.f32 %v6753, %v6762
  %v6781 = vmax.f32 %v6754, %v6763
  %v6782 = vmax.f32 %v6755, %v6764
  %v6783 = vmax.f32 %v6756, %v6765
  %v6784 = vmax.f32 %v6757, %v6766
  %v6785 = vmax.f32 %v6758, %v6767
  %v6786 = vrot.slane %v6678, 4
  %v6787 = vrot.slane %v6680, 4
  %v6788 = vrot.slane %v6682, 4
  %v6789 = vrot.slane %v6684, 4
  %v6790 = vrot.slane %v6686, 4
  %v6791 = vrot.slane %v6688, 4
  %v6792 = vrot.slane %v6690, 4
  %v6793 = vrot.slane %v6692, 4
  %v6794 = vrot.slane %v6694, 4
  %v6804 = vmax.f32 %v6777, %v6786
  %v6805 = vmax.f32 %v6778, %v6787
  %v6806 = vmax.f32 %v6779, %v6788
  %v6807 = vmax.f32 %v6780, %v6789
  %v6808 = vmax.f32 %v6781, %v6790
  %v6809 = vmax.f32 %v6782, %v6791
  %v6810 = vmax.f32 %v6783, %v6792
  %v6811 = vmax.f32 %v6784, %v6793
  %v6812 = vmax.f32 %v6785, %v6794
  %v6813 = vrot.slane %v6678, 5
  %v6814 = vrot.slane %v6680, 5
  %v6815 = vrot.slane %v6682, 5
  %v6816 = vrot.slane %v6684, 5
  %v6817 = vrot.slane %v6686, 5
  %v6818 = vrot.slane %v6688, 5
  %v6819 = vrot.slane %v6690, 5
  %v6820 = vrot.slane %v6692, 5
  %v6821 = vrot.slane %v6694, 5
  %v6831 = vmax.f32 %v6804, %v6813
  %v6832 = vmax.f32 %v6805, %v6814
  %v6833 = vmax.f32 %v6806, %v6815
  %v6834 = vmax.f32 %v6807, %v6816
  %v6835 = vmax.f32 %v6808, %v6817
  %v6836 = vmax.f32 %v6809, %v6818
  %v6837 = vmax.f32 %v6810, %v6819
  %v6838 = vmax.f32 %v6811, %v6820
  %v6839 = vmax.f32 %v6812, %v6821
  %v6840 = vrot.slane %v6678, 6
  %v6841 = vrot.slane %v6680, 6
  %v6842 = vrot.slane %v6682, 6
  %v6843 = vrot.slane %v6684, 6
  %v6844 = vrot.slane %v6686, 6
  %v6845 = vrot.slane %v6688, 6
  %v6846 = vrot.slane %v6690, 6
  %v6847 = vrot.slane %v6692, 6
  %v6848 = vrot.slane %v6694, 6
  %v6858 = vmax.f32 %v6831, %v6840
  %v6859 = vmax.f32 %v6832, %v6841
  %v6860 = vmax.f32 %v6833, %v6842
  %v6861 = vmax.f32 %v6834, %v6843
  %v6862 = vmax.f32 %v6835, %v6844
  %v6863 = vmax.f32 %v6836, %v6845
  %v6864 = vmax.f32 %v6837, %v6846
  %v6865 = vmax.f32 %v6838, %v6847
  %v6866 = vmax.f32 %v6839, %v6848
  %v6867 = vrot.slane %v6678, 7
  %v6868 = vrot.slane %v6680, 7
  %v6869 = vrot.slane %v6682, 7
  %v6870 = vrot.slane %v6684, 7
  %v6871 = vrot.slane %v6686, 7
  %v6872 = vrot.slane %v6688, 7
  %v6873 = vrot.slane %v6690, 7
  %v6874 = vrot.slane %v6692, 7
  %v6875 = vrot.slane %v6694, 7
  %v6885 = vmax.f32 %v6858, %v6867
  %v6886 = vmax.f32 %v6859, %v6868
  %v6887 = vmax.f32 %v6860, %v6869
  %v6888 = vmax.f32 %v6861, %v6870
  %v6889 = vmax.f32 %v6862, %v6871
  %v6890 = vmax.f32 %v6863, %v6872
  %v6891 = vmax.f32 %v6864, %v6873
  %v6892 = vmax.f32 %v6865, %v6874
  %v6893 = vmax.f32 %v6866, %v6875
  %v6894 = vmax.f32 %v6885, %v6679
  %v6895 = vmax.f32 %v6886, %v6681
  %v6896 = vmax.f32 %v6887, %v6683
  %v6897 = vmax.f32 %v6888, %v6685
  %v6898 = vmax.f32 %v6889, %v6687
  %v6899 = vmax.f32 %v6890, %v6689
  %v6900 = vmax.f32 %v6891, %v6691
  %v6901 = vmax.f32 %v6892, %v6693
  %v6902 = vmax.f32 %v6893, %v6695
  %v6903 = vlaneseq
  %v6904 = vshrl.u32 %v6903, 7
  %v6905 = vsub.s32 0, %v6904
  %v6906 = vrot.slane %v6894, %v6905
  %v6907 = vlaneseq
  %v6908 = vshrl.u32 %v6907, 7
  %v6909 = vsub.s32 0, %v6908
  %v6910 = vrot.slane %v6895, %v6909
  %v6911 = vlaneseq
  %v6912 = vshrl.u32 %v6911, 7
  %v6913 = vsub.s32 0, %v6912
  %v6914 = vrot.slane %v6896, %v6913
  %v6915 = vlaneseq
  %v6916 = vshrl.u32 %v6915, 7
  %v6917 = vsub.s32 0, %v6916
  %v6918 = vrot.slane %v6897, %v6917
  %v6919 = vlaneseq
  %v6920 = vshrl.u32 %v6919, 7
  %v6921 = vsub.s32 0, %v6920
  %v6922 = vrot.slane %v6898, %v6921
  %v6923 = vlaneseq
  %v6924 = vshrl.u32 %v6923, 7
  %v6925 = vsub.s32 0, %v6924
  %v6926 = vrot.slane %v6899, %v6925
  %v6927 = vlaneseq
  %v6928 = vshrl.u32 %v6927, 7
  %v6929 = vsub.s32 0, %v6928
  %v6930 = vrot.slane %v6900, %v6929
  %v6931 = vlaneseq
  %v6932 = vshrl.u32 %v6931, 7
  %v6933 = vsub.s32 0, %v6932
  %v6934 = vrot.slane %v6901, %v6933
  %v6935 = vlaneseq
  %v6936 = vshrl.u32 %v6935, 7
  %v6937 = vsub.s32 0, %v6936
  %v6938 = vrot.slane %v6902, %v6937
  %v6939 = vsub.f32 %v6678, %v6906
  %v6940 = vsub.f32 %v6679, %v6906
  %v6941 = vsub.f32 %v6680, %v6910
  %v6942 = vsub.f32 %v6681, %v6910
  %v6943 = vsub.f32 %v6682, %v6914
  %v6944 = vsub.f32 %v6683, %v6914
  %v6945 = vsub.f32 %v6684, %v6918
  %v6946 = vsub.f32 %v6685, %v6918
  %v6947 = vsub.f32 %v6686, %v6922
  %v6948 = vsub.f32 %v6687, %v6922
  %v6949 = vsub.f32 %v6688, %v6926
  %v6950 = vsub.f32 %v6689, %v6926
  %v6951 = vsub.f32 %v6690, %v6930
  %v6952 = vsub.f32 %v6691, %v6930
  %v6953 = vsub.f32 %v6692, %v6934
  %v6954 = vsub.f32 %v6693, %v6934
  %v6955 = vsub.f32 %v6694, %v6938
  %v6956 = vsub.f32 %v6695, %v6938
  %v6957 = vmul.f32 %v6939, 1.442695
  %v6958 = vpow.pop %v6957
  %v6959 = vmul.f32 %v6940, 1.442695
  %v6960 = vpow.pop %v6959
  %v6961 = vmul.f32 %v6941, 1.442695
  %v6962 = vpow.pop %v6961
  %v6963 = vmul.f32 %v6942, 1.442695
  %v6964 = vpow.pop %v6963
  %v6965 = vmul.f32 %v6943, 1.442695
  %v6966 = vpow.pop %v6965
  %v6967 = vmul.f32 %v6944, 1.442695
  %v6968 = vpow.pop %v6967
  %v6969 = vmul.f32 %v6945, 1.442695
  %v6970 = vpow.pop %v6969
  %v6971 = vmul.f32 %v6946, 1.442695
  %v6972 = vpow.pop %v6971
  %v6973 = vmul.f32 %v6947, 1.442695
  %v6974 = vpow.pop %v6973
  %v6975 = vmul.f32 %v6948, 1.442695
  %v6976 = vpow.pop %v6975
  %v6977 = vmul.f32 %v6949, 1.442695
  %v6978 = vpow.pop %v6977
  %v6979 = vmul.f32 %v6950, 1.442695
  %v6980 = vpow.pop %v6979
  %v6981 = vmul.f32 %v6951, 1.442695
  %v6982 = vpow.pop %v6981
  %v6983 = vmul.f32 %v6952, 1.442695
  %v6984 = vpow.pop %v6983
  %v6985 = vmul.f32 %v6953, 1.442695
  %v6986 = vpow.pop %v6985
  %v6987 = vmul.f32 %v6954, 1.442695
  %v6988 = vpow.pop %v6987
  %v6989 = vmul.f32 %v6955, 1.442695
  %v6990 = vpow.pop %v6989
  %v6991 = vmul.f32 %v6956, 1.442695
  %v6992 = vpow.pop %v6991
  %v7002 = vrot.slane %v6958, 1
  %v7003 = vrot.slane %v6962, 1
  %v7004 = vrot.slane %v6966, 1
  %v7005 = vrot.slane %v6970, 1
  %v7006 = vrot.slane %v6974, 1
  %v7007 = vrot.slane %v6978, 1
  %v7008 = vrot.slane %v6982, 1
  %v7009 = vrot.slane %v6986, 1
  %v7010 = vrot.slane %v6990, 1
  %v7020 = vadd.f32 %v6958, %v7002
  %v7021 = vadd.f32 %v6962, %v7003
  %v7022 = vadd.f32 %v6966, %v7004
  %v7023 = vadd.f32 %v6970, %v7005
  %v7024 = vadd.f32 %v6974, %v7006
  %v7025 = vadd.f32 %v6978, %v7007
  %v7026 = vadd.f32 %v6982, %v7008
  %v7027 = vadd.f32 %v6986, %v7009
  %v7028 = vadd.f32 %v6990, %v7010
  %v7029 = vrot.slane %v6958, 2
  %v7030 = vrot.slane %v6962, 2
  %v7031 = vrot.slane %v6966, 2
  %v7032 = vrot.slane %v6970, 2
  %v7033 = vrot.slane %v6974, 2
  %v7034 = vrot.slane %v6978, 2
  %v7035 = vrot.slane %v6982, 2
  %v7036 = vrot.slane %v6986, 2
  %v7037 = vrot.slane %v6990, 2
  %v7047 = vadd.f32 %v7020, %v7029
  %v7048 = vadd.f32 %v7021, %v7030
  %v7049 = vadd.f32 %v7022, %v7031
  %v7050 = vadd.f32 %v7023, %v7032
  %v7051 = vadd.f32 %v7024, %v7033
  %v7052 = vadd.f32 %v7025, %v7034
  %v7053 = vadd.f32 %v7026, %v7035
  %v7054 = vadd.f32 %v7027, %v7036
  %v7055 = vadd.f32 %v7028, %v7037
  %v7056 = vrot.slane %v6958, 3
  %v7057 = vrot.slane %v6962, 3
  %v7058 = vrot.slane %v6966, 3
  %v7059 = vrot.slane %v6970, 3
  %v7060 = vrot.slane %v6974, 3
  %v7061 = vrot.slane %v6978, 3
  %v7062 = vrot.slane %v6982, 3
  %v7063 = vrot.slane %v6986, 3
  %v7064 = vrot.slane %v6990, 3
  %v7074 = vadd.f32 %v7047, %v7056
  %v7075 = vadd.f32 %v7048, %v7057
  %v7076 = vadd.f32 %v7049, %v7058
  %v7077 = vadd.f32 %v7050, %v7059
  %v7078 = vadd.f32 %v7051, %v7060
  %v7079 = vadd.f32 %v7052, %v7061
  %v7080 = vadd.f32 %v7053, %v7062
  %v7081 = vadd.f32 %v7054, %v7063
  %v7082 = vadd.f32 %v7055, %v7064
  %v7083 = vrot.slane %v6958, 4
  %v7084 = vrot.slane %v6962, 4
  %v7085 = vrot.slane %v6966, 4
  %v7086 = vrot.slane %v6970, 4
  %v7087 = vrot.slane %v6974, 4
  %v7088 = vrot.slane %v6978, 4
  %v7089 = vrot.slane %v6982, 4
  %v7090 = vrot.slane %v6986, 4
  %v7091 = vrot.slane %v6990, 4
  %v7101 = vadd.f32 %v7074, %v7083
  %v7102 = vadd.f32 %v7075, %v7084
  %v7103 = vadd.f32 %v7076, %v7085
  %v7104 = vadd.f32 %v7077, %v7086
  %v7105 = vadd.f32 %v7078, %v7087
  %v7106 = vadd.f32 %v7079, %v7088
  %v7107 = vadd.f32 %v7080, %v7089
  %v7108 = vadd.f32 %v7081, %v7090
  %v7109 = vadd.f32 %v7082, %v7091
  %v7110 = vrot.slane %v6958, 5
  %v7111 = vrot.slane %v6962, 5
  %v7112 = vrot.slane %v6966, 5
  %v7113 = vrot.slane %v6970, 5
  %v7114 = vrot.slane %v6974, 5
  %v7115 = vrot.slane %v6978, 5
  %v7116 = vrot.slane %v6982, 5
  %v7117 = vrot.slane %v6986, 5
  %v7118 = vrot.slane %v6990, 5
  %v7128 = vadd.f32 %v7101, %v7110
  %v7129 = vadd.f32 %v7102, %v7111
  %v7130 = vadd.f32 %v7103, %v7112
  %v7131 = vadd.f32 %v7104, %v7113
  %v7132 = vadd.f32 %v7105, %v7114
  %v7133 = vadd.f32 %v7106, %v7115
  %v7134 = vadd.f32 %v7107, %v7116
  %v7135 = vadd.f32 %v7108, %v7117
  %v7136 = vadd.f32 %v7109, %v7118
  %v7137 = vrot.slane %v6958, 6
  %v7138 = vrot.slane %v6962, 6
  %v7139 = vrot.slane %v6966, 6
  %v7140 = vrot.slane %v6970, 6
  %v7141 = vrot.slane %v6974, 6
  %v7142 = vrot.slane %v6978, 6
  %v7143 = vrot.slane %v6982, 6
  %v7144 = vrot.slane %v6986, 6
  %v7145 = vrot.slane %v6990, 6
  %v7155 = vadd.f32 %v7128, %v7137
  %v7156 = vadd.f32 %v7129, %v7138
  %v7157 = vadd.f32 %v7130, %v7139
  %v7158 = vadd.f32 %v7131, %v7140
  %v7159 = vadd.f32 %v7132, %v7141
  %v7160 = vadd.f32 %v7133, %v7142
  %v7161 = vadd.f32 %v7134, %v7143
  %v7162 = vadd.f32 %v7135, %v7144
  %v7163 = vadd.f32 %v7136, %v7145
  %v7164 = vrot.slane %v6958, 7
  %v7165 = vrot.slane %v6962, 7
  %v7166 = vrot.slane %v6966, 7
  %v7167 = vrot.slane %v6970, 7
  %v7168 = vrot.slane %v6974, 7
  %v7169 = vrot.slane %v6978, 7
  %v7170 = vrot.slane %v6982, 7
  %v7171 = vrot.slane %v6986, 7
  %v7172 = vrot.slane %v6990, 7
  %v7182 = vadd.f32 %v7155, %v7164
  %v7183 = vadd.f32 %v7156, %v7165
  %v7184 = vadd.f32 %v7157, %v7166
  %v7185 = vadd.f32 %v7158, %v7167
  %v7186 = vadd.f32 %v7159, %v7168
  %v7187 = vadd.f32 %v7160, %v7169
  %v7188 = vadd.f32 %v7161, %v7170
  %v7189 = vadd.f32 %v7162, %v7171
  %v7190 = vadd.f32 %v7163, %v7172
  %v7191 = vadd.f32 %v7182, %v6960
  %v7192 = vadd.f32 %v7183, %v6964
  %v7193 = vadd.f32 %v7184, %v6968
  %v7194 = vadd.f32 %v7185, %v6972
  %v7195 = vadd.f32 %v7186, %v6976
  %v7196 = vadd.f32 %v7187, %v6980
  %v7197 = vadd.f32 %v7188, %v6984
  %v7198 = vadd.f32 %v7189, %v6988
  %v7199 = vadd.f32 %v7190, %v6992
  %v7200 = vrcp.pop %v7191
  %v7201 = vrcp.pop %v7192
  %v7202 = vrcp.pop %v7193
  %v7203 = vrcp.pop %v7194
  %v7204 = vrcp.pop %v7195
  %v7205 = vrcp.pop %v7196
  %v7206 = vrcp.pop %v7197
  %v7207 = vrcp.pop %v7198
  %v7208 = vrcp.pop %v7199
  %v7209 = vmul.f32 %v6958, %v7200
  %v7210 = vmul.f32 %v6962, %v7201
  %v7211 = vmul.f32 %v6966, %v7202
  %v7212 = vmul.f32 %v6970, %v7203
  %v7213 = vmul.f32 %v6974, %v7204
  %v7214 = vmul.f32 %v6978, %v7205
  %v7215 = vmul.f32 %v6982, %v7206
  %v7216 = vmul.f32 %v6986, %v7207
  %v7217 = vmul.f32 %v6990, %v7208
  %v7218 = vlaneseq
  %v7219 = vshrl.u32 %v7218, 7
  %v7220 = vsub.s32 0, %v7219
  %v7221 = vrot.slane %v7209, %v7220
  %v7222 = vlaneseq
  %v7223 = vshrl.u32 %v7222, 7
  %v7224 = vsub.s32 0, %v7223
  %v7225 = vrot.slane %v7210, %v7224
  %v7226 = vlaneseq
  %v7227 = vshrl.u32 %v7226, 7
  %v7228 = vsub.s32 0, %v7227
  %v7229 = vrot.slane %v7211, %v7228
  %v7230 = vlaneseq
  %v7231 = vshrl.u32 %v7230, 7
  %v7232 = vsub.s32 0, %v7231
  %v7233 = vrot.slane %v7212, %v7232
  %v7234 = vlaneseq
  %v7235 = vshrl.u32 %v7234, 7
  %v7236 = vsub.s32 0, %v7235
  %v7237 = vrot.slane %v7213, %v7236
  %v7238 = vlaneseq
  %v7239 = vshrl.u32 %v7238, 7
  %v7240 = vsub.s32 0, %v7239
  %v7241 = vrot.slane %v7214, %v7240
  %v7242 = vlaneseq
  %v7243 = vshrl.u32 %v7242, 7
  %v7244 = vsub.s32 0, %v7243
  %v7245 = vrot.slane %v7215, %v7244
  %v7246 = vlaneseq
  %v7247 = vshrl.u32 %v7246, 7
  %v7248 = vsub.s32 0, %v7247
  %v7249 = vrot.slane %v7216, %v7248
  %v7250 = vlaneseq
  %v7251 = vshrl.u32 %v7250, 7
  %v7252 = vsub.s32 0, %v7251
  %v7253 = vrot.slane %v7217, %v7252
  %v7254 = vmul.f32 %v7221, %v5958
  %v7255 = vmul.f32 %v7221, %v5959
  %v7256 = vmul.f32 %v7225, %v5958
  %v7257 = vmul.f32 %v7225, %v5959
  %v7258 = vmul.f32 %v7229, %v5958
  %v7259 = vmul.f32 %v7229, %v5959
  %v7260 = vmul.f32 %v7233, %v5958
  %v7261 = vmul.f32 %v7233, %v5959
  %v7262 = vmul.f32 %v7237, %v5958
  %v7263 = vmul.f32 %v7237, %v5959
  %v7264 = vmul.f32 %v7241, %v5958
  %v7265 = vmul.f32 %v7241, %v5959
  %v7266 = vmul.f32 %v7245, %v5958
  %v7267 = vmul.f32 %v7245, %v5959
  %v7268 = vmul.f32 %v7249, %v5958
  %v7269 = vmul.f32 %v7249, %v5959
  %v7270 = vmul.f32 %v7253, %v5958
  %v7271 = vmul.f32 %v7253, %v5959
  %v7272 = vadd.f32 %v5922, %v7254
  %v7273 = vadd.f32 %v5923, %v7255
  %v7274 = vadd.f32 %v5924, %v7256
  %v7275 = vadd.f32 %v5925, %v7257
  %v7276 = vadd.f32 %v5926, %v7258
  %v7277 = vadd.f32 %v5927, %v7259
  %v7278 = vadd.f32 %v5928, %v7260
  %v7279 = vadd.f32 %v5929, %v7261
  %v7280 = vadd.f32 %v5930, %v7262
  %v7281 = vadd.f32 %v5931, %v7263
  %v7282 = vadd.f32 %v5932, %v7264
  %v7283 = vadd.f32 %v5933, %v7265
  %v7284 = vadd.f32 %v5934, %v7266
  %v7285 = vadd.f32 %v5935, %v7267
  %v7286 = vadd.f32 %v5936, %v7268
  %v7287 = vadd.f32 %v5937, %v7269
  %v7288 = vadd.f32 %v5938, %v7270
  %v7289 = vadd.f32 %v5939, %v7271
  %v7299 = vrot.slane %v7200, 7
  %v7300 = vrot.slane %v7201, 7
  %v7301 = vrot.slane %v7202, 7
  %v7302 = vrot.slane %v7203, 7
  %v7303 = vrot.slane %v7204, 7
  %v7304 = vrot.slane %v7205, 7
  %v7305 = vrot.slane %v7206, 7
  %v7306 = vrot.slane %v7207, 7
  %v7307 = vrot.slane %v7208, 7
  %v7317 = vmul.f32 %v6958, %v7299
  %v7318 = vmul.f32 %v6962, %v7300
  %v7319 = vmul.f32 %v6966, %v7301
  %v7320 = vmul.f32 %v6970, %v7302
  %v7321 = vmul.f32 %v6974, %v7303
  %v7322 = vmul.f32 %v6978, %v7304
  %v7323 = vmul.f32 %v6982, %v7305
  %v7324 = vmul.f32 %v6986, %v7306
  %v7325 = vmul.f32 %v6990, %v7307
  %v7326 = vlaneseq
  %v7327 = vshrl.u32 %v7326, 7
  %v7328 = vsub.s32 1, %v7327
  %v7329 = vrot.slane %v7317, %v7328
  %v7330 = vlaneseq
  %v7331 = vshrl.u32 %v7330, 7
  %v7332 = vsub.s32 1, %v7331
  %v7333 = vrot.slane %v7318, %v7332
  %v7334 = vlaneseq
  %v7335 = vshrl.u32 %v7334, 7
  %v7336 = vsub.s32 1, %v7335
  %v7337 = vrot.slane %v7319, %v7336
  %v7338 = vlaneseq
  %v7339 = vshrl.u32 %v7338, 7
  %v7340 = vsub.s32 1, %v7339
  %v7341 = vrot.slane %v7320, %v7340
  %v7342 = vlaneseq
  %v7343 = vshrl.u32 %v7342, 7
  %v7344 = vsub.s32 1, %v7343
  %v7345 = vrot.slane %v7321, %v7344
  %v7346 = vlaneseq
  %v7347 = vshrl.u32 %v7346, 7
  %v7348 = vsub.s32 1, %v7347
  %v7349 = vrot.slane %v7322, %v7348
  %v7350 = vlaneseq
  %v7351 = vshrl.u32 %v7350, 7
  %v7352 = vsub.s32 1, %v7351
  %v7353 = vrot.slane %v7323, %v7352
  %v7354 = vlaneseq
  %v7355 = vshrl.u32 %v7354, 7
  %v7356 = vsub.s32 1, %v7355
  %v7357 = vrot.slane %v7324, %v7356
  %v7358 = vlaneseq
  %v7359 = vshrl.u32 %v7358, 7
  %v7360 = vsub.s32 1, %v7359
  %v7361 = vrot.slane %v7325, %v7360
  %v7362 = vmul.f32 %v7329, %v5960
  %v7363 = vmul.f32 %v7329, %v5961
  %v7364 = vmul.f32 %v7333, %v5960
  %v7365 = vmul.f32 %v7333, %v5961
  %v7366 = vmul.f32 %v7337, %v5960
  %v7367 = vmul.f32 %v7337, %v5961
  %v7368 = vmul.f32 %v7341, %v5960
  %v7369 = vmul.f32 %v7341, %v5961
  %v7370 = vmul.f32 %v7345, %v5960
  %v7371 = vmul.f32 %v7345, %v5961
  %v7372 = vmul.f32 %v7349, %v5960
  %v7373 = vmul.f32 %v7349, %v5961
  %v7374 = vmul.f32 %v7353, %v5960
  %v7375 = vmul.f32 %v7353, %v5961
  %v7376 = vmul.f32 %v7357, %v5960
  %v7377 = vmul.f32 %v7357, %v5961
  %v7378 = vmul.f32 %v7361, %v5960
  %v7379 = vmul.f32 %v7361, %v5961
  %v7380 = vadd.f32 %v7272, %v7362
  %v7381 = vadd.f32 %v7273, %v7363
  %v7382 = vadd.f32 %v7274, %v7364
  %v7383 = vadd.f32 %v7275, %v7365
  %v7384 = vadd.f32 %v7276, %v7366
  %v7385 = vadd.f32 %v7277, %v7367
  %v7386 = vadd.f32 %v7278, %v7368
  %v7387 = vadd.f32 %v7279, %v7369
  %v7388 = vadd.f32 %v7280, %v7370
  %v7389 = vadd.f32 %v7281, %v7371
  %v7390 = vadd.f32 %v7282, %v7372
  %v7391 = vadd.f32 %v7283, %v7373
  %v7392 = vadd.f32 %v7284, %v7374
  %v7393 = vadd.f32 %v7285, %v7375
  %v7394 = vadd.f32 %v7286, %v7376
  %v7395 = vadd.f32 %v7287, %v7377
  %v7396 = vadd.f32 %v7288, %v7378
  %v7397 = vadd.f32 %v7289, %v7379
  %v7398 = vrot.slane %v7200, 6
  %v7399 = vrot.slane %v7201, 6
  %v7400 = vrot.slane %v7202, 6
  %v7401 = vrot.slane %v7203, 6
  %v7402 = vrot.slane %v7204, 6
  %v7403 = vrot.slane %v7205, 6
  %v7404 = vrot.slane %v7206, 6
  %v7405 = vrot.slane %v7207, 6
  %v7406 = vrot.slane %v7208, 6
  %v7416 = vmul.f32 %v6958, %v7398
  %v7417 = vmul.f32 %v6962, %v7399
  %v7418 = vmul.f32 %v6966, %v7400
  %v7419 = vmul.f32 %v6970, %v7401
  %v7420 = vmul.f32 %v6974, %v7402
  %v7421 = vmul.f32 %v6978, %v7403
  %v7422 = vmul.f32 %v6982, %v7404
  %v7423 = vmul.f32 %v6986, %v7405
  %v7424 = vmul.f32 %v6990, %v7406
  %v7425 = vlaneseq
  %v7426 = vshrl.u32 %v7425, 7
  %v7427 = vsub.s32 2, %v7426
  %v7428 = vrot.slane %v7416, %v7427
  %v7429 = vlaneseq
  %v7430 = vshrl.u32 %v7429, 7
  %v7431 = vsub.s32 2, %v7430
  %v7432 = vrot.slane %v7417, %v7431
  %v7433 = vlaneseq
  %v7434 = vshrl.u32 %v7433, 7
  %v7435 = vsub.s32 2, %v7434
  %v7436 = vrot.slane %v7418, %v7435
  %v7437 = vlaneseq
  %v7438 = vshrl.u32 %v7437, 7
  %v7439 = vsub.s32 2, %v7438
  %v7440 = vrot.slane %v7419, %v7439
  %v7441 = vlaneseq
  %v7442 = vshrl.u32 %v7441, 7
  %v7443 = vsub.s32 2, %v7442
  %v7444 = vrot.slane %v7420, %v7443
  %v7445 = vlaneseq
  %v7446 = vshrl.u32 %v7445, 7
  %v7447 = vsub.s32 2, %v7446
  %v7448 = vrot.slane %v7421, %v7447
  %v7449 = vlaneseq
  %v7450 = vshrl.u32 %v7449, 7
  %v7451 = vsub.s32 2, %v7450
  %v7452 = vrot.slane %v7422, %v7451
  %v7453 = vlaneseq
  %v7454 = vshrl.u32 %v7453, 7
  %v7455 = vsub.s32 2, %v7454
  %v7456 = vrot.slane %v7423, %v7455
  %v7457 = vlaneseq
  %v7458 = vshrl.u32 %v7457, 7
  %v7459 = vsub.s32 2, %v7458
  %v7460 = vrot.slane %v7424, %v7459
  %v7461 = vmul.f32 %v7428, %v5962
  %v7462 = vmul.f32 %v7428, %v5963
  %v7463 = vmul.f32 %v7432, %v5962
  %v7464 = vmul.f32 %v7432, %v5963
  %v7465 = vmul.f32 %v7436, %v5962
  %v7466 = vmul.f32 %v7436, %v5963
  %v7467 = vmul.f32 %v7440, %v5962
  %v7468 = vmul.f32 %v7440, %v5963
  %v7469 = vmul.f32 %v7444, %v5962
  %v7470 = vmul.f32 %v7444, %v5963
  %v7471 = vmul.f32 %v7448, %v5962
  %v7472 = vmul.f32 %v7448, %v5963
  %v7473 = vmul.f32 %v7452, %v5962
  %v7474 = vmul.f32 %v7452, %v5963
  %v7475 = vmul.f32 %v7456, %v5962
  %v7476 = vmul.f32 %v7456, %v5963
  %v7477 = vmul.f32 %v7460, %v5962
  %v7478 = vmul.f32 %v7460, %v5963
  %v7479 = vadd.f32 %v7380, %v7461
  %v7480 = vadd.f32 %v7381, %v7462
  %v7481 = vadd.f32 %v7382, %v7463
  %v7482 = vadd.f32 %v7383, %v7464
  %v7483 = vadd.f32 %v7384, %v7465
  %v7484 = vadd.f32 %v7385, %v7466
  %v7485 = vadd.f32 %v7386, %v7467
  %v7486 = vadd.f32 %v7387, %v7468
  %v7487 = vadd.f32 %v7388, %v7469
  %v7488 = vadd.f32 %v7389, %v7470
  %v7489 = vadd.f32 %v7390, %v7471
  %v7490 = vadd.f32 %v7391, %v7472
  %v7491 = vadd.f32 %v7392, %v7473
  %v7492 = vadd.f32 %v7393, %v7474
  %v7493 = vadd.f32 %v7394, %v7475
  %v7494 = vadd.f32 %v7395, %v7476
  %v7495 = vadd.f32 %v7396, %v7477
  %v7496 = vadd.f32 %v7397, %v7478
  %v7497 = vrot.slane %v7200, 5
  %v7498 = vrot.slane %v7201, 5
  %v7499 = vrot.slane %v7202, 5
  %v7500 = vrot.slane %v7203, 5
  %v7501 = vrot.slane %v7204, 5
  %v7502 = vrot.slane %v7205, 5
  %v7503 = vrot.slane %v7206, 5
  %v7504 = vrot.slane %v7207, 5
  %v7505 = vrot.slane %v7208, 5
  %v7515 = vmul.f32 %v6958, %v7497
  %v7516 = vmul.f32 %v6962, %v7498
  %v7517 = vmul.f32 %v6966, %v7499
  %v7518 = vmul.f32 %v6970, %v7500
  %v7519 = vmul.f32 %v6974, %v7501
  %v7520 = vmul.f32 %v6978, %v7502
  %v7521 = vmul.f32 %v6982, %v7503
  %v7522 = vmul.f32 %v6986, %v7504
  %v7523 = vmul.f32 %v6990, %v7505
  %v7524 = vlaneseq
  %v7525 = vshrl.u32 %v7524, 7
  %v7526 = vsub.s32 3, %v7525
  %v7527 = vrot.slane %v7515, %v7526
  %v7528 = vlaneseq
  %v7529 = vshrl.u32 %v7528, 7
  %v7530 = vsub.s32 3, %v7529
  %v7531 = vrot.slane %v7516, %v7530
  %v7532 = vlaneseq
  %v7533 = vshrl.u32 %v7532, 7
  %v7534 = vsub.s32 3, %v7533
  %v7535 = vrot.slane %v7517, %v7534
  %v7536 = vlaneseq
  %v7537 = vshrl.u32 %v7536, 7
  %v7538 = vsub.s32 3, %v7537
  %v7539 = vrot.slane %v7518, %v7538
  %v7540 = vlaneseq
  %v7541 = vshrl.u32 %v7540, 7
  %v7542 = vsub.s32 3, %v7541
  %v7543 = vrot.slane %v7519, %v7542
  %v7544 = vlaneseq
  %v7545 = vshrl.u32 %v7544, 7
  %v7546 = vsub.s32 3, %v7545
  %v7547 = vrot.slane %v7520, %v7546
  %v7548 = vlaneseq
  %v7549 = vshrl.u32 %v7548, 7
  %v7550 = vsub.s32 3, %v7549
  %v7551 = vrot.slane %v7521, %v7550
  %v7552 = vlaneseq
  %v7553 = vshrl.u32 %v7552, 7
  %v7554 = vsub.s32 3, %v7553
  %v7555 = vrot.slane %v7522, %v7554
  %v7556 = vlaneseq
  %v7557 = vshrl.u32 %v7556, 7
  %v7558 = vsub.s32 3, %v7557
  %v7559 = vrot.slane %v7523, %v7558
  %v7560 = vmul.f32 %v7527, %v5964
  %v7561 = vmul.f32 %v7527, %v5965
  %v7562 = vmul.f32 %v7531, %v5964
  %v7563 = vmul.f32 %v7531, %v5965
  %v7564 = vmul.f32 %v7535, %v5964
  %v7565 = vmul.f32 %v7535, %v5965
  %v7566 = vmul.f32 %v7539, %v5964
  %v7567 = vmul.f32 %v7539, %v5965
  %v7568 = vmul.f32 %v7543, %v5964
  %v7569 = vmul.f32 %v7543, %v5965
  %v7570 = vmul.f32 %v7547, %v5964
  %v7571 = vmul.f32 %v7547, %v5965
  %v7572 = vmul.f32 %v7551, %v5964
  %v7573 = vmul.f32 %v7551, %v5965
  %v7574 = vmul.f32 %v7555, %v5964
  %v7575 = vmul.f32 %v7555, %v5965
  %v7576 = vmul.f32 %v7559, %v5964
  %v7577 = vmul.f32 %v7559, %v5965
  %v7578 = vadd.f32 %v7479, %v7560
  %v7579 = vadd.f32 %v7480, %v7561
  %v7580 = vadd.f32 %v7481, %v7562
  %v7581 = vadd.f32 %v7482, %v7563
  %v7582 = vadd.f32 %v7483, %v7564
  %v7583 = vadd.f32 %v7484, %v7565
  %v7584 = vadd.f32 %v7485, %v7566
  %v7585 = vadd.f32 %v7486, %v7567
  %v7586 = vadd.f32 %v7487, %v7568
  %v7587 = vadd.f32 %v7488, %v7569
  %v7588 = vadd.f32 %v7489, %v7570
  %v7589 = vadd.f32 %v7490, %v7571
  %v7590 = vadd.f32 %v7491, %v7572
  %v7591 = vadd.f32 %v7492, %v7573
  %v7592 = vadd.f32 %v7493, %v7574
  %v7593 = vadd.f32 %v7494, %v7575
  %v7594 = vadd.f32 %v7495, %v7576
  %v7595 = vadd.f32 %v7496, %v7577
  %v7596 = vrot.slane %v7200, 4
  %v7597 = vrot.slane %v7201, 4
  %v7598 = vrot.slane %v7202, 4
  %v7599 = vrot.slane %v7203, 4
  %v7600 = vrot.slane %v7204, 4
  %v7601 = vrot.slane %v7205, 4
  %v7602 = vrot.slane %v7206, 4
  %v7603 = vrot.slane %v7207, 4
  %v7604 = vrot.slane %v7208, 4
  %v7614 = vmul.f32 %v6958, %v7596
  %v7615 = vmul.f32 %v6962, %v7597
  %v7616 = vmul.f32 %v6966, %v7598
  %v7617 = vmul.f32 %v6970, %v7599
  %v7618 = vmul.f32 %v6974, %v7600
  %v7619 = vmul.f32 %v6978, %v7601
  %v7620 = vmul.f32 %v6982, %v7602
  %v7621 = vmul.f32 %v6986, %v7603
  %v7622 = vmul.f32 %v6990, %v7604
  %v7623 = vlaneseq
  %v7624 = vshrl.u32 %v7623, 7
  %v7625 = vsub.s32 4, %v7624
  %v7626 = vrot.slane %v7614, %v7625
  %v7627 = vlaneseq
  %v7628 = vshrl.u32 %v7627, 7
  %v7629 = vsub.s32 4, %v7628
  %v7630 = vrot.slane %v7615, %v7629
  %v7631 = vlaneseq
  %v7632 = vshrl.u32 %v7631, 7
  %v7633 = vsub.s32 4, %v7632
  %v7634 = vrot.slane %v7616, %v7633
  %v7635 = vlaneseq
  %v7636 = vshrl.u32 %v7635, 7
  %v7637 = vsub.s32 4, %v7636
  %v7638 = vrot.slane %v7617, %v7637
  %v7639 = vlaneseq
  %v7640 = vshrl.u32 %v7639, 7
  %v7641 = vsub.s32 4, %v7640
  %v7642 = vrot.slane %v7618, %v7641
  %v7643 = vlaneseq
  %v7644 = vshrl.u32 %v7643, 7
  %v7645 = vsub.s32 4, %v7644
  %v7646 = vrot.slane %v7619, %v7645
  %v7647 = vlaneseq
  %v7648 = vshrl.u32 %v7647, 7
  %v7649 = vsub.s32 4, %v7648
  %v7650 = vrot.slane %v7620, %v7649
  %v7651 = vlaneseq
  %v7652 = vshrl.u32 %v7651, 7
  %v7653 = vsub.s32 4, %v7652
  %v7654 = vrot.slane %v7621, %v7653
  %v7655 = vlaneseq
  %v7656 = vshrl.u32 %v7655, 7
  %v7657 = vsub.s32 4, %v7656
  %v7658 = vrot.slane %v7622, %v7657
  %v7659 = vmul.f32 %v7626, %v5966
  %v7660 = vmul.f32 %v7626, %v5967
  %v7661 = vmul.f32 %v7630, %v5966
  %v7662 = vmul.f32 %v7630, %v5967
  %v7663 = vmul.f32 %v7634, %v5966
  %v7664 = vmul.f32 %v7634, %v5967
  %v7665 = vmul.f32 %v7638, %v5966
  %v7666 = vmul.f32 %v7638, %v5967
  %v7667 = vmul.f32 %v7642, %v5966
  %v7668 = vmul.f32 %v7642, %v5967
  %v7669 = vmul.f32 %v7646, %v5966
  %v7670 = vmul.f32 %v7646, %v5967
  %v7671 = vmul.f32 %v7650, %v5966
  %v7672 = vmul.f32 %v7650, %v5967
  %v7673 = vmul.f32 %v7654, %v5966
  %v7674 = vmul.f32 %v7654, %v5967
  %v7675 = vmul.f32 %v7658, %v5966
  %v7676 = vmul.f32 %v7658, %v5967
  %v7677 = vadd.f32 %v7578, %v7659
  %v7678 = vadd.f32 %v7579, %v7660
  %v7679 = vadd.f32 %v7580, %v7661
  %v7680 = vadd.f32 %v7581, %v7662
  %v7681 = vadd.f32 %v7582, %v7663
  %v7682 = vadd.f32 %v7583, %v7664
  %v7683 = vadd.f32 %v7584, %v7665
  %v7684 = vadd.f32 %v7585, %v7666
  %v7685 = vadd.f32 %v7586, %v7667
  %v7686 = vadd.f32 %v7587, %v7668
  %v7687 = vadd.f32 %v7588, %v7669
  %v7688 = vadd.f32 %v7589, %v7670
  %v7689 = vadd.f32 %v7590, %v7671
  %v7690 = vadd.f32 %v7591, %v7672
  %v7691 = vadd.f32 %v7592, %v7673
  %v7692 = vadd.f32 %v7593, %v7674
  %v7693 = vadd.f32 %v7594, %v7675
  %v7694 = vadd.f32 %v7595, %v7676
  %v7695 = vrot.slane %v7200, 3
  %v7696 = vrot.slane %v7201, 3
  %v7697 = vrot.slane %v7202, 3
  %v7698 = vrot.slane %v7203, 3
  %v7699 = vrot.slane %v7204, 3
  %v7700 = vrot.slane %v7205, 3
  %v7701 = vrot.slane %v7206, 3
  %v7702 = vrot.slane %v7207, 3
  %v7703 = vrot.slane %v7208, 3
  %v7713 = vmul.f32 %v6958, %v7695
  %v7714 = vmul.f32 %v6962, %v7696
  %v7715 = vmul.f32 %v6966, %v7697
  %v7716 = vmul.f32 %v6970, %v7698
  %v7717 = vmul.f32 %v6974, %v7699
  %v7718 = vmul.f32 %v6978, %v7700
  %v7719 = vmul.f32 %v6982, %v7701
  %v7720 = vmul.f32 %v6986, %v7702
  %v7721 = vmul.f32 %v6990, %v7703
  %v7722 = vlaneseq
  %v7723 = vshrl.u32 %v7722, 7
  %v7724 = vsub.s32 5, %v7723
  %v7725 = vrot.slane %v7713, %v7724
  %v7726 = vlaneseq
  %v7727 = vshrl.u32 %v7726, 7
  %v7728 = vsub.s32 5, %v7727
  %v7729 = vrot.slane %v7714, %v7728
  %v7730 = vlaneseq
  %v7731 = vshrl.u32 %v7730, 7
  %v7732 = vsub.s32 5, %v7731
  %v7733 = vrot.slane %v7715, %v7732
  %v7734 = vlaneseq
  %v7735 = vshrl.u32 %v7734, 7
  %v7736 = vsub.s32 5, %v7735
  %v7737 = vrot.slane %v7716, %v7736
  %v7738 = vlaneseq
  %v7739 = vshrl.u32 %v7738, 7
  %v7740 = vsub.s32 5, %v7739
  %v7741 = vrot.slane %v7717, %v7740
  %v7742 = vlaneseq
  %v7743 = vshrl.u32 %v7742, 7
  %v7744 = vsub.s32 5, %v7743
  %v7745 = vrot.slane %v7718, %v7744
  %v7746 = vlaneseq
  %v7747 = vshrl.u32 %v7746, 7
  %v7748 = vsub.s32 5, %v7747
  %v7749 = vrot.slane %v7719, %v7748
  %v7750 = vlaneseq
  %v7751 = vshrl.u32 %v7750, 7
  %v7752 = vsub.s32 5, %v7751
  %v7753 = vrot.slane %v7720, %v7752
  %v7754 = vlaneseq
  %v7755 = vshrl.u32 %v7754, 7
  %v7756 = vsub.s32 5, %v7755
  %v7757 = vrot.slane %v7721, %v7756
  %v7758 = vmul.f32 %v7725, %v5968
  %v7759 = vmul.f32 %v7725, %v5969
  %v7760 = vmul.f32 %v7729, %v5968
  %v7761 = vmul.f32 %v7729, %v5969
  %v7762 = vmul.f32 %v7733, %v5968
  %v7763 = vmul.f32 %v7733, %v5969
  %v7764 = vmul.f32 %v7737, %v5968
  %v7765 = vmul.f32 %v7737, %v5969
  %v7766 = vmul.f32 %v7741, %v5968
  %v7767 = vmul.f32 %v7741, %v5969
  %v7768 = vmul.f32 %v7745, %v5968
  %v7769 = vmul.f32 %v7745, %v5969
  %v7770 = vmul.f32 %v7749, %v5968
  %v7771 = vmul.f32 %v7749, %v5969
  %v7772 = vmul.f32 %v7753, %v5968
  %v7773 = vmul.f32 %v7753, %v5969
  %v7774 = vmul.f32 %v7757, %v5968
  %v7775 = vmul.f32 %v7757, %v5969
  %v7776 = vadd.f32 %v7677, %v7758
  %v7777 = vadd.f32 %v7678, %v7759
  %v7778 = vadd.f32 %v7679, %v7760
  %v7779 = vadd.f32 %v7680, %v7761
  %v7780 = vadd.f32 %v7681, %v7762
  %v7781 = vadd.f32 %v7682, %v7763
  %v7782 = vadd.f32 %v7683, %v7764
  %v7783 = vadd.f32 %v7684, %v7765
  %v7784 = vadd.f32 %v7685, %v7766
  %v7785 = vadd.f32 %v7686, %v7767
  %v7786 = vadd.f32 %v7687, %v7768
  %v7787 = vadd.f32 %v7688, %v7769
  %v7788 = vadd.f32 %v7689, %v7770
  %v7789 = vadd.f32 %v7690, %v7771
  %v7790 = vadd.f32 %v7691, %v7772
  %v7791 = vadd.f32 %v7692, %v7773
  %v7792 = vadd.f32 %v7693, %v7774
  %v7793 = vadd.f32 %v7694, %v7775
  %v7794 = vrot.slane %v7200, 2
  %v7795 = vrot.slane %v7201, 2
  %v7796 = vrot.slane %v7202, 2
  %v7797 = vrot.slane %v7203, 2
  %v7798 = vrot.slane %v7204, 2
  %v7799 = vrot.slane %v7205, 2
  %v7800 = vrot.slane %v7206, 2
  %v7801 = vrot.slane %v7207, 2
  %v7802 = vrot.slane %v7208, 2
  %v7812 = vmul.f32 %v6958, %v7794
  %v7813 = vmul.f32 %v6962, %v7795
  %v7814 = vmul.f32 %v6966, %v7796
  %v7815 = vmul.f32 %v6970, %v7797
  %v7816 = vmul.f32 %v6974, %v7798
  %v7817 = vmul.f32 %v6978, %v7799
  %v7818 = vmul.f32 %v6982, %v7800
  %v7819 = vmul.f32 %v6986, %v7801
  %v7820 = vmul.f32 %v6990, %v7802
  %v7821 = vlaneseq
  %v7822 = vshrl.u32 %v7821, 7
  %v7823 = vsub.s32 6, %v7822
  %v7824 = vrot.slane %v7812, %v7823
  %v7825 = vlaneseq
  %v7826 = vshrl.u32 %v7825, 7
  %v7827 = vsub.s32 6, %v7826
  %v7828 = vrot.slane %v7813, %v7827
  %v7829 = vlaneseq
  %v7830 = vshrl.u32 %v7829, 7
  %v7831 = vsub.s32 6, %v7830
  %v7832 = vrot.slane %v7814, %v7831
  %v7833 = vlaneseq
  %v7834 = vshrl.u32 %v7833, 7
  %v7835 = vsub.s32 6, %v7834
  %v7836 = vrot.slane %v7815, %v7835
  %v7837 = vlaneseq
  %v7838 = vshrl.u32 %v7837, 7
  %v7839 = vsub.s32 6, %v7838
  %v7840 = vrot.slane %v7816, %v7839
  %v7841 = vlaneseq
  %v7842 = vshrl.u32 %v7841, 7
  %v7843 = vsub.s32 6, %v7842
  %v7844 = vrot.slane %v7817, %v7843
  %v7845 = vlaneseq
  %v7846 = vshrl.u32 %v7845, 7
  %v7847 = vsub.s32 6, %v7846
  %v7848 = vrot.slane %v7818, %v7847
  %v7849 = vlaneseq
  %v7850 = vshrl.u32 %v7849, 7
  %v7851 = vsub.s32 6, %v7850
  %v7852 = vrot.slane %v7819, %v7851
  %v7853 = vlaneseq
  %v7854 = vshrl.u32 %v7853, 7
  %v7855 = vsub.s32 6, %v7854
  %v7856 = vrot.slane %v7820, %v7855
  %v7857 = vmul.f32 %v7824, %v5970
  %v7858 = vmul.f32 %v7824, %v5971
  %v7859 = vmul.f32 %v7828, %v5970
  %v7860 = vmul.f32 %v7828, %v5971
  %v7861 = vmul.f32 %v7832, %v5970
  %v7862 = vmul.f32 %v7832, %v5971
  %v7863 = vmul.f32 %v7836, %v5970
  %v7864 = vmul.f32 %v7836, %v5971
  %v7865 = vmul.f32 %v7840, %v5970
  %v7866 = vmul.f32 %v7840, %v5971
  %v7867 = vmul.f32 %v7844, %v5970
  %v7868 = vmul.f32 %v7844, %v5971
  %v7869 = vmul.f32 %v7848, %v5970
  %v7870 = vmul.f32 %v7848, %v5971
  %v7871 = vmul.f32 %v7852, %v5970
  %v7872 = vmul.f32 %v7852, %v5971
  %v7873 = vmul.f32 %v7856, %v5970
  %v7874 = vmul.f32 %v7856, %v5971
  %v7875 = vadd.f32 %v7776, %v7857
  %v7876 = vadd.f32 %v7777, %v7858
  %v7877 = vadd.f32 %v7778, %v7859
  %v7878 = vadd.f32 %v7779, %v7860
  %v7879 = vadd.f32 %v7780, %v7861
  %v7880 = vadd.f32 %v7781, %v7862
  %v7881 = vadd.f32 %v7782, %v7863
  %v7882 = vadd.f32 %v7783, %v7864
  %v7883 = vadd.f32 %v7784, %v7865
  %v7884 = vadd.f32 %v7785, %v7866
  %v7885 = vadd.f32 %v7786, %v7867
  %v7886 = vadd.f32 %v7787, %v7868
  %v7887 = vadd.f32 %v7788, %v7869
  %v7888 = vadd.f32 %v7789, %v7870
  %v7889 = vadd.f32 %v7790, %v7871
  %v7890 = vadd.f32 %v7791, %v7872
  %v7891 = vadd.f32 %v7792, %v7873
  %v7892 = vadd.f32 %v7793, %v7874
  %v7893 = vrot.slane %v7200, 1
  %v7894 = vrot.slane %v7201, 1
  %v7895 = vrot.slane %v7202, 1
  %v7896 = vrot.slane %v7203, 1
  %v7897 = vrot.slane %v7204, 1
  %v7898 = vrot.slane %v7205, 1
  %v7899 = vrot.slane %v7206, 1
  %v7900 = vrot.slane %v7207, 1
  %v7901 = vrot.slane %v7208, 1
  %v7911 = vmul.f32 %v6958, %v7893
  %v7912 = vmul.f32 %v6962, %v7894
  %v7913 = vmul.f32 %v6966, %v7895
  %v7914 = vmul.f32 %v6970, %v7896
  %v7915 = vmul.f32 %v6974, %v7897
  %v7916 = vmul.f32 %v6978, %v7898
  %v7917 = vmul.f32 %v6982, %v7899
  %v7918 = vmul.f32 %v6986, %v7900
  %v7919 = vmul.f32 %v6990, %v7901
  %v7920 = vlaneseq
  %v7921 = vshrl.u32 %v7920, 7
  %v7922 = vsub.s32 7, %v7921
  %v7923 = vrot.slane %v7911, %v7922
  %v7924 = vlaneseq
  %v7925 = vshrl.u32 %v7924, 7
  %v7926 = vsub.s32 7, %v7925
  %v7927 = vrot.slane %v7912, %v7926
  %v7928 = vlaneseq
  %v7929 = vshrl.u32 %v7928, 7
  %v7930 = vsub.s32 7, %v7929
  %v7931 = vrot.slane %v7913, %v7930
  %v7932 = vlaneseq
  %v7933 = vshrl.u32 %v7932, 7
  %v7934 = vsub.s32 7, %v7933
  %v7935 = vrot.slane %v7914, %v7934
  %v7936 = vlaneseq
  %v7937 = vshrl.u32 %v7936, 7
  %v7938 = vsub.s32 7, %v7937
  %v7939 = vrot.slane %v7915, %v7938
  %v7940 = vlaneseq
  %v7941 = vshrl.u32 %v7940, 7
  %v7942 = vsub.s32 7, %v7941
  %v7943 = vrot.slane %v7916, %v7942
  %v7944 = vlaneseq
  %v7945 = vshrl.u32 %v7944, 7
  %v7946 = vsub.s32 7, %v7945
  %v7947 = vrot.slane %v7917, %v7946
  %v7948 = vlaneseq
  %v7949 = vshrl.u32 %v7948, 7
  %v7950 = vsub.s32 7, %v7949
  %v7951 = vrot.slane %v7918, %v7950
  %v7952 = vlaneseq
  %v7953 = vshrl.u32 %v7952, 7
  %v7954 = vsub.s32 7, %v7953
  %v7955 = vrot.slane %v7919, %v7954
  %v7956 = vmul.f32 %v7923, %v5972
  %v7957 = vmul.f32 %v7923, %v5973
  %v7958 = vmul.f32 %v7927, %v5972
  %v7959 = vmul.f32 %v7927, %v5973
  %v7960 = vmul.f32 %v7931, %v5972
  %v7961 = vmul.f32 %v7931, %v5973
  %v7962 = vmul.f32 %v7935, %v5972
  %v7963 = vmul.f32 %v7935, %v5973
  %v7964 = vmul.f32 %v7939, %v5972
  %v7965 = vmul.f32 %v7939, %v5973
  %v7966 = vmul.f32 %v7943, %v5972
  %v7967 = vmul.f32 %v7943, %v5973
  %v7968 = vmul.f32 %v7947, %v5972
  %v7969 = vmul.f32 %v7947, %v5973
  %v7970 = vmul.f32 %v7951, %v5972
  %v7971 = vmul.f32 %v7951, %v5973
  %v7972 = vmul.f32 %v7955, %v5972
  %v7973 = vmul.f32 %v7955, %v5973
  %v7974 = vadd.f32 %v7875, %v7956
  %v7975 = vadd.f32 %v7876, %v7957
  %v7976 = vadd.f32 %v7877, %v7958
  %v7977 = vadd.f32 %v7878, %v7959
  %v7978 = vadd.f32 %v7879, %v7960
  %v7979 = vadd.f32 %v7880, %v7961
  %v7980 = vadd.f32 %v7881, %v7962
  %v7981 = vadd.f32 %v7882, %v7963
  %v7982 = vadd.f32 %v7883, %v7964
  %v7983 = vadd.f32 %v7884, %v7965
  %v7984 = vadd.f32 %v7885, %v7966
  %v7985 = vadd.f32 %v7886, %v7967
  %v7986 = vadd.f32 %v7887, %v7968
  %v7987 = vadd.f32 %v7888, %v7969
  %v7988 = vadd.f32 %v7889, %v7970
  %v7989 = vadd.f32 %v7890, %v7971
  %v7990 = vadd.f32 %v7891, %v7972
  %v7991 = vadd.f32 %v7892, %v7973
  %v7992 = vmul.f32 %v6960, %v7200
  %v7993 = vmul.f32 %v6964, %v7201
  %v7994 = vmul.f32 %v6968, %v7202
  %v7995 = vmul.f32 %v6972, %v7203
  %v7996 = vmul.f32 %v6976, %v7204
  %v7997 = vmul.f32 %v6980, %v7205
  %v7998 = vmul.f32 %v6984, %v7206
  %v7999 = vmul.f32 %v6988, %v7207
  %v8000 = vmul.f32 %v6992, %v7208
  %v8001 = vlaneseq
  %v8002 = vshrl.u32 %v8001, 7
  %v8003 = vsub.s32 0, %v8002
  %v8004 = vrot.slane %v7992, %v8003
  %v8005 = vlaneseq
  %v8006 = vshrl.u32 %v8005, 7
  %v8007 = vsub.s32 0, %v8006
  %v8008 = vrot.slane %v7993, %v8007
  %v8009 = vlaneseq
  %v8010 = vshrl.u32 %v8009, 7
  %v8011 = vsub.s32 0, %v8010
  %v8012 = vrot.slane %v7994, %v8011
  %v8013 = vlaneseq
  %v8014 = vshrl.u32 %v8013, 7
  %v8015 = vsub.s32 0, %v8014
  %v8016 = vrot.slane %v7995, %v8015
  %v8017 = vlaneseq
  %v8018 = vshrl.u32 %v8017, 7
  %v8019 = vsub.s32 0, %v8018
  %v8020 = vrot.slane %v7996, %v8019
  %v8021 = vlaneseq
  %v8022 = vshrl.u32 %v8021, 7
  %v8023 = vsub.s32 0, %v8022
  %v8024 = vrot.slane %v7997, %v8023
  %v8025 = vlaneseq
  %v8026 = vshrl.u32 %v8025, 7
  %v8027 = vsub.s32 0, %v8026
  %v8028 = vrot.slane %v7998, %v8027
  %v8029 = vlaneseq
  %v8030 = vshrl.u32 %v8029, 7
  %v8031 = vsub.s32 0, %v8030
  %v8032 = vrot.slane %v7999, %v8031
  %v8033 = vlaneseq
  %v8034 = vshrl.u32 %v8033, 7
  %v8035 = vsub.s32 0, %v8034
  %v8036 = vrot.slane %v8000, %v8035
  %v8037 = vmul.f32 %v8004, %v5974
  %v8038 = vmul.f32 %v8004, %v5975
  %v8039 = vmul.f32 %v8008, %v5974
  %v8040 = vmul.f32 %v8008, %v5975
  %v8041 = vmul.f32 %v8012, %v5974
  %v8042 = vmul.f32 %v8012, %v5975
  %v8043 = vmul.f32 %v8016, %v5974
  %v8044 = vmul.f32 %v8016, %v5975
  %v8045 = vmul.f32 %v8020, %v5974
  %v8046 = vmul.f32 %v8020, %v5975
  %v8047 = vmul.f32 %v8024, %v5974
  %v8048 = vmul.f32 %v8024, %v5975
  %v8049 = vmul.f32 %v8028, %v5974
  %v8050 = vmul.f32 %v8028, %v5975
  %v8051 = vmul.f32 %v8032, %v5974
  %v8052 = vmul.f32 %v8032, %v5975
  %v8053 = vmul.f32 %v8036, %v5974
  %v8054 = vmul.f32 %v8036, %v5975
  %v8055 = vadd.f32 %v7974, %v8037
  %v8056 = vadd.f32 %v7975, %v8038
  %v8057 = vadd.f32 %v7976, %v8039
  %v8058 = vadd.f32 %v7977, %v8040
  %v8059 = vadd.f32 %v7978, %v8041
  %v8060 = vadd.f32 %v7979, %v8042
  %v8061 = vadd.f32 %v7980, %v8043
  %v8062 = vadd.f32 %v7981, %v8044
  %v8063 = vadd.f32 %v7982, %v8045
  %v8064 = vadd.f32 %v7983, %v8046
  %v8065 = vadd.f32 %v7984, %v8047
  %v8066 = vadd.f32 %v7985, %v8048
  %v8067 = vadd.f32 %v7986, %v8049
  %v8068 = vadd.f32 %v7987, %v8050
  %v8069 = vadd.f32 %v7988, %v8051
  %v8070 = vadd.f32 %v7989, %v8052
  %v8071 = vadd.f32 %v7990, %v8053
  %v8072 = vadd.f32 %v7991, %v8054
  %v8073 = vld [vmem:[#allocation2 + $0x18] sm:$0xff]
  %v8074 = vld [vmem:[#allocation2 + $0x98] sm:$0xff]
  %v8075 = vld [vmem:[#allocation2 + $0x118] sm:$0xff]
  %v8076 = vld [vmem:[#allocation2 + $0x198] sm:$0xff]
  %v8077 = vld [vmem:[#allocation2 + $0x218] sm:$0xff]
  %v8078 = vld [vmem:[#allocation2 + $0x298] sm:$0xff]
  %v8079 = vld [vmem:[#allocation2 + $0x318] sm:$0xff]
  %v8080 = vld [vmem:[#allocation2 + $0x398] sm:$0xff]
  %v8081 = vld [vmem:[#allocation2 + $0x418] sm:$0xff]
  %v8082 = vld [vmem:[#allocation2 + $0x38] sm:$0xff]
  %v8083 = vld [vmem:[#allocation2 + $0xb8] sm:$0xff]
  %v8084 = vld [vmem:[#allocation2 + $0x138] sm:$0xff]
  %v8085 = vld [vmem:[#allocation2 + $0x1b8] sm:$0xff]
  %v8086 = vld [vmem:[#allocation2 + $0x238] sm:$0xff]
  %v8087 = vld [vmem:[#allocation2 + $0x2b8] sm:$0xff]
  %v8088 = vld [vmem:[#allocation2 + $0x338] sm:$0xff]
  %v8089 = vld [vmem:[#allocation2 + $0x3b8] sm:$0xff]
  %v8090 = vld [vmem:[#allocation2 + $0x438] sm:$0xff]
  %v8091 = vld [vmem:[#allocation2 + $0x70] sm:$0xff]
  %v8092 = vld [vmem:[#allocation2 + $0x78] sm:$0xff]
  %v8093 = vld [vmem:[#allocation2 + $0xf0] sm:$0xff]
  %v8094 = vld [vmem:[#allocation2 + $0xf8] sm:$0xff]
  %v8095 = vld [vmem:[#allocation2 + $0x170] sm:$0xff]
  %v8096 = vld [vmem:[#allocation2 + $0x178] sm:$0xff]
  %v8097 = vld [vmem:[#allocation2 + $0x1f0] sm:$0xff]
  %v8098 = vld [vmem:[#allocation2 + $0x1f8] sm:$0xff]
  %v8099 = vld [vmem:[#allocation2 + $0x270] sm:$0xff]
  %v8100 = vld [vmem:[#allocation2 + $0x278] sm:$0xff]
  %v8101 = vld [vmem:[#allocation2 + $0x2f0] sm:$0xff]
  %v8102 = vld [vmem:[#allocation2 + $0x2f8] sm:$0xff]
  %v8103 = vld [vmem:[#allocation2 + $0x370] sm:$0xff]
  %v8104 = vld [vmem:[#allocation2 + $0x378] sm:$0xff]
  %v8105 = vld [vmem:[#allocation2 + $0x3f0] sm:$0xff]
  %v8106 = vld [vmem:[#allocation2 + $0x3f8] sm:$0xff]
  %v8107 = vld [vmem:[#allocation2 + $0x470] sm:$0xff]
  %v8108 = vld [vmem:[#allocation2 + $0x478] sm:$0xff]
  %v8109 = vlaneseq
  %v8110 = vshrl.u32 %v8109, 7
  %v8111 = vsub.s32 0, %v8110
  %v8112 = vrot.slane %v8073, %v8111
  %v8113 = vlaneseq
  %v8114 = vshrl.u32 %v8113, 7
  %v8115 = vsub.s32 0, %v8114
  %v8116 = vrot.slane %v8074, %v8115
  %v8117 = vlaneseq
  %v8118 = vshrl.u32 %v8117, 7
  %v8119 = vsub.s32 0, %v8118
  %v8120 = vrot.slane %v8075, %v8119
  %v8121 = vlaneseq
  %v8122 = vshrl.u32 %v8121, 7
  %v8123 = vsub.s32 0, %v8122
  %v8124 = vrot.slane %v8076, %v8123
  %v8125 = vlaneseq
  %v8126 = vshrl.u32 %v8125, 7
  %v8127 = vsub.s32 0, %v8126
  %v8128 = vrot.slane %v8077, %v8127
  %v8129 = vlaneseq
  %v8130 = vshrl.u32 %v8129, 7
  %v8131 = vsub.s32 0, %v8130
  %v8132 = vrot.slane %v8078, %v8131
  %v8133 = vlaneseq
  %v8134 = vshrl.u32 %v8133, 7
  %v8135 = vsub.s32 0, %v8134
  %v8136 = vrot.slane %v8079, %v8135
  %v8137 = vlaneseq
  %v8138 = vshrl.u32 %v8137, 7
  %v8139 = vsub.s32 0, %v8138
  %v8140 = vrot.slane %v8080, %v8139
  %v8141 = vlaneseq
  %v8142 = vshrl.u32 %v8141, 7
  %v8143 = vsub.s32 0, %v8142
  %v8144 = vrot.slane %v8081, %v8143
  %v8154 = vrot.slane %v8083, 7
  %v8155 = vsel %vm1767, %v8154, %v8082
  %v8156 = vrot.slane %v8084, 6
  %v8157 = vsel %vm1770, %v8156, %v8155
  %v8158 = vrot.slane %v8085, 5
  %v8159 = vsel %vm1773, %v8158, %v8157
  %v8160 = vrot.slane %v8086, 4
  %v8161 = vsel %vm1776, %v8160, %v8159
  %v8162 = vrot.slane %v8087, 3
  %v8163 = vsel %vm1779, %v8162, %v8161
  %v8164 = vrot.slane %v8088, 2
  %v8165 = vsel %vm1782, %v8164, %v8163
  %v8166 = vrot.slane %v8089, 1
  %v8167 = vsel %vm1785, %v8166, %v8165
  %v8170 = vmul.f32 %v8112, %v8167
  %v8171 = vmul.f32 %v8112, %v8090
  %v8172 = vmul.f32 %v8116, %v8167
  %v8173 = vmul.f32 %v8116, %v8090
  %v8174 = vmul.f32 %v8120, %v8167
  %v8175 = vmul.f32 %v8120, %v8090
  %v8176 = vmul.f32 %v8124, %v8167
  %v8177 = vmul.f32 %v8124, %v8090
  %v8178 = vmul.f32 %v8128, %v8167
  %v8179 = vmul.f32 %v8128, %v8090
  %v8180 = vmul.f32 %v8132, %v8167
  %v8181 = vmul.f32 %v8132, %v8090
  %v8182 = vmul.f32 %v8136, %v8167
  %v8183 = vmul.f32 %v8136, %v8090
  %v8184 = vmul.f32 %v8140, %v8167
  %v8185 = vmul.f32 %v8140, %v8090
  %v8186 = vmul.f32 %v8144, %v8167
  %v8187 = vmul.f32 %v8144, %v8090
  %v8188 = vlaneseq
  %v8189 = vshrl.u32 %v8188, 7
  %v8190 = vsub.s32 1, %v8189
  %v8191 = vrot.slane %v8073, %v8190
  %v8192 = vlaneseq
  %v8193 = vshrl.u32 %v8192, 7
  %v8194 = vsub.s32 1, %v8193
  %v8195 = vrot.slane %v8074, %v8194
  %v8196 = vlaneseq
  %v8197 = vshrl.u32 %v8196, 7
  %v8198 = vsub.s32 1, %v8197
  %v8199 = vrot.slane %v8075, %v8198
  %v8200 = vlaneseq
  %v8201 = vshrl.u32 %v8200, 7
  %v8202 = vsub.s32 1, %v8201
  %v8203 = vrot.slane %v8076, %v8202
  %v8204 = vlaneseq
  %v8205 = vshrl.u32 %v8204, 7
  %v8206 = vsub.s32 1, %v8205
  %v8207 = vrot.slane %v8077, %v8206
  %v8208 = vlaneseq
  %v8209 = vshrl.u32 %v8208, 7
  %v8210 = vsub.s32 1, %v8209
  %v8211 = vrot.slane %v8078, %v8210
  %v8212 = vlaneseq
  %v8213 = vshrl.u32 %v8212, 7
  %v8214 = vsub.s32 1, %v8213
  %v8215 = vrot.slane %v8079, %v8214
  %v8216 = vlaneseq
  %v8217 = vshrl.u32 %v8216, 7
  %v8218 = vsub.s32 1, %v8217
  %v8219 = vrot.slane %v8080, %v8218
  %v8220 = vlaneseq
  %v8221 = vshrl.u32 %v8220, 7
  %v8222 = vsub.s32 1, %v8221
  %v8223 = vrot.slane %v8081, %v8222
  %v8224 = vrot.slane %v8082, 1
  %v8225 = vsel %vm1767, %v8083, %v8224
  %v8226 = vrot.slane %v8084, 7
  %v8227 = vsel %vm1770, %v8226, %v8225
  %v8228 = vrot.slane %v8085, 6
  %v8229 = vsel %vm1773, %v8228, %v8227
  %v8230 = vrot.slane %v8086, 5
  %v8231 = vsel %vm1776, %v8230, %v8229
  %v8232 = vrot.slane %v8087, 4
  %v8233 = vsel %vm1779, %v8232, %v8231
  %v8234 = vrot.slane %v8088, 3
  %v8235 = vsel %vm1782, %v8234, %v8233
  %v8236 = vrot.slane %v8089, 2
  %v8237 = vsel %vm1785, %v8236, %v8235
  %v8238 = vrot.slane %v8090, 1
  %v8241 = vmul.f32 %v8191, %v8237
  %v8242 = vmul.f32 %v8191, %v8238
  %v8243 = vmul.f32 %v8195, %v8237
  %v8244 = vmul.f32 %v8195, %v8238
  %v8245 = vmul.f32 %v8199, %v8237
  %v8246 = vmul.f32 %v8199, %v8238
  %v8247 = vmul.f32 %v8203, %v8237
  %v8248 = vmul.f32 %v8203, %v8238
  %v8249 = vmul.f32 %v8207, %v8237
  %v8250 = vmul.f32 %v8207, %v8238
  %v8251 = vmul.f32 %v8211, %v8237
  %v8252 = vmul.f32 %v8211, %v8238
  %v8253 = vmul.f32 %v8215, %v8237
  %v8254 = vmul.f32 %v8215, %v8238
  %v8255 = vmul.f32 %v8219, %v8237
  %v8256 = vmul.f32 %v8219, %v8238
  %v8257 = vmul.f32 %v8223, %v8237
  %v8258 = vmul.f32 %v8223, %v8238
  %v8259 = vadd.f32 %v8170, %v8241
  %v8260 = vadd.f32 %v8171, %v8242
  %v8261 = vadd.f32 %v8172, %v8243
  %v8262 = vadd.f32 %v8173, %v8244
  %v8263 = vadd.f32 %v8174, %v8245
  %v8264 = vadd.f32 %v8175, %v8246
  %v8265 = vadd.f32 %v8176, %v8247
  %v8266 = vadd.f32 %v8177, %v8248
  %v8267 = vadd.f32 %v8178, %v8249
  %v8268 = vadd.f32 %v8179, %v8250
  %v8269 = vadd.f32 %v8180, %v8251
  %v8270 = vadd.f32 %v8181, %v8252
  %v8271 = vadd.f32 %v8182, %v8253
  %v8272 = vadd.f32 %v8183, %v8254
  %v8273 = vadd.f32 %v8184, %v8255
  %v8274 = vadd.f32 %v8185, %v8256
  %v8275 = vadd.f32 %v8186, %v8257
  %v8276 = vadd.f32 %v8187, %v8258
  %v8277 = vlaneseq
  %v8278 = vshrl.u32 %v8277, 7
  %v8279 = vsub.s32 2, %v8278
  %v8280 = vrot.slane %v8073, %v8279
  %v8281 = vlaneseq
  %v8282 = vshrl.u32 %v8281, 7
  %v8283 = vsub.s32 2, %v8282
  %v8284 = vrot.slane %v8074, %v8283
  %v8285 = vlaneseq
  %v8286 = vshrl.u32 %v8285, 7
  %v8287 = vsub.s32 2, %v8286
  %v8288 = vrot.slane %v8075, %v8287
  %v8289 = vlaneseq
  %v8290 = vshrl.u32 %v8289, 7
  %v8291 = vsub.s32 2, %v8290
  %v8292 = vrot.slane %v8076, %v8291
  %v8293 = vlaneseq
  %v8294 = vshrl.u32 %v8293, 7
  %v8295 = vsub.s32 2, %v8294
  %v8296 = vrot.slane %v8077, %v8295
  %v8297 = vlaneseq
  %v8298 = vshrl.u32 %v8297, 7
  %v8299 = vsub.s32 2, %v8298
  %v8300 = vrot.slane %v8078, %v8299
  %v8301 = vlaneseq
  %v8302 = vshrl.u32 %v8301, 7
  %v8303 = vsub.s32 2, %v8302
  %v8304 = vrot.slane %v8079, %v8303
  %v8305 = vlaneseq
  %v8306 = vshrl.u32 %v8305, 7
  %v8307 = vsub.s32 2, %v8306
  %v8308 = vrot.slane %v8080, %v8307
  %v8309 = vlaneseq
  %v8310 = vshrl.u32 %v8309, 7
  %v8311 = vsub.s32 2, %v8310
  %v8312 = vrot.slane %v8081, %v8311
  %v8313 = vrot.slane %v8082, 2
  %v8314 = vrot.slane %v8083, 1
  %v8315 = vsel %vm1767, %v8314, %v8313
  %v8316 = vsel %vm1770, %v8084, %v8315
  %v8317 = vrot.slane %v8085, 7
  %v8318 = vsel %vm1773, %v8317, %v8316
  %v8319 = vrot.slane %v8086, 6
  %v8320 = vsel %vm1776, %v8319, %v8318
  %v8321 = vrot.slane %v8087, 5
  %v8322 = vsel %vm1779, %v8321, %v8320
  %v8323 = vrot.slane %v8088, 4
  %v8324 = vsel %vm1782, %v8323, %v8322
  %v8325 = vrot.slane %v8089, 3
  %v8326 = vsel %vm1785, %v8325, %v8324
  %v8327 = vrot.slane %v8090, 2
  %v8330 = vmul.f32 %v8280, %v8326
  %v8331 = vmul.f32 %v8280, %v8327
  %v8332 = vmul.f32 %v8284, %v8326
  %v8333 = vmul.f32 %v8284, %v8327
  %v8334 = vmul.f32 %v8288, %v8326
  %v8335 = vmul.f32 %v8288, %v8327
  %v8336 = vmul.f32 %v8292, %v8326
  %v8337 = vmul.f32 %v8292, %v8327
  %v8338 = vmul.f32 %v8296, %v8326
  %v8339 = vmul.f32 %v8296, %v8327
  %v8340 = vmul.f32 %v8300, %v8326
  %v8341 = vmul.f32 %v8300, %v8327
  %v8342 = vmul.f32 %v8304, %v8326
  %v8343 = vmul.f32 %v8304, %v8327
  %v8344 = vmul.f32 %v8308, %v8326
  %v8345 = vmul.f32 %v8308, %v8327
  %v8346 = vmul.f32 %v8312, %v8326
  %v8347 = vmul.f32 %v8312, %v8327
  %v8348 = vadd.f32 %v8259, %v8330
  %v8349 = vadd.f32 %v8260, %v8331
  %v8350 = vadd.f32 %v8261, %v8332
  %v8351 = vadd.f32 %v8262, %v8333
  %v8352 = vadd.f32 %v8263, %v8334
  %v8353 = vadd.f32 %v8264, %v8335
  %v8354 = vadd.f32 %v8265, %v8336
  %v8355 = vadd.f32 %v8266, %v8337
  %v8356 = vadd.f32 %v8267, %v8338
  %v8357 = vadd.f32 %v8268, %v8339
  %v8358 = vadd.f32 %v8269, %v8340
  %v8359 = vadd.f32 %v8270, %v8341
  %v8360 = vadd.f32 %v8271, %v8342
  %v8361 = vadd.f32 %v8272, %v8343
  %v8362 = vadd.f32 %v8273, %v8344
  %v8363 = vadd.f32 %v8274, %v8345
  %v8364 = vadd.f32 %v8275, %v8346
  %v8365 = vadd.f32 %v8276, %v8347
  %v8366 = vlaneseq
  %v8367 = vshrl.u32 %v8366, 7
  %v8368 = vsub.s32 3, %v8367
  %v8369 = vrot.slane %v8073, %v8368
  %v8370 = vlaneseq
  %v8371 = vshrl.u32 %v8370, 7
  %v8372 = vsub.s32 3, %v8371
  %v8373 = vrot.slane %v8074, %v8372
  %v8374 = vlaneseq
  %v8375 = vshrl.u32 %v8374, 7
  %v8376 = vsub.s32 3, %v8375
  %v8377 = vrot.slane %v8075, %v8376
  %v8378 = vlaneseq
  %v8379 = vshrl.u32 %v8378, 7
  %v8380 = vsub.s32 3, %v8379
  %v8381 = vrot.slane %v8076, %v8380
  %v8382 = vlaneseq
  %v8383 = vshrl.u32 %v8382, 7
  %v8384 = vsub.s32 3, %v8383
  %v8385 = vrot.slane %v8077, %v8384
  %v8386 = vlaneseq
  %v8387 = vshrl.u32 %v8386, 7
  %v8388 = vsub.s32 3, %v8387
  %v8389 = vrot.slane %v8078, %v8388
  %v8390 = vlaneseq
  %v8391 = vshrl.u32 %v8390, 7
  %v8392 = vsub.s32 3, %v8391
  %v8393 = vrot.slane %v8079, %v8392
  %v8394 = vlaneseq
  %v8395 = vshrl.u32 %v8394, 7
  %v8396 = vsub.s32 3, %v8395
  %v8397 = vrot.slane %v8080, %v8396
  %v8398 = vlaneseq
  %v8399 = vshrl.u32 %v8398, 7
  %v8400 = vsub.s32 3, %v8399
  %v8401 = vrot.slane %v8081, %v8400
  %v8402 = vrot.slane %v8082, 3
  %v8403 = vrot.slane %v8083, 2
  %v8404 = vsel %vm1767, %v8403, %v8402
  %v8405 = vrot.slane %v8084, 1
  %v8406 = vsel %vm1770, %v8405, %v8404
  %v8407 = vsel %vm1773, %v8085, %v8406
  %v8408 = vrot.slane %v8086, 7
  %v8409 = vsel %vm1776, %v8408, %v8407
  %v8410 = vrot.slane %v8087, 6
  %v8411 = vsel %vm1779, %v8410, %v8409
  %v8412 = vrot.slane %v8088, 5
  %v8413 = vsel %vm1782, %v8412, %v8411
  %v8414 = vrot.slane %v8089, 4
  %v8415 = vsel %vm1785, %v8414, %v8413
  %v8416 = vrot.slane %v8090, 3
  %v8419 = vmul.f32 %v8369, %v8415
  %v8420 = vmul.f32 %v8369, %v8416
  %v8421 = vmul.f32 %v8373, %v8415
  %v8422 = vmul.f32 %v8373, %v8416
  %v8423 = vmul.f32 %v8377, %v8415
  %v8424 = vmul.f32 %v8377, %v8416
  %v8425 = vmul.f32 %v8381, %v8415
  %v8426 = vmul.f32 %v8381, %v8416
  %v8427 = vmul.f32 %v8385, %v8415
  %v8428 = vmul.f32 %v8385, %v8416
  %v8429 = vmul.f32 %v8389, %v8415
  %v8430 = vmul.f32 %v8389, %v8416
  %v8431 = vmul.f32 %v8393, %v8415
  %v8432 = vmul.f32 %v8393, %v8416
  %v8433 = vmul.f32 %v8397, %v8415
  %v8434 = vmul.f32 %v8397, %v8416
  %v8435 = vmul.f32 %v8401, %v8415
  %v8436 = vmul.f32 %v8401, %v8416
  %v8437 = vadd.f32 %v8348, %v8419
  %v8438 = vadd.f32 %v8349, %v8420
  %v8439 = vadd.f32 %v8350, %v8421
  %v8440 = vadd.f32 %v8351, %v8422
  %v8441 = vadd.f32 %v8352, %v8423
  %v8442 = vadd.f32 %v8353, %v8424
  %v8443 = vadd.f32 %v8354, %v8425
  %v8444 = vadd.f32 %v8355, %v8426
  %v8445 = vadd.f32 %v8356, %v8427
  %v8446 = vadd.f32 %v8357, %v8428
  %v8447 = vadd.f32 %v8358, %v8429
  %v8448 = vadd.f32 %v8359, %v8430
  %v8449 = vadd.f32 %v8360, %v8431
  %v8450 = vadd.f32 %v8361, %v8432
  %v8451 = vadd.f32 %v8362, %v8433
  %v8452 = vadd.f32 %v8363, %v8434
  %v8453 = vadd.f32 %v8364, %v8435
  %v8454 = vadd.f32 %v8365, %v8436
  %v8455 = vlaneseq
  %v8456 = vshrl.u32 %v8455, 7
  %v8457 = vsub.s32 4, %v8456
  %v8458 = vrot.slane %v8073, %v8457
  %v8459 = vlaneseq
  %v8460 = vshrl.u32 %v8459, 7
  %v8461 = vsub.s32 4, %v8460
  %v8462 = vrot.slane %v8074, %v8461
  %v8463 = vlaneseq
  %v8464 = vshrl.u32 %v8463, 7
  %v8465 = vsub.s32 4, %v8464
  %v8466 = vrot.slane %v8075, %v8465
  %v8467 = vlaneseq
  %v8468 = vshrl.u32 %v8467, 7
  %v8469 = vsub.s32 4, %v8468
  %v8470 = vrot.slane %v8076, %v8469
  %v8471 = vlaneseq
  %v8472 = vshrl.u32 %v8471, 7
  %v8473 = vsub.s32 4, %v8472
  %v8474 = vrot.slane %v8077, %v8473
  %v8475 = vlaneseq
  %v8476 = vshrl.u32 %v8475, 7
  %v8477 = vsub.s32 4, %v8476
  %v8478 = vrot.slane %v8078, %v8477
  %v8479 = vlaneseq
  %v8480 = vshrl.u32 %v8479, 7
  %v8481 = vsub.s32 4, %v8480
  %v8482 = vrot.slane %v8079, %v8481
  %v8483 = vlaneseq
  %v8484 = vshrl.u32 %v8483, 7
  %v8485 = vsub.s32 4, %v8484
  %v8486 = vrot.slane %v8080, %v8485
  %v8487 = vlaneseq
  %v8488 = vshrl.u32 %v8487, 7
  %v8489 = vsub.s32 4, %v8488
  %v8490 = vrot.slane %v8081, %v8489
  %v8491 = vrot.slane %v8082, 4
  %v8492 = vrot.slane %v8083, 3
  %v8493 = vsel %vm1767, %v8492, %v8491
  %v8494 = vrot.slane %v8084, 2
  %v8495 = vsel %vm1770, %v8494, %v8493
  %v8496 = vrot.slane %v8085, 1
  %v8497 = vsel %vm1773, %v8496, %v8495
  %v8498 = vsel %vm1776, %v8086, %v8497
  %v8499 = vrot.slane %v8087, 7
  %v8500 = vsel %vm1779, %v8499, %v8498
  %v8501 = vrot.slane %v8088, 6
  %v8502 = vsel %vm1782, %v8501, %v8500
  %v8503 = vrot.slane %v8089, 5
  %v8504 = vsel %vm1785, %v8503, %v8502
  %v8505 = vrot.slane %v8090, 4
  %v8508 = vmul.f32 %v8458, %v8504
  %v8509 = vmul.f32 %v8458, %v8505
  %v8510 = vmul.f32 %v8462, %v8504
  %v8511 = vmul.f32 %v8462, %v8505
  %v8512 = vmul.f32 %v8466, %v8504
  %v8513 = vmul.f32 %v8466, %v8505
  %v8514 = vmul.f32 %v8470, %v8504
  %v8515 = vmul.f32 %v8470, %v8505
  %v8516 = vmul.f32 %v8474, %v8504
  %v8517 = vmul.f32 %v8474, %v8505
  %v8518 = vmul.f32 %v8478, %v8504
  %v8519 = vmul.f32 %v8478, %v8505
  %v8520 = vmul.f32 %v8482, %v8504
  %v8521 = vmul.f32 %v8482, %v8505
  %v8522 = vmul.f32 %v8486, %v8504
  %v8523 = vmul.f32 %v8486, %v8505
  %v8524 = vmul.f32 %v8490, %v8504
  %v8525 = vmul.f32 %v8490, %v8505
  %v8526 = vadd.f32 %v8437, %v8508
  %v8527 = vadd.f32 %v8438, %v8509
  %v8528 = vadd.f32 %v8439, %v8510
  %v8529 = vadd.f32 %v8440, %v8511
  %v8530 = vadd.f32 %v8441, %v8512
  %v8531 = vadd.f32 %v8442, %v8513
  %v8532 = vadd.f32 %v8443, %v8514
  %v8533 = vadd.f32 %v8444, %v8515
  %v8534 = vadd.f32 %v8445, %v8516
  %v8535 = vadd.f32 %v8446, %v8517
  %v8536 = vadd.f32 %v8447, %v8518
  %v8537 = vadd.f32 %v8448, %v8519
  %v8538 = vadd.f32 %v8449, %v8520
  %v8539 = vadd.f32 %v8450, %v8521
  %v8540 = vadd.f32 %v8451, %v8522
  %v8541 = vadd.f32 %v8452, %v8523
  %v8542 = vadd.f32 %v8453, %v8524
  %v8543 = vadd.f32 %v8454, %v8525
  %v8544 = vlaneseq
  %v8545 = vshrl.u32 %v8544, 7
  %v8546 = vsub.s32 5, %v8545
  %v8547 = vrot.slane %v8073, %v8546
  %v8548 = vlaneseq
  %v8549 = vshrl.u32 %v8548, 7
  %v8550 = vsub.s32 5, %v8549
  %v8551 = vrot.slane %v8074, %v8550
  %v8552 = vlaneseq
  %v8553 = vshrl.u32 %v8552, 7
  %v8554 = vsub.s32 5, %v8553
  %v8555 = vrot.slane %v8075, %v8554
  %v8556 = vlaneseq
  %v8557 = vshrl.u32 %v8556, 7
  %v8558 = vsub.s32 5, %v8557
  %v8559 = vrot.slane %v8076, %v8558
  %v8560 = vlaneseq
  %v8561 = vshrl.u32 %v8560, 7
  %v8562 = vsub.s32 5, %v8561
  %v8563 = vrot.slane %v8077, %v8562
  %v8564 = vlaneseq
  %v8565 = vshrl.u32 %v8564, 7
  %v8566 = vsub.s32 5, %v8565
  %v8567 = vrot.slane %v8078, %v8566
  %v8568 = vlaneseq
  %v8569 = vshrl.u32 %v8568, 7
  %v8570 = vsub.s32 5, %v8569
  %v8571 = vrot.slane %v8079, %v8570
  %v8572 = vlaneseq
  %v8573 = vshrl.u32 %v8572, 7
  %v8574 = vsub.s32 5, %v8573
  %v8575 = vrot.slane %v8080, %v8574
  %v8576 = vlaneseq
  %v8577 = vshrl.u32 %v8576, 7
  %v8578 = vsub.s32 5, %v8577
  %v8579 = vrot.slane %v8081, %v8578
  %v8580 = vrot.slane %v8082, 5
  %v8581 = vrot.slane %v8083, 4
  %v8582 = vsel %vm1767, %v8581, %v8580
  %v8583 = vrot.slane %v8084, 3
  %v8584 = vsel %vm1770, %v8583, %v8582
  %v8585 = vrot.slane %v8085, 2
  %v8586 = vsel %vm1773, %v8585, %v8584
  %v8587 = vrot.slane %v8086, 1
  %v8588 = vsel %vm1776, %v8587, %v8586
  %v8589 = vsel %vm1779, %v8087, %v8588
  %v8590 = vrot.slane %v8088, 7
  %v8591 = vsel %vm1782, %v8590, %v8589
  %v8592 = vrot.slane %v8089, 6
  %v8593 = vsel %vm1785, %v8592, %v8591
  %v8594 = vrot.slane %v8090, 5
  %v8597 = vmul.f32 %v8547, %v8593
  %v8598 = vmul.f32 %v8547, %v8594
  %v8599 = vmul.f32 %v8551, %v8593
  %v8600 = vmul.f32 %v8551, %v8594
  %v8601 = vmul.f32 %v8555, %v8593
  %v8602 = vmul.f32 %v8555, %v8594
  %v8603 = vmul.f32 %v8559, %v8593
  %v8604 = vmul.f32 %v8559, %v8594
  %v8605 = vmul.f32 %v8563, %v8593
  %v8606 = vmul.f32 %v8563, %v8594
  %v8607 = vmul.f32 %v8567, %v8593
  %v8608 = vmul.f32 %v8567, %v8594
  %v8609 = vmul.f32 %v8571, %v8593
  %v8610 = vmul.f32 %v8571, %v8594
  %v8611 = vmul.f32 %v8575, %v8593
  %v8612 = vmul.f32 %v8575, %v8594
  %v8613 = vmul.f32 %v8579, %v8593
  %v8614 = vmul.f32 %v8579, %v8594
  %v8615 = vadd.f32 %v8526, %v8597
  %v8616 = vadd.f32 %v8527, %v8598
  %v8617 = vadd.f32 %v8528, %v8599
  %v8618 = vadd.f32 %v8529, %v8600
  %v8619 = vadd.f32 %v8530, %v8601
  %v8620 = vadd.f32 %v8531, %v8602
  %v8621 = vadd.f32 %v8532, %v8603
  %v8622 = vadd.f32 %v8533, %v8604
  %v8623 = vadd.f32 %v8534, %v8605
  %v8624 = vadd.f32 %v8535, %v8606
  %v8625 = vadd.f32 %v8536, %v8607
  %v8626 = vadd.f32 %v8537, %v8608
  %v8627 = vadd.f32 %v8538, %v8609
  %v8628 = vadd.f32 %v8539, %v8610
  %v8629 = vadd.f32 %v8540, %v8611
  %v8630 = vadd.f32 %v8541, %v8612
  %v8631 = vadd.f32 %v8542, %v8613
  %v8632 = vadd.f32 %v8543, %v8614
  %v8633 = vlaneseq
  %v8634 = vshrl.u32 %v8633, 7
  %v8635 = vsub.s32 6, %v8634
  %v8636 = vrot.slane %v8073, %v8635
  %v8637 = vlaneseq
  %v8638 = vshrl.u32 %v8637, 7
  %v8639 = vsub.s32 6, %v8638
  %v8640 = vrot.slane %v8074, %v8639
  %v8641 = vlaneseq
  %v8642 = vshrl.u32 %v8641, 7
  %v8643 = vsub.s32 6, %v8642
  %v8644 = vrot.slane %v8075, %v8643
  %v8645 = vlaneseq
  %v8646 = vshrl.u32 %v8645, 7
  %v8647 = vsub.s32 6, %v8646
  %v8648 = vrot.slane %v8076, %v8647
  %v8649 = vlaneseq
  %v8650 = vshrl.u32 %v8649, 7
  %v8651 = vsub.s32 6, %v8650
  %v8652 = vrot.slane %v8077, %v8651
  %v8653 = vlaneseq
  %v8654 = vshrl.u32 %v8653, 7
  %v8655 = vsub.s32 6, %v8654
  %v8656 = vrot.slane %v8078, %v8655
  %v8657 = vlaneseq
  %v8658 = vshrl.u32 %v8657, 7
  %v8659 = vsub.s32 6, %v8658
  %v8660 = vrot.slane %v8079, %v8659
  %v8661 = vlaneseq
  %v8662 = vshrl.u32 %v8661, 7
  %v8663 = vsub.s32 6, %v8662
  %v8664 = vrot.slane %v8080, %v8663
  %v8665 = vlaneseq
  %v8666 = vshrl.u32 %v8665, 7
  %v8667 = vsub.s32 6, %v8666
  %v8668 = vrot.slane %v8081, %v8667
  %v8669 = vrot.slane %v8082, 6
  %v8670 = vrot.slane %v8083, 5
  %v8671 = vsel %vm1767, %v8670, %v8669
  %v8672 = vrot.slane %v8084, 4
  %v8673 = vsel %vm1770, %v8672, %v8671
  %v8674 = vrot.slane %v8085, 3
  %v8675 = vsel %vm1773, %v8674, %v8673
  %v8676 = vrot.slane %v8086, 2
  %v8677 = vsel %vm1776, %v8676, %v8675
  %v8678 = vrot.slane %v8087, 1
  %v8679 = vsel %vm1779, %v8678, %v8677
  %v8680 = vsel %vm1782, %v8088, %v8679
  %v8681 = vrot.slane %v8089, 7
  %v8682 = vsel %vm1785, %v8681, %v8680
  %v8683 = vrot.slane %v8090, 6
  %v8686 = vmul.f32 %v8636, %v8682
  %v8687 = vmul.f32 %v8636, %v8683
  %v8688 = vmul.f32 %v8640, %v8682
  %v8689 = vmul.f32 %v8640, %v8683
  %v8690 = vmul.f32 %v8644, %v8682
  %v8691 = vmul.f32 %v8644, %v8683
  %v8692 = vmul.f32 %v8648, %v8682
  %v8693 = vmul.f32 %v8648, %v8683
  %v8694 = vmul.f32 %v8652, %v8682
  %v8695 = vmul.f32 %v8652, %v8683
  %v8696 = vmul.f32 %v8656, %v8682
  %v8697 = vmul.f32 %v8656, %v8683
  %v8698 = vmul.f32 %v8660, %v8682
  %v8699 = vmul.f32 %v8660, %v8683
  %v8700 = vmul.f32 %v8664, %v8682
  %v8701 = vmul.f32 %v8664, %v8683
  %v8702 = vmul.f32 %v8668, %v8682
  %v8703 = vmul.f32 %v8668, %v8683
  %v8704 = vadd.f32 %v8615, %v8686
  %v8705 = vadd.f32 %v8616, %v8687
  %v8706 = vadd.f32 %v8617, %v8688
  %v8707 = vadd.f32 %v8618, %v8689
  %v8708 = vadd.f32 %v8619, %v8690
  %v8709 = vadd.f32 %v8620, %v8691
  %v8710 = vadd.f32 %v8621, %v8692
  %v8711 = vadd.f32 %v8622, %v8693
  %v8712 = vadd.f32 %v8623, %v8694
  %v8713 = vadd.f32 %v8624, %v8695
  %v8714 = vadd.f32 %v8625, %v8696
  %v8715 = vadd.f32 %v8626, %v8697
  %v8716 = vadd.f32 %v8627, %v8698
  %v8717 = vadd.f32 %v8628, %v8699
  %v8718 = vadd.f32 %v8629, %v8700
  %v8719 = vadd.f32 %v8630, %v8701
  %v8720 = vadd.f32 %v8631, %v8702
  %v8721 = vadd.f32 %v8632, %v8703
  %v8722 = vlaneseq
  %v8723 = vshrl.u32 %v8722, 7
  %v8724 = vsub.s32 7, %v8723
  %v8725 = vrot.slane %v8073, %v8724
  %v8726 = vlaneseq
  %v8727 = vshrl.u32 %v8726, 7
  %v8728 = vsub.s32 7, %v8727
  %v8729 = vrot.slane %v8074, %v8728
  %v8730 = vlaneseq
  %v8731 = vshrl.u32 %v8730, 7
  %v8732 = vsub.s32 7, %v8731
  %v8733 = vrot.slane %v8075, %v8732
  %v8734 = vlaneseq
  %v8735 = vshrl.u32 %v8734, 7
  %v8736 = vsub.s32 7, %v8735
  %v8737 = vrot.slane %v8076, %v8736
  %v8738 = vlaneseq
  %v8739 = vshrl.u32 %v8738, 7
  %v8740 = vsub.s32 7, %v8739
  %v8741 = vrot.slane %v8077, %v8740
  %v8742 = vlaneseq
  %v8743 = vshrl.u32 %v8742, 7
  %v8744 = vsub.s32 7, %v8743
  %v8745 = vrot.slane %v8078, %v8744
  %v8746 = vlaneseq
  %v8747 = vshrl.u32 %v8746, 7
  %v8748 = vsub.s32 7, %v8747
  %v8749 = vrot.slane %v8079, %v8748
  %v8750 = vlaneseq
  %v8751 = vshrl.u32 %v8750, 7
  %v8752 = vsub.s32 7, %v8751
  %v8753 = vrot.slane %v8080, %v8752
  %v8754 = vlaneseq
  %v8755 = vshrl.u32 %v8754, 7
  %v8756 = vsub.s32 7, %v8755
  %v8757 = vrot.slane %v8081, %v8756
  %v8758 = vrot.slane %v8082, 7
  %v8759 = vrot.slane %v8083, 6
  %v8760 = vsel %vm1767, %v8759, %v8758
  %v8761 = vrot.slane %v8084, 5
  %v8762 = vsel %vm1770, %v8761, %v8760
  %v8763 = vrot.slane %v8085, 4
  %v8764 = vsel %vm1773, %v8763, %v8762
  %v8765 = vrot.slane %v8086, 3
  %v8766 = vsel %vm1776, %v8765, %v8764
  %v8767 = vrot.slane %v8087, 2
  %v8768 = vsel %vm1779, %v8767, %v8766
  %v8769 = vrot.slane %v8088, 1
  %v8770 = vsel %vm1782, %v8769, %v8768
  %v8771 = vsel %vm1785, %v8089, %v8770
  %v8772 = vrot.slane %v8090, 7
  %v8775 = vmul.f32 %v8725, %v8771
  %v8776 = vmul.f32 %v8725, %v8772
  %v8777 = vmul.f32 %v8729, %v8771
  %v8778 = vmul.f32 %v8729, %v8772
  %v8779 = vmul.f32 %v8733, %v8771
  %v8780 = vmul.f32 %v8733, %v8772
  %v8781 = vmul.f32 %v8737, %v8771
  %v8782 = vmul.f32 %v8737, %v8772
  %v8783 = vmul.f32 %v8741, %v8771
  %v8784 = vmul.f32 %v8741, %v8772
  %v8785 = vmul.f32 %v8745, %v8771
  %v8786 = vmul.f32 %v8745, %v8772
  %v8787 = vmul.f32 %v8749, %v8771
  %v8788 = vmul.f32 %v8749, %v8772
  %v8789 = vmul.f32 %v8753, %v8771
  %v8790 = vmul.f32 %v8753, %v8772
  %v8791 = vmul.f32 %v8757, %v8771
  %v8792 = vmul.f32 %v8757, %v8772
  %v8793 = vadd.f32 %v8704, %v8775
  %v8794 = vadd.f32 %v8705, %v8776
  %v8795 = vadd.f32 %v8706, %v8777
  %v8796 = vadd.f32 %v8707, %v8778
  %v8797 = vadd.f32 %v8708, %v8779
  %v8798 = vadd.f32 %v8709, %v8780
  %v8799 = vadd.f32 %v8710, %v8781
  %v8800 = vadd.f32 %v8711, %v8782
  %v8801 = vadd.f32 %v8712, %v8783
  %v8802 = vadd.f32 %v8713, %v8784
  %v8803 = vadd.f32 %v8714, %v8785
  %v8804 = vadd.f32 %v8715, %v8786
  %v8805 = vadd.f32 %v8716, %v8787
  %v8806 = vadd.f32 %v8717, %v8788
  %v8807 = vadd.f32 %v8718, %v8789
  %v8808 = vadd.f32 %v8719, %v8790
  %v8809 = vadd.f32 %v8720, %v8791
  %v8810 = vadd.f32 %v8721, %v8792
  %v8811 = vmul.f32 %v8793, 0.35355338
  %v8812 = vmul.f32 %v8794, 0.35355338
  %v8813 = vmul.f32 %v8795, 0.35355338
  %v8814 = vmul.f32 %v8796, 0.35355338
  %v8815 = vmul.f32 %v8797, 0.35355338
  %v8816 = vmul.f32 %v8798, 0.35355338
  %v8817 = vmul.f32 %v8799, 0.35355338
  %v8818 = vmul.f32 %v8800, 0.35355338
  %v8819 = vmul.f32 %v8801, 0.35355338
  %v8820 = vmul.f32 %v8802, 0.35355338
  %v8821 = vmul.f32 %v8803, 0.35355338
  %v8822 = vmul.f32 %v8804, 0.35355338
  %v8823 = vmul.f32 %v8805, 0.35355338
  %v8824 = vmul.f32 %v8806, 0.35355338
  %v8825 = vmul.f32 %v8807, 0.35355338
  %v8826 = vmul.f32 %v8808, 0.35355338
  %v8827 = vmul.f32 %v8809, 0.35355338
  %v8828 = vmul.f32 %v8810, 0.35355338
  %v8838 = vrot.slane %v8811, 1
  %v8839 = vrot.slane %v8813, 1
  %v8840 = vrot.slane %v8815, 1
  %v8841 = vrot.slane %v8817, 1
  %v8842 = vrot.slane %v8819, 1
  %v8843 = vrot.slane %v8821, 1
  %v8844 = vrot.slane %v8823, 1
  %v8845 = vrot.slane %v8825, 1
  %v8846 = vrot.slane %v8827, 1
  %v8856 = vmax.f32 %v8811, %v8838
  %v8857 = vmax.f32 %v8813, %v8839
  %v8858 = vmax.f32 %v8815, %v8840
  %v8859 = vmax.f32 %v8817, %v8841
  %v8860 = vmax.f32 %v8819, %v8842
  %v8861 = vmax.f32 %v8821, %v8843
  %v8862 = vmax.f32 %v8823, %v8844
  %v8863 = vmax.f32 %v8825, %v8845
  %v8864 = vmax.f32 %v8827, %v8846
  %v8865 = vrot.slane %v8811, 2
  %v8866 = vrot.slane %v8813, 2
  %v8867 = vrot.slane %v8815, 2
  %v8868 = vrot.slane %v8817, 2
  %v8869 = vrot.slane %v8819, 2
  %v8870 = vrot.slane %v8821, 2
  %v8871 = vrot.slane %v8823, 2
  %v8872 = vrot.slane %v8825, 2
  %v8873 = vrot.slane %v8827, 2
  %v8883 = vmax.f32 %v8856, %v8865
  %v8884 = vmax.f32 %v8857, %v8866
  %v8885 = vmax.f32 %v8858, %v8867
  %v8886 = vmax.f32 %v8859, %v8868
  %v8887 = vmax.f32 %v8860, %v8869
  %v8888 = vmax.f32 %v8861, %v8870
  %v8889 = vmax.f32 %v8862, %v8871
  %v8890 = vmax.f32 %v8863, %v8872
  %v8891 = vmax.f32 %v8864, %v8873
  %v8892 = vrot.slane %v8811, 3
  %v8893 = vrot.slane %v8813, 3
  %v8894 = vrot.slane %v8815, 3
  %v8895 = vrot.slane %v8817, 3
  %v8896 = vrot.slane %v8819, 3
  %v8897 = vrot.slane %v8821, 3
  %v8898 = vrot.slane %v8823, 3
  %v8899 = vrot.slane %v8825, 3
  %v8900 = vrot.slane %v8827, 3
  %v8910 = vmax.f32 %v8883, %v8892
  %v8911 = vmax.f32 %v8884, %v8893
  %v8912 = vmax.f32 %v8885, %v8894
  %v8913 = vmax.f32 %v8886, %v8895
  %v8914 = vmax.f32 %v8887, %v8896
  %v8915 = vmax.f32 %v8888, %v8897
  %v8916 = vmax.f32 %v8889, %v8898
  %v8917 = vmax.f32 %v8890, %v8899
  %v8918 = vmax.f32 %v8891, %v8900
  %v8919 = vrot.slane %v8811, 4
  %v8920 = vrot.slane %v8813, 4
  %v8921 = vrot.slane %v8815, 4
  %v8922 = vrot.slane %v8817, 4
  %v8923 = vrot.slane %v8819, 4
  %v8924 = vrot.slane %v8821, 4
  %v8925 = vrot.slane %v8823, 4
  %v8926 = vrot.slane %v8825, 4
  %v8927 = vrot.slane %v8827, 4
  %v8937 = vmax.f32 %v8910, %v8919
  %v8938 = vmax.f32 %v8911, %v8920
  %v8939 = vmax.f32 %v8912, %v8921
  %v8940 = vmax.f32 %v8913, %v8922
  %v8941 = vmax.f32 %v8914, %v8923
  %v8942 = vmax.f32 %v8915, %v8924
  %v8943 = vmax.f32 %v8916, %v8925
  %v8944 = vmax.f32 %v8917, %v8926
  %v8945 = vmax.f32 %v8918, %v8927
  %v8946 = vrot.slane %v8811, 5
  %v8947 = vrot.slane %v8813, 5
  %v8948 = vrot.slane %v8815, 5
  %v8949 = vrot.slane %v8817, 5
  %v8950 = vrot.slane %v8819, 5
  %v8951 = vrot.slane %v8821, 5
  %v8952 = vrot.slane %v8823, 5
  %v8953 = vrot.slane %v8825, 5
  %v8954 = vrot.slane %v8827, 5
  %v8964 = vmax.f32 %v8937, %v8946
  %v8965 = vmax.f32 %v8938, %v8947
  %v8966 = vmax.f32 %v8939, %v8948
  %v8967 = vmax.f32 %v8940, %v8949
  %v8968 = vmax.f32 %v8941, %v8950
  %v8969 = vmax.f32 %v8942, %v8951
  %v8970 = vmax.f32 %v8943, %v8952
  %v8971 = vmax.f32 %v8944, %v8953
  %v8972 = vmax.f32 %v8945, %v8954
  %v8973 = vrot.slane %v8811, 6
  %v8974 = vrot.slane %v8813, 6
  %v8975 = vrot.slane %v8815, 6
  %v8976 = vrot.slane %v8817, 6
  %v8977 = vrot.slane %v8819, 6
  %v8978 = vrot.slane %v8821, 6
  %v8979 = vrot.slane %v8823, 6
  %v8980 = vrot.slane %v8825, 6
  %v8981 = vrot.slane %v8827, 6
  %v8991 = vmax.f32 %v8964, %v8973
  %v8992 = vmax.f32 %v8965, %v8974
  %v8993 = vmax.f32 %v8966, %v8975
  %v8994 = vmax.f32 %v8967, %v8976
  %v8995 = vmax.f32 %v8968, %v8977
  %v8996 = vmax.f32 %v8969, %v8978
  %v8997 = vmax.f32 %v8970, %v8979
  %v8998 = vmax.f32 %v8971, %v8980
  %v8999 = vmax.f32 %v8972, %v8981
  %v9000 = vrot.slane %v8811, 7
  %v9001 = vrot.slane %v8813, 7
  %v9002 = vrot.slane %v8815, 7
  %v9003 = vrot.slane %v8817, 7
  %v9004 = vrot.slane %v8819, 7
  %v9005 = vrot.slane %v8821, 7
  %v9006 = vrot.slane %v8823, 7
  %v9007 = vrot.slane %v8825, 7
  %v9008 = vrot.slane %v8827, 7
  %v9018 = vmax.f32 %v8991, %v9000
  %v9019 = vmax.f32 %v8992, %v9001
  %v9020 = vmax.f32 %v8993, %v9002
  %v9021 = vmax.f32 %v8994, %v9003
  %v9022 = vmax.f32 %v8995, %v9004
  %v9023 = vmax.f32 %v8996, %v9005
  %v9024 = vmax.f32 %v8997, %v9006
  %v9025 = vmax.f32 %v8998, %v9007
  %v9026 = vmax.f32 %v8999, %v9008
  %v9027 = vmax.f32 %v9018, %v8812
  %v9028 = vmax.f32 %v9019, %v8814
  %v9029 = vmax.f32 %v9020, %v8816
  %v9030 = vmax.f32 %v9021, %v8818
  %v9031 = vmax.f32 %v9022, %v8820
  %v9032 = vmax.f32 %v9023, %v8822
  %v9033 = vmax.f32 %v9024, %v8824
  %v9034 = vmax.f32 %v9025, %v8826
  %v9035 = vmax.f32 %v9026, %v8828
  %v9036 = vlaneseq
  %v9037 = vshrl.u32 %v9036, 7
  %v9038 = vsub.s32 0, %v9037
  %v9039 = vrot.slane %v9027, %v9038
  %v9040 = vlaneseq
  %v9041 = vshrl.u32 %v9040, 7
  %v9042 = vsub.s32 0, %v9041
  %v9043 = vrot.slane %v9028, %v9042
  %v9044 = vlaneseq
  %v9045 = vshrl.u32 %v9044, 7
  %v9046 = vsub.s32 0, %v9045
  %v9047 = vrot.slane %v9029, %v9046
  %v9048 = vlaneseq
  %v9049 = vshrl.u32 %v9048, 7
  %v9050 = vsub.s32 0, %v9049
  %v9051 = vrot.slane %v9030, %v9050
  %v9052 = vlaneseq
  %v9053 = vshrl.u32 %v9052, 7
  %v9054 = vsub.s32 0, %v9053
  %v9055 = vrot.slane %v9031, %v9054
  %v9056 = vlaneseq
  %v9057 = vshrl.u32 %v9056, 7
  %v9058 = vsub.s32 0, %v9057
  %v9059 = vrot.slane %v9032, %v9058
  %v9060 = vlaneseq
  %v9061 = vshrl.u32 %v9060, 7
  %v9062 = vsub.s32 0, %v9061
  %v9063 = vrot.slane %v9033, %v9062
  %v9064 = vlaneseq
  %v9065 = vshrl.u32 %v9064, 7
  %v9066 = vsub.s32 0, %v9065
  %v9067 = vrot.slane %v9034, %v9066
  %v9068 = vlaneseq
  %v9069 = vshrl.u32 %v9068, 7
  %v9070 = vsub.s32 0, %v9069
  %v9071 = vrot.slane %v9035, %v9070
  %v9072 = vsub.f32 %v8811, %v9039
  %v9073 = vsub.f32 %v8812, %v9039
  %v9074 = vsub.f32 %v8813, %v9043
  %v9075 = vsub.f32 %v8814, %v9043
  %v9076 = vsub.f32 %v8815, %v9047
  %v9077 = vsub.f32 %v8816, %v9047
  %v9078 = vsub.f32 %v8817, %v9051
  %v9079 = vsub.f32 %v8818, %v9051
  %v9080 = vsub.f32 %v8819, %v9055
  %v9081 = vsub.f32 %v8820, %v9055
  %v9082 = vsub.f32 %v8821, %v9059
  %v9083 = vsub.f32 %v8822, %v9059
  %v9084 = vsub.f32 %v8823, %v9063
  %v9085 = vsub.f32 %v8824, %v9063
  %v9086 = vsub.f32 %v8825, %v9067
  %v9087 = vsub.f32 %v8826, %v9067
  %v9088 = vsub.f32 %v8827, %v9071
  %v9089 = vsub.f32 %v8828, %v9071
  %v9090 = vmul.f32 %v9072, 1.442695
  %v9091 = vpow.pop %v9090
  %v9092 = vmul.f32 %v9073, 1.442695
  %v9093 = vpow.pop %v9092
  %v9094 = vmul.f32 %v9074, 1.442695
  %v9095 = vpow.pop %v9094
  %v9096 = vmul.f32 %v9075, 1.442695
  %v9097 = vpow.pop %v9096
  %v9098 = vmul.f32 %v9076, 1.442695
  %v9099 = vpow.pop %v9098
  %v9100 = vmul.f32 %v9077, 1.442695
  %v9101 = vpow.pop %v9100
  %v9102 = vmul.f32 %v9078, 1.442695
  %v9103 = vpow.pop %v9102
  %v9104 = vmul.f32 %v9079, 1.442695
  %v9105 = vpow.pop %v9104
  %v9106 = vmul.f32 %v9080, 1.442695
  %v9107 = vpow.pop %v9106
  %v9108 = vmul.f32 %v9081, 1.442695
  %v9109 = vpow.pop %v9108
  %v9110 = vmul.f32 %v9082, 1.442695
  %v9111 = vpow.pop %v9110
  %v9112 = vmul.f32 %v9083, 1.442695
  %v9113 = vpow.pop %v9112
  %v9114 = vmul.f32 %v9084, 1.442695
  %v9115 = vpow.pop %v9114
  %v9116 = vmul.f32 %v9085, 1.442695
  %v9117 = vpow.pop %v9116
  %v9118 = vmul.f32 %v9086, 1.442695
  %v9119 = vpow.pop %v9118
  %v9120 = vmul.f32 %v9087, 1.442695
  %v9121 = vpow.pop %v9120
  %v9122 = vmul.f32 %v9088, 1.442695
  %v9123 = vpow.pop %v9122
  %v9124 = vmul.f32 %v9089, 1.442695
  %v9125 = vpow.pop %v9124
  %v9135 = vrot.slane %v9091, 1
  %v9136 = vrot.slane %v9095, 1
  %v9137 = vrot.slane %v9099, 1
  %v9138 = vrot.slane %v9103, 1
  %v9139 = vrot.slane %v9107, 1
  %v9140 = vrot.slane %v9111, 1
  %v9141 = vrot.slane %v9115, 1
  %v9142 = vrot.slane %v9119, 1
  %v9143 = vrot.slane %v9123, 1
  %v9153 = vadd.f32 %v9091, %v9135
  %v9154 = vadd.f32 %v9095, %v9136
  %v9155 = vadd.f32 %v9099, %v9137
  %v9156 = vadd.f32 %v9103, %v9138
  %v9157 = vadd.f32 %v9107, %v9139
  %v9158 = vadd.f32 %v9111, %v9140
  %v9159 = vadd.f32 %v9115, %v9141
  %v9160 = vadd.f32 %v9119, %v9142
  %v9161 = vadd.f32 %v9123, %v9143
  %v9162 = vrot.slane %v9091, 2
  %v9163 = vrot.slane %v9095, 2
  %v9164 = vrot.slane %v9099, 2
  %v9165 = vrot.slane %v9103, 2
  %v9166 = vrot.slane %v9107, 2
  %v9167 = vrot.slane %v9111, 2
  %v9168 = vrot.slane %v9115, 2
  %v9169 = vrot.slane %v9119, 2
  %v9170 = vrot.slane %v9123, 2
  %v9180 = vadd.f32 %v9153, %v9162
  %v9181 = vadd.f32 %v9154, %v9163
  %v9182 = vadd.f32 %v9155, %v9164
  %v9183 = vadd.f32 %v9156, %v9165
  %v9184 = vadd.f32 %v9157, %v9166
  %v9185 = vadd.f32 %v9158, %v9167
  %v9186 = vadd.f32 %v9159, %v9168
  %v9187 = vadd.f32 %v9160, %v9169
  %v9188 = vadd.f32 %v9161, %v9170
  %v9189 = vrot.slane %v9091, 3
  %v9190 = vrot.slane %v9095, 3
  %v9191 = vrot.slane %v9099, 3
  %v9192 = vrot.slane %v9103, 3
  %v9193 = vrot.slane %v9107, 3
  %v9194 = vrot.slane %v9111, 3
  %v9195 = vrot.slane %v9115, 3
  %v9196 = vrot.slane %v9119, 3
  %v9197 = vrot.slane %v9123, 3
  %v9207 = vadd.f32 %v9180, %v9189
  %v9208 = vadd.f32 %v9181, %v9190
  %v9209 = vadd.f32 %v9182, %v9191
  %v9210 = vadd.f32 %v9183, %v9192
  %v9211 = vadd.f32 %v9184, %v9193
  %v9212 = vadd.f32 %v9185, %v9194
  %v9213 = vadd.f32 %v9186, %v9195
  %v9214 = vadd.f32 %v9187, %v9196
  %v9215 = vadd.f32 %v9188, %v9197
  %v9216 = vrot.slane %v9091, 4
  %v9217 = vrot.slane %v9095, 4
  %v9218 = vrot.slane %v9099, 4
  %v9219 = vrot.slane %v9103, 4
  %v9220 = vrot.slane %v9107, 4
  %v9221 = vrot.slane %v9111, 4
  %v9222 = vrot.slane %v9115, 4
  %v9223 = vrot.slane %v9119, 4
  %v9224 = vrot.slane %v9123, 4
  %v9234 = vadd.f32 %v9207, %v9216
  %v9235 = vadd.f32 %v9208, %v9217
  %v9236 = vadd.f32 %v9209, %v9218
  %v9237 = vadd.f32 %v9210, %v9219
  %v9238 = vadd.f32 %v9211, %v9220
  %v9239 = vadd.f32 %v9212, %v9221
  %v9240 = vadd.f32 %v9213, %v9222
  %v9241 = vadd.f32 %v9214, %v9223
  %v9242 = vadd.f32 %v9215, %v9224
  %v9243 = vrot.slane %v9091, 5
  %v9244 = vrot.slane %v9095, 5
  %v9245 = vrot.slane %v9099, 5
  %v9246 = vrot.slane %v9103, 5
  %v9247 = vrot.slane %v9107, 5
  %v9248 = vrot.slane %v9111, 5
  %v9249 = vrot.slane %v9115, 5
  %v9250 = vrot.slane %v9119, 5
  %v9251 = vrot.slane %v9123, 5
  %v9261 = vadd.f32 %v9234, %v9243
  %v9262 = vadd.f32 %v9235, %v9244
  %v9263 = vadd.f32 %v9236, %v9245
  %v9264 = vadd.f32 %v9237, %v9246
  %v9265 = vadd.f32 %v9238, %v9247
  %v9266 = vadd.f32 %v9239, %v9248
  %v9267 = vadd.f32 %v9240, %v9249
  %v9268 = vadd.f32 %v9241, %v9250
  %v9269 = vadd.f32 %v9242, %v9251
  %v9270 = vrot.slane %v9091, 6
  %v9271 = vrot.slane %v9095, 6
  %v9272 = vrot.slane %v9099, 6
  %v9273 = vrot.slane %v9103, 6
  %v9274 = vrot.slane %v9107, 6
  %v9275 = vrot.slane %v9111, 6
  %v9276 = vrot.slane %v9115, 6
  %v9277 = vrot.slane %v9119, 6
  %v9278 = vrot.slane %v9123, 6
  %v9288 = vadd.f32 %v9261, %v9270
  %v9289 = vadd.f32 %v9262, %v9271
  %v9290 = vadd.f32 %v9263, %v9272
  %v9291 = vadd.f32 %v9264, %v9273
  %v9292 = vadd.f32 %v9265, %v9274
  %v9293 = vadd.f32 %v9266, %v9275
  %v9294 = vadd.f32 %v9267, %v9276
  %v9295 = vadd.f32 %v9268, %v9277
  %v9296 = vadd.f32 %v9269, %v9278
  %v9297 = vrot.slane %v9091, 7
  %v9298 = vrot.slane %v9095, 7
  %v9299 = vrot.slane %v9099, 7
  %v9300 = vrot.slane %v9103, 7
  %v9301 = vrot.slane %v9107, 7
  %v9302 = vrot.slane %v9111, 7
  %v9303 = vrot.slane %v9115, 7
  %v9304 = vrot.slane %v9119, 7
  %v9305 = vrot.slane %v9123, 7
  %v9315 = vadd.f32 %v9288, %v9297
  %v9316 = vadd.f32 %v9289, %v9298
  %v9317 = vadd.f32 %v9290, %v9299
  %v9318 = vadd.f32 %v9291, %v9300
  %v9319 = vadd.f32 %v9292, %v9301
  %v9320 = vadd.f32 %v9293, %v9302
  %v9321 = vadd.f32 %v9294, %v9303
  %v9322 = vadd.f32 %v9295, %v9304
  %v9323 = vadd.f32 %v9296, %v9305
  %v9324 = vadd.f32 %v9315, %v9093
  %v9325 = vadd.f32 %v9316, %v9097
  %v9326 = vadd.f32 %v9317, %v9101
  %v9327 = vadd.f32 %v9318, %v9105
  %v9328 = vadd.f32 %v9319, %v9109
  %v9329 = vadd.f32 %v9320, %v9113
  %v9330 = vadd.f32 %v9321, %v9117
  %v9331 = vadd.f32 %v9322, %v9121
  %v9332 = vadd.f32 %v9323, %v9125
  %v9333 = vrcp.pop %v9324
  %v9334 = vrcp.pop %v9325
  %v9335 = vrcp.pop %v9326
  %v9336 = vrcp.pop %v9327
  %v9337 = vrcp.pop %v9328
  %v9338 = vrcp.pop %v9329
  %v9339 = vrcp.pop %v9330
  %v9340 = vrcp.pop %v9331
  %v9341 = vrcp.pop %v9332
  %v9342 = vmul.f32 %v9091, %v9333
  %v9343 = vmul.f32 %v9095, %v9334
  %v9344 = vmul.f32 %v9099, %v9335
  %v9345 = vmul.f32 %v9103, %v9336
  %v9346 = vmul.f32 %v9107, %v9337
  %v9347 = vmul.f32 %v9111, %v9338
  %v9348 = vmul.f32 %v9115, %v9339
  %v9349 = vmul.f32 %v9119, %v9340
  %v9350 = vmul.f32 %v9123, %v9341
  %v9351 = vlaneseq
  %v9352 = vshrl.u32 %v9351, 7
  %v9353 = vsub.s32 0, %v9352
  %v9354 = vrot.slane %v9342, %v9353
  %v9355 = vlaneseq
  %v9356 = vshrl.u32 %v9355, 7
  %v9357 = vsub.s32 0, %v9356
  %v9358 = vrot.slane %v9343, %v9357
  %v9359 = vlaneseq
  %v9360 = vshrl.u32 %v9359, 7
  %v9361 = vsub.s32 0, %v9360
  %v9362 = vrot.slane %v9344, %v9361
  %v9363 = vlaneseq
  %v9364 = vshrl.u32 %v9363, 7
  %v9365 = vsub.s32 0, %v9364
  %v9366 = vrot.slane %v9345, %v9365
  %v9367 = vlaneseq
  %v9368 = vshrl.u32 %v9367, 7
  %v9369 = vsub.s32 0, %v9368
  %v9370 = vrot.slane %v9346, %v9369
  %v9371 = vlaneseq
  %v9372 = vshrl.u32 %v9371, 7
  %v9373 = vsub.s32 0, %v9372
  %v9374 = vrot.slane %v9347, %v9373
  %v9375 = vlaneseq
  %v9376 = vshrl.u32 %v9375, 7
  %v9377 = vsub.s32 0, %v9376
  %v9378 = vrot.slane %v9348, %v9377
  %v9379 = vlaneseq
  %v9380 = vshrl.u32 %v9379, 7
  %v9381 = vsub.s32 0, %v9380
  %v9382 = vrot.slane %v9349, %v9381
  %v9383 = vlaneseq
  %v9384 = vshrl.u32 %v9383, 7
  %v9385 = vsub.s32 0, %v9384
  %v9386 = vrot.slane %v9350, %v9385
  %v9387 = vmul.f32 %v9354, %v8091
  %v9388 = vmul.f32 %v9354, %v8092
  %v9389 = vmul.f32 %v9358, %v8091
  %v9390 = vmul.f32 %v9358, %v8092
  %v9391 = vmul.f32 %v9362, %v8091
  %v9392 = vmul.f32 %v9362, %v8092
  %v9393 = vmul.f32 %v9366, %v8091
  %v9394 = vmul.f32 %v9366, %v8092
  %v9395 = vmul.f32 %v9370, %v8091
  %v9396 = vmul.f32 %v9370, %v8092
  %v9397 = vmul.f32 %v9374, %v8091
  %v9398 = vmul.f32 %v9374, %v8092
  %v9399 = vmul.f32 %v9378, %v8091
  %v9400 = vmul.f32 %v9378, %v8092
  %v9401 = vmul.f32 %v9382, %v8091
  %v9402 = vmul.f32 %v9382, %v8092
  %v9403 = vmul.f32 %v9386, %v8091
  %v9404 = vmul.f32 %v9386, %v8092
  %v9405 = vadd.f32 %v8055, %v9387
  %v9406 = vadd.f32 %v8056, %v9388
  %v9407 = vadd.f32 %v8057, %v9389
  %v9408 = vadd.f32 %v8058, %v9390
  %v9409 = vadd.f32 %v8059, %v9391
  %v9410 = vadd.f32 %v8060, %v9392
  %v9411 = vadd.f32 %v8061, %v9393
  %v9412 = vadd.f32 %v8062, %v9394
  %v9413 = vadd.f32 %v8063, %v9395
  %v9414 = vadd.f32 %v8064, %v9396
  %v9415 = vadd.f32 %v8065, %v9397
  %v9416 = vadd.f32 %v8066, %v9398
  %v9417 = vadd.f32 %v8067, %v9399
  %v9418 = vadd.f32 %v8068, %v9400
  %v9419 = vadd.f32 %v8069, %v9401
  %v9420 = vadd.f32 %v8070, %v9402
  %v9421 = vadd.f32 %v8071, %v9403
  %v9422 = vadd.f32 %v8072, %v9404
  %v9432 = vrot.slane %v9333, 7
  %v9433 = vrot.slane %v9334, 7
  %v9434 = vrot.slane %v9335, 7
  %v9435 = vrot.slane %v9336, 7
  %v9436 = vrot.slane %v9337, 7
  %v9437 = vrot.slane %v9338, 7
  %v9438 = vrot.slane %v9339, 7
  %v9439 = vrot.slane %v9340, 7
  %v9440 = vrot.slane %v9341, 7
  %v9450 = vmul.f32 %v9091, %v9432
  %v9451 = vmul.f32 %v9095, %v9433
  %v9452 = vmul.f32 %v9099, %v9434
  %v9453 = vmul.f32 %v9103, %v9435
  %v9454 = vmul.f32 %v9107, %v9436
  %v9455 = vmul.f32 %v9111, %v9437
  %v9456 = vmul.f32 %v9115, %v9438
  %v9457 = vmul.f32 %v9119, %v9439
  %v9458 = vmul.f32 %v9123, %v9440
  %v9459 = vlaneseq
  %v9460 = vshrl.u32 %v9459, 7
  %v9461 = vsub.s32 1, %v9460
  %v9462 = vrot.slane %v9450, %v9461
  %v9463 = vlaneseq
  %v9464 = vshrl.u32 %v9463, 7
  %v9465 = vsub.s32 1, %v9464
  %v9466 = vrot.slane %v9451, %v9465
  %v9467 = vlaneseq
  %v9468 = vshrl.u32 %v9467, 7
  %v9469 = vsub.s32 1, %v9468
  %v9470 = vrot.slane %v9452, %v9469
  %v9471 = vlaneseq
  %v9472 = vshrl.u32 %v9471, 7
  %v9473 = vsub.s32 1, %v9472
  %v9474 = vrot.slane %v9453, %v9473
  %v9475 = vlaneseq
  %v9476 = vshrl.u32 %v9475, 7
  %v9477 = vsub.s32 1, %v9476
  %v9478 = vrot.slane %v9454, %v9477
  %v9479 = vlaneseq
  %v9480 = vshrl.u32 %v9479, 7
  %v9481 = vsub.s32 1, %v9480
  %v9482 = vrot.slane %v9455, %v9481
  %v9483 = vlaneseq
  %v9484 = vshrl.u32 %v9483, 7
  %v9485 = vsub.s32 1, %v9484
  %v9486 = vrot.slane %v9456, %v9485
  %v9487 = vlaneseq
  %v9488 = vshrl.u32 %v9487, 7
  %v9489 = vsub.s32 1, %v9488
  %v9490 = vrot.slane %v9457, %v9489
  %v9491 = vlaneseq
  %v9492 = vshrl.u32 %v9491, 7
  %v9493 = vsub.s32 1, %v9492
  %v9494 = vrot.slane %v9458, %v9493
  %v9495 = vmul.f32 %v9462, %v8093
  %v9496 = vmul.f32 %v9462, %v8094
  %v9497 = vmul.f32 %v9466, %v8093
  %v9498 = vmul.f32 %v9466, %v8094
  %v9499 = vmul.f32 %v9470, %v8093
  %v9500 = vmul.f32 %v9470, %v8094
  %v9501 = vmul.f32 %v9474, %v8093
  %v9502 = vmul.f32 %v9474, %v8094
  %v9503 = vmul.f32 %v9478, %v8093
  %v9504 = vmul.f32 %v9478, %v8094
  %v9505 = vmul.f32 %v9482, %v8093
  %v9506 = vmul.f32 %v9482, %v8094
  %v9507 = vmul.f32 %v9486, %v8093
  %v9508 = vmul.f32 %v9486, %v8094
  %v9509 = vmul.f32 %v9490, %v8093
  %v9510 = vmul.f32 %v9490, %v8094
  %v9511 = vmul.f32 %v9494, %v8093
  %v9512 = vmul.f32 %v9494, %v8094
  %v9513 = vadd.f32 %v9405, %v9495
  %v9514 = vadd.f32 %v9406, %v9496
  %v9515 = vadd.f32 %v9407, %v9497
  %v9516 = vadd.f32 %v9408, %v9498
  %v9517 = vadd.f32 %v9409, %v9499
  %v9518 = vadd.f32 %v9410, %v9500
  %v9519 = vadd.f32 %v9411, %v9501
  %v9520 = vadd.f32 %v9412, %v9502
  %v9521 = vadd.f32 %v9413, %v9503
  %v9522 = vadd.f32 %v9414, %v9504
  %v9523 = vadd.f32 %v9415, %v9505
  %v9524 = vadd.f32 %v9416, %v9506
  %v9525 = vadd.f32 %v9417, %v9507
  %v9526 = vadd.f32 %v9418, %v9508
  %v9527 = vadd.f32 %v9419, %v9509
  %v9528 = vadd.f32 %v9420, %v9510
  %v9529 = vadd.f32 %v9421, %v9511
  %v9530 = vadd.f32 %v9422, %v9512
  %v9531 = vrot.slane %v9333, 6
  %v9532 = vrot.slane %v9334, 6
  %v9533 = vrot.slane %v9335, 6
  %v9534 = vrot.slane %v9336, 6
  %v9535 = vrot.slane %v9337, 6
  %v9536 = vrot.slane %v9338, 6
  %v9537 = vrot.slane %v9339, 6
  %v9538 = vrot.slane %v9340, 6
  %v9539 = vrot.slane %v9341, 6
  %v9549 = vmul.f32 %v9091, %v9531
  %v9550 = vmul.f32 %v9095, %v9532
  %v9551 = vmul.f32 %v9099, %v9533
  %v9552 = vmul.f32 %v9103, %v9534
  %v9553 = vmul.f32 %v9107, %v9535
  %v9554 = vmul.f32 %v9111, %v9536
  %v9555 = vmul.f32 %v9115, %v9537
  %v9556 = vmul.f32 %v9119, %v9538
  %v9557 = vmul.f32 %v9123, %v9539
  %v9558 = vlaneseq
  %v9559 = vshrl.u32 %v9558, 7
  %v9560 = vsub.s32 2, %v9559
  %v9561 = vrot.slane %v9549, %v9560
  %v9562 = vlaneseq
  %v9563 = vshrl.u32 %v9562, 7
  %v9564 = vsub.s32 2, %v9563
  %v9565 = vrot.slane %v9550, %v9564
  %v9566 = vlaneseq
  %v9567 = vshrl.u32 %v9566, 7
  %v9568 = vsub.s32 2, %v9567
  %v9569 = vrot.slane %v9551, %v9568
  %v9570 = vlaneseq
  %v9571 = vshrl.u32 %v9570, 7
  %v9572 = vsub.s32 2, %v9571
  %v9573 = vrot.slane %v9552, %v9572
  %v9574 = vlaneseq
  %v9575 = vshrl.u32 %v9574, 7
  %v9576 = vsub.s32 2, %v9575
  %v9577 = vrot.slane %v9553, %v9576
  %v9578 = vlaneseq
  %v9579 = vshrl.u32 %v9578, 7
  %v9580 = vsub.s32 2, %v9579
  %v9581 = vrot.slane %v9554, %v9580
  %v9582 = vlaneseq
  %v9583 = vshrl.u32 %v9582, 7
  %v9584 = vsub.s32 2, %v9583
  %v9585 = vrot.slane %v9555, %v9584
  %v9586 = vlaneseq
  %v9587 = vshrl.u32 %v9586, 7
  %v9588 = vsub.s32 2, %v9587
  %v9589 = vrot.slane %v9556, %v9588
  %v9590 = vlaneseq
  %v9591 = vshrl.u32 %v9590, 7
  %v9592 = vsub.s32 2, %v9591
  %v9593 = vrot.slane %v9557, %v9592
  %v9594 = vmul.f32 %v9561, %v8095
  %v9595 = vmul.f32 %v9561, %v8096
  %v9596 = vmul.f32 %v9565, %v8095
  %v9597 = vmul.f32 %v9565, %v8096
  %v9598 = vmul.f32 %v9569, %v8095
  %v9599 = vmul.f32 %v9569, %v8096
  %v9600 = vmul.f32 %v9573, %v8095
  %v9601 = vmul.f32 %v9573, %v8096
  %v9602 = vmul.f32 %v9577, %v8095
  %v9603 = vmul.f32 %v9577, %v8096
  %v9604 = vmul.f32 %v9581, %v8095
  %v9605 = vmul.f32 %v9581, %v8096
  %v9606 = vmul.f32 %v9585, %v8095
  %v9607 = vmul.f32 %v9585, %v8096
  %v9608 = vmul.f32 %v9589, %v8095
  %v9609 = vmul.f32 %v9589, %v8096
  %v9610 = vmul.f32 %v9593, %v8095
  %v9611 = vmul.f32 %v9593, %v8096
  %v9612 = vadd.f32 %v9513, %v9594
  %v9613 = vadd.f32 %v9514, %v9595
  %v9614 = vadd.f32 %v9515, %v9596
  %v9615 = vadd.f32 %v9516, %v9597
  %v9616 = vadd.f32 %v9517, %v9598
  %v9617 = vadd.f32 %v9518, %v9599
  %v9618 = vadd.f32 %v9519, %v9600
  %v9619 = vadd.f32 %v9520, %v9601
  %v9620 = vadd.f32 %v9521, %v9602
  %v9621 = vadd.f32 %v9522, %v9603
  %v9622 = vadd.f32 %v9523, %v9604
  %v9623 = vadd.f32 %v9524, %v9605
  %v9624 = vadd.f32 %v9525, %v9606
  %v9625 = vadd.f32 %v9526, %v9607
  %v9626 = vadd.f32 %v9527, %v9608
  %v9627 = vadd.f32 %v9528, %v9609
  %v9628 = vadd.f32 %v9529, %v9610
  %v9629 = vadd.f32 %v9530, %v9611
  %v9630 = vrot.slane %v9333, 5
  %v9631 = vrot.slane %v9334, 5
  %v9632 = vrot.slane %v9335, 5
  %v9633 = vrot.slane %v9336, 5
  %v9634 = vrot.slane %v9337, 5
  %v9635 = vrot.slane %v9338, 5
  %v9636 = vrot.slane %v9339, 5
  %v9637 = vrot.slane %v9340, 5
  %v9638 = vrot.slane %v9341, 5
  %v9648 = vmul.f32 %v9091, %v9630
  %v9649 = vmul.f32 %v9095, %v9631
  %v9650 = vmul.f32 %v9099, %v9632
  %v9651 = vmul.f32 %v9103, %v9633
  %v9652 = vmul.f32 %v9107, %v9634
  %v9653 = vmul.f32 %v9111, %v9635
  %v9654 = vmul.f32 %v9115, %v9636
  %v9655 = vmul.f32 %v9119, %v9637
  %v9656 = vmul.f32 %v9123, %v9638
  %v9657 = vlaneseq
  %v9658 = vshrl.u32 %v9657, 7
  %v9659 = vsub.s32 3, %v9658
  %v9660 = vrot.slane %v9648, %v9659
  %v9661 = vlaneseq
  %v9662 = vshrl.u32 %v9661, 7
  %v9663 = vsub.s32 3, %v9662
  %v9664 = vrot.slane %v9649, %v9663
  %v9665 = vlaneseq
  %v9666 = vshrl.u32 %v9665, 7
  %v9667 = vsub.s32 3, %v9666
  %v9668 = vrot.slane %v9650, %v9667
  %v9669 = vlaneseq
  %v9670 = vshrl.u32 %v9669, 7
  %v9671 = vsub.s32 3, %v9670
  %v9672 = vrot.slane %v9651, %v9671
  %v9673 = vlaneseq
  %v9674 = vshrl.u32 %v9673, 7
  %v9675 = vsub.s32 3, %v9674
  %v9676 = vrot.slane %v9652, %v9675
  %v9677 = vlaneseq
  %v9678 = vshrl.u32 %v9677, 7
  %v9679 = vsub.s32 3, %v9678
  %v9680 = vrot.slane %v9653, %v9679
  %v9681 = vlaneseq
  %v9682 = vshrl.u32 %v9681, 7
  %v9683 = vsub.s32 3, %v9682
  %v9684 = vrot.slane %v9654, %v9683
  %v9685 = vlaneseq
  %v9686 = vshrl.u32 %v9685, 7
  %v9687 = vsub.s32 3, %v9686
  %v9688 = vrot.slane %v9655, %v9687
  %v9689 = vlaneseq
  %v9690 = vshrl.u32 %v9689, 7
  %v9691 = vsub.s32 3, %v9690
  %v9692 = vrot.slane %v9656, %v9691
  %v9693 = vmul.f32 %v9660, %v8097
  %v9694 = vmul.f32 %v9660, %v8098
  %v9695 = vmul.f32 %v9664, %v8097
  %v9696 = vmul.f32 %v9664, %v8098
  %v9697 = vmul.f32 %v9668, %v8097
  %v9698 = vmul.f32 %v9668, %v8098
  %v9699 = vmul.f32 %v9672, %v8097
  %v9700 = vmul.f32 %v9672, %v8098
  %v9701 = vmul.f32 %v9676, %v8097
  %v9702 = vmul.f32 %v9676, %v8098
  %v9703 = vmul.f32 %v9680, %v8097
  %v9704 = vmul.f32 %v9680, %v8098
  %v9705 = vmul.f32 %v9684, %v8097
  %v9706 = vmul.f32 %v9684, %v8098
  %v9707 = vmul.f32 %v9688, %v8097
  %v9708 = vmul.f32 %v9688, %v8098
  %v9709 = vmul.f32 %v9692, %v8097
  %v9710 = vmul.f32 %v9692, %v8098
  %v9711 = vadd.f32 %v9612, %v9693
  %v9712 = vadd.f32 %v9613, %v9694
  %v9713 = vadd.f32 %v9614, %v9695
  %v9714 = vadd.f32 %v9615, %v9696
  %v9715 = vadd.f32 %v9616, %v9697
  %v9716 = vadd.f32 %v9617, %v9698
  %v9717 = vadd.f32 %v9618, %v9699
  %v9718 = vadd.f32 %v9619, %v9700
  %v9719 = vadd.f32 %v9620, %v9701
  %v9720 = vadd.f32 %v9621, %v9702
  %v9721 = vadd.f32 %v9622, %v9703
  %v9722 = vadd.f32 %v9623, %v9704
  %v9723 = vadd.f32 %v9624, %v9705
  %v9724 = vadd.f32 %v9625, %v9706
  %v9725 = vadd.f32 %v9626, %v9707
  %v9726 = vadd.f32 %v9627, %v9708
  %v9727 = vadd.f32 %v9628, %v9709
  %v9728 = vadd.f32 %v9629, %v9710
  %v9729 = vrot.slane %v9333, 4
  %v9730 = vrot.slane %v9334, 4
  %v9731 = vrot.slane %v9335, 4
  %v9732 = vrot.slane %v9336, 4
  %v9733 = vrot.slane %v9337, 4
  %v9734 = vrot.slane %v9338, 4
  %v9735 = vrot.slane %v9339, 4
  %v9736 = vrot.slane %v9340, 4
  %v9737 = vrot.slane %v9341, 4
  %v9747 = vmul.f32 %v9091, %v9729
  %v9748 = vmul.f32 %v9095, %v9730
  %v9749 = vmul.f32 %v9099, %v9731
  %v9750 = vmul.f32 %v9103, %v9732
  %v9751 = vmul.f32 %v9107, %v9733
  %v9752 = vmul.f32 %v9111, %v9734
  %v9753 = vmul.f32 %v9115, %v9735
  %v9754 = vmul.f32 %v9119, %v9736
  %v9755 = vmul.f32 %v9123, %v9737
  %v9756 = vlaneseq
  %v9757 = vshrl.u32 %v9756, 7
  %v9758 = vsub.s32 4, %v9757
  %v9759 = vrot.slane %v9747, %v9758
  %v9760 = vlaneseq
  %v9761 = vshrl.u32 %v9760, 7
  %v9762 = vsub.s32 4, %v9761
  %v9763 = vrot.slane %v9748, %v9762
  %v9764 = vlaneseq
  %v9765 = vshrl.u32 %v9764, 7
  %v9766 = vsub.s32 4, %v9765
  %v9767 = vrot.slane %v9749, %v9766
  %v9768 = vlaneseq
  %v9769 = vshrl.u32 %v9768, 7
  %v9770 = vsub.s32 4, %v9769
  %v9771 = vrot.slane %v9750, %v9770
  %v9772 = vlaneseq
  %v9773 = vshrl.u32 %v9772, 7
  %v9774 = vsub.s32 4, %v9773
  %v9775 = vrot.slane %v9751, %v9774
  %v9776 = vlaneseq
  %v9777 = vshrl.u32 %v9776, 7
  %v9778 = vsub.s32 4, %v9777
  %v9779 = vrot.slane %v9752, %v9778
  %v9780 = vlaneseq
  %v9781 = vshrl.u32 %v9780, 7
  %v9782 = vsub.s32 4, %v9781
  %v9783 = vrot.slane %v9753, %v9782
  %v9784 = vlaneseq
  %v9785 = vshrl.u32 %v9784, 7
  %v9786 = vsub.s32 4, %v9785
  %v9787 = vrot.slane %v9754, %v9786
  %v9788 = vlaneseq
  %v9789 = vshrl.u32 %v9788, 7
  %v9790 = vsub.s32 4, %v9789
  %v9791 = vrot.slane %v9755, %v9790
  %v9792 = vmul.f32 %v9759, %v8099
  %v9793 = vmul.f32 %v9759, %v8100
  %v9794 = vmul.f32 %v9763, %v8099
  %v9795 = vmul.f32 %v9763, %v8100
  %v9796 = vmul.f32 %v9767, %v8099
  %v9797 = vmul.f32 %v9767, %v8100
  %v9798 = vmul.f32 %v9771, %v8099
  %v9799 = vmul.f32 %v9771, %v8100
  %v9800 = vmul.f32 %v9775, %v8099
  %v9801 = vmul.f32 %v9775, %v8100
  %v9802 = vmul.f32 %v9779, %v8099
  %v9803 = vmul.f32 %v9779, %v8100
  %v9804 = vmul.f32 %v9783, %v8099
  %v9805 = vmul.f32 %v9783, %v8100
  %v9806 = vmul.f32 %v9787, %v8099
  %v9807 = vmul.f32 %v9787, %v8100
  %v9808 = vmul.f32 %v9791, %v8099
  %v9809 = vmul.f32 %v9791, %v8100
  %v9810 = vadd.f32 %v9711, %v9792
  %v9811 = vadd.f32 %v9712, %v9793
  %v9812 = vadd.f32 %v9713, %v9794
  %v9813 = vadd.f32 %v9714, %v9795
  %v9814 = vadd.f32 %v9715, %v9796
  %v9815 = vadd.f32 %v9716, %v9797
  %v9816 = vadd.f32 %v9717, %v9798
  %v9817 = vadd.f32 %v9718, %v9799
  %v9818 = vadd.f32 %v9719, %v9800
  %v9819 = vadd.f32 %v9720, %v9801
  %v9820 = vadd.f32 %v9721, %v9802
  %v9821 = vadd.f32 %v9722, %v9803
  %v9822 = vadd.f32 %v9723, %v9804
  %v9823 = vadd.f32 %v9724, %v9805
  %v9824 = vadd.f32 %v9725, %v9806
  %v9825 = vadd.f32 %v9726, %v9807
  %v9826 = vadd.f32 %v9727, %v9808
  %v9827 = vadd.f32 %v9728, %v9809
  %v9828 = vrot.slane %v9333, 3
  %v9829 = vrot.slane %v9334, 3
  %v9830 = vrot.slane %v9335, 3
  %v9831 = vrot.slane %v9336, 3
  %v9832 = vrot.slane %v9337, 3
  %v9833 = vrot.slane %v9338, 3
  %v9834 = vrot.slane %v9339, 3
  %v9835 = vrot.slane %v9340, 3
  %v9836 = vrot.slane %v9341, 3
  %v9846 = vmul.f32 %v9091, %v9828
  %v9847 = vmul.f32 %v9095, %v9829
  %v9848 = vmul.f32 %v9099, %v9830
  %v9849 = vmul.f32 %v9103, %v9831
  %v9850 = vmul.f32 %v9107, %v9832
  %v9851 = vmul.f32 %v9111, %v9833
  %v9852 = vmul.f32 %v9115, %v9834
  %v9853 = vmul.f32 %v9119, %v9835
  %v9854 = vmul.f32 %v9123, %v9836
  %v9855 = vlaneseq
  %v9856 = vshrl.u32 %v9855, 7
  %v9857 = vsub.s32 5, %v9856
  %v9858 = vrot.slane %v9846, %v9857
  %v9859 = vlaneseq
  %v9860 = vshrl.u32 %v9859, 7
  %v9861 = vsub.s32 5, %v9860
  %v9862 = vrot.slane %v9847, %v9861
  %v9863 = vlaneseq
  %v9864 = vshrl.u32 %v9863, 7
  %v9865 = vsub.s32 5, %v9864
  %v9866 = vrot.slane %v9848, %v9865
  %v9867 = vlaneseq
  %v9868 = vshrl.u32 %v9867, 7
  %v9869 = vsub.s32 5, %v9868
  %v9870 = vrot.slane %v9849, %v9869
  %v9871 = vlaneseq
  %v9872 = vshrl.u32 %v9871, 7
  %v9873 = vsub.s32 5, %v9872
  %v9874 = vrot.slane %v9850, %v9873
  %v9875 = vlaneseq
  %v9876 = vshrl.u32 %v9875, 7
  %v9877 = vsub.s32 5, %v9876
  %v9878 = vrot.slane %v9851, %v9877
  %v9879 = vlaneseq
  %v9880 = vshrl.u32 %v9879, 7
  %v9881 = vsub.s32 5, %v9880
  %v9882 = vrot.slane %v9852, %v9881
  %v9883 = vlaneseq
  %v9884 = vshrl.u32 %v9883, 7
  %v9885 = vsub.s32 5, %v9884
  %v9886 = vrot.slane %v9853, %v9885
  %v9887 = vlaneseq
  %v9888 = vshrl.u32 %v9887, 7
  %v9889 = vsub.s32 5, %v9888
  %v9890 = vrot.slane %v9854, %v9889
  %v9891 = vmul.f32 %v9858, %v8101
  %v9892 = vmul.f32 %v9858, %v8102
  %v9893 = vmul.f32 %v9862, %v8101
  %v9894 = vmul.f32 %v9862, %v8102
  %v9895 = vmul.f32 %v9866, %v8101
  %v9896 = vmul.f32 %v9866, %v8102
  %v9897 = vmul.f32 %v9870, %v8101
  %v9898 = vmul.f32 %v9870, %v8102
  %v9899 = vmul.f32 %v9874, %v8101
  %v9900 = vmul.f32 %v9874, %v8102
  %v9901 = vmul.f32 %v9878, %v8101
  %v9902 = vmul.f32 %v9878, %v8102
  %v9903 = vmul.f32 %v9882, %v8101
  %v9904 = vmul.f32 %v9882, %v8102
  %v9905 = vmul.f32 %v9886, %v8101
  %v9906 = vmul.f32 %v9886, %v8102
  %v9907 = vmul.f32 %v9890, %v8101
  %v9908 = vmul.f32 %v9890, %v8102
  %v9909 = vadd.f32 %v9810, %v9891
  %v9910 = vadd.f32 %v9811, %v9892
  %v9911 = vadd.f32 %v9812, %v9893
  %v9912 = vadd.f32 %v9813, %v9894
  %v9913 = vadd.f32 %v9814, %v9895
  %v9914 = vadd.f32 %v9815, %v9896
  %v9915 = vadd.f32 %v9816, %v9897
  %v9916 = vadd.f32 %v9817, %v9898
  %v9917 = vadd.f32 %v9818, %v9899
  %v9918 = vadd.f32 %v9819, %v9900
  %v9919 = vadd.f32 %v9820, %v9901
  %v9920 = vadd.f32 %v9821, %v9902
  %v9921 = vadd.f32 %v9822, %v9903
  %v9922 = vadd.f32 %v9823, %v9904
  %v9923 = vadd.f32 %v9824, %v9905
  %v9924 = vadd.f32 %v9825, %v9906
  %v9925 = vadd.f32 %v9826, %v9907
  %v9926 = vadd.f32 %v9827, %v9908
  %v9927 = vrot.slane %v9333, 2
  %v9928 = vrot.slane %v9334, 2
  %v9929 = vrot.slane %v9335, 2
  %v9930 = vrot.slane %v9336, 2
  %v9931 = vrot.slane %v9337, 2
  %v9932 = vrot.slane %v9338, 2
  %v9933 = vrot.slane %v9339, 2
  %v9934 = vrot.slane %v9340, 2
  %v9935 = vrot.slane %v9341, 2
  %v9945 = vmul.f32 %v9091, %v9927
  %v9946 = vmul.f32 %v9095, %v9928
  %v9947 = vmul.f32 %v9099, %v9929
  %v9948 = vmul.f32 %v9103, %v9930
  %v9949 = vmul.f32 %v9107, %v9931
  %v9950 = vmul.f32 %v9111, %v9932
  %v9951 = vmul.f32 %v9115, %v9933
  %v9952 = vmul.f32 %v9119, %v9934
  %v9953 = vmul.f32 %v9123, %v9935
  %v9954 = vlaneseq
  %v9955 = vshrl.u32 %v9954, 7
  %v9956 = vsub.s32 6, %v9955
  %v9957 = vrot.slane %v9945, %v9956
  %v9958 = vlaneseq
  %v9959 = vshrl.u32 %v9958, 7
  %v9960 = vsub.s32 6, %v9959
  %v9961 = vrot.slane %v9946, %v9960
  %v9962 = vlaneseq
  %v9963 = vshrl.u32 %v9962, 7
  %v9964 = vsub.s32 6, %v9963
  %v9965 = vrot.slane %v9947, %v9964
  %v9966 = vlaneseq
  %v9967 = vshrl.u32 %v9966, 7
  %v9968 = vsub.s32 6, %v9967
  %v9969 = vrot.slane %v9948, %v9968
  %v9970 = vlaneseq
  %v9971 = vshrl.u32 %v9970, 7
  %v9972 = vsub.s32 6, %v9971
  %v9973 = vrot.slane %v9949, %v9972
  %v9974 = vlaneseq
  %v9975 = vshrl.u32 %v9974, 7
  %v9976 = vsub.s32 6, %v9975
  %v9977 = vrot.slane %v9950, %v9976
  %v9978 = vlaneseq
  %v9979 = vshrl.u32 %v9978, 7
  %v9980 = vsub.s32 6, %v9979
  %v9981 = vrot.slane %v9951, %v9980
  %v9982 = vlaneseq
  %v9983 = vshrl.u32 %v9982, 7
  %v9984 = vsub.s32 6, %v9983
  %v9985 = vrot.slane %v9952, %v9984
  %v9986 = vlaneseq
  %v9987 = vshrl.u32 %v9986, 7
  %v9988 = vsub.s32 6, %v9987
  %v9989 = vrot.slane %v9953, %v9988
  %v9990 = vmul.f32 %v9957, %v8103
  %v9991 = vmul.f32 %v9957, %v8104
  %v9992 = vmul.f32 %v9961, %v8103
  %v9993 = vmul.f32 %v9961, %v8104
  %v9994 = vmul.f32 %v9965, %v8103
  %v9995 = vmul.f32 %v9965, %v8104
  %v9996 = vmul.f32 %v9969, %v8103
  %v9997 = vmul.f32 %v9969, %v8104
  %v9998 = vmul.f32 %v9973, %v8103
  %v9999 = vmul.f32 %v9973, %v8104
  %v10000 = vmul.f32 %v9977, %v8103
  %v10001 = vmul.f32 %v9977, %v8104
  %v10002 = vmul.f32 %v9981, %v8103
  %v10003 = vmul.f32 %v9981, %v8104
  %v10004 = vmul.f32 %v9985, %v8103
  %v10005 = vmul.f32 %v9985, %v8104
  %v10006 = vmul.f32 %v9989, %v8103
  %v10007 = vmul.f32 %v9989, %v8104
  %v10008 = vadd.f32 %v9909, %v9990
  %v10009 = vadd.f32 %v9910, %v9991
  %v10010 = vadd.f32 %v9911, %v9992
  %v10011 = vadd.f32 %v9912, %v9993
  %v10012 = vadd.f32 %v9913, %v9994
  %v10013 = vadd.f32 %v9914, %v9995
  %v10014 = vadd.f32 %v9915, %v9996
  %v10015 = vadd.f32 %v9916, %v9997
  %v10016 = vadd.f32 %v9917, %v9998
  %v10017 = vadd.f32 %v9918, %v9999
  %v10018 = vadd.f32 %v9919, %v10000
  %v10019 = vadd.f32 %v9920, %v10001
  %v10020 = vadd.f32 %v9921, %v10002
  %v10021 = vadd.f32 %v9922, %v10003
  %v10022 = vadd.f32 %v9923, %v10004
  %v10023 = vadd.f32 %v9924, %v10005
  %v10024 = vadd.f32 %v9925, %v10006
  %v10025 = vadd.f32 %v9926, %v10007
  %v10026 = vrot.slane %v9333, 1
  %v10027 = vrot.slane %v9334, 1
  %v10028 = vrot.slane %v9335, 1
  %v10029 = vrot.slane %v9336, 1
  %v10030 = vrot.slane %v9337, 1
  %v10031 = vrot.slane %v9338, 1
  %v10032 = vrot.slane %v9339, 1
  %v10033 = vrot.slane %v9340, 1
  %v10034 = vrot.slane %v9341, 1
  %v10044 = vmul.f32 %v9091, %v10026
  %v10045 = vmul.f32 %v9095, %v10027
  %v10046 = vmul.f32 %v9099, %v10028
  %v10047 = vmul.f32 %v9103, %v10029
  %v10048 = vmul.f32 %v9107, %v10030
  %v10049 = vmul.f32 %v9111, %v10031
  %v10050 = vmul.f32 %v9115, %v10032
  %v10051 = vmul.f32 %v9119, %v10033
  %v10052 = vmul.f32 %v9123, %v10034
  %v10053 = vlaneseq
  %v10054 = vshrl.u32 %v10053, 7
  %v10055 = vsub.s32 7, %v10054
  %v10056 = vrot.slane %v10044, %v10055
  %v10057 = vlaneseq
  %v10058 = vshrl.u32 %v10057, 7
  %v10059 = vsub.s32 7, %v10058
  %v10060 = vrot.slane %v10045, %v10059
  %v10061 = vlaneseq
  %v10062 = vshrl.u32 %v10061, 7
  %v10063 = vsub.s32 7, %v10062
  %v10064 = vrot.slane %v10046, %v10063
  %v10065 = vlaneseq
  %v10066 = vshrl.u32 %v10065, 7
  %v10067 = vsub.s32 7, %v10066
  %v10068 = vrot.slane %v10047, %v10067
  %v10069 = vlaneseq
  %v10070 = vshrl.u32 %v10069, 7
  %v10071 = vsub.s32 7, %v10070
  %v10072 = vrot.slane %v10048, %v10071
  %v10073 = vlaneseq
  %v10074 = vshrl.u32 %v10073, 7
  %v10075 = vsub.s32 7, %v10074
  %v10076 = vrot.slane %v10049, %v10075
  %v10077 = vlaneseq
  %v10078 = vshrl.u32 %v10077, 7
  %v10079 = vsub.s32 7, %v10078
  %v10080 = vrot.slane %v10050, %v10079
  %v10081 = vlaneseq
  %v10082 = vshrl.u32 %v10081, 7
  %v10083 = vsub.s32 7, %v10082
  %v10084 = vrot.slane %v10051, %v10083
  %v10085 = vlaneseq
  %v10086 = vshrl.u32 %v10085, 7
  %v10087 = vsub.s32 7, %v10086
  %v10088 = vrot.slane %v10052, %v10087
  %v10089 = vmul.f32 %v10056, %v8105
  %v10090 = vmul.f32 %v10056, %v8106
  %v10091 = vmul.f32 %v10060, %v8105
  %v10092 = vmul.f32 %v10060, %v8106
  %v10093 = vmul.f32 %v10064, %v8105
  %v10094 = vmul.f32 %v10064, %v8106
  %v10095 = vmul.f32 %v10068, %v8105
  %v10096 = vmul.f32 %v10068, %v8106
  %v10097 = vmul.f32 %v10072, %v8105
  %v10098 = vmul.f32 %v10072, %v8106
  %v10099 = vmul.f32 %v10076, %v8105
  %v10100 = vmul.f32 %v10076, %v8106
  %v10101 = vmul.f32 %v10080, %v8105
  %v10102 = vmul.f32 %v10080, %v8106
  %v10103 = vmul.f32 %v10084, %v8105
  %v10104 = vmul.f32 %v10084, %v8106
  %v10105 = vmul.f32 %v10088, %v8105
  %v10106 = vmul.f32 %v10088, %v8106
  %v10107 = vadd.f32 %v10008, %v10089
  %v10108 = vadd.f32 %v10009, %v10090
  %v10109 = vadd.f32 %v10010, %v10091
  %v10110 = vadd.f32 %v10011, %v10092
  %v10111 = vadd.f32 %v10012, %v10093
  %v10112 = vadd.f32 %v10013, %v10094
  %v10113 = vadd.f32 %v10014, %v10095
  %v10114 = vadd.f32 %v10015, %v10096
  %v10115 = vadd.f32 %v10016, %v10097
  %v10116 = vadd.f32 %v10017, %v10098
  %v10117 = vadd.f32 %v10018, %v10099
  %v10118 = vadd.f32 %v10019, %v10100
  %v10119 = vadd.f32 %v10020, %v10101
  %v10120 = vadd.f32 %v10021, %v10102
  %v10121 = vadd.f32 %v10022, %v10103
  %v10122 = vadd.f32 %v10023, %v10104
  %v10123 = vadd.f32 %v10024, %v10105
  %v10124 = vadd.f32 %v10025, %v10106
  %v10125 = vmul.f32 %v9093, %v9333
  %v10126 = vmul.f32 %v9097, %v9334
  %v10127 = vmul.f32 %v9101, %v9335
  %v10128 = vmul.f32 %v9105, %v9336
  %v10129 = vmul.f32 %v9109, %v9337
  %v10130 = vmul.f32 %v9113, %v9338
  %v10131 = vmul.f32 %v9117, %v9339
  %v10132 = vmul.f32 %v9121, %v9340
  %v10133 = vmul.f32 %v9125, %v9341
  %v10134 = vlaneseq
  %v10135 = vshrl.u32 %v10134, 7
  %v10136 = vsub.s32 0, %v10135
  %v10137 = vrot.slane %v10125, %v10136
  %v10138 = vlaneseq
  %v10139 = vshrl.u32 %v10138, 7
  %v10140 = vsub.s32 0, %v10139
  %v10141 = vrot.slane %v10126, %v10140
  %v10142 = vlaneseq
  %v10143 = vshrl.u32 %v10142, 7
  %v10144 = vsub.s32 0, %v10143
  %v10145 = vrot.slane %v10127, %v10144
  %v10146 = vlaneseq
  %v10147 = vshrl.u32 %v10146, 7
  %v10148 = vsub.s32 0, %v10147
  %v10149 = vrot.slane %v10128, %v10148
  %v10150 = vlaneseq
  %v10151 = vshrl.u32 %v10150, 7
  %v10152 = vsub.s32 0, %v10151
  %v10153 = vrot.slane %v10129, %v10152
  %v10154 = vlaneseq
  %v10155 = vshrl.u32 %v10154, 7
  %v10156 = vsub.s32 0, %v10155
  %v10157 = vrot.slane %v10130, %v10156
  %v10158 = vlaneseq
  %v10159 = vshrl.u32 %v10158, 7
  %v10160 = vsub.s32 0, %v10159
  %v10161 = vrot.slane %v10131, %v10160
  %v10162 = vlaneseq
  %v10163 = vshrl.u32 %v10162, 7
  %v10164 = vsub.s32 0, %v10163
  %v10165 = vrot.slane %v10132, %v10164
  %v10166 = vlaneseq
  %v10167 = vshrl.u32 %v10166, 7
  %v10168 = vsub.s32 0, %v10167
  %v10169 = vrot.slane %v10133, %v10168
  %v10170 = vmul.f32 %v10137, %v8107
  %v10171 = vmul.f32 %v10137, %v8108
  %v10172 = vmul.f32 %v10141, %v8107
  %v10173 = vmul.f32 %v10141, %v8108
  %v10174 = vmul.f32 %v10145, %v8107
  %v10175 = vmul.f32 %v10145, %v8108
  %v10176 = vmul.f32 %v10149, %v8107
  %v10177 = vmul.f32 %v10149, %v8108
  %v10178 = vmul.f32 %v10153, %v8107
  %v10179 = vmul.f32 %v10153, %v8108
  %v10180 = vmul.f32 %v10157, %v8107
  %v10181 = vmul.f32 %v10157, %v8108
  %v10182 = vmul.f32 %v10161, %v8107
  %v10183 = vmul.f32 %v10161, %v8108
  %v10184 = vmul.f32 %v10165, %v8107
  %v10185 = vmul.f32 %v10165, %v8108
  %v10186 = vmul.f32 %v10169, %v8107
  %v10187 = vmul.f32 %v10169, %v8108
  %v10188 = vadd.f32 %v10107, %v10170
  %v10189 = vadd.f32 %v10108, %v10171
  %v10190 = vadd.f32 %v10109, %v10172
  %v10191 = vadd.f32 %v10110, %v10173
  %v10192 = vadd.f32 %v10111, %v10174
  %v10193 = vadd.f32 %v10112, %v10175
  %v10194 = vadd.f32 %v10113, %v10176
  %v10195 = vadd.f32 %v10114, %v10177
  %v10196 = vadd.f32 %v10115, %v10178
  %v10197 = vadd.f32 %v10116, %v10179
  %v10198 = vadd.f32 %v10117, %v10180
  %v10199 = vadd.f32 %v10118, %v10181
  %v10200 = vadd.f32 %v10119, %v10182
  %v10201 = vadd.f32 %v10120, %v10183
  %v10202 = vadd.f32 %v10121, %v10184
  %v10203 = vadd.f32 %v10122, %v10185
  %v10204 = vadd.f32 %v10123, %v10186
  %v10205 = vadd.f32 %v10124, %v10187
  %v10206 = vld [vmem:[%s4] sm:$0xff]
  %v10207 = vld [vmem:[%s4 + $0x8] sm:$0xff]
  %10209 = vset.pattern.permute.xlu0 0
  %10210 = vperm.xlu0 %10209, %v10206
  %v10211 = vpop.permute.xlu0 %10210
  %10214 = vset.pattern.permute.xlu0 0
  %10215 = vperm.xlu0 %10214, %v10207
  %v10216 = vpop.permute.xlu0 %10215
  %v10218 = vadd.f32 %v10188, %v10211
  %v10219 = vadd.f32 %v10189, %v10216
  %v10220 = vadd.f32 %v10190, %v10211
  %v10221 = vadd.f32 %v10191, %v10216
  %v10222 = vadd.f32 %v10192, %v10211
  %v10223 = vadd.f32 %v10193, %v10216
  %v10224 = vadd.f32 %v10194, %v10211
  %v10225 = vadd.f32 %v10195, %v10216
  %v10226 = vadd.f32 %v10196, %v10211
  %v10227 = vadd.f32 %v10197, %v10216
  %v10228 = vadd.f32 %v10198, %v10211
  %v10229 = vadd.f32 %v10199, %v10216
  %v10230 = vadd.f32 %v10200, %v10211
  %v10231 = vadd.f32 %v10201, %v10216
  %v10232 = vadd.f32 %v10202, %v10211
  %v10233 = vadd.f32 %v10203, %v10216
  %v10234 = vadd.f32 %v10204, %v10211
  %v10235 = vadd.f32 %v10205, %v10216
  %v10236 = vmax.f32 %v10218, 0.0
  %v10237 = vmax.f32 %v10219, 0.0
  %v10238 = vmax.f32 %v10220, 0.0
  %v10239 = vmax.f32 %v10221, 0.0
  %v10240 = vmax.f32 %v10222, 0.0
  %v10241 = vmax.f32 %v10223, 0.0
  %v10242 = vmax.f32 %v10224, 0.0
  %v10243 = vmax.f32 %v10225, 0.0
  %v10244 = vmax.f32 %v10226, 0.0
  %v10245 = vmax.f32 %v10227, 0.0
  %v10246 = vmax.f32 %v10228, 0.0
  %v10247 = vmax.f32 %v10229, 0.0
  %v10248 = vmax.f32 %v10230, 0.0
  %v10249 = vmax.f32 %v10231, 0.0
  %v10250 = vmax.f32 %v10232, 0.0
  %v10251 = vmax.f32 %v10233, 0.0
  %v10252 = vmax.f32 %v10234, 0.0
  %v10253 = vmax.f32 %v10235, 0.0
  %v10254 = vld [vmem:[%s5] sm:$0xff]
  %v10255 = vld [vmem:[%s5 + $0x8] sm:$0xff]
  %10257 = vset.pattern.permute.xlu0 0
  %10258 = vperm.xlu0 %10257, %v10254
  %v10259 = vpop.permute.xlu0 %10258
  %10262 = vset.pattern.permute.xlu0 0
  %10263 = vperm.xlu0 %10262, %v10255
  %v10264 = vpop.permute.xlu0 %10263
  %v10266 = vmul.f32 %v10236, %v10259
  %v10267 = vmul.f32 %v10237, %v10264
  %v10268 = vmul.f32 %v10238, %v10259
  %v10269 = vmul.f32 %v10239, %v10264
  %v10270 = vmul.f32 %v10240, %v10259
  %v10271 = vmul.f32 %v10241, %v10264
  %v10272 = vmul.f32 %v10242, %v10259
  %v10273 = vmul.f32 %v10243, %v10264
  %v10274 = vmul.f32 %v10244, %v10259
  %v10275 = vmul.f32 %v10245, %v10264
  %v10276 = vmul.f32 %v10246, %v10259
  %v10277 = vmul.f32 %v10247, %v10264
  %v10278 = vmul.f32 %v10248, %v10259
  %v10279 = vmul.f32 %v10249, %v10264
  %v10280 = vmul.f32 %v10250, %v10259
  %v10281 = vmul.f32 %v10251, %v10264
  %v10282 = vmul.f32 %v10252, %v10259
  %v10283 = vmul.f32 %v10253, %v10264
  %v10293 = vrot.slane %v10266, 1
  %v10294 = vrot.slane %v10268, 1
  %v10295 = vrot.slane %v10270, 1
  %v10296 = vrot.slane %v10272, 1
  %v10297 = vrot.slane %v10274, 1
  %v10298 = vrot.slane %v10276, 1
  %v10299 = vrot.slane %v10278, 1
  %v10300 = vrot.slane %v10280, 1
  %v10301 = vrot.slane %v10282, 1
  %v10311 = vadd.f32 %v10266, %v10293
  %v10312 = vadd.f32 %v10268, %v10294
  %v10313 = vadd.f32 %v10270, %v10295
  %v10314 = vadd.f32 %v10272, %v10296
  %v10315 = vadd.f32 %v10274, %v10297
  %v10316 = vadd.f32 %v10276, %v10298
  %v10317 = vadd.f32 %v10278, %v10299
  %v10318 = vadd.f32 %v10280, %v10300
  %v10319 = vadd.f32 %v10282, %v10301
  %v10320 = vrot.slane %v10266, 2
  %v10321 = vrot.slane %v10268, 2
  %v10322 = vrot.slane %v10270, 2
  %v10323 = vrot.slane %v10272, 2
  %v10324 = vrot.slane %v10274, 2
  %v10325 = vrot.slane %v10276, 2
  %v10326 = vrot.slane %v10278, 2
  %v10327 = vrot.slane %v10280, 2
  %v10328 = vrot.slane %v10282, 2
  %v10338 = vadd.f32 %v10311, %v10320
  %v10339 = vadd.f32 %v10312, %v10321
  %v10340 = vadd.f32 %v10313, %v10322
  %v10341 = vadd.f32 %v10314, %v10323
  %v10342 = vadd.f32 %v10315, %v10324
  %v10343 = vadd.f32 %v10316, %v10325
  %v10344 = vadd.f32 %v10317, %v10326
  %v10345 = vadd.f32 %v10318, %v10327
  %v10346 = vadd.f32 %v10319, %v10328
  %v10347 = vrot.slane %v10266, 3
  %v10348 = vrot.slane %v10268, 3
  %v10349 = vrot.slane %v10270, 3
  %v10350 = vrot.slane %v10272, 3
  %v10351 = vrot.slane %v10274, 3
  %v10352 = vrot.slane %v10276, 3
  %v10353 = vrot.slane %v10278, 3
  %v10354 = vrot.slane %v10280, 3
  %v10355 = vrot.slane %v10282, 3
  %v10365 = vadd.f32 %v10338, %v10347
  %v10366 = vadd.f32 %v10339, %v10348
  %v10367 = vadd.f32 %v10340, %v10349
  %v10368 = vadd.f32 %v10341, %v10350
  %v10369 = vadd.f32 %v10342, %v10351
  %v10370 = vadd.f32 %v10343, %v10352
  %v10371 = vadd.f32 %v10344, %v10353
  %v10372 = vadd.f32 %v10345, %v10354
  %v10373 = vadd.f32 %v10346, %v10355
  %v10374 = vrot.slane %v10266, 4
  %v10375 = vrot.slane %v10268, 4
  %v10376 = vrot.slane %v10270, 4
  %v10377 = vrot.slane %v10272, 4
  %v10378 = vrot.slane %v10274, 4
  %v10379 = vrot.slane %v10276, 4
  %v10380 = vrot.slane %v10278, 4
  %v10381 = vrot.slane %v10280, 4
  %v10382 = vrot.slane %v10282, 4
  %v10392 = vadd.f32 %v10365, %v10374
  %v10393 = vadd.f32 %v10366, %v10375
  %v10394 = vadd.f32 %v10367, %v10376
  %v10395 = vadd.f32 %v10368, %v10377
  %v10396 = vadd.f32 %v10369, %v10378
  %v10397 = vadd.f32 %v10370, %v10379
  %v10398 = vadd.f32 %v10371, %v10380
  %v10399 = vadd.f32 %v10372, %v10381
  %v10400 = vadd.f32 %v10373, %v10382
  %v10401 = vrot.slane %v10266, 5
  %v10402 = vrot.slane %v10268, 5
  %v10403 = vrot.slane %v10270, 5
  %v10404 = vrot.slane %v10272, 5
  %v10405 = vrot.slane %v10274, 5
  %v10406 = vrot.slane %v10276, 5
  %v10407 = vrot.slane %v10278, 5
  %v10408 = vrot.slane %v10280, 5
  %v10409 = vrot.slane %v10282, 5
  %v10419 = vadd.f32 %v10392, %v10401
  %v10420 = vadd.f32 %v10393, %v10402
  %v10421 = vadd.f32 %v10394, %v10403
  %v10422 = vadd.f32 %v10395, %v10404
  %v10423 = vadd.f32 %v10396, %v10405
  %v10424 = vadd.f32 %v10397, %v10406
  %v10425 = vadd.f32 %v10398, %v10407
  %v10426 = vadd.f32 %v10399, %v10408
  %v10427 = vadd.f32 %v10400, %v10409
  %v10428 = vrot.slane %v10266, 6
  %v10429 = vrot.slane %v10268, 6
  %v10430 = vrot.slane %v10270, 6
  %v10431 = vrot.slane %v10272, 6
  %v10432 = vrot.slane %v10274, 6
  %v10433 = vrot.slane %v10276, 6
  %v10434 = vrot.slane %v10278, 6
  %v10435 = vrot.slane %v10280, 6
  %v10436 = vrot.slane %v10282, 6
  %v10446 = vadd.f32 %v10419, %v10428
  %v10447 = vadd.f32 %v10420, %v10429
  %v10448 = vadd.f32 %v10421, %v10430
  %v10449 = vadd.f32 %v10422, %v10431
  %v10450 = vadd.f32 %v10423, %v10432
  %v10451 = vadd.f32 %v10424, %v10433
  %v10452 = vadd.f32 %v10425, %v10434
  %v10453 = vadd.f32 %v10426, %v10435
  %v10454 = vadd.f32 %v10427, %v10436
  %v10455 = vrot.slane %v10266, 7
  %v10456 = vrot.slane %v10268, 7
  %v10457 = vrot.slane %v10270, 7
  %v10458 = vrot.slane %v10272, 7
  %v10459 = vrot.slane %v10274, 7
  %v10460 = vrot.slane %v10276, 7
  %v10461 = vrot.slane %v10278, 7
  %v10462 = vrot.slane %v10280, 7
  %v10463 = vrot.slane %v10282, 7
  %v10473 = vadd.f32 %v10446, %v10455
  %v10474 = vadd.f32 %v10447, %v10456
  %v10475 = vadd.f32 %v10448, %v10457
  %v10476 = vadd.f32 %v10449, %v10458
  %v10477 = vadd.f32 %v10450, %v10459
  %v10478 = vadd.f32 %v10451, %v10460
  %v10479 = vadd.f32 %v10452, %v10461
  %v10480 = vadd.f32 %v10453, %v10462
  %v10481 = vadd.f32 %v10454, %v10463
  %v10482 = vadd.f32 %v10473, %v10267
  %v10483 = vadd.f32 %v10474, %v10269
  %v10484 = vadd.f32 %v10475, %v10271
  %v10485 = vadd.f32 %v10476, %v10273
  %v10486 = vadd.f32 %v10477, %v10275
  %v10487 = vadd.f32 %v10478, %v10277
  %v10488 = vadd.f32 %v10479, %v10279
  %v10489 = vadd.f32 %v10480, %v10281
  %v10490 = vadd.f32 %v10481, %v10283
  %v10500 = vrot.slane %v10267, 1
  %v10501 = vrot.slane %v10269, 1
  %v10502 = vrot.slane %v10271, 1
  %v10503 = vrot.slane %v10273, 1
  %v10504 = vrot.slane %v10275, 1
  %v10505 = vrot.slane %v10277, 1
  %v10506 = vrot.slane %v10279, 1
  %v10507 = vrot.slane %v10281, 1
  %v10508 = vrot.slane %v10283, 1
  %v10518 = vadd.f32 %v10482, %v10500
  %v10519 = vadd.f32 %v10483, %v10501
  %v10520 = vadd.f32 %v10484, %v10502
  %v10521 = vadd.f32 %v10485, %v10503
  %v10522 = vadd.f32 %v10486, %v10504
  %v10523 = vadd.f32 %v10487, %v10505
  %v10524 = vadd.f32 %v10488, %v10506
  %v10525 = vadd.f32 %v10489, %v10507
  %v10526 = vadd.f32 %v10490, %v10508
  %v10527 = vrot.slane %v10267, 2
  %v10528 = vrot.slane %v10269, 2
  %v10529 = vrot.slane %v10271, 2
  %v10530 = vrot.slane %v10273, 2
  %v10531 = vrot.slane %v10275, 2
  %v10532 = vrot.slane %v10277, 2
  %v10533 = vrot.slane %v10279, 2
  %v10534 = vrot.slane %v10281, 2
  %v10535 = vrot.slane %v10283, 2
  %v10545 = vadd.f32 %v10518, %v10527
  %v10546 = vadd.f32 %v10519, %v10528
  %v10547 = vadd.f32 %v10520, %v10529
  %v10548 = vadd.f32 %v10521, %v10530
  %v10549 = vadd.f32 %v10522, %v10531
  %v10550 = vadd.f32 %v10523, %v10532
  %v10551 = vadd.f32 %v10524, %v10533
  %v10552 = vadd.f32 %v10525, %v10534
  %v10553 = vadd.f32 %v10526, %v10535
  %v10554 = vrot.slane %v10267, 3
  %v10555 = vrot.slane %v10269, 3
  %v10556 = vrot.slane %v10271, 3
  %v10557 = vrot.slane %v10273, 3
  %v10558 = vrot.slane %v10275, 3
  %v10559 = vrot.slane %v10277, 3
  %v10560 = vrot.slane %v10279, 3
  %v10561 = vrot.slane %v10281, 3
  %v10562 = vrot.slane %v10283, 3
  %v10572 = vadd.f32 %v10545, %v10554
  %v10573 = vadd.f32 %v10546, %v10555
  %v10574 = vadd.f32 %v10547, %v10556
  %v10575 = vadd.f32 %v10548, %v10557
  %v10576 = vadd.f32 %v10549, %v10558
  %v10577 = vadd.f32 %v10550, %v10559
  %v10578 = vadd.f32 %v10551, %v10560
  %v10579 = vadd.f32 %v10552, %v10561
  %v10580 = vadd.f32 %v10553, %v10562
  %v10581 = vrot.slane %v10267, 4
  %v10582 = vrot.slane %v10269, 4
  %v10583 = vrot.slane %v10271, 4
  %v10584 = vrot.slane %v10273, 4
  %v10585 = vrot.slane %v10275, 4
  %v10586 = vrot.slane %v10277, 4
  %v10587 = vrot.slane %v10279, 4
  %v10588 = vrot.slane %v10281, 4
  %v10589 = vrot.slane %v10283, 4
  %v10599 = vadd.f32 %v10572, %v10581
  %v10600 = vadd.f32 %v10573, %v10582
  %v10601 = vadd.f32 %v10574, %v10583
  %v10602 = vadd.f32 %v10575, %v10584
  %v10603 = vadd.f32 %v10576, %v10585
  %v10604 = vadd.f32 %v10577, %v10586
  %v10605 = vadd.f32 %v10578, %v10587
  %v10606 = vadd.f32 %v10579, %v10588
  %v10607 = vadd.f32 %v10580, %v10589
  %v10608 = vrot.slane %v10267, 5
  %v10609 = vrot.slane %v10269, 5
  %v10610 = vrot.slane %v10271, 5
  %v10611 = vrot.slane %v10273, 5
  %v10612 = vrot.slane %v10275, 5
  %v10613 = vrot.slane %v10277, 5
  %v10614 = vrot.slane %v10279, 5
  %v10615 = vrot.slane %v10281, 5
  %v10616 = vrot.slane %v10283, 5
  %v10626 = vadd.f32 %v10599, %v10608
  %v10627 = vadd.f32 %v10600, %v10609
  %v10628 = vadd.f32 %v10601, %v10610
  %v10629 = vadd.f32 %v10602, %v10611
  %v10630 = vadd.f32 %v10603, %v10612
  %v10631 = vadd.f32 %v10604, %v10613
  %v10632 = vadd.f32 %v10605, %v10614
  %v10633 = vadd.f32 %v10606, %v10615
  %v10634 = vadd.f32 %v10607, %v10616
  %v10635 = vrot.slane %v10267, 6
  %v10636 = vrot.slane %v10269, 6
  %v10637 = vrot.slane %v10271, 6
  %v10638 = vrot.slane %v10273, 6
  %v10639 = vrot.slane %v10275, 6
  %v10640 = vrot.slane %v10277, 6
  %v10641 = vrot.slane %v10279, 6
  %v10642 = vrot.slane %v10281, 6
  %v10643 = vrot.slane %v10283, 6
  %v10653 = vadd.f32 %v10626, %v10635
  %v10654 = vadd.f32 %v10627, %v10636
  %v10655 = vadd.f32 %v10628, %v10637
  %v10656 = vadd.f32 %v10629, %v10638
  %v10657 = vadd.f32 %v10630, %v10639
  %v10658 = vadd.f32 %v10631, %v10640
  %v10659 = vadd.f32 %v10632, %v10641
  %v10660 = vadd.f32 %v10633, %v10642
  %v10661 = vadd.f32 %v10634, %v10643
  %v10662 = vrot.slane %v10267, 7
  %v10663 = vrot.slane %v10269, 7
  %v10664 = vrot.slane %v10271, 7
  %v10665 = vrot.slane %v10273, 7
  %v10666 = vrot.slane %v10275, 7
  %v10667 = vrot.slane %v10277, 7
  %v10668 = vrot.slane %v10279, 7
  %v10669 = vrot.slane %v10281, 7
  %v10670 = vrot.slane %v10283, 7
  %v10680 = vadd.f32 %v10653, %v10662
  %v10681 = vadd.f32 %v10654, %v10663
  %v10682 = vadd.f32 %v10655, %v10664
  %v10683 = vadd.f32 %v10656, %v10665
  %v10684 = vadd.f32 %v10657, %v10666
  %v10685 = vadd.f32 %v10658, %v10667
  %v10686 = vadd.f32 %v10659, %v10668
  %v10687 = vadd.f32 %v10660, %v10669
  %v10688 = vadd.f32 %v10661, %v10670
  %v10689 = vmax.f32 %v10680, %v10681
  %v10690 = vmax.f32 %v10689, %v10682
  %v10691 = vmax.f32 %v10690, %v10683
  %v10692 = vmax.f32 %v10691, %v10684
  %v10693 = vmax.f32 %v10692, %v10685
  %v10694 = vmax.f32 %v10693, %v10686
  %v10695 = vmax.f32 %v10694, %v10687
  %v10696 = vmax.f32 %v10695, %v10688
  %v10697 = vlaneseq
  %v10698 = vshrl.u32 %v10697, 7
  %v10699 = vsub.s32 0, %v10698
  %v10700 = vrot.slane %v10696, %v10699
  %v10701 = vsub.f32 %v10680, %v10700
  %v10702 = vsub.f32 %v10681, %v10700
  %v10703 = vsub.f32 %v10682, %v10700
  %v10704 = vsub.f32 %v10683, %v10700
  %v10705 = vsub.f32 %v10684, %v10700
  %v10706 = vsub.f32 %v10685, %v10700
  %v10707 = vsub.f32 %v10686, %v10700
  %v10708 = vsub.f32 %v10687, %v10700
  %v10709 = vsub.f32 %v10688, %v10700
  %v10710 = vmul.f32 %v10701, 1.442695
  %v10711 = vpow.pop %v10710
  %v10712 = vmul.f32 %v10702, 1.442695
  %v10713 = vpow.pop %v10712
  %v10714 = vmul.f32 %v10703, 1.442695
  %v10715 = vpow.pop %v10714
  %v10716 = vmul.f32 %v10704, 1.442695
  %v10717 = vpow.pop %v10716
  %v10718 = vmul.f32 %v10705, 1.442695
  %v10719 = vpow.pop %v10718
  %v10720 = vmul.f32 %v10706, 1.442695
  %v10721 = vpow.pop %v10720
  %v10722 = vmul.f32 %v10707, 1.442695
  %v10723 = vpow.pop %v10722
  %v10724 = vmul.f32 %v10708, 1.442695
  %v10725 = vpow.pop %v10724
  %v10726 = vmul.f32 %v10709, 1.442695
  %v10727 = vpow.pop %v10726
  %v10728 = vadd.f32 %v10711, %v10713
  %v10729 = vadd.f32 %v10728, %v10715
  %v10730 = vadd.f32 %v10729, %v10717
  %v10731 = vadd.f32 %v10730, %v10719
  %v10732 = vadd.f32 %v10731, %v10721
  %v10733 = vadd.f32 %v10732, %v10723
  %v10734 = vadd.f32 %v10733, %v10725
  %v10735 = vadd.f32 %v10734, %v10727
  %v10736 = vlaneseq
  %v10737 = vshrl.u32 %v10736, 7
  %v10738 = vsub.s32 0, %v10737
  %v10739 = vrot.slane %v10735, %v10738
  %v10740 = vrcp.pop %v10739
  %v10741 = vmul.f32 %v10711, %v10740
  %v10742 = vmul.f32 %v10713, %v10740
  %v10743 = vmul.f32 %v10715, %v10740
  %v10744 = vmul.f32 %v10717, %v10740
  %v10745 = vmul.f32 %v10719, %v10740
  %v10746 = vmul.f32 %v10721, %v10740
  %v10747 = vmul.f32 %v10723, %v10740
  %v10748 = vmul.f32 %v10725, %v10740
  %v10749 = vmul.f32 %v10727, %v10740
  %v10759 = vrot.slane %v10742, 7
  %v10760 = vsel %vm1767, %v10759, %v10741
  %v10761 = vrot.slane %v10743, 6
  %v10762 = vsel %vm1770, %v10761, %v10760
  %v10763 = vrot.slane %v10744, 5
  %v10764 = vsel %vm1773, %v10763, %v10762
  %v10765 = vrot.slane %v10745, 4
  %v10766 = vsel %vm1776, %v10765, %v10764
  %v10767 = vrot.slane %v10746, 3
  %v10768 = vsel %vm1779, %v10767, %v10766
  %v10769 = vrot.slane %v10747, 2
  %v10770 = vsel %vm1782, %v10769, %v10768
  %v10771 = vrot.slane %v10748, 1
  %v10772 = vsel %vm1785, %v10771, %v10770
  %10775 = vst.msk [vmem:[%s6] sm:$0xff] %vm333, %v10772
  %vm10776 = vcmask 57344
  %10777 = vst.msk [vmem:[%s6 + $0x8] sm:$0x1] %vm10776, %v10749
  // Predicated region
  $region26: #{tpu_custom_call.1} parent=0 // pred_check
    _
  $region27: #{tpu_custom_call.1} parent=0 // pred_check_branch
    %10779 = sbr.rel (0) target = $region29
  $region28: #{tpu_custom_call.1} parent=0 // pred_region
    _
  $region29: #{tpu_custom_call.1} parent=0 // pred_fallthru
    _
  // Predicated region
  $region30: #{tpu_custom_call.1} parent=0 // pred_check
    _
  $region31: #{tpu_custom_call.1} parent=0 // pred_check_branch
    %10781 = sbr.rel (0) target = $region33
  $region32: #{tpu_custom_call.1} parent=0 // pred_region
    _
  $region33: #{tpu_custom_call.1} parent=0 // pred_fallthru
    _

</llo_original>
